<compile_context>
chip_gen: v5e
topology: v5e:2x2
jax: 0.10.0
libtpu: 0.0.40
codegen_flags: <defaults>
</compile_context>

<pallas_src>
import functools

import jax
import jax.numpy as jnp
from jax.experimental import pallas as pl
from jax.experimental.pallas import tpu as pltpu

BN_EPS = 1e-5     # nn.BatchNorm2d default eps
FUSE_EPS = 1e-4   # BiFPN fusion eps


def _round_up(x, m):
    return -(-x // m) * m


def _tile_rows(M, cap=2048):
    """Return (padded_rows, row_tile).  One maximal tile (<= cap rows) per call;
    when the problem is bigger than cap, tiles stay large and near-even so a
    multi-step 'parallel' grid still splits evenly across v7x's two cores."""
    Mp = _round_up(max(int(M), 1), 128)
    if Mp <= cap:
        return Mp, Mp
    n = -(-Mp // cap)
    tm = _round_up(-(-Mp // n), 128)
    return n * tm, tm


def _apply_act(y, act):
    if act == "relu":
        return jnp.maximum(y, 0.0)
    if act == "sigmoid":
        return 1.0 / (1.0 + jnp.exp(-y))   # exact reciprocal (numerics parity)
    return y


# ----------------------------------------------------------------------------
# Pallas kernels
# ----------------------------------------------------------------------------
def _conv_kernel(x_ref, w_ref, b_ref, o_ref, *, act):
    """out = act(x @ w + bias): single long-K MXU dot (K = k*k*Cin).
    x/w are bf16 MXU operands; accumulation + epilogue stay f32.
    BatchNorm scale is pre-folded into w; bias = (conv_b - mean)*scale + beta."""
    y = jnp.dot(x_ref[...], w_ref[...], preferred_element_type=jnp.float32)
    o_ref[...] = _apply_act(y + b_ref[...], act)


def _head_tail_kernel(x_ref, w1_ref, b1_ref, w2_ref, b2_ref, o_ref, *, act1, act2):
    """Fused head tail: last E-layer conv (+BN+act) and the final 1x1 conv
    (+activation) of BOTH heads in one kernel — the (tm, C1) ReLU activation
    never leaves VMEM and the lane-sparse (tm, 2) store happens only once."""
    h = jnp.dot(x_ref[...], w1_ref[...], preferred_element_type=jnp.float32)
    h = _apply_act(h + b1_ref[...], act1)
    y = jnp.dot(h.astype(jnp.bfloat16), w2_ref[...],
                preferred_element_type=jnp.float32)
    o_ref[...] = _apply_act(y + b2_ref[...], act2)


# ----------------------------------------------------------------------------
# Pallas wrappers
# ----------------------------------------------------------------------------
def matmul_act(x2d, w, bias, act):
    """x2d: (M, K), w: (K, Cout) f32 (BN folded), bias: (Cout,) -> (M, Cout) f32."""
    M, K = x2d.shape
    Cout = w.shape[-1]
    Mp, tm = _tile_rows(M)
    xp = jnp.pad(x2d.astype(jnp.bfloat16), ((0, Mp - M), (0, 0)))
    out = pl.pallas_call(
        functools.partial(_conv_kernel, act=act),
        out_shape=jax.ShapeDtypeStruct((Mp, Cout), jnp.float32),
        grid=(Mp // tm,),
        in_specs=[
            pl.BlockSpec((tm, K), lambda i: (i, 0)),
            pl.BlockSpec((K, Cout), lambda i: (0, 0)),
            pl.BlockSpec((1, Cout), lambda i: (0, 0)),
        ],
        out_specs=pl.BlockSpec((tm, Cout), lambda i: (i, 0)),
        compiler_params=pltpu.CompilerParams(dimension_semantics=("parallel",)),
    )(xp, w.astype(jnp.bfloat16), bias.reshape(1, Cout).astype(jnp.float32))
    return out[:M]


def head_tail_call(taps, w1, b1, w2, b2, act1, act2):
    """taps: (M, K1) bf16, w1: (K1, C1), w2: (C1, C2) -> (M, C2) f32."""
    M, K1 = taps.shape
    C1 = w1.shape[-1]
    C2 = w2.shape[-1]
    Mp, tm = _tile_rows(M)
    xp = jnp.pad(taps.astype(jnp.bfloat16), ((0, Mp - M), (0, 0)))
    out = pl.pallas_call(
        functools.partial(_head_tail_kernel, act1=act1, act2=act2),
        out_shape=jax.ShapeDtypeStruct((Mp, C2), jnp.float32),
        grid=(Mp // tm,),
        in_specs=[
            pl.BlockSpec((tm, K1), lambda i: (i, 0)),
            pl.BlockSpec((K1, C1), lambda i: (0, 0)),
            pl.BlockSpec((1, C1), lambda i: (0, 0)),
            pl.BlockSpec((C1, C2), lambda i: (0, 0)),
            pl.BlockSpec((1, C2), lambda i: (0, 0)),
        ],
        out_specs=pl.BlockSpec((tm, C2), lambda i: (i, 0)),
        compiler_params=pltpu.CompilerParams(dimension_semantics=("parallel",)),
    )(xp, w1.astype(jnp.bfloat16), b1.reshape(1, C1).astype(jnp.float32),
      w2.astype(jnp.bfloat16), b2.reshape(1, C2).astype(jnp.float32))
    return out[:M]


# ----------------------------------------------------------------------------
# Glue: tap extraction (lane-concatenated), upsample, fast-normalized fusion
# ----------------------------------------------------------------------------
def extract_taps_concat(x, k, stride, padding):
    """x: NHWC -> (N*Ho*Wo, k*k*C) bf16; last axis ordered [tap t = dy*k+dx, c].
    Staged in bf16 so the k*k-amplified HBM read of every conv is 16-bit."""
    N, H, W, C = x.shape
    x = x.astype(jnp.bfloat16)
    xp = jnp.pad(x, ((0, 0), (padding, padding), (padding, padding), (0, 0)))
    Ho = (H + 2 * padding - k) // stride + 1
    Wo = (W + 2 * padding - k) // stride + 1
    taps = []
    for dy in range(k):
        for dx in range(k):
            taps.append(xp[:, dy:dy + stride * Ho:stride, dx:dx + stride * Wo:stride, :])
    xcat = jnp.concatenate(taps, axis=-1).reshape(N * Ho * Wo, k * k * C)
    return xcat, (N, Ho, Wo)


def upsample2x(x):  # nearest, scale_factor=2 (NHWC)
    return jnp.repeat(jnp.repeat(x, 2, axis=1), 2, axis=2)


def fuse(maps, raw_w):
    """Fast normalized fusion in plain jnp: XLA fuses the weighted sum with the
    neighbouring upsample / tap-builder, so no extra launch or HBM round-trip."""
    w = jnp.maximum(raw_w.astype(jnp.float32), 0.0)
    wn = w / (jnp.sum(w) + FUSE_EPS)
    out = wn[0] * maps[0]
    for i in range(1, len(maps)):
        out = out + wn[i] * maps[i]
    return out


# ----------------------------------------------------------------------------
# Parameter init (deterministic, synthetic)
# ----------------------------------------------------------------------------
class KeyGen:
    def __init__(self, key):
        self._key = key

    def __call__(self):
        self._key, k = jax.random.split(self._key)
        return k


def init_conv2d(kg, cin, cout, k):
    fan = cin * k * k
    return {
        "w": jax.random.normal(kg(), (cout, cin, k, k)) / jnp.sqrt(float(fan)),
        "b": 0.05 * jax.random.normal(kg(), (cout,)),
        "gamma": jax.random.uniform(kg(), (cout,), jnp.float32, 0.5, 1.5),
        "beta": 0.1 * jax.random.normal(kg(), (cout,)),
        "mean": 0.1 * jax.random.normal(kg(), (cout,)),
        "var": jax.random.uniform(kg(), (cout,), jnp.float32, 0.5, 1.5),
    }


def init_dsconv(kg, cin, cout, k):
    return {
        "dw_w": jax.random.normal(kg(), (cin, 1, k, k)) / float(k),
        "dw_b": 0.05 * jax.random.normal(kg(), (cin,)),
        "pw_w": jax.random.normal(kg(), (cout, cin, 1, 1)) / jnp.sqrt(float(cin)),
        "pw_b": 0.05 * jax.random.normal(kg(), (cout,)),
        "gamma": jax.random.uniform(kg(), (cout,), jnp.float32, 0.5, 1.5),
        "beta": 0.1 * jax.random.normal(kg(), (cout,)),
        "mean": 0.1 * jax.random.normal(kg(), (cout,)),
        "var": jax.random.uniform(kg(), (cout,), jnp.float32, 0.5, 1.5),
    }


# ----------------------------------------------------------------------------
# Block forwards (Conv2D / DSConv2D from the reference, BN in eval mode)
# ----------------------------------------------------------------------------
def conv2d_fwd(p, x, k, stride, padding, act):
    taps, (N, Ho, Wo) = extract_taps_concat(x, k, stride, padding)   # (M, k*k*Cin)
    cout, cin = p["w"].shape[0], p["w"].shape[1]
    scale = p["gamma"] * jax.lax.rsqrt(p["var"] + BN_EPS)
    bias = (p["b"] - p["mean"]) * scale + p["beta"]
    # (k*k*Cin, Cout) weight, BN scale folded into the columns.
    w = jnp.transpose(p["w"], (2, 3, 1, 0)).reshape(k * k * cin, cout) * scale[None, :]
    y = matmul_act(taps, w, bias, act)
    return y.reshape(N, Ho, Wo, cout)


def dsconv_fwd(p, x, k, stride, padding):
    """Depthwise-separable conv collapsed into ONE long-K matmul:
    out[m,o] = sum_{t,c} x_tap[m,t,c] * (w_dw[t,c] * w_pw_scaled[c,o]) + bias."""
    cin = x.shape[-1]
    cout = p["pw_w"].shape[0]
    taps, (N, Ho, Wo) = extract_taps_concat(x, k, stride, padding)   # (M, k*k*Cin)
    T = k * k
    wd = jnp.transpose(p["dw_w"][:, 0], (1, 2, 0)).reshape(T, cin)   # (T, Cin)
    scale = p["gamma"] * jax.lax.rsqrt(p["var"] + BN_EPS)
    wp = p["pw_w"][:, :, 0, 0].T * scale[None, :]                    # (Cin, Cout), BN folded
    w = (wd[:, :, None] * wp[None, :, :]).reshape(T * cin, cout)     # (k*k*Cin, Cout)
    bias = p["dw_b"] @ wp + (p["pw_b"] - p["mean"]) * scale + p["beta"]
    y = matmul_act(taps, w, bias, "relu")
    return y.reshape(N, Ho, Wo, cout)


# ----------------------------------------------------------------------------
# BiFPN
# ----------------------------------------------------------------------------
def init_bifpn(kg, in_ch, p_ch, out_ch):
    n = len(in_ch)
    gain = jnp.sqrt(2.0)  # calculate_gain('relu')
    p = {
        "td": jax.random.normal(kg(), (n, 2)) * gain * jnp.sqrt(2.0 / (n + 2)),
        "out": jax.random.normal(kg(), (n, 3)) * gain * jnp.sqrt(2.0 / (n + 3)),
        "P": [], "Ptd": {}, "conv": {}, "Pout": [],
    }
    for i, ch in enumerate(in_ch):
        p["P"].append(init_conv2d(kg, ch, p_ch, 1))
        if i != 0 and i != n - 1:
            p["Ptd"][i] = init_dsconv(kg, p_ch, p_ch, 3)
        if i != 0:
            p["conv"][i] = init_dsconv(kg, out_ch, p_ch, 2)
        p["Pout"].append(init_dsconv(kg, p_ch, out_ch, 3))
    return p


def bifpn_fwd(p, feats):
    n = len(feats)
    P = [conv2d_fwd(p["P"][i], feats[i], 1, 1, 0, "relu") for i in range(n)]
    td = [None] * n
    for i in range(n - 1, -1, -1):
        if i == 0 or i == n - 1:
            td[i] = P[i]
        else:
            fused = fuse([upsample2x(td[i + 1]), P[i]], p["td"][i])
            td[i] = dsconv_fwd(p["Ptd"][i], fused, 3, 1, 1)
    out = [None] * n
    for i in range(n):
        w = p["out"][i]
        if i == 0:
            fused = fuse([upsample2x(td[1]), P[0]], w[:2])
        else:
            down = dsconv_fwd(p["conv"][i], out[i - 1], 2, 2, 0)
            if i == n - 1:
                fused = fuse([down, P[i]], w[:2])
            else:
                fused = fuse([down, P[i], td[i]], w[:3])
        out[i] = dsconv_fwd(p["Pout"][i], fused, 3, 1, 1)
    return out


# ----------------------------------------------------------------------------
# Backbone (EffNet stand-in) and Heads
# ----------------------------------------------------------------------------
# TODO(synk): pretrained torchvision efficientnet_b0 weights cannot be loaded
# in-script; the backbone is replaced by deterministic strided Conv2D(+BN+ReLU)
# blocks reproducing the EffNet shape contract (halved spatial per level).
def init_backbone(kg, chans):
    return [init_conv2d(kg, chans[i], chans[i + 1], 3) for i in range(len(chans) - 1)]


def backbone_fwd(p, x):
    # First conv has Cin=3 (K=27 after tap-concat); negligible at these sizes.
    feats = []
    for blk in p:
        x = conv2d_fwd(blk, x, 3, 2, 1, "relu")
        feats.append(x)
    return feats


def init_head(kg, channels, kernels):
    return {
        "E": [init_conv2d(kg, channels[i], channels[i + 1], kernels[i])
              for i in range(len(kernels))],
        "final_w": jax.random.normal(kg(), (1, channels[-1], 1, 1))
                   / jnp.sqrt(float(channels[-1])),
        "final_b": 0.05 * jax.random.normal(kg(), (1,)),
    }


def _combine_head_layer(mp_, ep_, first):
    """Concatenate (layer 0) / block-diagonal (later layers) mask+edge params."""
    cout_m, cin_m, k, _ = mp_["w"].shape
    cout_e, cin_e = ep_["w"].shape[0], ep_["w"].shape[1]
    if first:
        # Both heads read the same input -> concatenate along cout only.
        w = jnp.concatenate([mp_["w"], ep_["w"]], axis=0)
    else:
        w = jnp.zeros((cout_m + cout_e, cin_m + cin_e, k, k), jnp.float32)
        w = w.at[:cout_m, :cin_m].set(mp_["w"])
        w = w.at[cout_m:, cin_m:].set(ep_["w"])
    comb = {name: jnp.concatenate([mp_[name], ep_[name]])
            for name in ("b", "gamma", "beta", "mean", "var")}
    comb["w"] = w
    return comb


def fused_heads_fwd(mask_p, edge_p, cfg, x):
    """Run mask_head and edge_head as ONE fused pass; the last E layer, the final
    1x1 conv and the final activation are ONE Pallas kernel."""
    nE = len(cfg["E"])
    assert len(mask_p["E"]) == len(edge_p["E"]) == nE
    combined = [_combine_head_layer(mask_p["E"][li], edge_p["E"][li], li == 0)
                for li in range(nE)]
    for li in range(nE - 1):
        k, s, pad, act = cfg["E"][li]
        x = conv2d_fwd(combined[li], x, k, s, pad, act)

    k, s, pad, act1 = cfg["E"][-1]
    pl_ = combined[-1]
    cout1, cin1 = pl_["w"].shape[0], pl_["w"].shape[1]
    taps, (N, Ho, Wo) = extract_taps_concat(x, k, s, pad)
    scale = pl_["gamma"] * jax.lax.rsqrt(pl_["var"] + BN_EPS)
    w1 = jnp.transpose(pl_["w"], (2, 3, 1, 0)).reshape(k * k * cin1, cout1) * scale[None, :]
    b1 = (pl_["b"] - pl_["mean"]) * scale + pl_["beta"]
    # Final 1x1 conv (no BN): block-diagonal over the two heads' channels.
    cm = mask_p["final_w"].shape[1]
    w2 = jnp.zeros((cout1, 2), jnp.float32)
    w2 = w2.at[:cm, 0].set(mask_p["final_w"][0, :, 0, 0])
    w2 = w2.at[cm:, 1].set(edge_p["final_w"][0, :, 0, 0])
    b2 = jnp.concatenate([mask_p["final_b"], edge_p["final_b"]])
    y = head_tail_call(taps, w1, b1, w2, b2, act1, cfg["final_act"])
    y = y.reshape(N, Ho, Wo, 2)
    return y[..., 0:1], y[..., 1:2]


# ----------------------------------------------------------------------------
# EfficientDet
# ----------------------------------------------------------------------------
def init_efficientdet(key, backbone_chans, bifpns_args, head_channels, head_kernels):
    kg = KeyGen(key)
    return {
        "backbone": init_backbone(kg, backbone_chans),
        "bifpns": [init_bifpn(kg, *a) for a in bifpns_args],
        "mask_head": init_head(kg, head_channels, head_kernels),
        "edge_head": init_head(kg, head_channels, head_kernels),
    }


def efficientdet_fwd(params, imgs_nchw, head_cfg):
    x = jnp.transpose(imgs_nchw, (0, 2, 3, 1))            # NCHW -> NHWC
    feats = backbone_fwd(params["backbone"], x)
    for bp in params["bifpns"]:
        feats = bifpn_fwd(bp, feats)
    mask, edge = fused_heads_fwd(params["mask_head"], params["edge_head"],
                                 head_cfg, feats[0])
    # NHWC -> NCHW (matches PyTorch output convention, C=1)
    return jnp.transpose(mask, (0, 3, 1, 2)), jnp.transpose(edge, (0, 3, 1, 2))


# ----------------------------------------------------------------------------
if __name__ == "__main__":
    key = jax.random.PRNGKey(0)
    key_params, key_imgs = jax.random.split(key)

    # Small configuration consistent with the reference module:
    #   backbone (EffNet stand-in): 3 levels, channels 16/24/40, stride 2 each
    #   BiFPN:  in_ch=[16,24,40], p_ch=32, out_ch=32
    #   Heads:  sigmas=[ReLU, Sigmoid], channels=[32,16], kernels=[3],
    #           kwargs=[{'stride':1,'padding':1}]
    backbone_chans = [3, 16, 24, 40]
    bifpns_args = [([16, 24, 40], 32, 32)]
    head_channels = [32, 16]
    head_kernels = [3]
    head_cfg = {"E": [(3, 1, 1, "relu")], "final_act": "sigmoid"}

    params = init_efficientdet(key_params, backbone_chans, bifpns_args,
                               head_channels, head_kernels)

    imgs = jax.random.normal(key_imgs, (2, 3, 32, 32), jnp.float32)  # NCHW

    fwd = jax.jit(lambda p, x: efficientdet_fwd(p, x, head_cfg))
    mask_pred, edge_pred = fwd(params, imgs)
    jax.block_until_ready((mask_pred, edge_pred))

    assert mask_pred.shape == (2, 1, 16, 16), mask_pred.shape
    assert edge_pred.shape == (2, 1, 16, 16), edge_pred.shape
    assert bool(jnp.all(jnp.isfinite(mask_pred))) and bool(jnp.all(jnp.isfinite(edge_pred)))
    print("KERNEL_OK")
</pallas_src>

<mosaic_0001>
module attributes {stable_mosaic.version = 11 : i64} {
  func.func @_conv_kernel(%arg0: i32, %arg1: memref<512x27xbf16, #tpu.memory_space<vmem>>, %arg2: memref<27x16xbf16, #tpu.memory_space<vmem>>, %arg3: memref<1x16xf32, #tpu.memory_space<vmem>>, %arg4: memref<512x16xf32, #tpu.memory_space<vmem>>) attributes {dimension_semantics = [#tpu.dimension_semantics<parallel>], iteration_bounds = array<i64: 1>, scalar_prefetch = 0 : i64, scratch_operands = 0 : i64, tpu.core_type = #tpu.core_type<tc>, window_params = [{transform_indices = @transform_0, window_bounds = array<i64: 512, 27>}, {pipeline_mode = #tpu.pipeline_mode<synchronous>, transform_indices = @transform_1, window_bounds = array<i64: 27, 16>}, {pipeline_mode = #tpu.pipeline_mode<synchronous>, transform_indices = @transform_2, window_bounds = array<i64: 1, 16>}, {transform_indices = @transform_3, window_bounds = array<i64: 512, 16>}]} {
    %c0 = arith.constant 0 : index
    %c0_0 = arith.constant 0 : index
    %0 = vector.load %arg1[%c0, %c0_0] : memref<512x27xbf16, #tpu.memory_space<vmem>>, vector<512x27xbf16>
    %c0_1 = arith.constant 0 : index
    %c0_2 = arith.constant 0 : index
    %1 = vector.load %arg2[%c0_1, %c0_2] : memref<27x16xbf16, #tpu.memory_space<vmem>>, vector<27x16xbf16>
    %cst = arith.constant dense<0.000000e+00> : vector<512x16xf32>
    %2 = tpu.matmul %0, %1, %cst {dimension_numbers = #tpu.dot_dimension_numbers<[1], [0], [0], [1], [0, 0, 1, 1], [], []>} : vector<512x27xbf16>, vector<27x16xbf16>, vector<512x16xf32> -> vector<512x16xf32>
    %c0_3 = arith.constant 0 : index
    %c0_4 = arith.constant 0 : index
    %3 = vector.load %arg3[%c0_3, %c0_4] : memref<1x16xf32, #tpu.memory_space<vmem>>, vector<1x16xf32>
    %4 = vector.broadcast %3 : vector<1x16xf32> to vector<512x16xf32>
    %5 = arith.addf %2, %4 : vector<512x16xf32>
    %cst_5 = arith.constant 0.000000e+00 : f32
    %6 = vector.broadcast %cst_5 : f32 to vector<512x16xf32>
    %7 = arith.maximumf %5, %6 : vector<512x16xf32>
    %c0_6 = arith.constant 0 : index
    %c0_7 = arith.constant 0 : index
    %8 = vector.load %arg4[%c0_6, %c0_7] : memref<512x16xf32, #tpu.memory_space<vmem>>, vector<512x16xf32>
    tpu.vector_store %arg4[%c0_6, %c0_7], %7 {strides = array<i32>} : memref<512x16xf32, #tpu.memory_space<vmem>>, vector<512x16xf32>,
    return
  }
  func.func @transform_0(%arg0: i32) -> (i32, i32) {
    %c0_i32 = arith.constant 0 : i32
    %c0_i32_0 = arith.constant 0 : i32
    return %arg0, %c0_i32 : i32, i32
  }
  func.func @transform_1(%arg0: i32) -> (i32, i32) {
    %c0_i32 = arith.constant 0 : i32
    %c0_i32_0 = arith.constant 0 : i32
    %c0_i32_1 = arith.constant 0 : i32
    return %c0_i32, %c0_i32_0 : i32, i32
  }
  func.func @transform_2(%arg0: i32) -> (i32, i32) {
    %c0_i32 = arith.constant 0 : i32
    %c0_i32_0 = arith.constant 0 : i32
    %c0_i32_1 = arith.constant 0 : i32
    return %c0_i32, %c0_i32_0 : i32, i32
  }
  func.func @transform_3(%arg0: i32) -> (i32, i32) {
    %c0_i32 = arith.constant 0 : i32
    %c0_i32_0 = arith.constant 0 : i32
    return %arg0, %c0_i32 : i32, i32
  }
}

module attributes {stable_mosaic.version = 11 : i64} {
  func.func @_conv_kernel(%arg0: i32, %arg1: memref<128x144xbf16, #tpu.memory_space<vmem>>, %arg2: memref<144x24xbf16, #tpu.memory_space<vmem>>, %arg3: memref<1x24xf32, #tpu.memory_space<vmem>>, %arg4: memref<128x24xf32, #tpu.memory_space<vmem>>) attributes {dimension_semantics = [#tpu.dimension_semantics<parallel>], iteration_bounds = array<i64: 1>, scalar_prefetch = 0 : i64, scratch_operands = 0 : i64, tpu.core_type = #tpu.core_type<tc>, window_params = [{transform_indices = @transform_0, window_bounds = array<i64: 128, 144>}, {pipeline_mode = #tpu.pipeline_mode<synchronous>, transform_indices = @transform_1, window_bounds = array<i64: 144, 24>}, {pipeline_mode = #tpu.pipeline_mode<synchronous>, transform_indices = @transform_2, window_bounds = array<i64: 1, 24>}, {transform_indices = @transform_3, window_bounds = array<i64: 128, 24>}]} {
    %c0 = arith.constant 0 : index
    %c0_0 = arith.constant 0 : index
    %0 = vector.load %arg1[%c0, %c0_0] : memref<128x144xbf16, #tpu.memory_space<vmem>>, vector<128x144xbf16>
    %c0_1 = arith.constant 0 : index
    %c0_2 = arith.constant 0 : index
    %1 = vector.load %arg2[%c0_1, %c0_2] : memref<144x24xbf16, #tpu.memory_space<vmem>>, vector<144x24xbf16>
    %cst = arith.constant dense<0.000000e+00> : vector<128x24xf32>
    %2 = tpu.matmul %0, %1, %cst {dimension_numbers = #tpu.dot_dimension_numbers<[1], [0], [0], [1], [0, 0, 1, 1], [], []>} : vector<128x144xbf16>, vector<144x24xbf16>, vector<128x24xf32> -> vector<128x24xf32>
    %c0_3 = arith.constant 0 : index
    %c0_4 = arith.constant 0 : index
    %3 = vector.load %arg3[%c0_3, %c0_4] : memref<1x24xf32, #tpu.memory_space<vmem>>, vector<1x24xf32>
    %4 = vector.broadcast %3 : vector<1x24xf32> to vector<128x24xf32>
    %5 = arith.addf %2, %4 : vector<128x24xf32>
    %cst_5 = arith.constant 0.000000e+00 : f32
    %6 = vector.broadcast %cst_5 : f32 to vector<128x24xf32>
    %7 = arith.maximumf %5, %6 : vector<128x24xf32>
    %c0_6 = arith.constant 0 : index
    %c0_7 = arith.constant 0 : index
    %8 = vector.load %arg4[%c0_6, %c0_7] : memref<128x24xf32, #tpu.memory_space<vmem>>, vector<128x24xf32>
    tpu.vector_store %arg4[%c0_6, %c0_7], %7 {strides = array<i32>} : memref<128x24xf32, #tpu.memory_space<vmem>>, vector<128x24xf32>,
    return
  }
  func.func @transform_0(%arg0: i32) -> (i32, i32) {
    %c0_i32 = arith.constant 0 : i32
    %c0_i32_0 = arith.constant 0 : i32
    return %arg0, %c0_i32 : i32, i32
  }
  func.func @transform_1(%arg0: i32) -> (i32, i32) {
    %c0_i32 = arith.constant 0 : i32
    %c0_i32_0 = arith.constant 0 : i32
    %c0_i32_1 = arith.constant 0 : i32
    return %c0_i32, %c0_i32_0 : i32, i32
  }
  func.func @transform_2(%arg0: i32) -> (i32, i32) {
    %c0_i32 = arith.constant 0 : i32
    %c0_i32_0 = arith.constant 0 : i32
    %c0_i32_1 = arith.constant 0 : i32
    return %c0_i32, %c0_i32_0 : i32, i32
  }
  func.func @transform_3(%arg0: i32) -> (i32, i32) {
    %c0_i32 = arith.constant 0 : i32
    %c0_i32_0 = arith.constant 0 : i32
    return %arg0, %c0_i32 : i32, i32
  }
}

module attributes {stable_mosaic.version = 11 : i64} {
  func.func @_conv_kernel(%arg0: i32, %arg1: memref<128x216xbf16, #tpu.memory_space<vmem>>, %arg2: memref<216x40xbf16, #tpu.memory_space<vmem>>, %arg3: memref<1x40xf32, #tpu.memory_space<vmem>>, %arg4: memref<128x40xf32, #tpu.memory_space<vmem>>) attributes {dimension_semantics = [#tpu.dimension_semantics<parallel>], iteration_bounds = array<i64: 1>, scalar_prefetch = 0 : i64, scratch_operands = 0 : i64, tpu.core_type = #tpu.core_type<tc>, window_params = [{transform_indices = @transform_0, window_bounds = array<i64: 128, 216>}, {pipeline_mode = #tpu.pipeline_mode<synchronous>, transform_indices = @transform_1, window_bounds = array<i64: 216, 40>}, {pipeline_mode = #tpu.pipeline_mode<synchronous>, transform_indices = @transform_2, window_bounds = array<i64: 1, 40>}, {transform_indices = @transform_3, window_bounds = array<i64: 128, 40>}]} {
    %c0 = arith.constant 0 : index
    %c0_0 = arith.constant 0 : index
    %0 = vector.load %arg1[%c0, %c0_0] : memref<128x216xbf16, #tpu.memory_space<vmem>>, vector<128x216xbf16>
    %c0_1 = arith.constant 0 : index
    %c0_2 = arith.constant 0 : index
    %1 = vector.load %arg2[%c0_1, %c0_2] : memref<216x40xbf16, #tpu.memory_space<vmem>>, vector<216x40xbf16>
    %cst = arith.constant dense<0.000000e+00> : vector<128x40xf32>
    %2 = tpu.matmul %0, %1, %cst {dimension_numbers = #tpu.dot_dimension_numbers<[1], [0], [0], [1], [0, 0, 1, 1], [], []>} : vector<128x216xbf16>, vector<216x40xbf16>, vector<128x40xf32> -> vector<128x40xf32>
    %c0_3 = arith.constant 0 : index
    %c0_4 = arith.constant 0 : index
    %3 = vector.load %arg3[%c0_3, %c0_4] : memref<1x40xf32, #tpu.memory_space<vmem>>, vector<1x40xf32>
    %4 = vector.broadcast %3 : vector<1x40xf32> to vector<128x40xf32>
    %5 = arith.addf %2, %4 : vector<128x40xf32>
    %cst_5 = arith.constant 0.000000e+00 : f32
    %6 = vector.broadcast %cst_5 : f32 to vector<128x40xf32>
    %7 = arith.maximumf %5, %6 : vector<128x40xf32>
    %c0_6 = arith.constant 0 : index
    %c0_7 = arith.constant 0 : index
    %8 = vector.load %arg4[%c0_6, %c0_7] : memref<128x40xf32, #tpu.memory_space<vmem>>, vector<128x40xf32>
    tpu.vector_store %arg4[%c0_6, %c0_7], %7 {strides = array<i32>} : memref<128x40xf32, #tpu.memory_space<vmem>>, vector<128x40xf32>,
    return
  }
  func.func @transform_0(%arg0: i32) -> (i32, i32) {
    %c0_i32 = arith.constant 0 : i32
    %c0_i32_0 = arith.constant 0 : i32
    return %arg0, %c0_i32 : i32, i32
  }
  func.func @transform_1(%arg0: i32) -> (i32, i32) {
    %c0_i32 = arith.constant 0 : i32
    %c0_i32_0 = arith.constant 0 : i32
    %c0_i32_1 = arith.constant 0 : i32
    return %c0_i32, %c0_i32_0 : i32, i32
  }
  func.func @transform_2(%arg0: i32) -> (i32, i32) {
    %c0_i32 = arith.constant 0 : i32
    %c0_i32_0 = arith.constant 0 : i32
    %c0_i32_1 = arith.constant 0 : i32
    return %c0_i32, %c0_i32_0 : i32, i32
  }
  func.func @transform_3(%arg0: i32) -> (i32, i32) {
    %c0_i32 = arith.constant 0 : i32
    %c0_i32_0 = arith.constant 0 : i32
    return %arg0, %c0_i32 : i32, i32
  }
}

module attributes {stable_mosaic.version = 11 : i64} {
  func.func @_conv_kernel(%arg0: i32, %arg1: memref<128x40xbf16, #tpu.memory_space<vmem>>, %arg2: memref<40x32xbf16, #tpu.memory_space<vmem>>, %arg3: memref<1x32xf32, #tpu.memory_space<vmem>>, %arg4: memref<128x32xf32, #tpu.memory_space<vmem>>) attributes {dimension_semantics = [#tpu.dimension_semantics<parallel>], iteration_bounds = array<i64: 1>, scalar_prefetch = 0 : i64, scratch_operands = 0 : i64, tpu.core_type = #tpu.core_type<tc>, window_params = [{transform_indices = @transform_0, window_bounds = array<i64: 128, 40>}, {pipeline_mode = #tpu.pipeline_mode<synchronous>, transform_indices = @transform_1, window_bounds = array<i64: 40, 32>}, {pipeline_mode = #tpu.pipeline_mode<synchronous>, transform_indices = @transform_2, window_bounds = array<i64: 1, 32>}, {transform_indices = @transform_3, window_bounds = array<i64: 128, 32>}]} {
    %c0 = arith.constant 0 : index
    %c0_0 = arith.constant 0 : index
    %0 = vector.load %arg1[%c0, %c0_0] : memref<128x40xbf16, #tpu.memory_space<vmem>>, vector<128x40xbf16>
    %c0_1 = arith.constant 0 : index
    %c0_2 = arith.constant 0 : index
    %1 = vector.load %arg2[%c0_1, %c0_2] : memref<40x32xbf16, #tpu.memory_space<vmem>>, vector<40x32xbf16>
    %cst = arith.constant dense<0.000000e+00> : vector<128x32xf32>
    %2 = tpu.matmul %0, %1, %cst {dimension_numbers = #tpu.dot_dimension_numbers<[1], [0], [0], [1], [0, 0, 1, 1], [], []>} : vector<128x40xbf16>, vector<40x32xbf16>, vector<128x32xf32> -> vector<128x32xf32>
    %c0_3 = arith.constant 0 : index
    %c0_4 = arith.constant 0 : index
    %3 = vector.load %arg3[%c0_3, %c0_4] : memref<1x32xf32, #tpu.memory_space<vmem>>, vector<1x32xf32>
    %4 = vector.broadcast %3 : vector<1x32xf32> to vector<128x32xf32>
    %5 = arith.addf %2, %4 : vector<128x32xf32>
    %cst_5 = arith.constant 0.000000e+00 : f32
    %6 = vector.broadcast %cst_5 : f32 to vector<128x32xf32>
    %7 = arith.maximumf %5, %6 : vector<128x32xf32>
    %c0_6 = arith.constant 0 : index
    %c0_7 = arith.constant 0 : index
    %8 = vector.load %arg4[%c0_6, %c0_7] : memref<128x32xf32, #tpu.memory_space<vmem>>, vector<128x32xf32>
    tpu.vector_store %arg4[%c0_6, %c0_7], %7 {strides = array<i32>} : memref<128x32xf32, #tpu.memory_space<vmem>>, vector<128x32xf32>,
    return
  }
  func.func @transform_0(%arg0: i32) -> (i32, i32) {
    %c0_i32 = arith.constant 0 : i32
    %c0_i32_0 = arith.constant 0 : i32
    return %arg0, %c0_i32 : i32, i32
  }
  func.func @transform_1(%arg0: i32) -> (i32, i32) {
    %c0_i32 = arith.constant 0 : i32
    %c0_i32_0 = arith.constant 0 : i32
    %c0_i32_1 = arith.constant 0 : i32
    return %c0_i32, %c0_i32_0 : i32, i32
  }
  func.func @transform_2(%arg0: i32) -> (i32, i32) {
    %c0_i32 = arith.constant 0 : i32
    %c0_i32_0 = arith.constant 0 : i32
    %c0_i32_1 = arith.constant 0 : i32
    return %c0_i32, %c0_i32_0 : i32, i32
  }
  func.func @transform_3(%arg0: i32) -> (i32, i32) {
    %c0_i32 = arith.constant 0 : i32
    %c0_i32_0 = arith.constant 0 : i32
    return %arg0, %c0_i32 : i32, i32
  }
}

module attributes {stable_mosaic.version = 11 : i64} {
  func.func @_conv_kernel(%arg0: i32, %arg1: memref<128x24xbf16, #tpu.memory_space<vmem>>, %arg2: memref<24x32xbf16, #tpu.memory_space<vmem>>, %arg3: memref<1x32xf32, #tpu.memory_space<vmem>>, %arg4: memref<128x32xf32, #tpu.memory_space<vmem>>) attributes {dimension_semantics = [#tpu.dimension_semantics<parallel>], iteration_bounds = array<i64: 1>, scalar_prefetch = 0 : i64, scratch_operands = 0 : i64, tpu.core_type = #tpu.core_type<tc>, window_params = [{transform_indices = @transform_0, window_bounds = array<i64: 128, 24>}, {pipeline_mode = #tpu.pipeline_mode<synchronous>, transform_indices = @transform_1, window_bounds = array<i64: 24, 32>}, {pipeline_mode = #tpu.pipeline_mode<synchronous>, transform_indices = @transform_2, window_bounds = array<i64: 1, 32>}, {transform_indices = @transform_3, window_bounds = array<i64: 128, 32>}]} {
    %c0 = arith.constant 0 : index
    %c0_0 = arith.constant 0 : index
    %0 = vector.load %arg1[%c0, %c0_0] : memref<128x24xbf16, #tpu.memory_space<vmem>>, vector<128x24xbf16>
    %c0_1 = arith.constant 0 : index
    %c0_2 = arith.constant 0 : index
    %1 = vector.load %arg2[%c0_1, %c0_2] : memref<24x32xbf16, #tpu.memory_space<vmem>>, vector<24x32xbf16>
    %cst = arith.constant dense<0.000000e+00> : vector<128x32xf32>
    %2 = tpu.matmul %0, %1, %cst {dimension_numbers = #tpu.dot_dimension_numbers<[1], [0], [0], [1], [0, 0, 1, 1], [], []>} : vector<128x24xbf16>, vector<24x32xbf16>, vector<128x32xf32> -> vector<128x32xf32>
    %c0_3 = arith.constant 0 : index
    %c0_4 = arith.constant 0 : index
    %3 = vector.load %arg3[%c0_3, %c0_4] : memref<1x32xf32, #tpu.memory_space<vmem>>, vector<1x32xf32>
    %4 = vector.broadcast %3 : vector<1x32xf32> to vector<128x32xf32>
    %5 = arith.addf %2, %4 : vector<128x32xf32>
    %cst_5 = arith.constant 0.000000e+00 : f32
    %6 = vector.broadcast %cst_5 : f32 to vector<128x32xf32>
    %7 = arith.maximumf %5, %6 : vector<128x32xf32>
    %c0_6 = arith.constant 0 : index
    %c0_7 = arith.constant 0 : index
    %8 = vector.load %arg4[%c0_6, %c0_7] : memref<128x32xf32, #tpu.memory_space<vmem>>, vector<128x32xf32>
    tpu.vector_store %arg4[%c0_6, %c0_7], %7 {strides = array<i32>} : memref<128x32xf32, #tpu.memory_space<vmem>>, vector<128x32xf32>,
    return
  }
  func.func @transform_0(%arg0: i32) -> (i32, i32) {
    %c0_i32 = arith.constant 0 : i32
    %c0_i32_0 = arith.constant 0 : i32
    return %arg0, %c0_i32 : i32, i32
  }
  func.func @transform_1(%arg0: i32) -> (i32, i32) {
    %c0_i32 = arith.constant 0 : i32
    %c0_i32_0 = arith.constant 0 : i32
    %c0_i32_1 = arith.constant 0 : i32
    return %c0_i32, %c0_i32_0 : i32, i32
  }
  func.func @transform_2(%arg0: i32) -> (i32, i32) {
    %c0_i32 = arith.constant 0 : i32
    %c0_i32_0 = arith.constant 0 : i32
    %c0_i32_1 = arith.constant 0 : i32
    return %c0_i32, %c0_i32_0 : i32, i32
  }
  func.func @transform_3(%arg0: i32) -> (i32, i32) {
    %c0_i32 = arith.constant 0 : i32
    %c0_i32_0 = arith.constant 0 : i32
    return %arg0, %c0_i32 : i32, i32
  }
}

module attributes {stable_mosaic.version = 11 : i64} {
  func.func @_conv_kernel(%arg0: i32, %arg1: memref<128x288xbf16, #tpu.memory_space<vmem>>, %arg2: memref<288x32xbf16, #tpu.memory_space<vmem>>, %arg3: memref<1x32xf32, #tpu.memory_space<vmem>>, %arg4: memref<128x32xf32, #tpu.memory_space<vmem>>) attributes {dimension_semantics = [#tpu.dimension_semantics<parallel>], iteration_bounds = array<i64: 1>, scalar_prefetch = 0 : i64, scratch_operands = 0 : i64, tpu.core_type = #tpu.core_type<tc>, window_params = [{transform_indices = @transform_0, window_bounds = array<i64: 128, 288>}, {pipeline_mode = #tpu.pipeline_mode<synchronous>, transform_indices = @transform_1, window_bounds = array<i64: 288, 32>}, {pipeline_mode = #tpu.pipeline_mode<synchronous>, transform_indices = @transform_2, window_bounds = array<i64: 1, 32>}, {transform_indices = @transform_3, window_bounds = array<i64: 128, 32>}]} {
    %c0 = arith.constant 0 : index
    %c0_0 = arith.constant 0 : index
    %0 = vector.load %arg1[%c0, %c0_0] : memref<128x288xbf16, #tpu.memory_space<vmem>>, vector<128x288xbf16>
    %c0_1 = arith.constant 0 : index
    %c0_2 = arith.constant 0 : index
    %1 = vector.load %arg2[%c0_1, %c0_2] : memref<288x32xbf16, #tpu.memory_space<vmem>>, vector<288x32xbf16>
    %cst = arith.constant dense<0.000000e+00> : vector<128x32xf32>
    %2 = tpu.matmul %0, %1, %cst {dimension_numbers = #tpu.dot_dimension_numbers<[1], [0], [0], [1], [0, 0, 1, 1], [], []>} : vector<128x288xbf16>, vector<288x32xbf16>, vector<128x32xf32> -> vector<128x32xf32>
    %c0_3 = arith.constant 0 : index
    %c0_4 = arith.constant 0 : index
    %3 = vector.load %arg3[%c0_3, %c0_4] : memref<1x32xf32, #tpu.memory_space<vmem>>, vector<1x32xf32>
    %4 = vector.broadcast %3 : vector<1x32xf32> to vector<128x32xf32>
    %5 = arith.addf %2, %4 : vector<128x32xf32>
    %cst_5 = arith.constant 0.000000e+00 : f32
    %6 = vector.broadcast %cst_5 : f32 to vector<128x32xf32>
    %7 = arith.maximumf %5, %6 : vector<128x32xf32>
    %c0_6 = arith.constant 0 : index
    %c0_7 = arith.constant 0 : index
    %8 = vector.load %arg4[%c0_6, %c0_7] : memref<128x32xf32, #tpu.memory_space<vmem>>, vector<128x32xf32>
    tpu.vector_store %arg4[%c0_6, %c0_7], %7 {strides = array<i32>} : memref<128x32xf32, #tpu.memory_space<vmem>>, vector<128x32xf32>,
    return
  }
  func.func @transform_0(%arg0: i32) -> (i32, i32) {
    %c0_i32 = arith.constant 0 : i32
    %c0_i32_0 = arith.constant 0 : i32
    return %arg0, %c0_i32 : i32, i32
  }
  func.func @transform_1(%arg0: i32) -> (i32, i32) {
    %c0_i32 = arith.constant 0 : i32
    %c0_i32_0 = arith.constant 0 : i32
    %c0_i32_1 = arith.constant 0 : i32
    return %c0_i32, %c0_i32_0 : i32, i32
  }
  func.func @transform_2(%arg0: i32) -> (i32, i32) {
    %c0_i32 = arith.constant 0 : i32
    %c0_i32_0 = arith.constant 0 : i32
    %c0_i32_1 = arith.constant 0 : i32
    return %c0_i32, %c0_i32_0 : i32, i32
  }
  func.func @transform_3(%arg0: i32) -> (i32, i32) {
    %c0_i32 = arith.constant 0 : i32
    %c0_i32_0 = arith.constant 0 : i32
    return %arg0, %c0_i32 : i32, i32
  }
}

module attributes {stable_mosaic.version = 11 : i64} {
  func.func @_conv_kernel(%arg0: i32, %arg1: memref<512x16xbf16, #tpu.memory_space<vmem>>, %arg2: memref<16x32xbf16, #tpu.memory_space<vmem>>, %arg3: memref<1x32xf32, #tpu.memory_space<vmem>>, %arg4: memref<512x32xf32, #tpu.memory_space<vmem>>) attributes {dimension_semantics = [#tpu.dimension_semantics<parallel>], iteration_bounds = array<i64: 1>, scalar_prefetch = 0 : i64, scratch_operands = 0 : i64, tpu.core_type = #tpu.core_type<tc>, window_params = [{transform_indices = @transform_0, window_bounds = array<i64: 512, 16>}, {pipeline_mode = #tpu.pipeline_mode<synchronous>, transform_indices = @transform_1, window_bounds = array<i64: 16, 32>}, {pipeline_mode = #tpu.pipeline_mode<synchronous>, transform_indices = @transform_2, window_bounds = array<i64: 1, 32>}, {transform_indices = @transform_3, window_bounds = array<i64: 512, 32>}]} {
    %c0 = arith.constant 0 : index
    %c0_0 = arith.constant 0 : index
    %0 = vector.load %arg1[%c0, %c0_0] : memref<512x16xbf16, #tpu.memory_space<vmem>>, vector<512x16xbf16>
    %c0_1 = arith.constant 0 : index
    %c0_2 = arith.constant 0 : index
    %1 = vector.load %arg2[%c0_1, %c0_2] : memref<16x32xbf16, #tpu.memory_space<vmem>>, vector<16x32xbf16>
    %cst = arith.constant dense<0.000000e+00> : vector<512x32xf32>
    %2 = tpu.matmul %0, %1, %cst {dimension_numbers = #tpu.dot_dimension_numbers<[1], [0], [0], [1], [0, 0, 1, 1], [], []>} : vector<512x16xbf16>, vector<16x32xbf16>, vector<512x32xf32> -> vector<512x32xf32>
    %c0_3 = arith.constant 0 : index
    %c0_4 = arith.constant 0 : index
    %3 = vector.load %arg3[%c0_3, %c0_4] : memref<1x32xf32, #tpu.memory_space<vmem>>, vector<1x32xf32>
    %4 = vector.broadcast %3 : vector<1x32xf32> to vector<512x32xf32>
    %5 = arith.addf %2, %4 : vector<512x32xf32>
    %cst_5 = arith.constant 0.000000e+00 : f32
    %6 = vector.broadcast %cst_5 : f32 to vector<512x32xf32>
    %7 = arith.maximumf %5, %6 : vector<512x32xf32>
    %c0_6 = arith.constant 0 : index
    %c0_7 = arith.constant 0 : index
    %8 = vector.load %arg4[%c0_6, %c0_7] : memref<512x32xf32, #tpu.memory_space<vmem>>, vector<512x32xf32>
    tpu.vector_store %arg4[%c0_6, %c0_7], %7 {strides = array<i32>} : memref<512x32xf32, #tpu.memory_space<vmem>>, vector<512x32xf32>,
    return
  }
  func.func @transform_0(%arg0: i32) -> (i32, i32) {
    %c0_i32 = arith.constant 0 : i32
    %c0_i32_0 = arith.constant 0 : i32
    return %arg0, %c0_i32 : i32, i32
  }
  func.func @transform_1(%arg0: i32) -> (i32, i32) {
    %c0_i32 = arith.constant 0 : i32
    %c0_i32_0 = arith.constant 0 : i32
    %c0_i32_1 = arith.constant 0 : i32
    return %c0_i32, %c0_i32_0 : i32, i32
  }
  func.func @transform_2(%arg0: i32) -> (i32, i32) {
    %c0_i32 = arith.constant 0 : i32
    %c0_i32_0 = arith.constant 0 : i32
    %c0_i32_1 = arith.constant 0 : i32
    return %c0_i32, %c0_i32_0 : i32, i32
  }
  func.func @transform_3(%arg0: i32) -> (i32, i32) {
    %c0_i32 = arith.constant 0 : i32
    %c0_i32_0 = arith.constant 0 : i32
    return %arg0, %c0_i32 : i32, i32
  }
}

module attributes {stable_mosaic.version = 11 : i64} {
  func.func @_conv_kernel(%arg0: i32, %arg1: memref<512x288xbf16, #tpu.memory_space<vmem>>, %arg2: memref<288x32xbf16, #tpu.memory_space<vmem>>, %arg3: memref<1x32xf32, #tpu.memory_space<vmem>>, %arg4: memref<512x32xf32, #tpu.memory_space<vmem>>) attributes {dimension_semantics = [#tpu.dimension_semantics<parallel>], iteration_bounds = array<i64: 1>, scalar_prefetch = 0 : i64, scratch_operands = 0 : i64, tpu.core_type = #tpu.core_type<tc>, window_params = [{transform_indices = @transform_0, window_bounds = array<i64: 512, 288>}, {pipeline_mode = #tpu.pipeline_mode<synchronous>, transform_indices = @transform_1, window_bounds = array<i64: 288, 32>}, {pipeline_mode = #tpu.pipeline_mode<synchronous>, transform_indices = @transform_2, window_bounds = array<i64: 1, 32>}, {transform_indices = @transform_3, window_bounds = array<i64: 512, 32>}]} {
    %c0 = arith.constant 0 : index
    %c0_0 = arith.constant 0 : index
    %0 = vector.load %arg1[%c0, %c0_0] : memref<512x288xbf16, #tpu.memory_space<vmem>>, vector<512x288xbf16>
    %c0_1 = arith.constant 0 : index
    %c0_2 = arith.constant 0 : index
    %1 = vector.load %arg2[%c0_1, %c0_2] : memref<288x32xbf16, #tpu.memory_space<vmem>>, vector<288x32xbf16>
    %cst = arith.constant dense<0.000000e+00> : vector<512x32xf32>
    %2 = tpu.matmul %0, %1, %cst {dimension_numbers = #tpu.dot_dimension_numbers<[1], [0], [0], [1], [0, 0, 1, 1], [], []>} : vector<512x288xbf16>, vector<288x32xbf16>, vector<512x32xf32> -> vector<512x32xf32>
    %c0_3 = arith.constant 0 : index
    %c0_4 = arith.constant 0 : index
    %3 = vector.load %arg3[%c0_3, %c0_4] : memref<1x32xf32, #tpu.memory_space<vmem>>, vector<1x32xf32>
    %4 = vector.broadcast %3 : vector<1x32xf32> to vector<512x32xf32>
    %5 = arith.addf %2, %4 : vector<512x32xf32>
    %cst_5 = arith.constant 0.000000e+00 : f32
    %6 = vector.broadcast %cst_5 : f32 to vector<512x32xf32>
    %7 = arith.maximumf %5, %6 : vector<512x32xf32>
    %c0_6 = arith.constant 0 : index
    %c0_7 = arith.constant 0 : index
    %8 = vector.load %arg4[%c0_6, %c0_7] : memref<512x32xf32, #tpu.memory_space<vmem>>, vector<512x32xf32>
    tpu.vector_store %arg4[%c0_6, %c0_7], %7 {strides = array<i32>} : memref<512x32xf32, #tpu.memory_space<vmem>>, vector<512x32xf32>,
    return
  }
  func.func @transform_0(%arg0: i32) -> (i32, i32) {
    %c0_i32 = arith.constant 0 : i32
    %c0_i32_0 = arith.constant 0 : i32
    return %arg0, %c0_i32 : i32, i32
  }
  func.func @transform_1(%arg0: i32) -> (i32, i32) {
    %c0_i32 = arith.constant 0 : i32
    %c0_i32_0 = arith.constant 0 : i32
    %c0_i32_1 = arith.constant 0 : i32
    return %c0_i32, %c0_i32_0 : i32, i32
  }
  func.func @transform_2(%arg0: i32) -> (i32, i32) {
    %c0_i32 = arith.constant 0 : i32
    %c0_i32_0 = arith.constant 0 : i32
    %c0_i32_1 = arith.constant 0 : i32
    return %c0_i32, %c0_i32_0 : i32, i32
  }
  func.func @transform_3(%arg0: i32) -> (i32, i32) {
    %c0_i32 = arith.constant 0 : i32
    %c0_i32_0 = arith.constant 0 : i32
    return %arg0, %c0_i32 : i32, i32
  }
}

module attributes {stable_mosaic.version = 11 : i64} {
  func.func @_head_tail_kernel(%arg0: i32, %arg1: memref<512x288xbf16, #tpu.memory_space<vmem>>, %arg2: memref<288x32xbf16, #tpu.memory_space<vmem>>, %arg3: memref<1x32xf32, #tpu.memory_space<vmem>>, %arg4: memref<32x2xbf16, #tpu.memory_space<vmem>>, %arg5: memref<1x2xf32, #tpu.memory_space<vmem>>, %arg6: memref<512x2xf32, #tpu.memory_space<vmem>>) attributes {dimension_semantics = [#tpu.dimension_semantics<parallel>], iteration_bounds = array<i64: 1>, scalar_prefetch = 0 : i64, scratch_operands = 0 : i64, tpu.core_type = #tpu.core_type<tc>, window_params = [{transform_indices = @transform_0, window_bounds = array<i64: 512, 288>}, {pipeline_mode = #tpu.pipeline_mode<synchronous>, transform_indices = @transform_1, window_bounds = array<i64: 288, 32>}, {pipeline_mode = #tpu.pipeline_mode<synchronous>, transform_indices = @transform_2, window_bounds = array<i64: 1, 32>}, {pipeline_mode = #tpu.pipeline_mode<synchronous>, transform_indices = @transform_3, window_bounds = array<i64: 32, 2>}, {pipeline_mode = #tpu.pipeline_mode<synchronous>, transform_indices = @transform_4, window_bounds = array<i64: 1, 2>}, {transform_indices = @transform_5, window_bounds = array<i64: 512, 2>}]} {
    %c0 = arith.constant 0 : index
    %c0_0 = arith.constant 0 : index
    %0 = vector.load %arg1[%c0, %c0_0] : memref<512x288xbf16, #tpu.memory_space<vmem>>, vector<512x288xbf16>
    %c0_1 = arith.constant 0 : index
    %c0_2 = arith.constant 0 : index
    %1 = vector.load %arg2[%c0_1, %c0_2] : memref<288x32xbf16, #tpu.memory_space<vmem>>, vector<288x32xbf16>
    %cst = arith.constant dense<0.000000e+00> : vector<512x32xf32>
    %2 = tpu.matmul %0, %1, %cst {dimension_numbers = #tpu.dot_dimension_numbers<[1], [0], [0], [1], [0, 0, 1, 1], [], []>} : vector<512x288xbf16>, vector<288x32xbf16>, vector<512x32xf32> -> vector<512x32xf32>
    %c0_3 = arith.constant 0 : index
    %c0_4 = arith.constant 0 : index
    %3 = vector.load %arg3[%c0_3, %c0_4] : memref<1x32xf32, #tpu.memory_space<vmem>>, vector<1x32xf32>
    %4 = vector.broadcast %3 : vector<1x32xf32> to vector<512x32xf32>
    %5 = arith.addf %2, %4 : vector<512x32xf32>
    %cst_5 = arith.constant 0.000000e+00 : f32
    %6 = vector.broadcast %cst_5 : f32 to vector<512x32xf32>
    %7 = arith.maximumf %5, %6 : vector<512x32xf32>
    %8 = arith.truncf %7 : vector<512x32xf32> to vector<512x32xbf16>
    %c0_6 = arith.constant 0 : index
    %c0_7 = arith.constant 0 : index
    %9 = vector.load %arg4[%c0_6, %c0_7] : memref<32x2xbf16, #tpu.memory_space<vmem>>, vector<32x2xbf16>
    %cst_8 = arith.constant dense<0.000000e+00> : vector<512x2xf32>
    %10 = tpu.matmul %8, %9, %cst_8 {dimension_numbers = #tpu.dot_dimension_numbers<[1], [0], [0], [1], [0, 0, 1, 1], [], []>} : vector<512x32xbf16>, vector<32x2xbf16>, vector<512x2xf32> -> vector<512x2xf32>
    %c0_9 = arith.constant 0 : index
    %c0_10 = arith.constant 0 : index
    %11 = vector.load %arg5[%c0_9, %c0_10] : memref<1x2xf32, #tpu.memory_space<vmem>>, vector<1x2xf32>
    %12 = vector.broadcast %11 : vector<1x2xf32> to vector<512x2xf32>
    %13 = arith.addf %10, %12 : vector<512x2xf32>
    %cst_11 = arith.constant 0.000000e+00 : f32
    %14 = vector.broadcast %cst_11 : f32 to vector<512x2xf32>
    %15 = arith.subf %14, %13 : vector<512x2xf32>
    %16 = math.exp %15 : vector<512x2xf32>
    %cst_12 = arith.constant 1.000000e+00 : f32
    %17 = vector.broadcast %cst_12 : f32 to vector<512x2xf32>
    %18 = arith.addf %17, %16 : vector<512x2xf32>
    %cst_13 = arith.constant 1.000000e+00 : f32
    %19 = vector.broadcast %cst_13 : f32 to vector<512x2xf32>
    %20 = arith.divf %19, %18 : vector<512x2xf32>
    %c0_14 = arith.constant 0 : index
    %c0_15 = arith.constant 0 : index
    %21 = vector.load %arg6[%c0_14, %c0_15] : memref<512x2xf32, #tpu.memory_space<vmem>>, vector<512x2xf32>
    tpu.vector_store %arg6[%c0_14, %c0_15], %20 {strides = array<i32>} : memref<512x2xf32, #tpu.memory_space<vmem>>, vector<512x2xf32>,
    return
  }
  func.func @transform_0(%arg0: i32) -> (i32, i32) {
    %c0_i32 = arith.constant 0 : i32
    %c0_i32_0 = arith.constant 0 : i32
    return %arg0, %c0_i32 : i32, i32
  }
  func.func @transform_1(%arg0: i32) -> (i32, i32) {
    %c0_i32 = arith.constant 0 : i32
    %c0_i32_0 = arith.constant 0 : i32
    %c0_i32_1 = arith.constant 0 : i32
    return %c0_i32, %c0_i32_0 : i32, i32
  }
  func.func @transform_2(%arg0: i32) -> (i32, i32) {
    %c0_i32 = arith.constant 0 : i32
    %c0_i32_0 = arith.constant 0 : i32
    %c0_i32_1 = arith.constant 0 : i32
    return %c0_i32, %c0_i32_0 : i32, i32
  }
  func.func @transform_3(%arg0: i32) -> (i32, i32) {
    %c0_i32 = arith.constant 0 : i32
    %c0_i32_0 = arith.constant 0 : i32
    %c0_i32_1 = arith.constant 0 : i32
    return %c0_i32, %c0_i32_0 : i32, i32
  }
  func.func @transform_4(%arg0: i32) -> (i32, i32) {
    %c0_i32 = arith.constant 0 : i32
    %c0_i32_0 = arith.constant 0 : i32
    %c0_i32_1 = arith.constant 0 : i32
    return %c0_i32, %c0_i32_0 : i32, i32
  }
  func.func @transform_5(%arg0: i32) -> (i32, i32) {
    %c0_i32 = arith.constant 0 : i32
    %c0_i32_0 = arith.constant 0 : i32
    return %arg0, %c0_i32 : i32, i32
  }
}

</mosaic_0001>

<llo_original>
// kernel: _lambda_.9
$region0: #{_lambda_.9}
  #allocation0 [shape = 'u32[]', space=smem, size = 0x4, offset = 0x4, fixed_abs, tag = 'smem constant byte address 0x4 - core index']
  #allocation1 [shape = 'u32[72,128]{1,0:T(1,128)}', space=vmem, size = 0x9000, scoped, tag = 'internal scratch']
  %s0 = inlined_call_operand.vmem [shape: bf16[512,27], index: 0, kind: input, shape index: {}]
  %s1 = inlined_call_operand.vmem [shape: bf16[27,16], index: 1, kind: input, shape index: {}]
  %s2 = inlined_call_operand.vmem [shape: f32[1,16], index: 2, kind: input, shape index: {}]
  %s3 = inlined_call_operand.vmem [shape: f32[512,16], index: 3, kind: output, shape index: {}]
  %s4 = sld [smem:[#allocation0]]
  $region22: #{_lambda_.9} parent=0
    _
  %s6 = ssub.s32 1, %s4
  %s7 = scalar_select 0, %s6, %s4
  // Predicated region
  $region2: #{_lambda_.9} parent=0 // pred_check
    _
  $region3: #{_lambda_.9} parent=0 // pred_check_branch
    %9 = sbr.rel (0) target = $region5
  $region4: #{_lambda_.9} parent=0 // pred_region
    _
  $region5: #{_lambda_.9} parent=0 // pred_fallthru
    _
  // Predicated region
  $region6: #{_lambda_.9} parent=0 // pred_check
    _
  $region7: #{_lambda_.9} parent=0 // pred_check_branch
    %11 = sbr.rel (0) target = $region9
  $region8: #{_lambda_.9} parent=0 // pred_region
    _
  $region9: #{_lambda_.9} parent=0 // pred_fallthru
    _
  // Predicated region
  $region10: #{_lambda_.9} parent=0 // pred_check
    _
  $region11: #{_lambda_.9} parent=0 // pred_check_branch
    %13 = sbr.rel (0) target = $region13
  $region12: #{_lambda_.9} parent=0 // pred_region
    _
  $region13: #{_lambda_.9} parent=0 // pred_fallthru
    _
  %v15 = vld [vmem:[%s0] sm:$0xf]
  %v16 = vld [vmem:[%s0 + $0x4] sm:$0xf]
  %v17 = vld [vmem:[%s0 + $0x8] sm:$0xf]
  %v18 = vld [vmem:[%s0 + $0xc] sm:$0xf]
  %v19 = vld [vmem:[%s0 + $0x10] sm:$0xf]
  %v20 = vld [vmem:[%s0 + $0x14] sm:$0xf]
  %v21 = vld [vmem:[%s0 + $0x18] sm:$0xf]
  %v22 = vld [vmem:[%s0 + $0x1c] sm:$0xf]
  %v23 = vld [vmem:[%s0 + $0x20] sm:$0xf]
  %v24 = vld [vmem:[%s0 + $0x24] sm:$0xf]
  %v25 = vld [vmem:[%s0 + $0x28] sm:$0xf]
  %v26 = vld [vmem:[%s0 + $0x2c] sm:$0xf]
  %v27 = vld [vmem:[%s0 + $0x30] sm:$0xf]
  %v28 = vld [vmem:[%s0 + $0x34] sm:$0xf]
  %v29 = vld [vmem:[%s0 + $0x38] sm:$0xf]
  %v30 = vld [vmem:[%s0 + $0x3c] sm:$0xf]
  %v31 = vld [vmem:[%s0 + $0x40] sm:$0xf]
  %v32 = vld [vmem:[%s0 + $0x44] sm:$0xf]
  %v33 = vld [vmem:[%s0 + $0x48] sm:$0xf]
  %v34 = vld [vmem:[%s0 + $0x4c] sm:$0xf]
  %v35 = vld [vmem:[%s0 + $0x50] sm:$0xf]
  %v36 = vld [vmem:[%s0 + $0x54] sm:$0xf]
  %v37 = vld [vmem:[%s0 + $0x58] sm:$0xf]
  %v38 = vld [vmem:[%s0 + $0x5c] sm:$0xf]
  %v39 = vld [vmem:[%s0 + $0x60] sm:$0xf]
  %v40 = vld [vmem:[%s0 + $0x64] sm:$0xf]
  %v41 = vld [vmem:[%s0 + $0x68] sm:$0xf]
  %v42 = vld [vmem:[%s0 + $0x6c] sm:$0xf]
  %v43 = vld [vmem:[%s0 + $0x70] sm:$0xf]
  %v44 = vld [vmem:[%s0 + $0x74] sm:$0xf]
  %v45 = vld [vmem:[%s0 + $0x78] sm:$0xf]
  %v46 = vld [vmem:[%s0 + $0x7c] sm:$0xf]
  %v47 = vld [vmem:[%s0 + $0x80] sm:$0xf]
  %v48 = vld [vmem:[%s0 + $0x84] sm:$0xf]
  %v49 = vld [vmem:[%s0 + $0x88] sm:$0xf]
  %v50 = vld [vmem:[%s0 + $0x8c] sm:$0xf]
  %v51 = vld [vmem:[%s0 + $0x90] sm:$0xf]
  %v52 = vld [vmem:[%s0 + $0x94] sm:$0xf]
  %v53 = vld [vmem:[%s0 + $0x98] sm:$0xf]
  %v54 = vld [vmem:[%s0 + $0x9c] sm:$0xf]
  %v55 = vld [vmem:[%s0 + $0xa0] sm:$0xf]
  %v56 = vld [vmem:[%s0 + $0xa4] sm:$0xf]
  %v57 = vld [vmem:[%s0 + $0xa8] sm:$0xf]
  %v58 = vld [vmem:[%s0 + $0xac] sm:$0xf]
  %v59 = vld [vmem:[%s0 + $0xb0] sm:$0xf]
  %v60 = vld [vmem:[%s0 + $0xb4] sm:$0xf]
  %v61 = vld [vmem:[%s0 + $0xb8] sm:$0xf]
  %v62 = vld [vmem:[%s0 + $0xbc] sm:$0xf]
  %v63 = vld [vmem:[%s0 + $0xc0] sm:$0xf]
  %v64 = vld [vmem:[%s0 + $0xc4] sm:$0xf]
  %v65 = vld [vmem:[%s0 + $0xc8] sm:$0xf]
  %v66 = vld [vmem:[%s0 + $0xcc] sm:$0xf]
  %v67 = vld [vmem:[%s0 + $0xd0] sm:$0xf]
  %v68 = vld [vmem:[%s0 + $0xd4] sm:$0xf]
  %v69 = vld [vmem:[%s0 + $0xd8] sm:$0xf]
  %v70 = vld [vmem:[%s0 + $0xdc] sm:$0xf]
  %v71 = vld [vmem:[%s0 + $0xe0] sm:$0xf]
  %v72 = vld [vmem:[%s0 + $0xe4] sm:$0xf]
  %v73 = vld [vmem:[%s0 + $0xe8] sm:$0xf]
  %v74 = vld [vmem:[%s0 + $0xec] sm:$0xf]
  %v75 = vld [vmem:[%s0 + $0xf0] sm:$0xf]
  %v76 = vld [vmem:[%s0 + $0xf4] sm:$0xf]
  %v77 = vld [vmem:[%s0 + $0xf8] sm:$0xf]
  %v78 = vld [vmem:[%s0 + $0xfc] sm:$0xf]
  %v79 = vld [vmem:[%s1] sm:$0xf]
  %v80 = vld [vmem:[%s1 + $0x4] sm:$0xf]
  %v81 = vld [vmem:[%s1 + $0x8] sm:$0xf]
  %v82 = vld [vmem:[%s1 + $0xc] sm:$0x3]
  %v83 = vld [vmem:[%s2] sm:$0x1]
  %v85 = vperm.slane %v83, 0
  %v151 = vunpack.c.l.b16 %v15
  %v152 = vunpack.c.l.b16 %v16
  %v153 = vunpack.c.l.b16 %v17
  %v154 = vunpack.c.l.b16 %v18
  %v155 = vunpack.c.l.b16 %v19
  %v156 = vunpack.c.l.b16 %v20
  %v157 = vunpack.c.l.b16 %v21
  %v158 = vunpack.c.l.b16 %v22
  %v159 = vunpack.c.l.b16 %v23
  %v160 = vunpack.c.l.b16 %v24
  %v161 = vunpack.c.l.b16 %v25
  %v162 = vunpack.c.l.b16 %v26
  %v163 = vunpack.c.l.b16 %v27
  %v164 = vunpack.c.l.b16 %v28
  %v165 = vunpack.c.l.b16 %v29
  %v166 = vunpack.c.l.b16 %v30
  %v167 = vunpack.c.l.b16 %v31
  %v168 = vunpack.c.l.b16 %v32
  %v169 = vunpack.c.l.b16 %v33
  %v170 = vunpack.c.l.b16 %v34
  %v171 = vunpack.c.l.b16 %v35
  %v172 = vunpack.c.l.b16 %v36
  %v173 = vunpack.c.l.b16 %v37
  %v174 = vunpack.c.l.b16 %v38
  %v175 = vunpack.c.l.b16 %v39
  %v176 = vunpack.c.l.b16 %v40
  %v177 = vunpack.c.l.b16 %v41
  %v178 = vunpack.c.l.b16 %v42
  %v179 = vunpack.c.l.b16 %v43
  %v180 = vunpack.c.l.b16 %v44
  %v181 = vunpack.c.l.b16 %v45
  %v182 = vunpack.c.l.b16 %v46
  %v183 = vunpack.c.l.b16 %v47
  %v184 = vunpack.c.l.b16 %v48
  %v185 = vunpack.c.l.b16 %v49
  %v186 = vunpack.c.l.b16 %v50
  %v187 = vunpack.c.l.b16 %v51
  %v188 = vunpack.c.l.b16 %v52
  %v189 = vunpack.c.l.b16 %v53
  %v190 = vunpack.c.l.b16 %v54
  %v191 = vunpack.c.l.b16 %v55
  %v192 = vunpack.c.l.b16 %v56
  %v193 = vunpack.c.l.b16 %v57
  %v194 = vunpack.c.l.b16 %v58
  %v195 = vunpack.c.l.b16 %v59
  %v196 = vunpack.c.l.b16 %v60
  %v197 = vunpack.c.l.b16 %v61
  %v198 = vunpack.c.l.b16 %v62
  %v199 = vunpack.c.l.b16 %v63
  %v200 = vunpack.c.l.b16 %v64
  %v201 = vunpack.c.l.b16 %v65
  %v202 = vunpack.c.l.b16 %v66
  %v203 = vunpack.c.l.b16 %v67
  %v204 = vunpack.c.l.b16 %v68
  %v205 = vunpack.c.l.b16 %v69
  %v206 = vunpack.c.l.b16 %v70
  %v207 = vunpack.c.l.b16 %v71
  %v208 = vunpack.c.l.b16 %v72
  %v209 = vunpack.c.l.b16 %v73
  %v210 = vunpack.c.l.b16 %v74
  %v211 = vunpack.c.l.b16 %v75
  %v212 = vunpack.c.l.b16 %v76
  %v213 = vunpack.c.l.b16 %v77
  %v214 = vunpack.c.l.b16 %v78
  %v215 = vpack.c.b16 %v152, %v151
  %v216 = vpack.c.b16 %v154, %v153
  %v217 = vpack.c.b16 %v156, %v155
  %v218 = vpack.c.b16 %v158, %v157
  %v219 = vpack.c.b16 %v160, %v159
  %v220 = vpack.c.b16 %v162, %v161
  %v221 = vpack.c.b16 %v164, %v163
  %v222 = vpack.c.b16 %v166, %v165
  %v223 = vpack.c.b16 %v168, %v167
  %v224 = vpack.c.b16 %v170, %v169
  %v225 = vpack.c.b16 %v172, %v171
  %v226 = vpack.c.b16 %v174, %v173
  %v227 = vpack.c.b16 %v176, %v175
  %v228 = vpack.c.b16 %v178, %v177
  %v229 = vpack.c.b16 %v180, %v179
  %v230 = vpack.c.b16 %v182, %v181
  %v231 = vpack.c.b16 %v184, %v183
  %v232 = vpack.c.b16 %v186, %v185
  %v233 = vpack.c.b16 %v188, %v187
  %v234 = vpack.c.b16 %v190, %v189
  %v235 = vpack.c.b16 %v192, %v191
  %v236 = vpack.c.b16 %v194, %v193
  %v237 = vpack.c.b16 %v196, %v195
  %v238 = vpack.c.b16 %v198, %v197
  %v239 = vpack.c.b16 %v200, %v199
  %v240 = vpack.c.b16 %v202, %v201
  %v241 = vpack.c.b16 %v204, %v203
  %v242 = vpack.c.b16 %v206, %v205
  %v243 = vpack.c.b16 %v208, %v207
  %v244 = vpack.c.b16 %v210, %v209
  %v245 = vpack.c.b16 %v212, %v211
  %v246 = vpack.c.b16 %v214, %v213
  %v251 = vunpack.c.l.b16 %v79
  %v252 = vunpack.c.l.b16 %v80
  %v253 = vunpack.c.l.b16 %v81
  %v254 = vunpack.c.l.b16 %v82
  %v255 = vpack.c.b16 %v252, %v251
  %v256 = vpack.c.b16 %v254, %v253
  %vm258 = vcmask 220160
  %v260 = vsel %vm258, %v215, 0
  %v263 = vsel %vm258, %v216, 0
  %v266 = vsel %vm258, %v217, 0
  %v269 = vsel %vm258, %v218, 0
  %v272 = vsel %vm258, %v219, 0
  %v275 = vsel %vm258, %v220, 0
  %v278 = vsel %vm258, %v221, 0
  %v281 = vsel %vm258, %v222, 0
  %v284 = vsel %vm258, %v223, 0
  %v287 = vsel %vm258, %v224, 0
  %v290 = vsel %vm258, %v225, 0
  %v293 = vsel %vm258, %v226, 0
  %v296 = vsel %vm258, %v227, 0
  %v299 = vsel %vm258, %v228, 0
  %v302 = vsel %vm258, %v229, 0
  %v305 = vsel %vm258, %v230, 0
  %v308 = vsel %vm258, %v231, 0
  %v311 = vsel %vm258, %v232, 0
  %v314 = vsel %vm258, %v233, 0
  %v317 = vsel %vm258, %v234, 0
  %v320 = vsel %vm258, %v235, 0
  %v323 = vsel %vm258, %v236, 0
  %v326 = vsel %vm258, %v237, 0
  %v329 = vsel %vm258, %v238, 0
  %v332 = vsel %vm258, %v239, 0
  %v335 = vsel %vm258, %v240, 0
  %v338 = vsel %vm258, %v241, 0
  %v341 = vsel %vm258, %v242, 0
  %v344 = vsel %vm258, %v243, 0
  %v347 = vsel %vm258, %v244, 0
  %v350 = vsel %vm258, %v245, 0
  %v353 = vsel %vm258, %v246, 0
  %vm355 = vcmask 1044480
  %vm356 = vcmask 1045504
  %v357 = vsel %vm355, 4294967295, 65535
  %v358 = vsel %vm356, %v357, 0
  %v360 = vand.u32 %v256, %v358
  %362 = vmatpush.bf16.msra.mxu0 0
  %363 = vmatpush.bf16.msra.mxu0 0
  %364 = vmatpush.bf16.msra.mxu0 0
  %365 = vmatpush.bf16.msra.mxu0 0
  %366 = vmatpush.bf16.msra.mxu0 0
  %367 = vmatpush.bf16.msra.mxu0 0
  %368 = vmatpush.bf16.msra.mxu0 %v360
  %369 = vmatpush.bf16.msra.mxu0 %v255
  %370 = vmatmul.bf16.gmra.mxu0 %v260
  %v371 = vpop.f32.mrf.mxu0
  %v372 = vadd.f32 %v85, %v371
  %v373 = vpop.f32.mrf.mxu0
  %v374 = vadd.f32 %v85, %v373
  %375 = vmatmul.bf16.gmra.mxu0 %v263
  %v376 = vpop.f32.mrf.mxu0
  %v377 = vadd.f32 %v85, %v376
  %v378 = vpop.f32.mrf.mxu0
  %v379 = vadd.f32 %v85, %v378
  %380 = vmatmul.bf16.gmra.mxu0 %v266
  %v381 = vpop.f32.mrf.mxu0
  %v382 = vadd.f32 %v85, %v381
  %v383 = vpop.f32.mrf.mxu0
  %v384 = vadd.f32 %v85, %v383
  %385 = vmatmul.bf16.gmra.mxu0 %v269
  %v386 = vpop.f32.mrf.mxu0
  %v387 = vadd.f32 %v85, %v386
  %v388 = vpop.f32.mrf.mxu0
  %v389 = vadd.f32 %v85, %v388
  %390 = vmatmul.bf16.gmra.mxu0 %v272
  %v391 = vpop.f32.mrf.mxu0
  %v392 = vadd.f32 %v85, %v391
  %v393 = vpop.f32.mrf.mxu0
  %v394 = vadd.f32 %v85, %v393
  %395 = vmatmul.bf16.gmra.mxu0 %v275
  %v396 = vpop.f32.mrf.mxu0
  %v397 = vadd.f32 %v85, %v396
  %v398 = vpop.f32.mrf.mxu0
  %v399 = vadd.f32 %v85, %v398
  %400 = vmatmul.bf16.gmra.mxu0 %v278
  %v401 = vpop.f32.mrf.mxu0
  %v402 = vadd.f32 %v85, %v401
  %v403 = vpop.f32.mrf.mxu0
  %v404 = vadd.f32 %v85, %v403
  %405 = vmatmul.bf16.gmra.mxu0 %v281
  %v406 = vpop.f32.mrf.mxu0
  %v407 = vadd.f32 %v85, %v406
  %v408 = vpop.f32.mrf.mxu0
  %v409 = vadd.f32 %v85, %v408
  %410 = vmatmul.bf16.gmra.mxu0 %v284
  %v411 = vpop.f32.mrf.mxu0
  %v412 = vadd.f32 %v85, %v411
  %v413 = vpop.f32.mrf.mxu0
  %v414 = vadd.f32 %v85, %v413
  %415 = vmatmul.bf16.gmra.mxu0 %v287
  %v416 = vpop.f32.mrf.mxu0
  %v417 = vadd.f32 %v85, %v416
  %v418 = vpop.f32.mrf.mxu0
  %v419 = vadd.f32 %v85, %v418
  %420 = vmatmul.bf16.gmra.mxu0 %v290
  %v421 = vpop.f32.mrf.mxu0
  %v422 = vadd.f32 %v85, %v421
  %v423 = vpop.f32.mrf.mxu0
  %v424 = vadd.f32 %v85, %v423
  %425 = vmatmul.bf16.gmra.mxu0 %v293
  %v426 = vpop.f32.mrf.mxu0
  %v427 = vadd.f32 %v85, %v426
  %v428 = vpop.f32.mrf.mxu0
  %v429 = vadd.f32 %v85, %v428
  %430 = vmatmul.bf16.gmra.mxu0 %v296
  %v431 = vpop.f32.mrf.mxu0
  %v432 = vadd.f32 %v85, %v431
  %v433 = vpop.f32.mrf.mxu0
  %v434 = vadd.f32 %v85, %v433
  %435 = vmatmul.bf16.gmra.mxu0 %v299
  %v436 = vpop.f32.mrf.mxu0
  %v437 = vadd.f32 %v85, %v436
  %v438 = vpop.f32.mrf.mxu0
  %v439 = vadd.f32 %v85, %v438
  %440 = vmatmul.bf16.gmra.mxu0 %v302
  %v441 = vpop.f32.mrf.mxu0
  %v442 = vadd.f32 %v85, %v441
  %v443 = vpop.f32.mrf.mxu0
  %v444 = vadd.f32 %v85, %v443
  %445 = vmatmul.bf16.gmra.mxu0 %v305
  %v446 = vpop.f32.mrf.mxu0
  %v447 = vadd.f32 %v85, %v446
  %v448 = vpop.f32.mrf.mxu0
  %v449 = vadd.f32 %v85, %v448
  %450 = vmatmul.bf16.gmra.mxu0 %v308
  %v451 = vpop.f32.mrf.mxu0
  %v452 = vadd.f32 %v85, %v451
  %v453 = vpop.f32.mrf.mxu0
  %v454 = vadd.f32 %v85, %v453
  %455 = vmatmul.bf16.gmra.mxu0 %v311
  %v456 = vpop.f32.mrf.mxu0
  %v457 = vadd.f32 %v85, %v456
  %v458 = vpop.f32.mrf.mxu0
  %v459 = vadd.f32 %v85, %v458
  %460 = vmatmul.bf16.gmra.mxu0 %v314
  %v461 = vpop.f32.mrf.mxu0
  %v462 = vadd.f32 %v85, %v461
  %v463 = vpop.f32.mrf.mxu0
  %v464 = vadd.f32 %v85, %v463
  %465 = vmatmul.bf16.gmra.mxu0 %v317
  %v466 = vpop.f32.mrf.mxu0
  %v467 = vadd.f32 %v85, %v466
  %v468 = vpop.f32.mrf.mxu0
  %v469 = vadd.f32 %v85, %v468
  %470 = vmatmul.bf16.gmra.mxu0 %v320
  %v471 = vpop.f32.mrf.mxu0
  %v472 = vadd.f32 %v85, %v471
  %v473 = vpop.f32.mrf.mxu0
  %v474 = vadd.f32 %v85, %v473
  %475 = vmatmul.bf16.gmra.mxu0 %v323
  %v476 = vpop.f32.mrf.mxu0
  %v477 = vadd.f32 %v85, %v476
  %v478 = vpop.f32.mrf.mxu0
  %v479 = vadd.f32 %v85, %v478
  %480 = vmatmul.bf16.gmra.mxu0 %v326
  %v481 = vpop.f32.mrf.mxu0
  %v482 = vadd.f32 %v85, %v481
  %v483 = vpop.f32.mrf.mxu0
  %v484 = vadd.f32 %v85, %v483
  %485 = vmatmul.bf16.gmra.mxu0 %v329
  %v486 = vpop.f32.mrf.mxu0
  %v487 = vadd.f32 %v85, %v486
  %v488 = vpop.f32.mrf.mxu0
  %v489 = vadd.f32 %v85, %v488
  %490 = vmatmul.bf16.gmra.mxu0 %v332
  %v491 = vpop.f32.mrf.mxu0
  %v492 = vadd.f32 %v85, %v491
  %v493 = vpop.f32.mrf.mxu0
  %v494 = vadd.f32 %v85, %v493
  %495 = vmatmul.bf16.gmra.mxu0 %v335
  %v496 = vpop.f32.mrf.mxu0
  %v497 = vadd.f32 %v85, %v496
  %v498 = vpop.f32.mrf.mxu0
  %v499 = vadd.f32 %v85, %v498
  %500 = vmatmul.bf16.gmra.mxu0 %v338
  %v501 = vpop.f32.mrf.mxu0
  %v502 = vadd.f32 %v85, %v501
  %v503 = vpop.f32.mrf.mxu0
  %v504 = vadd.f32 %v85, %v503
  %505 = vmatmul.bf16.gmra.mxu0 %v341
  %v506 = vpop.f32.mrf.mxu0
  %v507 = vadd.f32 %v85, %v506
  %v508 = vpop.f32.mrf.mxu0
  %v509 = vadd.f32 %v85, %v508
  %510 = vmatmul.bf16.gmra.mxu0 %v344
  %v511 = vpop.f32.mrf.mxu0
  %v512 = vadd.f32 %v85, %v511
  %v513 = vpop.f32.mrf.mxu0
  %v514 = vadd.f32 %v85, %v513
  %515 = vmatmul.bf16.gmra.mxu0 %v347
  %v516 = vpop.f32.mrf.mxu0
  %v517 = vadd.f32 %v85, %v516
  %v518 = vpop.f32.mrf.mxu0
  %v519 = vadd.f32 %v85, %v518
  %520 = vmatmul.bf16.gmra.mxu0 %v350
  %v521 = vpop.f32.mrf.mxu0
  %v522 = vadd.f32 %v85, %v521
  %v523 = vpop.f32.mrf.mxu0
  %v524 = vadd.f32 %v85, %v523
  %525 = vmatmul.bf16.gmra.mxu0 %v353
  %v526 = vpop.f32.mrf.mxu0
  %v527 = vadd.f32 %v85, %v526
  %v528 = vpop.f32.mrf.mxu0
  %v529 = vadd.f32 %v85, %v528
  %530 = vdwg.mxu0
  %v531 = vmax.f32 %v372, 0.0
  %v532 = vmax.f32 %v374, 0.0
  %v533 = vmax.f32 %v377, 0.0
  %v534 = vmax.f32 %v379, 0.0
  %v535 = vmax.f32 %v382, 0.0
  %v536 = vmax.f32 %v384, 0.0
  %v537 = vmax.f32 %v387, 0.0
  %v538 = vmax.f32 %v389, 0.0
  %v539 = vmax.f32 %v392, 0.0
  %v540 = vmax.f32 %v394, 0.0
  %v541 = vmax.f32 %v397, 0.0
  %v542 = vmax.f32 %v399, 0.0
  %v543 = vmax.f32 %v402, 0.0
  %v544 = vmax.f32 %v404, 0.0
  %v545 = vmax.f32 %v407, 0.0
  %v546 = vmax.f32 %v409, 0.0
  %v547 = vmax.f32 %v412, 0.0
  %v548 = vmax.f32 %v414, 0.0
  %v549 = vmax.f32 %v417, 0.0
  %v550 = vmax.f32 %v419, 0.0
  %v551 = vmax.f32 %v422, 0.0
  %v552 = vmax.f32 %v424, 0.0
  %v553 = vmax.f32 %v427, 0.0
  %v554 = vmax.f32 %v429, 0.0
  %v555 = vmax.f32 %v432, 0.0
  %v556 = vmax.f32 %v434, 0.0
  %v557 = vmax.f32 %v437, 0.0
  %v558 = vmax.f32 %v439, 0.0
  %v559 = vmax.f32 %v442, 0.0
  %v560 = vmax.f32 %v444, 0.0
  %v561 = vmax.f32 %v447, 0.0
  %v562 = vmax.f32 %v449, 0.0
  %v563 = vmax.f32 %v452, 0.0
  %v564 = vmax.f32 %v454, 0.0
  %v565 = vmax.f32 %v457, 0.0
  %v566 = vmax.f32 %v459, 0.0
  %v567 = vmax.f32 %v462, 0.0
  %v568 = vmax.f32 %v464, 0.0
  %v569 = vmax.f32 %v467, 0.0
  %v570 = vmax.f32 %v469, 0.0
  %v571 = vmax.f32 %v472, 0.0
  %v572 = vmax.f32 %v474, 0.0
  %v573 = vmax.f32 %v477, 0.0
  %v574 = vmax.f32 %v479, 0.0
  %v575 = vmax.f32 %v482, 0.0
  %v576 = vmax.f32 %v484, 0.0
  %v577 = vmax.f32 %v487, 0.0
  %v578 = vmax.f32 %v489, 0.0
  %v579 = vmax.f32 %v492, 0.0
  %v580 = vmax.f32 %v494, 0.0
  %v581 = vmax.f32 %v497, 0.0
  %v582 = vmax.f32 %v499, 0.0
  %v583 = vmax.f32 %v502, 0.0
  %v584 = vmax.f32 %v504, 0.0
  %v585 = vmax.f32 %v507, 0.0
  %v586 = vmax.f32 %v509, 0.0
  %v587 = vmax.f32 %v512, 0.0
  %v588 = vmax.f32 %v514, 0.0
  %v589 = vmax.f32 %v517, 0.0
  %v590 = vmax.f32 %v519, 0.0
  %v591 = vmax.f32 %v522, 0.0
  %v592 = vmax.f32 %v524, 0.0
  %v593 = vmax.f32 %v527, 0.0
  %v594 = vmax.f32 %v529, 0.0
  %vm595 = vcmask 130048
  %596 = vst.msk [vmem:[%s3] sm:$0xff] %vm595, %v531
  %597 = vst.msk [vmem:[%s3 + $0x8] sm:$0xff] %vm595, %v532
  %598 = vst.msk [vmem:[%s3 + $0x10] sm:$0xff] %vm595, %v533
  %599 = vst.msk [vmem:[%s3 + $0x18] sm:$0xff] %vm595, %v534
  %600 = vst.msk [vmem:[%s3 + $0x20] sm:$0xff] %vm595, %v535
  %601 = vst.msk [vmem:[%s3 + $0x28] sm:$0xff] %vm595, %v536
  %602 = vst.msk [vmem:[%s3 + $0x30] sm:$0xff] %vm595, %v537
  %603 = vst.msk [vmem:[%s3 + $0x38] sm:$0xff] %vm595, %v538
  %604 = vst.msk [vmem:[%s3 + $0x40] sm:$0xff] %vm595, %v539
  %605 = vst.msk [vmem:[%s3 + $0x48] sm:$0xff] %vm595, %v540
  %606 = vst.msk [vmem:[%s3 + $0x50] sm:$0xff] %vm595, %v541
  %607 = vst.msk [vmem:[%s3 + $0x58] sm:$0xff] %vm595, %v542
  %608 = vst.msk [vmem:[%s3 + $0x60] sm:$0xff] %vm595, %v543
  %609 = vst.msk [vmem:[%s3 + $0x68] sm:$0xff] %vm595, %v544
  %610 = vst.msk [vmem:[%s3 + $0x70] sm:$0xff] %vm595, %v545
  %611 = vst.msk [vmem:[%s3 + $0x78] sm:$0xff] %vm595, %v546
  %612 = vst.msk [vmem:[%s3 + $0x80] sm:$0xff] %vm595, %v547
  %613 = vst.msk [vmem:[%s3 + $0x88] sm:$0xff] %vm595, %v548
  %614 = vst.msk [vmem:[%s3 + $0x90] sm:$0xff] %vm595, %v549
  %615 = vst.msk [vmem:[%s3 + $0x98] sm:$0xff] %vm595, %v550
  %616 = vst.msk [vmem:[%s3 + $0xa0] sm:$0xff] %vm595, %v551
  %617 = vst.msk [vmem:[%s3 + $0xa8] sm:$0xff] %vm595, %v552
  %618 = vst.msk [vmem:[%s3 + $0xb0] sm:$0xff] %vm595, %v553
  %619 = vst.msk [vmem:[%s3 + $0xb8] sm:$0xff] %vm595, %v554
  %620 = vst.msk [vmem:[%s3 + $0xc0] sm:$0xff] %vm595, %v555
  %621 = vst.msk [vmem:[%s3 + $0xc8] sm:$0xff] %vm595, %v556
  %622 = vst.msk [vmem:[%s3 + $0xd0] sm:$0xff] %vm595, %v557
  %623 = vst.msk [vmem:[%s3 + $0xd8] sm:$0xff] %vm595, %v558
  %624 = vst.msk [vmem:[%s3 + $0xe0] sm:$0xff] %vm595, %v559
  %625 = vst.msk [vmem:[%s3 + $0xe8] sm:$0xff] %vm595, %v560
  %626 = vst.msk [vmem:[%s3 + $0xf0] sm:$0xff] %vm595, %v561
  %627 = vst.msk [vmem:[%s3 + $0xf8] sm:$0xff] %vm595, %v562
  %628 = vst.msk [vmem:[%s3 + $0x100] sm:$0xff] %vm595, %v563
  %629 = vst.msk [vmem:[%s3 + $0x108] sm:$0xff] %vm595, %v564
  %630 = vst.msk [vmem:[%s3 + $0x110] sm:$0xff] %vm595, %v565
  %631 = vst.msk [vmem:[%s3 + $0x118] sm:$0xff] %vm595, %v566
  %632 = vst.msk [vmem:[%s3 + $0x120] sm:$0xff] %vm595, %v567
  %633 = vst.msk [vmem:[%s3 + $0x128] sm:$0xff] %vm595, %v568
  %634 = vst.msk [vmem:[%s3 + $0x130] sm:$0xff] %vm595, %v569
  %635 = vst.msk [vmem:[%s3 + $0x138] sm:$0xff] %vm595, %v570
  %636 = vst.msk [vmem:[%s3 + $0x140] sm:$0xff] %vm595, %v571
  %637 = vst.msk [vmem:[%s3 + $0x148] sm:$0xff] %vm595, %v572
  %638 = vst.msk [vmem:[%s3 + $0x150] sm:$0xff] %vm595, %v573
  %639 = vst.msk [vmem:[%s3 + $0x158] sm:$0xff] %vm595, %v574
  %640 = vst.msk [vmem:[%s3 + $0x160] sm:$0xff] %vm595, %v575
  %641 = vst.msk [vmem:[%s3 + $0x168] sm:$0xff] %vm595, %v576
  %642 = vst.msk [vmem:[%s3 + $0x170] sm:$0xff] %vm595, %v577
  %643 = vst.msk [vmem:[%s3 + $0x178] sm:$0xff] %vm595, %v578
  %644 = vst.msk [vmem:[%s3 + $0x180] sm:$0xff] %vm595, %v579
  %645 = vst.msk [vmem:[%s3 + $0x188] sm:$0xff] %vm595, %v580
  %646 = vst.msk [vmem:[%s3 + $0x190] sm:$0xff] %vm595, %v581
  %647 = vst.msk [vmem:[%s3 + $0x198] sm:$0xff] %vm595, %v582
  %648 = vst.msk [vmem:[%s3 + $0x1a0] sm:$0xff] %vm595, %v583
  %649 = vst.msk [vmem:[%s3 + $0x1a8] sm:$0xff] %vm595, %v584
  %650 = vst.msk [vmem:[%s3 + $0x1b0] sm:$0xff] %vm595, %v585
  %651 = vst.msk [vmem:[%s3 + $0x1b8] sm:$0xff] %vm595, %v586
  %652 = vst.msk [vmem:[%s3 + $0x1c0] sm:$0xff] %vm595, %v587
  %653 = vst.msk [vmem:[%s3 + $0x1c8] sm:$0xff] %vm595, %v588
  %654 = vst.msk [vmem:[%s3 + $0x1d0] sm:$0xff] %vm595, %v589
  %655 = vst.msk [vmem:[%s3 + $0x1d8] sm:$0xff] %vm595, %v590
  %656 = vst.msk [vmem:[%s3 + $0x1e0] sm:$0xff] %vm595, %v591
  %657 = vst.msk [vmem:[%s3 + $0x1e8] sm:$0xff] %vm595, %v592
  %658 = vst.msk [vmem:[%s3 + $0x1f0] sm:$0xff] %vm595, %v593
  %659 = vst.msk [vmem:[%s3 + $0x1f8] sm:$0xff] %vm595, %v594
  // Predicated region
  $region14: #{_lambda_.9} parent=0 // pred_check
    _
  $region15: #{_lambda_.9} parent=0 // pred_check_branch
    %661 = sbr.rel (0) target = $region17
  $region16: #{_lambda_.9} parent=0 // pred_region
    _
  $region17: #{_lambda_.9} parent=0 // pred_fallthru
    _
  // Predicated region
  $region18: #{_lambda_.9} parent=0 // pred_check
    _
  $region19: #{_lambda_.9} parent=0 // pred_check_branch
    %663 = sbr.rel (0) target = $region21
  $region20: #{_lambda_.9} parent=0 // pred_region
    _
  $region21: #{_lambda_.9} parent=0 // pred_fallthru
    _

// kernel: _lambda_.10
$region0: #{_lambda_.10}
  #allocation0 [shape = 'u32[]', space=smem, size = 0x4, offset = 0x4, fixed_abs, tag = 'smem constant byte address 0x4 - core index']
  #allocation1 [shape = 'u32[72,128]{1,0:T(1,128)}', space=vmem, size = 0x9000, scoped, tag = 'internal scratch']
  %s0 = inlined_call_operand.vmem [shape: bf16[128,144], index: 0, kind: input, shape index: {}]
  %s1 = inlined_call_operand.vmem [shape: bf16[144,24], index: 1, kind: input, shape index: {}]
  %s2 = inlined_call_operand.vmem [shape: f32[1,24], index: 2, kind: input, shape index: {}]
  %s3 = inlined_call_operand.vmem [shape: f32[128,24], index: 3, kind: output, shape index: {}]
  %s4 = sld [smem:[#allocation0]]
  $region22: #{_lambda_.10} parent=0
    _
  %s6 = ssub.s32 1, %s4
  %s7 = scalar_select 0, %s6, %s4
  // Predicated region
  $region2: #{_lambda_.10} parent=0 // pred_check
    _
  $region3: #{_lambda_.10} parent=0 // pred_check_branch
    %9 = sbr.rel (0) target = $region5
  $region4: #{_lambda_.10} parent=0 // pred_region
    _
  $region5: #{_lambda_.10} parent=0 // pred_fallthru
    _
  // Predicated region
  $region6: #{_lambda_.10} parent=0 // pred_check
    _
  $region7: #{_lambda_.10} parent=0 // pred_check_branch
    %11 = sbr.rel (0) target = $region9
  $region8: #{_lambda_.10} parent=0 // pred_region
    _
  $region9: #{_lambda_.10} parent=0 // pred_fallthru
    _
  // Predicated region
  $region10: #{_lambda_.10} parent=0 // pred_check
    _
  $region11: #{_lambda_.10} parent=0 // pred_check_branch
    %13 = sbr.rel (0) target = $region13
  $region12: #{_lambda_.10} parent=0 // pred_region
    _
  $region13: #{_lambda_.10} parent=0 // pred_fallthru
    _
  %v15 = vld [vmem:[%s0] sm:$0xff]
  %v16 = vld [vmem:[%s0 + $0x8] sm:$0xff]
  %v17 = vld [vmem:[%s0 + $0x10] sm:$0xff]
  %v18 = vld [vmem:[%s0 + $0x18] sm:$0xff]
  %v19 = vld [vmem:[%s0 + $0x20] sm:$0xff]
  %v20 = vld [vmem:[%s0 + $0x28] sm:$0xff]
  %v21 = vld [vmem:[%s0 + $0x30] sm:$0xff]
  %v22 = vld [vmem:[%s0 + $0x38] sm:$0xff]
  %v23 = vld [vmem:[%s0 + $0x40] sm:$0xff]
  %v24 = vld [vmem:[%s0 + $0x48] sm:$0xff]
  %v25 = vld [vmem:[%s0 + $0x50] sm:$0xff]
  %v26 = vld [vmem:[%s0 + $0x58] sm:$0xff]
  %v27 = vld [vmem:[%s0 + $0x60] sm:$0xff]
  %v28 = vld [vmem:[%s0 + $0x68] sm:$0xff]
  %v29 = vld [vmem:[%s0 + $0x70] sm:$0xff]
  %v30 = vld [vmem:[%s0 + $0x78] sm:$0xff]
  %v31 = vld [vmem:[%s1] sm:$0xf]
  %v32 = vld [vmem:[%s1 + $0x4] sm:$0xf]
  %v33 = vld [vmem:[%s1 + $0x8] sm:$0xf]
  %v34 = vld [vmem:[%s1 + $0xc] sm:$0xf]
  %v35 = vld [vmem:[%s1 + $0x10] sm:$0xf]
  %v36 = vld [vmem:[%s1 + $0x14] sm:$0xf]
  %v37 = vld [vmem:[%s1 + $0x18] sm:$0xf]
  %v38 = vld [vmem:[%s1 + $0x1c] sm:$0xf]
  %v39 = vld [vmem:[%s1 + $0x20] sm:$0xf]
  %v40 = vld [vmem:[%s1 + $0x24] sm:$0xf]
  %v41 = vld [vmem:[%s1 + $0x28] sm:$0xf]
  %v42 = vld [vmem:[%s1 + $0x2c] sm:$0xf]
  %v43 = vld [vmem:[%s1 + $0x30] sm:$0xf]
  %v44 = vld [vmem:[%s1 + $0x34] sm:$0xf]
  %v45 = vld [vmem:[%s1 + $0x38] sm:$0xf]
  %v46 = vld [vmem:[%s1 + $0x3c] sm:$0xf]
  %v47 = vld [vmem:[%s1 + $0x40] sm:$0xf]
  %v48 = vld [vmem:[%s1 + $0x44] sm:$0xf]
  %v49 = vld [vmem:[%s2] sm:$0x1]
  %v51 = vperm.slane %v49, 0
  %v69 = vunpack.c.l.b16 %v15
  %v70 = vunpack.c.h.b16 %v15
  %v71 = vunpack.c.l.b16 %v16
  %v72 = vunpack.c.h.b16 %v16
  %v73 = vunpack.c.l.b16 %v17
  %v74 = vunpack.c.h.b16 %v17
  %v75 = vunpack.c.l.b16 %v18
  %v76 = vunpack.c.h.b16 %v18
  %v77 = vunpack.c.l.b16 %v19
  %v78 = vunpack.c.h.b16 %v19
  %v79 = vunpack.c.l.b16 %v20
  %v80 = vunpack.c.h.b16 %v20
  %v81 = vunpack.c.l.b16 %v21
  %v82 = vunpack.c.h.b16 %v21
  %v83 = vunpack.c.l.b16 %v22
  %v84 = vunpack.c.h.b16 %v22
  %v85 = vunpack.c.l.b16 %v23
  %v86 = vunpack.c.h.b16 %v23
  %v87 = vunpack.c.l.b16 %v24
  %v88 = vunpack.c.h.b16 %v24
  %v89 = vunpack.c.l.b16 %v25
  %v90 = vunpack.c.h.b16 %v25
  %v91 = vunpack.c.l.b16 %v26
  %v92 = vunpack.c.h.b16 %v26
  %v93 = vunpack.c.l.b16 %v27
  %v94 = vunpack.c.h.b16 %v27
  %v95 = vunpack.c.l.b16 %v28
  %v96 = vunpack.c.h.b16 %v28
  %v97 = vunpack.c.l.b16 %v29
  %v98 = vunpack.c.h.b16 %v29
  %v99 = vunpack.c.l.b16 %v30
  %v100 = vunpack.c.h.b16 %v30
  %v101 = vpack.c.b16 %v71, %v69
  %v102 = vpack.c.b16 %v72, %v70
  %v103 = vpack.c.b16 %v75, %v73
  %v104 = vpack.c.b16 %v76, %v74
  %v105 = vpack.c.b16 %v79, %v77
  %v106 = vpack.c.b16 %v80, %v78
  %v107 = vpack.c.b16 %v83, %v81
  %v108 = vpack.c.b16 %v84, %v82
  %v109 = vpack.c.b16 %v87, %v85
  %v110 = vpack.c.b16 %v88, %v86
  %v111 = vpack.c.b16 %v91, %v89
  %v112 = vpack.c.b16 %v92, %v90
  %v113 = vpack.c.b16 %v95, %v93
  %v114 = vpack.c.b16 %v96, %v94
  %v115 = vpack.c.b16 %v99, %v97
  %v116 = vpack.c.b16 %v100, %v98
  %v143 = vunpack.c.l.b16 %v31
  %v144 = vunpack.c.l.b16 %v32
  %v145 = vunpack.c.l.b16 %v33
  %v146 = vunpack.c.l.b16 %v34
  %v147 = vunpack.c.l.b16 %v35
  %v148 = vunpack.c.l.b16 %v36
  %v149 = vunpack.c.l.b16 %v37
  %v150 = vunpack.c.l.b16 %v38
  %v151 = vunpack.c.l.b16 %v39
  %v152 = vunpack.c.l.b16 %v40
  %v153 = vunpack.c.l.b16 %v41
  %v154 = vunpack.c.l.b16 %v42
  %v155 = vunpack.c.l.b16 %v43
  %v156 = vunpack.c.l.b16 %v44
  %v157 = vunpack.c.l.b16 %v45
  %v158 = vunpack.c.l.b16 %v46
  %v159 = vunpack.c.l.b16 %v47
  %v160 = vunpack.c.l.b16 %v48
  %v161 = vpack.c.b16 %v144, %v143
  %v162 = vpack.c.b16 %v146, %v145
  %v163 = vpack.c.b16 %v148, %v147
  %v164 = vpack.c.b16 %v150, %v149
  %v165 = vpack.c.b16 %v152, %v151
  %v166 = vpack.c.b16 %v154, %v153
  %v167 = vpack.c.b16 %v156, %v155
  %v168 = vpack.c.b16 %v158, %v157
  %v169 = vpack.c.b16 %v160, %v159
  %vm179 = vcmask 130048
  %v181 = vsel %vm179, %v102, 0
  %v184 = vsel %vm179, %v104, 0
  %v187 = vsel %vm179, %v106, 0
  %v190 = vsel %vm179, %v108, 0
  %v193 = vsel %vm179, %v110, 0
  %v196 = vsel %vm179, %v112, 0
  %v199 = vsel %vm179, %v114, 0
  %v202 = vsel %vm179, %v116, 0
  %204 = vmatpush.bf16.msra.mxu0 %v168
  %205 = vmatpush.bf16.msra.mxu0 %v167
  %206 = vmatpush.bf16.msra.mxu0 %v166
  %207 = vmatpush.bf16.msra.mxu0 %v165
  %208 = vmatpush.bf16.msra.mxu0 %v164
  %209 = vmatpush.bf16.msra.mxu0 %v163
  %210 = vmatpush.bf16.msra.mxu0 %v162
  %211 = vmatpush.bf16.msra.mxu0 %v161
  %212 = vmatmul.bf16.gmra.mxu0 %v101
  %v213 = vpop.f32.mrf.mxu0
  %v214 = vadd.f32 %v51, %v213
  %v215 = vpop.f32.mrf.mxu0
  %v216 = vadd.f32 %v51, %v215
  %217 = vmatmul.bf16.gmra.mxu0 %v103
  %v218 = vpop.f32.mrf.mxu0
  %v219 = vadd.f32 %v51, %v218
  %v220 = vpop.f32.mrf.mxu0
  %v221 = vadd.f32 %v51, %v220
  %222 = vmatmul.bf16.gmra.mxu0 %v105
  %v223 = vpop.f32.mrf.mxu0
  %v224 = vadd.f32 %v51, %v223
  %v225 = vpop.f32.mrf.mxu0
  %v226 = vadd.f32 %v51, %v225
  %227 = vmatmul.bf16.gmra.mxu0 %v107
  %v228 = vpop.f32.mrf.mxu0
  %v229 = vadd.f32 %v51, %v228
  %v230 = vpop.f32.mrf.mxu0
  %v231 = vadd.f32 %v51, %v230
  %232 = vmatmul.bf16.gmra.mxu0 %v109
  %v233 = vpop.f32.mrf.mxu0
  %v234 = vadd.f32 %v51, %v233
  %v235 = vpop.f32.mrf.mxu0
  %v236 = vadd.f32 %v51, %v235
  %237 = vmatmul.bf16.gmra.mxu0 %v111
  %v238 = vpop.f32.mrf.mxu0
  %v239 = vadd.f32 %v51, %v238
  %v240 = vpop.f32.mrf.mxu0
  %v241 = vadd.f32 %v51, %v240
  %242 = vmatmul.bf16.gmra.mxu0 %v113
  %v243 = vpop.f32.mrf.mxu0
  %v244 = vadd.f32 %v51, %v243
  %v245 = vpop.f32.mrf.mxu0
  %v246 = vadd.f32 %v51, %v245
  %247 = vmatmul.bf16.gmra.mxu0 %v115
  %v248 = vpop.f32.mrf.mxu0
  %v249 = vadd.f32 %v51, %v248
  %v250 = vpop.f32.mrf.mxu0
  %v251 = vadd.f32 %v51, %v250
  %252 = vdwg.mxu0
  %253 = vmatpush.bf16.msra.mxu0 0
  %254 = vmatpush.bf16.msra.mxu0 0
  %255 = vmatpush.bf16.msra.mxu0 0
  %256 = vmatpush.bf16.msra.mxu0 0
  %257 = vmatpush.bf16.msra.mxu0 0
  %258 = vmatpush.bf16.msra.mxu0 0
  %259 = vmatpush.bf16.msra.mxu0 0
  %260 = vmatpush.bf16.msra.mxu0 %v169
  %261 = vmatmul.bf16.gmra.mxu0 %v181
  %v262 = vpop.f32.mrf.mxu0
  %v263 = vadd.f32 %v214, %v262
  %v264 = vpop.f32.mrf.mxu0
  %v265 = vadd.f32 %v216, %v264
  %266 = vmatmul.bf16.gmra.mxu0 %v184
  %v267 = vpop.f32.mrf.mxu0
  %v268 = vadd.f32 %v219, %v267
  %v269 = vpop.f32.mrf.mxu0
  %v270 = vadd.f32 %v221, %v269
  %271 = vmatmul.bf16.gmra.mxu0 %v187
  %v272 = vpop.f32.mrf.mxu0
  %v273 = vadd.f32 %v224, %v272
  %v274 = vpop.f32.mrf.mxu0
  %v275 = vadd.f32 %v226, %v274
  %276 = vmatmul.bf16.gmra.mxu0 %v190
  %v277 = vpop.f32.mrf.mxu0
  %v278 = vadd.f32 %v229, %v277
  %v279 = vpop.f32.mrf.mxu0
  %v280 = vadd.f32 %v231, %v279
  %281 = vmatmul.bf16.gmra.mxu0 %v193
  %v282 = vpop.f32.mrf.mxu0
  %v283 = vadd.f32 %v234, %v282
  %v284 = vpop.f32.mrf.mxu0
  %v285 = vadd.f32 %v236, %v284
  %286 = vmatmul.bf16.gmra.mxu0 %v196
  %v287 = vpop.f32.mrf.mxu0
  %v288 = vadd.f32 %v239, %v287
  %v289 = vpop.f32.mrf.mxu0
  %v290 = vadd.f32 %v241, %v289
  %291 = vmatmul.bf16.gmra.mxu0 %v199
  %v292 = vpop.f32.mrf.mxu0
  %v293 = vadd.f32 %v244, %v292
  %v294 = vpop.f32.mrf.mxu0
  %v295 = vadd.f32 %v246, %v294
  %296 = vmatmul.bf16.gmra.mxu0 %v202
  %v297 = vpop.f32.mrf.mxu0
  %v298 = vadd.f32 %v249, %v297
  %v299 = vpop.f32.mrf.mxu0
  %v300 = vadd.f32 %v251, %v299
  %301 = vdwg.mxu0
  %v302 = vmax.f32 %v263, 0.0
  %v303 = vmax.f32 %v265, 0.0
  %v304 = vmax.f32 %v268, 0.0
  %v305 = vmax.f32 %v270, 0.0
  %v306 = vmax.f32 %v273, 0.0
  %v307 = vmax.f32 %v275, 0.0
  %v308 = vmax.f32 %v278, 0.0
  %v309 = vmax.f32 %v280, 0.0
  %v310 = vmax.f32 %v283, 0.0
  %v311 = vmax.f32 %v285, 0.0
  %v312 = vmax.f32 %v288, 0.0
  %v313 = vmax.f32 %v290, 0.0
  %v314 = vmax.f32 %v293, 0.0
  %v315 = vmax.f32 %v295, 0.0
  %v316 = vmax.f32 %v298, 0.0
  %v317 = vmax.f32 %v300, 0.0
  %vm318 = vcmask 195584
  %319 = vst.msk [vmem:[%s3] sm:$0xff] %vm318, %v302
  %320 = vst.msk [vmem:[%s3 + $0x8] sm:$0xff] %vm318, %v303
  %321 = vst.msk [vmem:[%s3 + $0x10] sm:$0xff] %vm318, %v304
  %322 = vst.msk [vmem:[%s3 + $0x18] sm:$0xff] %vm318, %v305
  %323 = vst.msk [vmem:[%s3 + $0x20] sm:$0xff] %vm318, %v306
  %324 = vst.msk [vmem:[%s3 + $0x28] sm:$0xff] %vm318, %v307
  %325 = vst.msk [vmem:[%s3 + $0x30] sm:$0xff] %vm318, %v308
  %326 = vst.msk [vmem:[%s3 + $0x38] sm:$0xff] %vm318, %v309
  %327 = vst.msk [vmem:[%s3 + $0x40] sm:$0xff] %vm318, %v310
  %328 = vst.msk [vmem:[%s3 + $0x48] sm:$0xff] %vm318, %v311
  %329 = vst.msk [vmem:[%s3 + $0x50] sm:$0xff] %vm318, %v312
  %330 = vst.msk [vmem:[%s3 + $0x58] sm:$0xff] %vm318, %v313
  %331 = vst.msk [vmem:[%s3 + $0x60] sm:$0xff] %vm318, %v314
  %332 = vst.msk [vmem:[%s3 + $0x68] sm:$0xff] %vm318, %v315
  %333 = vst.msk [vmem:[%s3 + $0x70] sm:$0xff] %vm318, %v316
  %334 = vst.msk [vmem:[%s3 + $0x78] sm:$0xff] %vm318, %v317
  // Predicated region
  $region14: #{_lambda_.10} parent=0 // pred_check
    _
  $region15: #{_lambda_.10} parent=0 // pred_check_branch
    %336 = sbr.rel (0) target = $region17
  $region16: #{_lambda_.10} parent=0 // pred_region
    _
  $region17: #{_lambda_.10} parent=0 // pred_fallthru
    _
  // Predicated region
  $region18: #{_lambda_.10} parent=0 // pred_check
    _
  $region19: #{_lambda_.10} parent=0 // pred_check_branch
    %338 = sbr.rel (0) target = $region21
  $region20: #{_lambda_.10} parent=0 // pred_region
    _
  $region21: #{_lambda_.10} parent=0 // pred_fallthru
    _

// kernel: _lambda_.11
$region0: #{_lambda_.11}
  #allocation0 [shape = 'u32[]', space=smem, size = 0x4, offset = 0x4, fixed_abs, tag = 'smem constant byte address 0x4 - core index']
  #allocation1 [shape = 'u32[72,128]{1,0:T(1,128)}', space=vmem, size = 0x9000, scoped, tag = 'internal scratch']
  %s0 = inlined_call_operand.vmem [shape: bf16[128,216], index: 0, kind: input, shape index: {}]
  %s1 = inlined_call_operand.vmem [shape: bf16[216,40], index: 1, kind: input, shape index: {}]
  %s2 = inlined_call_operand.vmem [shape: f32[1,40], index: 2, kind: input, shape index: {}]
  %s3 = inlined_call_operand.vmem [shape: f32[128,40], index: 3, kind: output, shape index: {}]
  %s4 = sld [smem:[#allocation0]]
  $region22: #{_lambda_.11} parent=0
    _
  %s6 = ssub.s32 1, %s4
  %s7 = scalar_select 0, %s6, %s4
  // Predicated region
  $region2: #{_lambda_.11} parent=0 // pred_check
    _
  $region3: #{_lambda_.11} parent=0 // pred_check_branch
    %9 = sbr.rel (0) target = $region5
  $region4: #{_lambda_.11} parent=0 // pred_region
    _
  $region5: #{_lambda_.11} parent=0 // pred_fallthru
    _
  // Predicated region
  $region6: #{_lambda_.11} parent=0 // pred_check
    _
  $region7: #{_lambda_.11} parent=0 // pred_check_branch
    %11 = sbr.rel (0) target = $region9
  $region8: #{_lambda_.11} parent=0 // pred_region
    _
  $region9: #{_lambda_.11} parent=0 // pred_fallthru
    _
  // Predicated region
  $region10: #{_lambda_.11} parent=0 // pred_check
    _
  $region11: #{_lambda_.11} parent=0 // pred_check_branch
    %13 = sbr.rel (0) target = $region13
  $region12: #{_lambda_.11} parent=0 // pred_region
    _
  $region13: #{_lambda_.11} parent=0 // pred_fallthru
    _
  %v15 = vld [vmem:[%s0] sm:$0xff]
  %v16 = vld [vmem:[%s0 + $0x8] sm:$0xff]
  %v17 = vld [vmem:[%s0 + $0x10] sm:$0xff]
  %v18 = vld [vmem:[%s0 + $0x18] sm:$0xff]
  %v19 = vld [vmem:[%s0 + $0x20] sm:$0xff]
  %v20 = vld [vmem:[%s0 + $0x28] sm:$0xff]
  %v21 = vld [vmem:[%s0 + $0x30] sm:$0xff]
  %v22 = vld [vmem:[%s0 + $0x38] sm:$0xff]
  %v23 = vld [vmem:[%s0 + $0x40] sm:$0xff]
  %v24 = vld [vmem:[%s0 + $0x48] sm:$0xff]
  %v25 = vld [vmem:[%s0 + $0x50] sm:$0xff]
  %v26 = vld [vmem:[%s0 + $0x58] sm:$0xff]
  %v27 = vld [vmem:[%s0 + $0x60] sm:$0xff]
  %v28 = vld [vmem:[%s0 + $0x68] sm:$0xff]
  %v29 = vld [vmem:[%s0 + $0x70] sm:$0xff]
  %v30 = vld [vmem:[%s0 + $0x78] sm:$0xff]
  %v31 = vld [vmem:[%s1] sm:$0xf]
  %v32 = vld [vmem:[%s1 + $0x4] sm:$0xf]
  %v33 = vld [vmem:[%s1 + $0x8] sm:$0xf]
  %v34 = vld [vmem:[%s1 + $0xc] sm:$0xf]
  %v35 = vld [vmem:[%s1 + $0x10] sm:$0xf]
  %v36 = vld [vmem:[%s1 + $0x14] sm:$0xf]
  %v37 = vld [vmem:[%s1 + $0x18] sm:$0xf]
  %v38 = vld [vmem:[%s1 + $0x1c] sm:$0xf]
  %v39 = vld [vmem:[%s1 + $0x20] sm:$0xf]
  %v40 = vld [vmem:[%s1 + $0x24] sm:$0xf]
  %v41 = vld [vmem:[%s1 + $0x28] sm:$0xf]
  %v42 = vld [vmem:[%s1 + $0x2c] sm:$0xf]
  %v43 = vld [vmem:[%s1 + $0x30] sm:$0xf]
  %v44 = vld [vmem:[%s1 + $0x34] sm:$0xf]
  %v45 = vld [vmem:[%s1 + $0x38] sm:$0xf]
  %v46 = vld [vmem:[%s1 + $0x3c] sm:$0xf]
  %v47 = vld [vmem:[%s1 + $0x40] sm:$0xf]
  %v48 = vld [vmem:[%s1 + $0x44] sm:$0xf]
  %v49 = vld [vmem:[%s1 + $0x48] sm:$0xf]
  %v50 = vld [vmem:[%s1 + $0x4c] sm:$0xf]
  %v51 = vld [vmem:[%s1 + $0x50] sm:$0xf]
  %v52 = vld [vmem:[%s1 + $0x54] sm:$0xf]
  %v53 = vld [vmem:[%s1 + $0x58] sm:$0xf]
  %v54 = vld [vmem:[%s1 + $0x5c] sm:$0xf]
  %v55 = vld [vmem:[%s1 + $0x60] sm:$0xf]
  %v56 = vld [vmem:[%s1 + $0x64] sm:$0xf]
  %v57 = vld [vmem:[%s1 + $0x68] sm:$0xf]
  %v58 = vld [vmem:[%s2] sm:$0x1]
  %v60 = vperm.slane %v58, 0
  %v78 = vunpack.c.l.b16 %v15
  %v79 = vunpack.c.h.b16 %v15
  %v80 = vunpack.c.l.b16 %v16
  %v81 = vunpack.c.h.b16 %v16
  %v82 = vunpack.c.l.b16 %v17
  %v83 = vunpack.c.h.b16 %v17
  %v84 = vunpack.c.l.b16 %v18
  %v85 = vunpack.c.h.b16 %v18
  %v86 = vunpack.c.l.b16 %v19
  %v87 = vunpack.c.h.b16 %v19
  %v88 = vunpack.c.l.b16 %v20
  %v89 = vunpack.c.h.b16 %v20
  %v90 = vunpack.c.l.b16 %v21
  %v91 = vunpack.c.h.b16 %v21
  %v92 = vunpack.c.l.b16 %v22
  %v93 = vunpack.c.h.b16 %v22
  %v94 = vunpack.c.l.b16 %v23
  %v95 = vunpack.c.h.b16 %v23
  %v96 = vunpack.c.l.b16 %v24
  %v97 = vunpack.c.h.b16 %v24
  %v98 = vunpack.c.l.b16 %v25
  %v99 = vunpack.c.h.b16 %v25
  %v100 = vunpack.c.l.b16 %v26
  %v101 = vunpack.c.h.b16 %v26
  %v102 = vunpack.c.l.b16 %v27
  %v103 = vunpack.c.h.b16 %v27
  %v104 = vunpack.c.l.b16 %v28
  %v105 = vunpack.c.h.b16 %v28
  %v106 = vunpack.c.l.b16 %v29
  %v107 = vunpack.c.h.b16 %v29
  %v108 = vunpack.c.l.b16 %v30
  %v109 = vunpack.c.h.b16 %v30
  %v110 = vpack.c.b16 %v80, %v78
  %v111 = vpack.c.b16 %v81, %v79
  %v112 = vpack.c.b16 %v84, %v82
  %v113 = vpack.c.b16 %v85, %v83
  %v114 = vpack.c.b16 %v88, %v86
  %v115 = vpack.c.b16 %v89, %v87
  %v116 = vpack.c.b16 %v92, %v90
  %v117 = vpack.c.b16 %v93, %v91
  %v118 = vpack.c.b16 %v96, %v94
  %v119 = vpack.c.b16 %v97, %v95
  %v120 = vpack.c.b16 %v100, %v98
  %v121 = vpack.c.b16 %v101, %v99
  %v122 = vpack.c.b16 %v104, %v102
  %v123 = vpack.c.b16 %v105, %v103
  %v124 = vpack.c.b16 %v108, %v106
  %v125 = vpack.c.b16 %v109, %v107
  %v161 = vunpack.c.l.b16 %v31
  %v162 = vunpack.c.l.b16 %v32
  %v163 = vunpack.c.l.b16 %v33
  %v164 = vunpack.c.l.b16 %v34
  %v165 = vunpack.c.l.b16 %v35
  %v166 = vunpack.c.l.b16 %v36
  %v167 = vunpack.c.l.b16 %v37
  %v168 = vunpack.c.l.b16 %v38
  %v169 = vunpack.c.l.b16 %v39
  %v170 = vunpack.c.l.b16 %v40
  %v171 = vunpack.c.l.b16 %v41
  %v172 = vunpack.c.l.b16 %v42
  %v173 = vunpack.c.l.b16 %v43
  %v174 = vunpack.c.l.b16 %v44
  %v175 = vunpack.c.l.b16 %v45
  %v176 = vunpack.c.l.b16 %v46
  %v177 = vunpack.c.l.b16 %v47
  %v178 = vunpack.c.l.b16 %v48
  %v179 = vunpack.c.l.b16 %v49
  %v180 = vunpack.c.l.b16 %v50
  %v181 = vunpack.c.l.b16 %v51
  %v182 = vunpack.c.l.b16 %v52
  %v183 = vunpack.c.l.b16 %v53
  %v184 = vunpack.c.l.b16 %v54
  %v185 = vunpack.c.l.b16 %v55
  %v186 = vunpack.c.l.b16 %v56
  %v187 = vunpack.c.l.b16 %v57
  %v188 = vpack.c.b16 %v162, %v161
  %v189 = vpack.c.b16 %v164, %v163
  %v190 = vpack.c.b16 %v166, %v165
  %v191 = vpack.c.b16 %v168, %v167
  %v192 = vpack.c.b16 %v170, %v169
  %v193 = vpack.c.b16 %v172, %v171
  %v194 = vpack.c.b16 %v174, %v173
  %v195 = vpack.c.b16 %v176, %v175
  %v196 = vpack.c.b16 %v178, %v177
  %v197 = vpack.c.b16 %v180, %v179
  %v198 = vpack.c.b16 %v182, %v181
  %v199 = vpack.c.b16 %v184, %v183
  %v200 = vpack.c.b16 %v186, %v185
  %v201 = vpack.c.b16 %v187, %v187
  %vm215 = vcmask 719872
  %v217 = vsel %vm215, %v111, 0
  %v220 = vsel %vm215, %v113, 0
  %v223 = vsel %vm215, %v115, 0
  %v226 = vsel %vm215, %v117, 0
  %v229 = vsel %vm215, %v119, 0
  %v232 = vsel %vm215, %v121, 0
  %v235 = vsel %vm215, %v123, 0
  %v238 = vsel %vm215, %v125, 0
  %vm240 = vcmask 1043456
  %v242 = vsel %vm240, %v201, 0
  %244 = vmatpush.bf16.msra.mxu0 %v195
  %245 = vmatpush.bf16.msra.mxu0 %v194
  %246 = vmatpush.bf16.msra.mxu0 %v193
  %247 = vmatpush.bf16.msra.mxu0 %v192
  %248 = vmatpush.bf16.msra.mxu0 %v191
  %249 = vmatpush.bf16.msra.mxu0 %v190
  %250 = vmatpush.bf16.msra.mxu0 %v189
  %251 = vmatpush.bf16.msra.mxu0 %v188
  %252 = vmatmul.bf16.gmra.mxu0 %v110
  %v253 = vpop.f32.mrf.mxu0
  %v254 = vadd.f32 %v60, %v253
  %v255 = vpop.f32.mrf.mxu0
  %v256 = vadd.f32 %v60, %v255
  %257 = vmatmul.bf16.gmra.mxu0 %v112
  %v258 = vpop.f32.mrf.mxu0
  %v259 = vadd.f32 %v60, %v258
  %v260 = vpop.f32.mrf.mxu0
  %v261 = vadd.f32 %v60, %v260
  %262 = vmatmul.bf16.gmra.mxu0 %v114
  %v263 = vpop.f32.mrf.mxu0
  %v264 = vadd.f32 %v60, %v263
  %v265 = vpop.f32.mrf.mxu0
  %v266 = vadd.f32 %v60, %v265
  %267 = vmatmul.bf16.gmra.mxu0 %v116
  %v268 = vpop.f32.mrf.mxu0
  %v269 = vadd.f32 %v60, %v268
  %v270 = vpop.f32.mrf.mxu0
  %v271 = vadd.f32 %v60, %v270
  %272 = vmatmul.bf16.gmra.mxu0 %v118
  %v273 = vpop.f32.mrf.mxu0
  %v274 = vadd.f32 %v60, %v273
  %v275 = vpop.f32.mrf.mxu0
  %v276 = vadd.f32 %v60, %v275
  %277 = vmatmul.bf16.gmra.mxu0 %v120
  %v278 = vpop.f32.mrf.mxu0
  %v279 = vadd.f32 %v60, %v278
  %v280 = vpop.f32.mrf.mxu0
  %v281 = vadd.f32 %v60, %v280
  %282 = vmatmul.bf16.gmra.mxu0 %v122
  %v283 = vpop.f32.mrf.mxu0
  %v284 = vadd.f32 %v60, %v283
  %v285 = vpop.f32.mrf.mxu0
  %v286 = vadd.f32 %v60, %v285
  %287 = vmatmul.bf16.gmra.mxu0 %v124
  %v288 = vpop.f32.mrf.mxu0
  %v289 = vadd.f32 %v60, %v288
  %v290 = vpop.f32.mrf.mxu0
  %v291 = vadd.f32 %v60, %v290
  %292 = vdwg.mxu0
  %293 = vmatpush.bf16.msra.mxu0 0
  %294 = vmatpush.bf16.msra.mxu0 0
  %295 = vmatpush.bf16.msra.mxu0 %v242
  %296 = vmatpush.bf16.msra.mxu0 %v200
  %297 = vmatpush.bf16.msra.mxu0 %v199
  %298 = vmatpush.bf16.msra.mxu0 %v198
  %299 = vmatpush.bf16.msra.mxu0 %v197
  %300 = vmatpush.bf16.msra.mxu0 %v196
  %301 = vmatmul.bf16.gmra.mxu0 %v217
  %v302 = vpop.f32.mrf.mxu0
  %v303 = vadd.f32 %v254, %v302
  %v304 = vpop.f32.mrf.mxu0
  %v305 = vadd.f32 %v256, %v304
  %306 = vmatmul.bf16.gmra.mxu0 %v220
  %v307 = vpop.f32.mrf.mxu0
  %v308 = vadd.f32 %v259, %v307
  %v309 = vpop.f32.mrf.mxu0
  %v310 = vadd.f32 %v261, %v309
  %311 = vmatmul.bf16.gmra.mxu0 %v223
  %v312 = vpop.f32.mrf.mxu0
  %v313 = vadd.f32 %v264, %v312
  %v314 = vpop.f32.mrf.mxu0
  %v315 = vadd.f32 %v266, %v314
  %316 = vmatmul.bf16.gmra.mxu0 %v226
  %v317 = vpop.f32.mrf.mxu0
  %v318 = vadd.f32 %v269, %v317
  %v319 = vpop.f32.mrf.mxu0
  %v320 = vadd.f32 %v271, %v319
  %321 = vmatmul.bf16.gmra.mxu0 %v229
  %v322 = vpop.f32.mrf.mxu0
  %v323 = vadd.f32 %v274, %v322
  %v324 = vpop.f32.mrf.mxu0
  %v325 = vadd.f32 %v276, %v324
  %326 = vmatmul.bf16.gmra.mxu0 %v232
  %v327 = vpop.f32.mrf.mxu0
  %v328 = vadd.f32 %v279, %v327
  %v329 = vpop.f32.mrf.mxu0
  %v330 = vadd.f32 %v281, %v329
  %331 = vmatmul.bf16.gmra.mxu0 %v235
  %v332 = vpop.f32.mrf.mxu0
  %v333 = vadd.f32 %v284, %v332
  %v334 = vpop.f32.mrf.mxu0
  %v335 = vadd.f32 %v286, %v334
  %336 = vmatmul.bf16.gmra.mxu0 %v238
  %v337 = vpop.f32.mrf.mxu0
  %v338 = vadd.f32 %v289, %v337
  %v339 = vpop.f32.mrf.mxu0
  %v340 = vadd.f32 %v291, %v339
  %341 = vdwg.mxu0
  %v342 = vmax.f32 %v303, 0.0
  %v343 = vmax.f32 %v305, 0.0
  %v344 = vmax.f32 %v308, 0.0
  %v345 = vmax.f32 %v310, 0.0
  %v346 = vmax.f32 %v313, 0.0
  %v347 = vmax.f32 %v315, 0.0
  %v348 = vmax.f32 %v318, 0.0
  %v349 = vmax.f32 %v320, 0.0
  %v350 = vmax.f32 %v323, 0.0
  %v351 = vmax.f32 %v325, 0.0
  %v352 = vmax.f32 %v328, 0.0
  %v353 = vmax.f32 %v330, 0.0
  %v354 = vmax.f32 %v333, 0.0
  %v355 = vmax.f32 %v335, 0.0
  %v356 = vmax.f32 %v338, 0.0
  %v357 = vmax.f32 %v340, 0.0
  %vm358 = vcmask 326656
  %359 = vst.msk [vmem:[%s3] sm:$0xff] %vm358, %v342
  %360 = vst.msk [vmem:[%s3 + $0x8] sm:$0xff] %vm358, %v343
  %361 = vst.msk [vmem:[%s3 + $0x10] sm:$0xff] %vm358, %v344
  %362 = vst.msk [vmem:[%s3 + $0x18] sm:$0xff] %vm358, %v345
  %363 = vst.msk [vmem:[%s3 + $0x20] sm:$0xff] %vm358, %v346
  %364 = vst.msk [vmem:[%s3 + $0x28] sm:$0xff] %vm358, %v347
  %365 = vst.msk [vmem:[%s3 + $0x30] sm:$0xff] %vm358, %v348
  %366 = vst.msk [vmem:[%s3 + $0x38] sm:$0xff] %vm358, %v349
  %367 = vst.msk [vmem:[%s3 + $0x40] sm:$0xff] %vm358, %v350
  %368 = vst.msk [vmem:[%s3 + $0x48] sm:$0xff] %vm358, %v351
  %369 = vst.msk [vmem:[%s3 + $0x50] sm:$0xff] %vm358, %v352
  %370 = vst.msk [vmem:[%s3 + $0x58] sm:$0xff] %vm358, %v353
  %371 = vst.msk [vmem:[%s3 + $0x60] sm:$0xff] %vm358, %v354
  %372 = vst.msk [vmem:[%s3 + $0x68] sm:$0xff] %vm358, %v355
  %373 = vst.msk [vmem:[%s3 + $0x70] sm:$0xff] %vm358, %v356
  %374 = vst.msk [vmem:[%s3 + $0x78] sm:$0xff] %vm358, %v357
  // Predicated region
  $region14: #{_lambda_.11} parent=0 // pred_check
    _
  $region15: #{_lambda_.11} parent=0 // pred_check_branch
    %376 = sbr.rel (0) target = $region17
  $region16: #{_lambda_.11} parent=0 // pred_region
    _
  $region17: #{_lambda_.11} parent=0 // pred_fallthru
    _
  // Predicated region
  $region18: #{_lambda_.11} parent=0 // pred_check
    _
  $region19: #{_lambda_.11} parent=0 // pred_check_branch
    %378 = sbr.rel (0) target = $region21
  $region20: #{_lambda_.11} parent=0 // pred_region
    _
  $region21: #{_lambda_.11} parent=0 // pred_fallthru
    _

// kernel: _lambda_.14
$region0: #{_lambda_.14}
  #allocation0 [shape = 'u32[]', space=smem, size = 0x4, offset = 0x4, fixed_abs, tag = 'smem constant byte address 0x4 - core index']
  #allocation1 [shape = 'u32[72,128]{1,0:T(1,128)}', space=vmem, size = 0x9000, scoped, tag = 'internal scratch']
  %s0 = inlined_call_operand.vmem [shape: bf16[128,40], index: 0, kind: input, shape index: {}]
  %s1 = inlined_call_operand.vmem [shape: bf16[40,32], index: 1, kind: input, shape index: {}]
  %s2 = inlined_call_operand.vmem [shape: f32[1,32], index: 2, kind: input, shape index: {}]
  %s3 = inlined_call_operand.vmem [shape: f32[128,32], index: 3, kind: output, shape index: {}]
  %s4 = sld [smem:[#allocation0]]
  $region22: #{_lambda_.14} parent=0
    _
  %s6 = ssub.s32 1, %s4
  %s7 = scalar_select 0, %s6, %s4
  // Predicated region
  $region2: #{_lambda_.14} parent=0 // pred_check
    _
  $region3: #{_lambda_.14} parent=0 // pred_check_branch
    %9 = sbr.rel (0) target = $region5
  $region4: #{_lambda_.14} parent=0 // pred_region
    _
  $region5: #{_lambda_.14} parent=0 // pred_fallthru
    _
  // Predicated region
  $region6: #{_lambda_.14} parent=0 // pred_check
    _
  $region7: #{_lambda_.14} parent=0 // pred_check_branch
    %11 = sbr.rel (0) target = $region9
  $region8: #{_lambda_.14} parent=0 // pred_region
    _
  $region9: #{_lambda_.14} parent=0 // pred_fallthru
    _
  // Predicated region
  $region10: #{_lambda_.14} parent=0 // pred_check
    _
  $region11: #{_lambda_.14} parent=0 // pred_check_branch
    %13 = sbr.rel (0) target = $region13
  $region12: #{_lambda_.14} parent=0 // pred_region
    _
  $region13: #{_lambda_.14} parent=0 // pred_fallthru
    _
  %v15 = vld [vmem:[%s0] sm:$0xf]
  %v16 = vld [vmem:[%s0 + $0x4] sm:$0xf]
  %v17 = vld [vmem:[%s0 + $0x8] sm:$0xf]
  %v18 = vld [vmem:[%s0 + $0xc] sm:$0xf]
  %v19 = vld [vmem:[%s0 + $0x10] sm:$0xf]
  %v20 = vld [vmem:[%s0 + $0x14] sm:$0xf]
  %v21 = vld [vmem:[%s0 + $0x18] sm:$0xf]
  %v22 = vld [vmem:[%s0 + $0x1c] sm:$0xf]
  %v23 = vld [vmem:[%s0 + $0x20] sm:$0xf]
  %v24 = vld [vmem:[%s0 + $0x24] sm:$0xf]
  %v25 = vld [vmem:[%s0 + $0x28] sm:$0xf]
  %v26 = vld [vmem:[%s0 + $0x2c] sm:$0xf]
  %v27 = vld [vmem:[%s0 + $0x30] sm:$0xf]
  %v28 = vld [vmem:[%s0 + $0x34] sm:$0xf]
  %v29 = vld [vmem:[%s0 + $0x38] sm:$0xf]
  %v30 = vld [vmem:[%s0 + $0x3c] sm:$0xf]
  %v31 = vld [vmem:[%s1] sm:$0xf]
  %v32 = vld [vmem:[%s1 + $0x4] sm:$0xf]
  %v33 = vld [vmem:[%s1 + $0x8] sm:$0xf]
  %v34 = vld [vmem:[%s1 + $0xc] sm:$0xf]
  %v35 = vld [vmem:[%s1 + $0x10] sm:$0xf]
  %v36 = vld [vmem:[%s2] sm:$0x1]
  %v38 = vperm.slane %v36, 0
  %v56 = vunpack.c.l.b16 %v15
  %v57 = vunpack.c.l.b16 %v16
  %v58 = vunpack.c.l.b16 %v17
  %v59 = vunpack.c.l.b16 %v18
  %v60 = vunpack.c.l.b16 %v19
  %v61 = vunpack.c.l.b16 %v20
  %v62 = vunpack.c.l.b16 %v21
  %v63 = vunpack.c.l.b16 %v22
  %v64 = vunpack.c.l.b16 %v23
  %v65 = vunpack.c.l.b16 %v24
  %v66 = vunpack.c.l.b16 %v25
  %v67 = vunpack.c.l.b16 %v26
  %v68 = vunpack.c.l.b16 %v27
  %v69 = vunpack.c.l.b16 %v28
  %v70 = vunpack.c.l.b16 %v29
  %v71 = vunpack.c.l.b16 %v30
  %v72 = vpack.c.b16 %v57, %v56
  %v73 = vpack.c.b16 %v59, %v58
  %v74 = vpack.c.b16 %v61, %v60
  %v75 = vpack.c.b16 %v63, %v62
  %v76 = vpack.c.b16 %v65, %v64
  %v77 = vpack.c.b16 %v67, %v66
  %v78 = vpack.c.b16 %v69, %v68
  %v79 = vpack.c.b16 %v71, %v70
  %v85 = vunpack.c.l.b16 %v31
  %v86 = vunpack.c.l.b16 %v32
  %v87 = vunpack.c.l.b16 %v33
  %v88 = vunpack.c.l.b16 %v34
  %v89 = vunpack.c.l.b16 %v35
  %v90 = vpack.c.b16 %v86, %v85
  %v91 = vpack.c.b16 %v88, %v87
  %v92 = vpack.c.b16 %v89, %v89
  %vm95 = vcmask 326656
  %v97 = vsel %vm95, %v72, 0
  %v100 = vsel %vm95, %v73, 0
  %v103 = vsel %vm95, %v74, 0
  %v106 = vsel %vm95, %v75, 0
  %v109 = vsel %vm95, %v76, 0
  %v112 = vsel %vm95, %v77, 0
  %v115 = vsel %vm95, %v78, 0
  %v118 = vsel %vm95, %v79, 0
  %vm120 = vcmask 1043456
  %v122 = vsel %vm120, %v92, 0
  %124 = vmatpush.bf16.msra.mxu0 0
  %125 = vmatpush.bf16.msra.mxu0 0
  %126 = vmatpush.bf16.msra.mxu0 0
  %127 = vmatpush.bf16.msra.mxu0 0
  %128 = vmatpush.bf16.msra.mxu0 0
  %129 = vmatpush.bf16.msra.mxu0 %v122
  %130 = vmatpush.bf16.msra.mxu0 %v91
  %131 = vmatpush.bf16.msra.mxu0 %v90
  %132 = vmatmul.bf16.gmra.mxu0 %v97
  %v133 = vpop.f32.mrf.mxu0
  %v134 = vadd.f32 %v38, %v133
  %v135 = vpop.f32.mrf.mxu0
  %v136 = vadd.f32 %v38, %v135
  %137 = vmatmul.bf16.gmra.mxu0 %v100
  %v138 = vpop.f32.mrf.mxu0
  %v139 = vadd.f32 %v38, %v138
  %v140 = vpop.f32.mrf.mxu0
  %v141 = vadd.f32 %v38, %v140
  %142 = vmatmul.bf16.gmra.mxu0 %v103
  %v143 = vpop.f32.mrf.mxu0
  %v144 = vadd.f32 %v38, %v143
  %v145 = vpop.f32.mrf.mxu0
  %v146 = vadd.f32 %v38, %v145
  %147 = vmatmul.bf16.gmra.mxu0 %v106
  %v148 = vpop.f32.mrf.mxu0
  %v149 = vadd.f32 %v38, %v148
  %v150 = vpop.f32.mrf.mxu0
  %v151 = vadd.f32 %v38, %v150
  %152 = vmatmul.bf16.gmra.mxu0 %v109
  %v153 = vpop.f32.mrf.mxu0
  %v154 = vadd.f32 %v38, %v153
  %v155 = vpop.f32.mrf.mxu0
  %v156 = vadd.f32 %v38, %v155
  %157 = vmatmul.bf16.gmra.mxu0 %v112
  %v158 = vpop.f32.mrf.mxu0
  %v159 = vadd.f32 %v38, %v158
  %v160 = vpop.f32.mrf.mxu0
  %v161 = vadd.f32 %v38, %v160
  %162 = vmatmul.bf16.gmra.mxu0 %v115
  %v163 = vpop.f32.mrf.mxu0
  %v164 = vadd.f32 %v38, %v163
  %v165 = vpop.f32.mrf.mxu0
  %v166 = vadd.f32 %v38, %v165
  %167 = vmatmul.bf16.gmra.mxu0 %v118
  %v168 = vpop.f32.mrf.mxu0
  %v169 = vadd.f32 %v38, %v168
  %v170 = vpop.f32.mrf.mxu0
  %v171 = vadd.f32 %v38, %v170
  %172 = vdwg.mxu0
  %v173 = vmax.f32 %v134, 0.0
  %v174 = vmax.f32 %v136, 0.0
  %v175 = vmax.f32 %v139, 0.0
  %v176 = vmax.f32 %v141, 0.0
  %v177 = vmax.f32 %v144, 0.0
  %v178 = vmax.f32 %v146, 0.0
  %v179 = vmax.f32 %v149, 0.0
  %v180 = vmax.f32 %v151, 0.0
  %v181 = vmax.f32 %v154, 0.0
  %v182 = vmax.f32 %v156, 0.0
  %v183 = vmax.f32 %v159, 0.0
  %v184 = vmax.f32 %v161, 0.0
  %v185 = vmax.f32 %v164, 0.0
  %v186 = vmax.f32 %v166, 0.0
  %v187 = vmax.f32 %v169, 0.0
  %v188 = vmax.f32 %v171, 0.0
  %vm189 = vcmask 261120
  %190 = vst.msk [vmem:[%s3] sm:$0xff] %vm189, %v173
  %191 = vst.msk [vmem:[%s3 + $0x8] sm:$0xff] %vm189, %v174
  %192 = vst.msk [vmem:[%s3 + $0x10] sm:$0xff] %vm189, %v175
  %193 = vst.msk [vmem:[%s3 + $0x18] sm:$0xff] %vm189, %v176
  %194 = vst.msk [vmem:[%s3 + $0x20] sm:$0xff] %vm189, %v177
  %195 = vst.msk [vmem:[%s3 + $0x28] sm:$0xff] %vm189, %v178
  %196 = vst.msk [vmem:[%s3 + $0x30] sm:$0xff] %vm189, %v179
  %197 = vst.msk [vmem:[%s3 + $0x38] sm:$0xff] %vm189, %v180
  %198 = vst.msk [vmem:[%s3 + $0x40] sm:$0xff] %vm189, %v181
  %199 = vst.msk [vmem:[%s3 + $0x48] sm:$0xff] %vm189, %v182
  %200 = vst.msk [vmem:[%s3 + $0x50] sm:$0xff] %vm189, %v183
  %201 = vst.msk [vmem:[%s3 + $0x58] sm:$0xff] %vm189, %v184
  %202 = vst.msk [vmem:[%s3 + $0x60] sm:$0xff] %vm189, %v185
  %203 = vst.msk [vmem:[%s3 + $0x68] sm:$0xff] %vm189, %v186
  %204 = vst.msk [vmem:[%s3 + $0x70] sm:$0xff] %vm189, %v187
  %205 = vst.msk [vmem:[%s3 + $0x78] sm:$0xff] %vm189, %v188
  // Predicated region
  $region14: #{_lambda_.14} parent=0 // pred_check
    _
  $region15: #{_lambda_.14} parent=0 // pred_check_branch
    %207 = sbr.rel (0) target = $region17
  $region16: #{_lambda_.14} parent=0 // pred_region
    _
  $region17: #{_lambda_.14} parent=0 // pred_fallthru
    _
  // Predicated region
  $region18: #{_lambda_.14} parent=0 // pred_check
    _
  $region19: #{_lambda_.14} parent=0 // pred_check_branch
    %209 = sbr.rel (0) target = $region21
  $region20: #{_lambda_.14} parent=0 // pred_region
    _
  $region21: #{_lambda_.14} parent=0 // pred_fallthru
    _

// kernel: _lambda_.13
$region0: #{_lambda_.13}
  #allocation0 [shape = 'u32[]', space=smem, size = 0x4, offset = 0x4, fixed_abs, tag = 'smem constant byte address 0x4 - core index']
  #allocation1 [shape = 'u32[72,128]{1,0:T(1,128)}', space=vmem, size = 0x9000, scoped, tag = 'internal scratch']
  %s0 = inlined_call_operand.vmem [shape: bf16[128,24], index: 0, kind: input, shape index: {}]
  %s1 = inlined_call_operand.vmem [shape: bf16[24,32], index: 1, kind: input, shape index: {}]
  %s2 = inlined_call_operand.vmem [shape: f32[1,32], index: 2, kind: input, shape index: {}]
  %s3 = inlined_call_operand.vmem [shape: f32[128,32], index: 3, kind: output, shape index: {}]
  %s4 = sld [smem:[#allocation0]]
  $region22: #{_lambda_.13} parent=0
    _
  %s6 = ssub.s32 1, %s4
  %s7 = scalar_select 0, %s6, %s4
  // Predicated region
  $region2: #{_lambda_.13} parent=0 // pred_check
    _
  $region3: #{_lambda_.13} parent=0 // pred_check_branch
    %9 = sbr.rel (0) target = $region5
  $region4: #{_lambda_.13} parent=0 // pred_region
    _
  $region5: #{_lambda_.13} parent=0 // pred_fallthru
    _
  // Predicated region
  $region6: #{_lambda_.13} parent=0 // pred_check
    _
  $region7: #{_lambda_.13} parent=0 // pred_check_branch
    %11 = sbr.rel (0) target = $region9
  $region8: #{_lambda_.13} parent=0 // pred_region
    _
  $region9: #{_lambda_.13} parent=0 // pred_fallthru
    _
  // Predicated region
  $region10: #{_lambda_.13} parent=0 // pred_check
    _
  $region11: #{_lambda_.13} parent=0 // pred_check_branch
    %13 = sbr.rel (0) target = $region13
  $region12: #{_lambda_.13} parent=0 // pred_region
    _
  $region13: #{_lambda_.13} parent=0 // pred_fallthru
    _
  %v15 = vld [vmem:[%s0] sm:$0xf]
  %v16 = vld [vmem:[%s0 + $0x4] sm:$0xf]
  %v17 = vld [vmem:[%s0 + $0x8] sm:$0xf]
  %v18 = vld [vmem:[%s0 + $0xc] sm:$0xf]
  %v19 = vld [vmem:[%s0 + $0x10] sm:$0xf]
  %v20 = vld [vmem:[%s0 + $0x14] sm:$0xf]
  %v21 = vld [vmem:[%s0 + $0x18] sm:$0xf]
  %v22 = vld [vmem:[%s0 + $0x1c] sm:$0xf]
  %v23 = vld [vmem:[%s0 + $0x20] sm:$0xf]
  %v24 = vld [vmem:[%s0 + $0x24] sm:$0xf]
  %v25 = vld [vmem:[%s0 + $0x28] sm:$0xf]
  %v26 = vld [vmem:[%s0 + $0x2c] sm:$0xf]
  %v27 = vld [vmem:[%s0 + $0x30] sm:$0xf]
  %v28 = vld [vmem:[%s0 + $0x34] sm:$0xf]
  %v29 = vld [vmem:[%s0 + $0x38] sm:$0xf]
  %v30 = vld [vmem:[%s0 + $0x3c] sm:$0xf]
  %v31 = vld [vmem:[%s1] sm:$0xf]
  %v32 = vld [vmem:[%s1 + $0x4] sm:$0xf]
  %v33 = vld [vmem:[%s1 + $0x8] sm:$0xf]
  %v34 = vld [vmem:[%s2] sm:$0x1]
  %v36 = vperm.slane %v34, 0
  %v54 = vunpack.c.l.b16 %v15
  %v55 = vunpack.c.l.b16 %v16
  %v56 = vunpack.c.l.b16 %v17
  %v57 = vunpack.c.l.b16 %v18
  %v58 = vunpack.c.l.b16 %v19
  %v59 = vunpack.c.l.b16 %v20
  %v60 = vunpack.c.l.b16 %v21
  %v61 = vunpack.c.l.b16 %v22
  %v62 = vunpack.c.l.b16 %v23
  %v63 = vunpack.c.l.b16 %v24
  %v64 = vunpack.c.l.b16 %v25
  %v65 = vunpack.c.l.b16 %v26
  %v66 = vunpack.c.l.b16 %v27
  %v67 = vunpack.c.l.b16 %v28
  %v68 = vunpack.c.l.b16 %v29
  %v69 = vunpack.c.l.b16 %v30
  %v70 = vpack.c.b16 %v55, %v54
  %v71 = vpack.c.b16 %v57, %v56
  %v72 = vpack.c.b16 %v59, %v58
  %v73 = vpack.c.b16 %v61, %v60
  %v74 = vpack.c.b16 %v63, %v62
  %v75 = vpack.c.b16 %v65, %v64
  %v76 = vpack.c.b16 %v67, %v66
  %v77 = vpack.c.b16 %v69, %v68
  %v81 = vunpack.c.l.b16 %v31
  %v82 = vunpack.c.l.b16 %v32
  %v83 = vunpack.c.l.b16 %v33
  %v84 = vpack.c.b16 %v82, %v81
  %v85 = vpack.c.b16 %v83, %v83
  %vm87 = vcmask 195584
  %v89 = vsel %vm87, %v70, 0
  %v92 = vsel %vm87, %v71, 0
  %v95 = vsel %vm87, %v72, 0
  %v98 = vsel %vm87, %v73, 0
  %v101 = vsel %vm87, %v74, 0
  %v104 = vsel %vm87, %v75, 0
  %v107 = vsel %vm87, %v76, 0
  %v110 = vsel %vm87, %v77, 0
  %vm112 = vcmask 1043456
  %v114 = vsel %vm112, %v85, 0
  %116 = vmatpush.bf16.msra.mxu0 0
  %117 = vmatpush.bf16.msra.mxu0 0
  %118 = vmatpush.bf16.msra.mxu0 0
  %119 = vmatpush.bf16.msra.mxu0 0
  %120 = vmatpush.bf16.msra.mxu0 0
  %121 = vmatpush.bf16.msra.mxu0 0
  %122 = vmatpush.bf16.msra.mxu0 %v114
  %123 = vmatpush.bf16.msra.mxu0 %v84
  %124 = vmatmul.bf16.gmra.mxu0 %v89
  %v125 = vpop.f32.mrf.mxu0
  %v126 = vadd.f32 %v36, %v125
  %v127 = vpop.f32.mrf.mxu0
  %v128 = vadd.f32 %v36, %v127
  %129 = vmatmul.bf16.gmra.mxu0 %v92
  %v130 = vpop.f32.mrf.mxu0
  %v131 = vadd.f32 %v36, %v130
  %v132 = vpop.f32.mrf.mxu0
  %v133 = vadd.f32 %v36, %v132
  %134 = vmatmul.bf16.gmra.mxu0 %v95
  %v135 = vpop.f32.mrf.mxu0
  %v136 = vadd.f32 %v36, %v135
  %v137 = vpop.f32.mrf.mxu0
  %v138 = vadd.f32 %v36, %v137
  %139 = vmatmul.bf16.gmra.mxu0 %v98
  %v140 = vpop.f32.mrf.mxu0
  %v141 = vadd.f32 %v36, %v140
  %v142 = vpop.f32.mrf.mxu0
  %v143 = vadd.f32 %v36, %v142
  %144 = vmatmul.bf16.gmra.mxu0 %v101
  %v145 = vpop.f32.mrf.mxu0
  %v146 = vadd.f32 %v36, %v145
  %v147 = vpop.f32.mrf.mxu0
  %v148 = vadd.f32 %v36, %v147
  %149 = vmatmul.bf16.gmra.mxu0 %v104
  %v150 = vpop.f32.mrf.mxu0
  %v151 = vadd.f32 %v36, %v150
  %v152 = vpop.f32.mrf.mxu0
  %v153 = vadd.f32 %v36, %v152
  %154 = vmatmul.bf16.gmra.mxu0 %v107
  %v155 = vpop.f32.mrf.mxu0
  %v156 = vadd.f32 %v36, %v155
  %v157 = vpop.f32.mrf.mxu0
  %v158 = vadd.f32 %v36, %v157
  %159 = vmatmul.bf16.gmra.mxu0 %v110
  %v160 = vpop.f32.mrf.mxu0
  %v161 = vadd.f32 %v36, %v160
  %v162 = vpop.f32.mrf.mxu0
  %v163 = vadd.f32 %v36, %v162
  %164 = vdwg.mxu0
  %v165 = vmax.f32 %v126, 0.0
  %v166 = vmax.f32 %v128, 0.0
  %v167 = vmax.f32 %v131, 0.0
  %v168 = vmax.f32 %v133, 0.0
  %v169 = vmax.f32 %v136, 0.0
  %v170 = vmax.f32 %v138, 0.0
  %v171 = vmax.f32 %v141, 0.0
  %v172 = vmax.f32 %v143, 0.0
  %v173 = vmax.f32 %v146, 0.0
  %v174 = vmax.f32 %v148, 0.0
  %v175 = vmax.f32 %v151, 0.0
  %v176 = vmax.f32 %v153, 0.0
  %v177 = vmax.f32 %v156, 0.0
  %v178 = vmax.f32 %v158, 0.0
  %v179 = vmax.f32 %v161, 0.0
  %v180 = vmax.f32 %v163, 0.0
  %vm181 = vcmask 261120
  %182 = vst.msk [vmem:[%s3] sm:$0xff] %vm181, %v165
  %183 = vst.msk [vmem:[%s3 + $0x8] sm:$0xff] %vm181, %v166
  %184 = vst.msk [vmem:[%s3 + $0x10] sm:$0xff] %vm181, %v167
  %185 = vst.msk [vmem:[%s3 + $0x18] sm:$0xff] %vm181, %v168
  %186 = vst.msk [vmem:[%s3 + $0x20] sm:$0xff] %vm181, %v169
  %187 = vst.msk [vmem:[%s3 + $0x28] sm:$0xff] %vm181, %v170
  %188 = vst.msk [vmem:[%s3 + $0x30] sm:$0xff] %vm181, %v171
  %189 = vst.msk [vmem:[%s3 + $0x38] sm:$0xff] %vm181, %v172
  %190 = vst.msk [vmem:[%s3 + $0x40] sm:$0xff] %vm181, %v173
  %191 = vst.msk [vmem:[%s3 + $0x48] sm:$0xff] %vm181, %v174
  %192 = vst.msk [vmem:[%s3 + $0x50] sm:$0xff] %vm181, %v175
  %193 = vst.msk [vmem:[%s3 + $0x58] sm:$0xff] %vm181, %v176
  %194 = vst.msk [vmem:[%s3 + $0x60] sm:$0xff] %vm181, %v177
  %195 = vst.msk [vmem:[%s3 + $0x68] sm:$0xff] %vm181, %v178
  %196 = vst.msk [vmem:[%s3 + $0x70] sm:$0xff] %vm181, %v179
  %197 = vst.msk [vmem:[%s3 + $0x78] sm:$0xff] %vm181, %v180
  // Predicated region
  $region14: #{_lambda_.13} parent=0 // pred_check
    _
  $region15: #{_lambda_.13} parent=0 // pred_check_branch
    %199 = sbr.rel (0) target = $region17
  $region16: #{_lambda_.13} parent=0 // pred_region
    _
  $region17: #{_lambda_.13} parent=0 // pred_fallthru
    _
  // Predicated region
  $region18: #{_lambda_.13} parent=0 // pred_check
    _
  $region19: #{_lambda_.13} parent=0 // pred_check_branch
    %201 = sbr.rel (0) target = $region21
  $region20: #{_lambda_.13} parent=0 // pred_region
    _
  $region21: #{_lambda_.13} parent=0 // pred_fallthru
    _

// kernel: _lambda_.15
$region0: #{_lambda_.15}
  #allocation0 [shape = 'u32[]', space=smem, size = 0x4, offset = 0x4, fixed_abs, tag = 'smem constant byte address 0x4 - core index']
  #allocation1 [shape = 'u32[72,128]{1,0:T(1,128)}', space=vmem, size = 0x9000, scoped, tag = 'internal scratch']
  %s0 = inlined_call_operand.vmem [shape: bf16[128,288], index: 0, kind: input, shape index: {}]
  %s1 = inlined_call_operand.vmem [shape: bf16[288,32], index: 1, kind: input, shape index: {}]
  %s2 = inlined_call_operand.vmem [shape: f32[1,32], index: 2, kind: input, shape index: {}]
  %s3 = inlined_call_operand.vmem [shape: f32[128,32], index: 3, kind: output, shape index: {}]
  %s4 = sld [smem:[#allocation0]]
  $region22: #{_lambda_.15} parent=0
    _
  %s6 = ssub.s32 1, %s4
  %s7 = scalar_select 0, %s6, %s4
  // Predicated region
  $region2: #{_lambda_.15} parent=0 // pred_check
    _
  $region3: #{_lambda_.15} parent=0 // pred_check_branch
    %9 = sbr.rel (0) target = $region5
  $region4: #{_lambda_.15} parent=0 // pred_region
    _
  $region5: #{_lambda_.15} parent=0 // pred_fallthru
    _
  // Predicated region
  $region6: #{_lambda_.15} parent=0 // pred_check
    _
  $region7: #{_lambda_.15} parent=0 // pred_check_branch
    %11 = sbr.rel (0) target = $region9
  $region8: #{_lambda_.15} parent=0 // pred_region
    _
  $region9: #{_lambda_.15} parent=0 // pred_fallthru
    _
  // Predicated region
  $region10: #{_lambda_.15} parent=0 // pred_check
    _
  $region11: #{_lambda_.15} parent=0 // pred_check_branch
    %13 = sbr.rel (0) target = $region13
  $region12: #{_lambda_.15} parent=0 // pred_region
    _
  $region13: #{_lambda_.15} parent=0 // pred_fallthru
    _
  %v15 = vld [vmem:[%s0] sm:$0xff]
  %v16 = vld [vmem:[%s0 + $0x8] sm:$0xf]
  %v17 = vld [vmem:[%s0 + $0xc] sm:$0xff]
  %v18 = vld [vmem:[%s0 + $0x14] sm:$0xf]
  %v19 = vld [vmem:[%s0 + $0x18] sm:$0xff]
  %v20 = vld [vmem:[%s0 + $0x20] sm:$0xf]
  %v21 = vld [vmem:[%s0 + $0x24] sm:$0xff]
  %v22 = vld [vmem:[%s0 + $0x2c] sm:$0xf]
  %v23 = vld [vmem:[%s0 + $0x30] sm:$0xff]
  %v24 = vld [vmem:[%s0 + $0x38] sm:$0xf]
  %v25 = vld [vmem:[%s0 + $0x3c] sm:$0xff]
  %v26 = vld [vmem:[%s0 + $0x44] sm:$0xf]
  %v27 = vld [vmem:[%s0 + $0x48] sm:$0xff]
  %v28 = vld [vmem:[%s0 + $0x50] sm:$0xf]
  %v29 = vld [vmem:[%s0 + $0x54] sm:$0xff]
  %v30 = vld [vmem:[%s0 + $0x5c] sm:$0xf]
  %v31 = vld [vmem:[%s0 + $0x60] sm:$0xff]
  %v32 = vld [vmem:[%s0 + $0x68] sm:$0xf]
  %v33 = vld [vmem:[%s0 + $0x6c] sm:$0xff]
  %v34 = vld [vmem:[%s0 + $0x74] sm:$0xf]
  %v35 = vld [vmem:[%s0 + $0x78] sm:$0xff]
  %v36 = vld [vmem:[%s0 + $0x80] sm:$0xf]
  %v37 = vld [vmem:[%s0 + $0x84] sm:$0xff]
  %v38 = vld [vmem:[%s0 + $0x8c] sm:$0xf]
  %v39 = vld [vmem:[%s0 + $0x90] sm:$0xff]
  %v40 = vld [vmem:[%s0 + $0x98] sm:$0xf]
  %v41 = vld [vmem:[%s0 + $0x9c] sm:$0xff]
  %v42 = vld [vmem:[%s0 + $0xa4] sm:$0xf]
  %v43 = vld [vmem:[%s0 + $0xa8] sm:$0xff]
  %v44 = vld [vmem:[%s0 + $0xb0] sm:$0xf]
  %v45 = vld [vmem:[%s0 + $0xb4] sm:$0xff]
  %v46 = vld [vmem:[%s0 + $0xbc] sm:$0xf]
  %v47 = vld [vmem:[%s1] sm:$0xf]
  %v48 = vld [vmem:[%s1 + $0x4] sm:$0xf]
  %v49 = vld [vmem:[%s1 + $0x8] sm:$0xf]
  %v50 = vld [vmem:[%s1 + $0xc] sm:$0xf]
  %v51 = vld [vmem:[%s1 + $0x10] sm:$0xf]
  %v52 = vld [vmem:[%s1 + $0x14] sm:$0xf]
  %v53 = vld [vmem:[%s1 + $0x18] sm:$0xf]
  %v54 = vld [vmem:[%s1 + $0x1c] sm:$0xf]
  %v55 = vld [vmem:[%s1 + $0x20] sm:$0xf]
  %v56 = vld [vmem:[%s1 + $0x24] sm:$0xf]
  %v57 = vld [vmem:[%s1 + $0x28] sm:$0xf]
  %v58 = vld [vmem:[%s1 + $0x2c] sm:$0xf]
  %v59 = vld [vmem:[%s1 + $0x30] sm:$0xf]
  %v60 = vld [vmem:[%s1 + $0x34] sm:$0xf]
  %v61 = vld [vmem:[%s1 + $0x38] sm:$0xf]
  %v62 = vld [vmem:[%s1 + $0x3c] sm:$0xf]
  %v63 = vld [vmem:[%s1 + $0x40] sm:$0xf]
  %v64 = vld [vmem:[%s1 + $0x44] sm:$0xf]
  %v65 = vld [vmem:[%s1 + $0x48] sm:$0xf]
  %v66 = vld [vmem:[%s1 + $0x4c] sm:$0xf]
  %v67 = vld [vmem:[%s1 + $0x50] sm:$0xf]
  %v68 = vld [vmem:[%s1 + $0x54] sm:$0xf]
  %v69 = vld [vmem:[%s1 + $0x58] sm:$0xf]
  %v70 = vld [vmem:[%s1 + $0x5c] sm:$0xf]
  %v71 = vld [vmem:[%s1 + $0x60] sm:$0xf]
  %v72 = vld [vmem:[%s1 + $0x64] sm:$0xf]
  %v73 = vld [vmem:[%s1 + $0x68] sm:$0xf]
  %v74 = vld [vmem:[%s1 + $0x6c] sm:$0xf]
  %v75 = vld [vmem:[%s1 + $0x70] sm:$0xf]
  %v76 = vld [vmem:[%s1 + $0x74] sm:$0xf]
  %v77 = vld [vmem:[%s1 + $0x78] sm:$0xf]
  %v78 = vld [vmem:[%s1 + $0x7c] sm:$0xf]
  %v79 = vld [vmem:[%s1 + $0x80] sm:$0xf]
  %v80 = vld [vmem:[%s1 + $0x84] sm:$0xf]
  %v81 = vld [vmem:[%s1 + $0x88] sm:$0xf]
  %v82 = vld [vmem:[%s1 + $0x8c] sm:$0xf]
  %v83 = vld [vmem:[%s2] sm:$0x1]
  %v85 = vperm.slane %v83, 0
  %v119 = vunpack.c.l.b16 %v15
  %v120 = vunpack.c.h.b16 %v15
  %v121 = vunpack.c.l.b16 %v16
  %v122 = vunpack.c.l.b16 %v17
  %v123 = vunpack.c.h.b16 %v17
  %v124 = vunpack.c.l.b16 %v18
  %v125 = vunpack.c.l.b16 %v19
  %v126 = vunpack.c.h.b16 %v19
  %v127 = vunpack.c.l.b16 %v20
  %v128 = vunpack.c.l.b16 %v21
  %v129 = vunpack.c.h.b16 %v21
  %v130 = vunpack.c.l.b16 %v22
  %v131 = vunpack.c.l.b16 %v23
  %v132 = vunpack.c.h.b16 %v23
  %v133 = vunpack.c.l.b16 %v24
  %v134 = vunpack.c.l.b16 %v25
  %v135 = vunpack.c.h.b16 %v25
  %v136 = vunpack.c.l.b16 %v26
  %v137 = vunpack.c.l.b16 %v27
  %v138 = vunpack.c.h.b16 %v27
  %v139 = vunpack.c.l.b16 %v28
  %v140 = vunpack.c.l.b16 %v29
  %v141 = vunpack.c.h.b16 %v29
  %v142 = vunpack.c.l.b16 %v30
  %v143 = vunpack.c.l.b16 %v31
  %v144 = vunpack.c.h.b16 %v31
  %v145 = vunpack.c.l.b16 %v32
  %v146 = vunpack.c.l.b16 %v33
  %v147 = vunpack.c.h.b16 %v33
  %v148 = vunpack.c.l.b16 %v34
  %v149 = vunpack.c.l.b16 %v35
  %v150 = vunpack.c.h.b16 %v35
  %v151 = vunpack.c.l.b16 %v36
  %v152 = vunpack.c.l.b16 %v37
  %v153 = vunpack.c.h.b16 %v37
  %v154 = vunpack.c.l.b16 %v38
  %v155 = vunpack.c.l.b16 %v39
  %v156 = vunpack.c.h.b16 %v39
  %v157 = vunpack.c.l.b16 %v40
  %v158 = vunpack.c.l.b16 %v41
  %v159 = vunpack.c.h.b16 %v41
  %v160 = vunpack.c.l.b16 %v42
  %v161 = vunpack.c.l.b16 %v43
  %v162 = vunpack.c.h.b16 %v43
  %v163 = vunpack.c.l.b16 %v44
  %v164 = vunpack.c.l.b16 %v45
  %v165 = vunpack.c.h.b16 %v45
  %v166 = vunpack.c.l.b16 %v46
  %v167 = vpack.c.b16 %v122, %v119
  %v168 = vpack.c.b16 %v123, %v120
  %v169 = vpack.c.b16 %v124, %v121
  %v170 = vpack.c.b16 %v128, %v125
  %v171 = vpack.c.b16 %v129, %v126
  %v172 = vpack.c.b16 %v130, %v127
  %v173 = vpack.c.b16 %v134, %v131
  %v174 = vpack.c.b16 %v135, %v132
  %v175 = vpack.c.b16 %v136, %v133
  %v176 = vpack.c.b16 %v140, %v137
  %v177 = vpack.c.b16 %v141, %v138
  %v178 = vpack.c.b16 %v142, %v139
  %v179 = vpack.c.b16 %v146, %v143
  %v180 = vpack.c.b16 %v147, %v144
  %v181 = vpack.c.b16 %v148, %v145
  %v182 = vpack.c.b16 %v152, %v149
  %v183 = vpack.c.b16 %v153, %v150
  %v184 = vpack.c.b16 %v154, %v151
  %v185 = vpack.c.b16 %v158, %v155
  %v186 = vpack.c.b16 %v159, %v156
  %v187 = vpack.c.b16 %v160, %v157
  %v188 = vpack.c.b16 %v164, %v161
  %v189 = vpack.c.b16 %v165, %v162
  %v190 = vpack.c.b16 %v166, %v163
  %v243 = vunpack.c.l.b16 %v47
  %v244 = vunpack.c.l.b16 %v48
  %v245 = vunpack.c.l.b16 %v49
  %v246 = vunpack.c.l.b16 %v50
  %v247 = vunpack.c.l.b16 %v51
  %v248 = vunpack.c.l.b16 %v52
  %v249 = vunpack.c.l.b16 %v53
  %v250 = vunpack.c.l.b16 %v54
  %v251 = vunpack.c.l.b16 %v55
  %v252 = vunpack.c.l.b16 %v56
  %v253 = vunpack.c.l.b16 %v57
  %v254 = vunpack.c.l.b16 %v58
  %v255 = vunpack.c.l.b16 %v59
  %v256 = vunpack.c.l.b16 %v60
  %v257 = vunpack.c.l.b16 %v61
  %v258 = vunpack.c.l.b16 %v62
  %v259 = vunpack.c.l.b16 %v63
  %v260 = vunpack.c.l.b16 %v64
  %v261 = vunpack.c.l.b16 %v65
  %v262 = vunpack.c.l.b16 %v66
  %v263 = vunpack.c.l.b16 %v67
  %v264 = vunpack.c.l.b16 %v68
  %v265 = vunpack.c.l.b16 %v69
  %v266 = vunpack.c.l.b16 %v70
  %v267 = vunpack.c.l.b16 %v71
  %v268 = vunpack.c.l.b16 %v72
  %v269 = vunpack.c.l.b16 %v73
  %v270 = vunpack.c.l.b16 %v74
  %v271 = vunpack.c.l.b16 %v75
  %v272 = vunpack.c.l.b16 %v76
  %v273 = vunpack.c.l.b16 %v77
  %v274 = vunpack.c.l.b16 %v78
  %v275 = vunpack.c.l.b16 %v79
  %v276 = vunpack.c.l.b16 %v80
  %v277 = vunpack.c.l.b16 %v81
  %v278 = vunpack.c.l.b16 %v82
  %v279 = vpack.c.b16 %v244, %v243
  %v280 = vpack.c.b16 %v246, %v245
  %v281 = vpack.c.b16 %v248, %v247
  %v282 = vpack.c.b16 %v250, %v249
  %v283 = vpack.c.b16 %v252, %v251
  %v284 = vpack.c.b16 %v254, %v253
  %v285 = vpack.c.b16 %v256, %v255
  %v286 = vpack.c.b16 %v258, %v257
  %v287 = vpack.c.b16 %v260, %v259
  %v288 = vpack.c.b16 %v262, %v261
  %v289 = vpack.c.b16 %v264, %v263
  %v290 = vpack.c.b16 %v266, %v265
  %v291 = vpack.c.b16 %v268, %v267
  %v292 = vpack.c.b16 %v270, %v269
  %v293 = vpack.c.b16 %v272, %v271
  %v294 = vpack.c.b16 %v274, %v273
  %v295 = vpack.c.b16 %v276, %v275
  %v296 = vpack.c.b16 %v278, %v277
  %vm315 = vcmask 261120
  %v317 = vsel %vm315, %v169, 0
  %v320 = vsel %vm315, %v172, 0
  %v323 = vsel %vm315, %v175, 0
  %v326 = vsel %vm315, %v178, 0
  %v329 = vsel %vm315, %v181, 0
  %v332 = vsel %vm315, %v184, 0
  %v335 = vsel %vm315, %v187, 0
  %v338 = vsel %vm315, %v190, 0
  %340 = vmatpush.bf16.msra.mxu0 %v286
  %341 = vmatpush.bf16.msra.mxu0 %v285
  %342 = vmatpush.bf16.msra.mxu0 %v284
  %343 = vmatpush.bf16.msra.mxu0 %v283
  %344 = vmatpush.bf16.msra.mxu0 %v282
  %345 = vmatpush.bf16.msra.mxu0 %v281
  %346 = vmatpush.bf16.msra.mxu0 %v280
  %347 = vmatpush.bf16.msra.mxu0 %v279
  %348 = vmatmul.bf16.gmra.mxu0 %v167
  %v349 = vpop.f32.mrf.mxu0
  %v350 = vadd.f32 %v85, %v349
  %v351 = vpop.f32.mrf.mxu0
  %v352 = vadd.f32 %v85, %v351
  %353 = vmatmul.bf16.gmra.mxu0 %v170
  %v354 = vpop.f32.mrf.mxu0
  %v355 = vadd.f32 %v85, %v354
  %v356 = vpop.f32.mrf.mxu0
  %v357 = vadd.f32 %v85, %v356
  %358 = vmatmul.bf16.gmra.mxu0 %v173
  %v359 = vpop.f32.mrf.mxu0
  %v360 = vadd.f32 %v85, %v359
  %v361 = vpop.f32.mrf.mxu0
  %v362 = vadd.f32 %v85, %v361
  %363 = vmatmul.bf16.gmra.mxu0 %v176
  %v364 = vpop.f32.mrf.mxu0
  %v365 = vadd.f32 %v85, %v364
  %v366 = vpop.f32.mrf.mxu0
  %v367 = vadd.f32 %v85, %v366
  %368 = vmatmul.bf16.gmra.mxu0 %v179
  %v369 = vpop.f32.mrf.mxu0
  %v370 = vadd.f32 %v85, %v369
  %v371 = vpop.f32.mrf.mxu0
  %v372 = vadd.f32 %v85, %v371
  %373 = vmatmul.bf16.gmra.mxu0 %v182
  %v374 = vpop.f32.mrf.mxu0
  %v375 = vadd.f32 %v85, %v374
  %v376 = vpop.f32.mrf.mxu0
  %v377 = vadd.f32 %v85, %v376
  %378 = vmatmul.bf16.gmra.mxu0 %v185
  %v379 = vpop.f32.mrf.mxu0
  %v380 = vadd.f32 %v85, %v379
  %v381 = vpop.f32.mrf.mxu0
  %v382 = vadd.f32 %v85, %v381
  %383 = vmatmul.bf16.gmra.mxu0 %v188
  %v384 = vpop.f32.mrf.mxu0
  %v385 = vadd.f32 %v85, %v384
  %v386 = vpop.f32.mrf.mxu0
  %v387 = vadd.f32 %v85, %v386
  %388 = vdwg.mxu0
  %389 = vmatpush.bf16.msra.mxu0 %v294
  %390 = vmatpush.bf16.msra.mxu0 %v293
  %391 = vmatpush.bf16.msra.mxu0 %v292
  %392 = vmatpush.bf16.msra.mxu0 %v291
  %393 = vmatpush.bf16.msra.mxu0 %v290
  %394 = vmatpush.bf16.msra.mxu0 %v289
  %395 = vmatpush.bf16.msra.mxu0 %v288
  %396 = vmatpush.bf16.msra.mxu0 %v287
  %397 = vmatmul.bf16.gmra.mxu0 %v168
  %v398 = vpop.f32.mrf.mxu0
  %v399 = vadd.f32 %v350, %v398
  %v400 = vpop.f32.mrf.mxu0
  %v401 = vadd.f32 %v352, %v400
  %402 = vmatmul.bf16.gmra.mxu0 %v171
  %v403 = vpop.f32.mrf.mxu0
  %v404 = vadd.f32 %v355, %v403
  %v405 = vpop.f32.mrf.mxu0
  %v406 = vadd.f32 %v357, %v405
  %407 = vmatmul.bf16.gmra.mxu0 %v174
  %v408 = vpop.f32.mrf.mxu0
  %v409 = vadd.f32 %v360, %v408
  %v410 = vpop.f32.mrf.mxu0
  %v411 = vadd.f32 %v362, %v410
  %412 = vmatmul.bf16.gmra.mxu0 %v177
  %v413 = vpop.f32.mrf.mxu0
  %v414 = vadd.f32 %v365, %v413
  %v415 = vpop.f32.mrf.mxu0
  %v416 = vadd.f32 %v367, %v415
  %417 = vmatmul.bf16.gmra.mxu0 %v180
  %v418 = vpop.f32.mrf.mxu0
  %v419 = vadd.f32 %v370, %v418
  %v420 = vpop.f32.mrf.mxu0
  %v421 = vadd.f32 %v372, %v420
  %422 = vmatmul.bf16.gmra.mxu0 %v183
  %v423 = vpop.f32.mrf.mxu0
  %v424 = vadd.f32 %v375, %v423
  %v425 = vpop.f32.mrf.mxu0
  %v426 = vadd.f32 %v377, %v425
  %427 = vmatmul.bf16.gmra.mxu0 %v186
  %v428 = vpop.f32.mrf.mxu0
  %v429 = vadd.f32 %v380, %v428
  %v430 = vpop.f32.mrf.mxu0
  %v431 = vadd.f32 %v382, %v430
  %432 = vmatmul.bf16.gmra.mxu0 %v189
  %v433 = vpop.f32.mrf.mxu0
  %v434 = vadd.f32 %v385, %v433
  %v435 = vpop.f32.mrf.mxu0
  %v436 = vadd.f32 %v387, %v435
  %437 = vdwg.mxu0
  %438 = vmatpush.bf16.msra.mxu0 0
  %439 = vmatpush.bf16.msra.mxu0 0
  %440 = vmatpush.bf16.msra.mxu0 0
  %441 = vmatpush.bf16.msra.mxu0 0
  %442 = vmatpush.bf16.msra.mxu0 0
  %443 = vmatpush.bf16.msra.mxu0 0
  %444 = vmatpush.bf16.msra.mxu0 %v296
  %445 = vmatpush.bf16.msra.mxu0 %v295
  %446 = vmatmul.bf16.gmra.mxu0 %v317
  %v447 = vpop.f32.mrf.mxu0
  %v448 = vadd.f32 %v399, %v447
  %v449 = vpop.f32.mrf.mxu0
  %v450 = vadd.f32 %v401, %v449
  %451 = vmatmul.bf16.gmra.mxu0 %v320
  %v452 = vpop.f32.mrf.mxu0
  %v453 = vadd.f32 %v404, %v452
  %v454 = vpop.f32.mrf.mxu0
  %v455 = vadd.f32 %v406, %v454
  %456 = vmatmul.bf16.gmra.mxu0 %v323
  %v457 = vpop.f32.mrf.mxu0
  %v458 = vadd.f32 %v409, %v457
  %v459 = vpop.f32.mrf.mxu0
  %v460 = vadd.f32 %v411, %v459
  %461 = vmatmul.bf16.gmra.mxu0 %v326
  %v462 = vpop.f32.mrf.mxu0
  %v463 = vadd.f32 %v414, %v462
  %v464 = vpop.f32.mrf.mxu0
  %v465 = vadd.f32 %v416, %v464
  %466 = vmatmul.bf16.gmra.mxu0 %v329
  %v467 = vpop.f32.mrf.mxu0
  %v468 = vadd.f32 %v419, %v467
  %v469 = vpop.f32.mrf.mxu0
  %v470 = vadd.f32 %v421, %v469
  %471 = vmatmul.bf16.gmra.mxu0 %v332
  %v472 = vpop.f32.mrf.mxu0
  %v473 = vadd.f32 %v424, %v472
  %v474 = vpop.f32.mrf.mxu0
  %v475 = vadd.f32 %v426, %v474
  %476 = vmatmul.bf16.gmra.mxu0 %v335
  %v477 = vpop.f32.mrf.mxu0
  %v478 = vadd.f32 %v429, %v477
  %v479 = vpop.f32.mrf.mxu0
  %v480 = vadd.f32 %v431, %v479
  %481 = vmatmul.bf16.gmra.mxu0 %v338
  %v482 = vpop.f32.mrf.mxu0
  %v483 = vadd.f32 %v434, %v482
  %v484 = vpop.f32.mrf.mxu0
  %v485 = vadd.f32 %v436, %v484
  %486 = vdwg.mxu0
  %v487 = vmax.f32 %v448, 0.0
  %v488 = vmax.f32 %v450, 0.0
  %v489 = vmax.f32 %v453, 0.0
  %v490 = vmax.f32 %v455, 0.0
  %v491 = vmax.f32 %v458, 0.0
  %v492 = vmax.f32 %v460, 0.0
  %v493 = vmax.f32 %v463, 0.0
  %v494 = vmax.f32 %v465, 0.0
  %v495 = vmax.f32 %v468, 0.0
  %v496 = vmax.f32 %v470, 0.0
  %v497 = vmax.f32 %v473, 0.0
  %v498 = vmax.f32 %v475, 0.0
  %v499 = vmax.f32 %v478, 0.0
  %v500 = vmax.f32 %v480, 0.0
  %v501 = vmax.f32 %v483, 0.0
  %v502 = vmax.f32 %v485, 0.0
  %503 = vst.msk [vmem:[%s3] sm:$0xff] %vm315, %v487
  %504 = vst.msk [vmem:[%s3 + $0x8] sm:$0xff] %vm315, %v488
  %505 = vst.msk [vmem:[%s3 + $0x10] sm:$0xff] %vm315, %v489
  %506 = vst.msk [vmem:[%s3 + $0x18] sm:$0xff] %vm315, %v490
  %507 = vst.msk [vmem:[%s3 + $0x20] sm:$0xff] %vm315, %v491
  %508 = vst.msk [vmem:[%s3 + $0x28] sm:$0xff] %vm315, %v492
  %509 = vst.msk [vmem:[%s3 + $0x30] sm:$0xff] %vm315, %v493
  %510 = vst.msk [vmem:[%s3 + $0x38] sm:$0xff] %vm315, %v494
  %511 = vst.msk [vmem:[%s3 + $0x40] sm:$0xff] %vm315, %v495
  %512 = vst.msk [vmem:[%s3 + $0x48] sm:$0xff] %vm315, %v496
  %513 = vst.msk [vmem:[%s3 + $0x50] sm:$0xff] %vm315, %v497
  %514 = vst.msk [vmem:[%s3 + $0x58] sm:$0xff] %vm315, %v498
  %515 = vst.msk [vmem:[%s3 + $0x60] sm:$0xff] %vm315, %v499
  %516 = vst.msk [vmem:[%s3 + $0x68] sm:$0xff] %vm315, %v500
  %517 = vst.msk [vmem:[%s3 + $0x70] sm:$0xff] %vm315, %v501
  %518 = vst.msk [vmem:[%s3 + $0x78] sm:$0xff] %vm315, %v502
  // Predicated region
  $region14: #{_lambda_.15} parent=0 // pred_check
    _
  $region15: #{_lambda_.15} parent=0 // pred_check_branch
    %520 = sbr.rel (0) target = $region17
  $region16: #{_lambda_.15} parent=0 // pred_region
    _
  $region17: #{_lambda_.15} parent=0 // pred_fallthru
    _
  // Predicated region
  $region18: #{_lambda_.15} parent=0 // pred_check
    _
  $region19: #{_lambda_.15} parent=0 // pred_check_branch
    %522 = sbr.rel (0) target = $region21
  $region20: #{_lambda_.15} parent=0 // pred_region
    _
  $region21: #{_lambda_.15} parent=0 // pred_fallthru
    _

// kernel: _lambda_.12
$region0: #{_lambda_.12}
  #allocation0 [shape = 'u32[]', space=smem, size = 0x4, offset = 0x4, fixed_abs, tag = 'smem constant byte address 0x4 - core index']
  #allocation1 [shape = 'u32[72,128]{1,0:T(1,128)}', space=vmem, size = 0x9000, scoped, tag = 'internal scratch']
  %s0 = inlined_call_operand.vmem [shape: bf16[512,16], index: 0, kind: input, shape index: {}]
  %s1 = inlined_call_operand.vmem [shape: bf16[16,32], index: 1, kind: input, shape index: {}]
  %s2 = inlined_call_operand.vmem [shape: f32[1,32], index: 2, kind: input, shape index: {}]
  %s3 = inlined_call_operand.vmem [shape: f32[512,32], index: 3, kind: output, shape index: {}]
  %s4 = sld [smem:[#allocation0]]
  $region22: #{_lambda_.12} parent=0
    _
  %s6 = ssub.s32 1, %s4
  %s7 = scalar_select 0, %s6, %s4
  // Predicated region
  $region2: #{_lambda_.12} parent=0 // pred_check
    _
  $region3: #{_lambda_.12} parent=0 // pred_check_branch
    %9 = sbr.rel (0) target = $region5
  $region4: #{_lambda_.12} parent=0 // pred_region
    _
  $region5: #{_lambda_.12} parent=0 // pred_fallthru
    _
  // Predicated region
  $region6: #{_lambda_.12} parent=0 // pred_check
    _
  $region7: #{_lambda_.12} parent=0 // pred_check_branch
    %11 = sbr.rel (0) target = $region9
  $region8: #{_lambda_.12} parent=0 // pred_region
    _
  $region9: #{_lambda_.12} parent=0 // pred_fallthru
    _
  // Predicated region
  $region10: #{_lambda_.12} parent=0 // pred_check
    _
  $region11: #{_lambda_.12} parent=0 // pred_check_branch
    %13 = sbr.rel (0) target = $region13
  $region12: #{_lambda_.12} parent=0 // pred_region
    _
  $region13: #{_lambda_.12} parent=0 // pred_fallthru
    _
  %v15 = vld [vmem:[%s0] sm:$0xf]
  %v16 = vld [vmem:[%s0 + $0x4] sm:$0xf]
  %v17 = vld [vmem:[%s0 + $0x8] sm:$0xf]
  %v18 = vld [vmem:[%s0 + $0xc] sm:$0xf]
  %v19 = vld [vmem:[%s0 + $0x10] sm:$0xf]
  %v20 = vld [vmem:[%s0 + $0x14] sm:$0xf]
  %v21 = vld [vmem:[%s0 + $0x18] sm:$0xf]
  %v22 = vld [vmem:[%s0 + $0x1c] sm:$0xf]
  %v23 = vld [vmem:[%s0 + $0x20] sm:$0xf]
  %v24 = vld [vmem:[%s0 + $0x24] sm:$0xf]
  %v25 = vld [vmem:[%s0 + $0x28] sm:$0xf]
  %v26 = vld [vmem:[%s0 + $0x2c] sm:$0xf]
  %v27 = vld [vmem:[%s0 + $0x30] sm:$0xf]
  %v28 = vld [vmem:[%s0 + $0x34] sm:$0xf]
  %v29 = vld [vmem:[%s0 + $0x38] sm:$0xf]
  %v30 = vld [vmem:[%s0 + $0x3c] sm:$0xf]
  %v31 = vld [vmem:[%s0 + $0x40] sm:$0xf]
  %v32 = vld [vmem:[%s0 + $0x44] sm:$0xf]
  %v33 = vld [vmem:[%s0 + $0x48] sm:$0xf]
  %v34 = vld [vmem:[%s0 + $0x4c] sm:$0xf]
  %v35 = vld [vmem:[%s0 + $0x50] sm:$0xf]
  %v36 = vld [vmem:[%s0 + $0x54] sm:$0xf]
  %v37 = vld [vmem:[%s0 + $0x58] sm:$0xf]
  %v38 = vld [vmem:[%s0 + $0x5c] sm:$0xf]
  %v39 = vld [vmem:[%s0 + $0x60] sm:$0xf]
  %v40 = vld [vmem:[%s0 + $0x64] sm:$0xf]
  %v41 = vld [vmem:[%s0 + $0x68] sm:$0xf]
  %v42 = vld [vmem:[%s0 + $0x6c] sm:$0xf]
  %v43 = vld [vmem:[%s0 + $0x70] sm:$0xf]
  %v44 = vld [vmem:[%s0 + $0x74] sm:$0xf]
  %v45 = vld [vmem:[%s0 + $0x78] sm:$0xf]
  %v46 = vld [vmem:[%s0 + $0x7c] sm:$0xf]
  %v47 = vld [vmem:[%s0 + $0x80] sm:$0xf]
  %v48 = vld [vmem:[%s0 + $0x84] sm:$0xf]
  %v49 = vld [vmem:[%s0 + $0x88] sm:$0xf]
  %v50 = vld [vmem:[%s0 + $0x8c] sm:$0xf]
  %v51 = vld [vmem:[%s0 + $0x90] sm:$0xf]
  %v52 = vld [vmem:[%s0 + $0x94] sm:$0xf]
  %v53 = vld [vmem:[%s0 + $0x98] sm:$0xf]
  %v54 = vld [vmem:[%s0 + $0x9c] sm:$0xf]
  %v55 = vld [vmem:[%s0 + $0xa0] sm:$0xf]
  %v56 = vld [vmem:[%s0 + $0xa4] sm:$0xf]
  %v57 = vld [vmem:[%s0 + $0xa8] sm:$0xf]
  %v58 = vld [vmem:[%s0 + $0xac] sm:$0xf]
  %v59 = vld [vmem:[%s0 + $0xb0] sm:$0xf]
  %v60 = vld [vmem:[%s0 + $0xb4] sm:$0xf]
  %v61 = vld [vmem:[%s0 + $0xb8] sm:$0xf]
  %v62 = vld [vmem:[%s0 + $0xbc] sm:$0xf]
  %v63 = vld [vmem:[%s0 + $0xc0] sm:$0xf]
  %v64 = vld [vmem:[%s0 + $0xc4] sm:$0xf]
  %v65 = vld [vmem:[%s0 + $0xc8] sm:$0xf]
  %v66 = vld [vmem:[%s0 + $0xcc] sm:$0xf]
  %v67 = vld [vmem:[%s0 + $0xd0] sm:$0xf]
  %v68 = vld [vmem:[%s0 + $0xd4] sm:$0xf]
  %v69 = vld [vmem:[%s0 + $0xd8] sm:$0xf]
  %v70 = vld [vmem:[%s0 + $0xdc] sm:$0xf]
  %v71 = vld [vmem:[%s0 + $0xe0] sm:$0xf]
  %v72 = vld [vmem:[%s0 + $0xe4] sm:$0xf]
  %v73 = vld [vmem:[%s0 + $0xe8] sm:$0xf]
  %v74 = vld [vmem:[%s0 + $0xec] sm:$0xf]
  %v75 = vld [vmem:[%s0 + $0xf0] sm:$0xf]
  %v76 = vld [vmem:[%s0 + $0xf4] sm:$0xf]
  %v77 = vld [vmem:[%s0 + $0xf8] sm:$0xf]
  %v78 = vld [vmem:[%s0 + $0xfc] sm:$0xf]
  %v79 = vld [vmem:[%s1] sm:$0xf]
  %v80 = vld [vmem:[%s1 + $0x4] sm:$0xf]
  %v81 = vld [vmem:[%s2] sm:$0x1]
  %v83 = vperm.slane %v81, 0
  %v149 = vunpack.c.l.b16 %v15
  %v150 = vunpack.c.l.b16 %v16
  %v151 = vunpack.c.l.b16 %v17
  %v152 = vunpack.c.l.b16 %v18
  %v153 = vunpack.c.l.b16 %v19
  %v154 = vunpack.c.l.b16 %v20
  %v155 = vunpack.c.l.b16 %v21
  %v156 = vunpack.c.l.b16 %v22
  %v157 = vunpack.c.l.b16 %v23
  %v158 = vunpack.c.l.b16 %v24
  %v159 = vunpack.c.l.b16 %v25
  %v160 = vunpack.c.l.b16 %v26
  %v161 = vunpack.c.l.b16 %v27
  %v162 = vunpack.c.l.b16 %v28
  %v163 = vunpack.c.l.b16 %v29
  %v164 = vunpack.c.l.b16 %v30
  %v165 = vunpack.c.l.b16 %v31
  %v166 = vunpack.c.l.b16 %v32
  %v167 = vunpack.c.l.b16 %v33
  %v168 = vunpack.c.l.b16 %v34
  %v169 = vunpack.c.l.b16 %v35
  %v170 = vunpack.c.l.b16 %v36
  %v171 = vunpack.c.l.b16 %v37
  %v172 = vunpack.c.l.b16 %v38
  %v173 = vunpack.c.l.b16 %v39
  %v174 = vunpack.c.l.b16 %v40
  %v175 = vunpack.c.l.b16 %v41
  %v176 = vunpack.c.l.b16 %v42
  %v177 = vunpack.c.l.b16 %v43
  %v178 = vunpack.c.l.b16 %v44
  %v179 = vunpack.c.l.b16 %v45
  %v180 = vunpack.c.l.b16 %v46
  %v181 = vunpack.c.l.b16 %v47
  %v182 = vunpack.c.l.b16 %v48
  %v183 = vunpack.c.l.b16 %v49
  %v184 = vunpack.c.l.b16 %v50
  %v185 = vunpack.c.l.b16 %v51
  %v186 = vunpack.c.l.b16 %v52
  %v187 = vunpack.c.l.b16 %v53
  %v188 = vunpack.c.l.b16 %v54
  %v189 = vunpack.c.l.b16 %v55
  %v190 = vunpack.c.l.b16 %v56
  %v191 = vunpack.c.l.b16 %v57
  %v192 = vunpack.c.l.b16 %v58
  %v193 = vunpack.c.l.b16 %v59
  %v194 = vunpack.c.l.b16 %v60
  %v195 = vunpack.c.l.b16 %v61
  %v196 = vunpack.c.l.b16 %v62
  %v197 = vunpack.c.l.b16 %v63
  %v198 = vunpack.c.l.b16 %v64
  %v199 = vunpack.c.l.b16 %v65
  %v200 = vunpack.c.l.b16 %v66
  %v201 = vunpack.c.l.b16 %v67
  %v202 = vunpack.c.l.b16 %v68
  %v203 = vunpack.c.l.b16 %v69
  %v204 = vunpack.c.l.b16 %v70
  %v205 = vunpack.c.l.b16 %v71
  %v206 = vunpack.c.l.b16 %v72
  %v207 = vunpack.c.l.b16 %v73
  %v208 = vunpack.c.l.b16 %v74
  %v209 = vunpack.c.l.b16 %v75
  %v210 = vunpack.c.l.b16 %v76
  %v211 = vunpack.c.l.b16 %v77
  %v212 = vunpack.c.l.b16 %v78
  %v213 = vpack.c.b16 %v150, %v149
  %v214 = vpack.c.b16 %v152, %v151
  %v215 = vpack.c.b16 %v154, %v153
  %v216 = vpack.c.b16 %v156, %v155
  %v217 = vpack.c.b16 %v158, %v157
  %v218 = vpack.c.b16 %v160, %v159
  %v219 = vpack.c.b16 %v162, %v161
  %v220 = vpack.c.b16 %v164, %v163
  %v221 = vpack.c.b16 %v166, %v165
  %v222 = vpack.c.b16 %v168, %v167
  %v223 = vpack.c.b16 %v170, %v169
  %v224 = vpack.c.b16 %v172, %v171
  %v225 = vpack.c.b16 %v174, %v173
  %v226 = vpack.c.b16 %v176, %v175
  %v227 = vpack.c.b16 %v178, %v177
  %v228 = vpack.c.b16 %v180, %v179
  %v229 = vpack.c.b16 %v182, %v181
  %v230 = vpack.c.b16 %v184, %v183
  %v231 = vpack.c.b16 %v186, %v185
  %v232 = vpack.c.b16 %v188, %v187
  %v233 = vpack.c.b16 %v190, %v189
  %v234 = vpack.c.b16 %v192, %v191
  %v235 = vpack.c.b16 %v194, %v193
  %v236 = vpack.c.b16 %v196, %v195
  %v237 = vpack.c.b16 %v198, %v197
  %v238 = vpack.c.b16 %v200, %v199
  %v239 = vpack.c.b16 %v202, %v201
  %v240 = vpack.c.b16 %v204, %v203
  %v241 = vpack.c.b16 %v206, %v205
  %v242 = vpack.c.b16 %v208, %v207
  %v243 = vpack.c.b16 %v210, %v209
  %v244 = vpack.c.b16 %v212, %v211
  %v247 = vunpack.c.l.b16 %v79
  %v248 = vunpack.c.l.b16 %v80
  %v249 = vpack.c.b16 %v248, %v247
  %vm251 = vcmask 130048
  %v253 = vsel %vm251, %v213, 0
  %v256 = vsel %vm251, %v214, 0
  %v259 = vsel %vm251, %v215, 0
  %v262 = vsel %vm251, %v216, 0
  %v265 = vsel %vm251, %v217, 0
  %v268 = vsel %vm251, %v218, 0
  %v271 = vsel %vm251, %v219, 0
  %v274 = vsel %vm251, %v220, 0
  %v277 = vsel %vm251, %v221, 0
  %v280 = vsel %vm251, %v222, 0
  %v283 = vsel %vm251, %v223, 0
  %v286 = vsel %vm251, %v224, 0
  %v289 = vsel %vm251, %v225, 0
  %v292 = vsel %vm251, %v226, 0
  %v295 = vsel %vm251, %v227, 0
  %v298 = vsel %vm251, %v228, 0
  %v301 = vsel %vm251, %v229, 0
  %v304 = vsel %vm251, %v230, 0
  %v307 = vsel %vm251, %v231, 0
  %v310 = vsel %vm251, %v232, 0
  %v313 = vsel %vm251, %v233, 0
  %v316 = vsel %vm251, %v234, 0
  %v319 = vsel %vm251, %v235, 0
  %v322 = vsel %vm251, %v236, 0
  %v325 = vsel %vm251, %v237, 0
  %v328 = vsel %vm251, %v238, 0
  %v331 = vsel %vm251, %v239, 0
  %v334 = vsel %vm251, %v240, 0
  %v337 = vsel %vm251, %v241, 0
  %v340 = vsel %vm251, %v242, 0
  %v343 = vsel %vm251, %v243, 0
  %v346 = vsel %vm251, %v244, 0
  %348 = vmatpush.bf16.msra.mxu0 0
  %349 = vmatpush.bf16.msra.mxu0 0
  %350 = vmatpush.bf16.msra.mxu0 0
  %351 = vmatpush.bf16.msra.mxu0 0
  %352 = vmatpush.bf16.msra.mxu0 0
  %353 = vmatpush.bf16.msra.mxu0 0
  %354 = vmatpush.bf16.msra.mxu0 0
  %355 = vmatpush.bf16.msra.mxu0 %v249
  %356 = vmatmul.bf16.gmra.mxu0 %v253
  %v357 = vpop.f32.mrf.mxu0
  %v358 = vadd.f32 %v83, %v357
  %v359 = vpop.f32.mrf.mxu0
  %v360 = vadd.f32 %v83, %v359
  %361 = vmatmul.bf16.gmra.mxu0 %v256
  %v362 = vpop.f32.mrf.mxu0
  %v363 = vadd.f32 %v83, %v362
  %v364 = vpop.f32.mrf.mxu0
  %v365 = vadd.f32 %v83, %v364
  %366 = vmatmul.bf16.gmra.mxu0 %v259
  %v367 = vpop.f32.mrf.mxu0
  %v368 = vadd.f32 %v83, %v367
  %v369 = vpop.f32.mrf.mxu0
  %v370 = vadd.f32 %v83, %v369
  %371 = vmatmul.bf16.gmra.mxu0 %v262
  %v372 = vpop.f32.mrf.mxu0
  %v373 = vadd.f32 %v83, %v372
  %v374 = vpop.f32.mrf.mxu0
  %v375 = vadd.f32 %v83, %v374
  %376 = vmatmul.bf16.gmra.mxu0 %v265
  %v377 = vpop.f32.mrf.mxu0
  %v378 = vadd.f32 %v83, %v377
  %v379 = vpop.f32.mrf.mxu0
  %v380 = vadd.f32 %v83, %v379
  %381 = vmatmul.bf16.gmra.mxu0 %v268
  %v382 = vpop.f32.mrf.mxu0
  %v383 = vadd.f32 %v83, %v382
  %v384 = vpop.f32.mrf.mxu0
  %v385 = vadd.f32 %v83, %v384
  %386 = vmatmul.bf16.gmra.mxu0 %v271
  %v387 = vpop.f32.mrf.mxu0
  %v388 = vadd.f32 %v83, %v387
  %v389 = vpop.f32.mrf.mxu0
  %v390 = vadd.f32 %v83, %v389
  %391 = vmatmul.bf16.gmra.mxu0 %v274
  %v392 = vpop.f32.mrf.mxu0
  %v393 = vadd.f32 %v83, %v392
  %v394 = vpop.f32.mrf.mxu0
  %v395 = vadd.f32 %v83, %v394
  %396 = vmatmul.bf16.gmra.mxu0 %v277
  %v397 = vpop.f32.mrf.mxu0
  %v398 = vadd.f32 %v83, %v397
  %v399 = vpop.f32.mrf.mxu0
  %v400 = vadd.f32 %v83, %v399
  %401 = vmatmul.bf16.gmra.mxu0 %v280
  %v402 = vpop.f32.mrf.mxu0
  %v403 = vadd.f32 %v83, %v402
  %v404 = vpop.f32.mrf.mxu0
  %v405 = vadd.f32 %v83, %v404
  %406 = vmatmul.bf16.gmra.mxu0 %v283
  %v407 = vpop.f32.mrf.mxu0
  %v408 = vadd.f32 %v83, %v407
  %v409 = vpop.f32.mrf.mxu0
  %v410 = vadd.f32 %v83, %v409
  %411 = vmatmul.bf16.gmra.mxu0 %v286
  %v412 = vpop.f32.mrf.mxu0
  %v413 = vadd.f32 %v83, %v412
  %v414 = vpop.f32.mrf.mxu0
  %v415 = vadd.f32 %v83, %v414
  %416 = vmatmul.bf16.gmra.mxu0 %v289
  %v417 = vpop.f32.mrf.mxu0
  %v418 = vadd.f32 %v83, %v417
  %v419 = vpop.f32.mrf.mxu0
  %v420 = vadd.f32 %v83, %v419
  %421 = vmatmul.bf16.gmra.mxu0 %v292
  %v422 = vpop.f32.mrf.mxu0
  %v423 = vadd.f32 %v83, %v422
  %v424 = vpop.f32.mrf.mxu0
  %v425 = vadd.f32 %v83, %v424
  %426 = vmatmul.bf16.gmra.mxu0 %v295
  %v427 = vpop.f32.mrf.mxu0
  %v428 = vadd.f32 %v83, %v427
  %v429 = vpop.f32.mrf.mxu0
  %v430 = vadd.f32 %v83, %v429
  %431 = vmatmul.bf16.gmra.mxu0 %v298
  %v432 = vpop.f32.mrf.mxu0
  %v433 = vadd.f32 %v83, %v432
  %v434 = vpop.f32.mrf.mxu0
  %v435 = vadd.f32 %v83, %v434
  %436 = vmatmul.bf16.gmra.mxu0 %v301
  %v437 = vpop.f32.mrf.mxu0
  %v438 = vadd.f32 %v83, %v437
  %v439 = vpop.f32.mrf.mxu0
  %v440 = vadd.f32 %v83, %v439
  %441 = vmatmul.bf16.gmra.mxu0 %v304
  %v442 = vpop.f32.mrf.mxu0
  %v443 = vadd.f32 %v83, %v442
  %v444 = vpop.f32.mrf.mxu0
  %v445 = vadd.f32 %v83, %v444
  %446 = vmatmul.bf16.gmra.mxu0 %v307
  %v447 = vpop.f32.mrf.mxu0
  %v448 = vadd.f32 %v83, %v447
  %v449 = vpop.f32.mrf.mxu0
  %v450 = vadd.f32 %v83, %v449
  %451 = vmatmul.bf16.gmra.mxu0 %v310
  %v452 = vpop.f32.mrf.mxu0
  %v453 = vadd.f32 %v83, %v452
  %v454 = vpop.f32.mrf.mxu0
  %v455 = vadd.f32 %v83, %v454
  %456 = vmatmul.bf16.gmra.mxu0 %v313
  %v457 = vpop.f32.mrf.mxu0
  %v458 = vadd.f32 %v83, %v457
  %v459 = vpop.f32.mrf.mxu0
  %v460 = vadd.f32 %v83, %v459
  %461 = vmatmul.bf16.gmra.mxu0 %v316
  %v462 = vpop.f32.mrf.mxu0
  %v463 = vadd.f32 %v83, %v462
  %v464 = vpop.f32.mrf.mxu0
  %v465 = vadd.f32 %v83, %v464
  %466 = vmatmul.bf16.gmra.mxu0 %v319
  %v467 = vpop.f32.mrf.mxu0
  %v468 = vadd.f32 %v83, %v467
  %v469 = vpop.f32.mrf.mxu0
  %v470 = vadd.f32 %v83, %v469
  %471 = vmatmul.bf16.gmra.mxu0 %v322
  %v472 = vpop.f32.mrf.mxu0
  %v473 = vadd.f32 %v83, %v472
  %v474 = vpop.f32.mrf.mxu0
  %v475 = vadd.f32 %v83, %v474
  %476 = vmatmul.bf16.gmra.mxu0 %v325
  %v477 = vpop.f32.mrf.mxu0
  %v478 = vadd.f32 %v83, %v477
  %v479 = vpop.f32.mrf.mxu0
  %v480 = vadd.f32 %v83, %v479
  %481 = vmatmul.bf16.gmra.mxu0 %v328
  %v482 = vpop.f32.mrf.mxu0
  %v483 = vadd.f32 %v83, %v482
  %v484 = vpop.f32.mrf.mxu0
  %v485 = vadd.f32 %v83, %v484
  %486 = vmatmul.bf16.gmra.mxu0 %v331
  %v487 = vpop.f32.mrf.mxu0
  %v488 = vadd.f32 %v83, %v487
  %v489 = vpop.f32.mrf.mxu0
  %v490 = vadd.f32 %v83, %v489
  %491 = vmatmul.bf16.gmra.mxu0 %v334
  %v492 = vpop.f32.mrf.mxu0
  %v493 = vadd.f32 %v83, %v492
  %v494 = vpop.f32.mrf.mxu0
  %v495 = vadd.f32 %v83, %v494
  %496 = vmatmul.bf16.gmra.mxu0 %v337
  %v497 = vpop.f32.mrf.mxu0
  %v498 = vadd.f32 %v83, %v497
  %v499 = vpop.f32.mrf.mxu0
  %v500 = vadd.f32 %v83, %v499
  %501 = vmatmul.bf16.gmra.mxu0 %v340
  %v502 = vpop.f32.mrf.mxu0
  %v503 = vadd.f32 %v83, %v502
  %v504 = vpop.f32.mrf.mxu0
  %v505 = vadd.f32 %v83, %v504
  %506 = vmatmul.bf16.gmra.mxu0 %v343
  %v507 = vpop.f32.mrf.mxu0
  %v508 = vadd.f32 %v83, %v507
  %v509 = vpop.f32.mrf.mxu0
  %v510 = vadd.f32 %v83, %v509
  %511 = vmatmul.bf16.gmra.mxu0 %v346
  %v512 = vpop.f32.mrf.mxu0
  %v513 = vadd.f32 %v83, %v512
  %v514 = vpop.f32.mrf.mxu0
  %v515 = vadd.f32 %v83, %v514
  %516 = vdwg.mxu0
  %v517 = vmax.f32 %v358, 0.0
  %v518 = vmax.f32 %v360, 0.0
  %v519 = vmax.f32 %v363, 0.0
  %v520 = vmax.f32 %v365, 0.0
  %v521 = vmax.f32 %v368, 0.0
  %v522 = vmax.f32 %v370, 0.0
  %v523 = vmax.f32 %v373, 0.0
  %v524 = vmax.f32 %v375, 0.0
  %v525 = vmax.f32 %v378, 0.0
  %v526 = vmax.f32 %v380, 0.0
  %v527 = vmax.f32 %v383, 0.0
  %v528 = vmax.f32 %v385, 0.0
  %v529 = vmax.f32 %v388, 0.0
  %v530 = vmax.f32 %v390, 0.0
  %v531 = vmax.f32 %v393, 0.0
  %v532 = vmax.f32 %v395, 0.0
  %v533 = vmax.f32 %v398, 0.0
  %v534 = vmax.f32 %v400, 0.0
  %v535 = vmax.f32 %v403, 0.0
  %v536 = vmax.f32 %v405, 0.0
  %v537 = vmax.f32 %v408, 0.0
  %v538 = vmax.f32 %v410, 0.0
  %v539 = vmax.f32 %v413, 0.0
  %v540 = vmax.f32 %v415, 0.0
  %v541 = vmax.f32 %v418, 0.0
  %v542 = vmax.f32 %v420, 0.0
  %v543 = vmax.f32 %v423, 0.0
  %v544 = vmax.f32 %v425, 0.0
  %v545 = vmax.f32 %v428, 0.0
  %v546 = vmax.f32 %v430, 0.0
  %v547 = vmax.f32 %v433, 0.0
  %v548 = vmax.f32 %v435, 0.0
  %v549 = vmax.f32 %v438, 0.0
  %v550 = vmax.f32 %v440, 0.0
  %v551 = vmax.f32 %v443, 0.0
  %v552 = vmax.f32 %v445, 0.0
  %v553 = vmax.f32 %v448, 0.0
  %v554 = vmax.f32 %v450, 0.0
  %v555 = vmax.f32 %v453, 0.0
  %v556 = vmax.f32 %v455, 0.0
  %v557 = vmax.f32 %v458, 0.0
  %v558 = vmax.f32 %v460, 0.0
  %v559 = vmax.f32 %v463, 0.0
  %v560 = vmax.f32 %v465, 0.0
  %v561 = vmax.f32 %v468, 0.0
  %v562 = vmax.f32 %v470, 0.0
  %v563 = vmax.f32 %v473, 0.0
  %v564 = vmax.f32 %v475, 0.0
  %v565 = vmax.f32 %v478, 0.0
  %v566 = vmax.f32 %v480, 0.0
  %v567 = vmax.f32 %v483, 0.0
  %v568 = vmax.f32 %v485, 0.0
  %v569 = vmax.f32 %v488, 0.0
  %v570 = vmax.f32 %v490, 0.0
  %v571 = vmax.f32 %v493, 0.0
  %v572 = vmax.f32 %v495, 0.0
  %v573 = vmax.f32 %v498, 0.0
  %v574 = vmax.f32 %v500, 0.0
  %v575 = vmax.f32 %v503, 0.0
  %v576 = vmax.f32 %v505, 0.0
  %v577 = vmax.f32 %v508, 0.0
  %v578 = vmax.f32 %v510, 0.0
  %v579 = vmax.f32 %v513, 0.0
  %v580 = vmax.f32 %v515, 0.0
  %vm581 = vcmask 261120
  %582 = vst.msk [vmem:[%s3] sm:$0xff] %vm581, %v517
  %583 = vst.msk [vmem:[%s3 + $0x8] sm:$0xff] %vm581, %v518
  %584 = vst.msk [vmem:[%s3 + $0x10] sm:$0xff] %vm581, %v519
  %585 = vst.msk [vmem:[%s3 + $0x18] sm:$0xff] %vm581, %v520
  %586 = vst.msk [vmem:[%s3 + $0x20] sm:$0xff] %vm581, %v521
  %587 = vst.msk [vmem:[%s3 + $0x28] sm:$0xff] %vm581, %v522
  %588 = vst.msk [vmem:[%s3 + $0x30] sm:$0xff] %vm581, %v523
  %589 = vst.msk [vmem:[%s3 + $0x38] sm:$0xff] %vm581, %v524
  %590 = vst.msk [vmem:[%s3 + $0x40] sm:$0xff] %vm581, %v525
  %591 = vst.msk [vmem:[%s3 + $0x48] sm:$0xff] %vm581, %v526
  %592 = vst.msk [vmem:[%s3 + $0x50] sm:$0xff] %vm581, %v527
  %593 = vst.msk [vmem:[%s3 + $0x58] sm:$0xff] %vm581, %v528
  %594 = vst.msk [vmem:[%s3 + $0x60] sm:$0xff] %vm581, %v529
  %595 = vst.msk [vmem:[%s3 + $0x68] sm:$0xff] %vm581, %v530
  %596 = vst.msk [vmem:[%s3 + $0x70] sm:$0xff] %vm581, %v531
  %597 = vst.msk [vmem:[%s3 + $0x78] sm:$0xff] %vm581, %v532
  %598 = vst.msk [vmem:[%s3 + $0x80] sm:$0xff] %vm581, %v533
  %599 = vst.msk [vmem:[%s3 + $0x88] sm:$0xff] %vm581, %v534
  %600 = vst.msk [vmem:[%s3 + $0x90] sm:$0xff] %vm581, %v535
  %601 = vst.msk [vmem:[%s3 + $0x98] sm:$0xff] %vm581, %v536
  %602 = vst.msk [vmem:[%s3 + $0xa0] sm:$0xff] %vm581, %v537
  %603 = vst.msk [vmem:[%s3 + $0xa8] sm:$0xff] %vm581, %v538
  %604 = vst.msk [vmem:[%s3 + $0xb0] sm:$0xff] %vm581, %v539
  %605 = vst.msk [vmem:[%s3 + $0xb8] sm:$0xff] %vm581, %v540
  %606 = vst.msk [vmem:[%s3 + $0xc0] sm:$0xff] %vm581, %v541
  %607 = vst.msk [vmem:[%s3 + $0xc8] sm:$0xff] %vm581, %v542
  %608 = vst.msk [vmem:[%s3 + $0xd0] sm:$0xff] %vm581, %v543
  %609 = vst.msk [vmem:[%s3 + $0xd8] sm:$0xff] %vm581, %v544
  %610 = vst.msk [vmem:[%s3 + $0xe0] sm:$0xff] %vm581, %v545
  %611 = vst.msk [vmem:[%s3 + $0xe8] sm:$0xff] %vm581, %v546
  %612 = vst.msk [vmem:[%s3 + $0xf0] sm:$0xff] %vm581, %v547
  %613 = vst.msk [vmem:[%s3 + $0xf8] sm:$0xff] %vm581, %v548
  %614 = vst.msk [vmem:[%s3 + $0x100] sm:$0xff] %vm581, %v549
  %615 = vst.msk [vmem:[%s3 + $0x108] sm:$0xff] %vm581, %v550
  %616 = vst.msk [vmem:[%s3 + $0x110] sm:$0xff] %vm581, %v551
  %617 = vst.msk [vmem:[%s3 + $0x118] sm:$0xff] %vm581, %v552
  %618 = vst.msk [vmem:[%s3 + $0x120] sm:$0xff] %vm581, %v553
  %619 = vst.msk [vmem:[%s3 + $0x128] sm:$0xff] %vm581, %v554
  %620 = vst.msk [vmem:[%s3 + $0x130] sm:$0xff] %vm581, %v555
  %621 = vst.msk [vmem:[%s3 + $0x138] sm:$0xff] %vm581, %v556
  %622 = vst.msk [vmem:[%s3 + $0x140] sm:$0xff] %vm581, %v557
  %623 = vst.msk [vmem:[%s3 + $0x148] sm:$0xff] %vm581, %v558
  %624 = vst.msk [vmem:[%s3 + $0x150] sm:$0xff] %vm581, %v559
  %625 = vst.msk [vmem:[%s3 + $0x158] sm:$0xff] %vm581, %v560
  %626 = vst.msk [vmem:[%s3 + $0x160] sm:$0xff] %vm581, %v561
  %627 = vst.msk [vmem:[%s3 + $0x168] sm:$0xff] %vm581, %v562
  %628 = vst.msk [vmem:[%s3 + $0x170] sm:$0xff] %vm581, %v563
  %629 = vst.msk [vmem:[%s3 + $0x178] sm:$0xff] %vm581, %v564
  %630 = vst.msk [vmem:[%s3 + $0x180] sm:$0xff] %vm581, %v565
  %631 = vst.msk [vmem:[%s3 + $0x188] sm:$0xff] %vm581, %v566
  %632 = vst.msk [vmem:[%s3 + $0x190] sm:$0xff] %vm581, %v567
  %633 = vst.msk [vmem:[%s3 + $0x198] sm:$0xff] %vm581, %v568
  %634 = vst.msk [vmem:[%s3 + $0x1a0] sm:$0xff] %vm581, %v569
  %635 = vst.msk [vmem:[%s3 + $0x1a8] sm:$0xff] %vm581, %v570
  %636 = vst.msk [vmem:[%s3 + $0x1b0] sm:$0xff] %vm581, %v571
  %637 = vst.msk [vmem:[%s3 + $0x1b8] sm:$0xff] %vm581, %v572
  %638 = vst.msk [vmem:[%s3 + $0x1c0] sm:$0xff] %vm581, %v573
  %639 = vst.msk [vmem:[%s3 + $0x1c8] sm:$0xff] %vm581, %v574
  %640 = vst.msk [vmem:[%s3 + $0x1d0] sm:$0xff] %vm581, %v575
  %641 = vst.msk [vmem:[%s3 + $0x1d8] sm:$0xff] %vm581, %v576
  %642 = vst.msk [vmem:[%s3 + $0x1e0] sm:$0xff] %vm581, %v577
  %643 = vst.msk [vmem:[%s3 + $0x1e8] sm:$0xff] %vm581, %v578
  %644 = vst.msk [vmem:[%s3 + $0x1f0] sm:$0xff] %vm581, %v579
  %645 = vst.msk [vmem:[%s3 + $0x1f8] sm:$0xff] %vm581, %v580
  // Predicated region
  $region14: #{_lambda_.12} parent=0 // pred_check
    _
  $region15: #{_lambda_.12} parent=0 // pred_check_branch
    %647 = sbr.rel (0) target = $region17
  $region16: #{_lambda_.12} parent=0 // pred_region
    _
  $region17: #{_lambda_.12} parent=0 // pred_fallthru
    _
  // Predicated region
  $region18: #{_lambda_.12} parent=0 // pred_check
    _
  $region19: #{_lambda_.12} parent=0 // pred_check_branch
    %649 = sbr.rel (0) target = $region21
  $region20: #{_lambda_.12} parent=0 // pred_region
    _
  $region21: #{_lambda_.12} parent=0 // pred_fallthru
    _

// kernel: _lambda_.16
$region0: #{_lambda_.16}
  #allocation0 [shape = 'u32[]', space=smem, size = 0x4, offset = 0x4, fixed_abs, tag = 'smem constant byte address 0x4 - core index']
  #allocation1 [shape = 'u32[72,128]{1,0:T(1,128)}', space=vmem, size = 0x9000, scoped, tag = 'internal scratch']
  %s0 = inlined_call_operand.vmem [shape: bf16[512,288], index: 0, kind: input, shape index: {}]
  %s1 = inlined_call_operand.vmem [shape: bf16[288,32], index: 1, kind: input, shape index: {}]
  %s2 = inlined_call_operand.vmem [shape: f32[1,32], index: 2, kind: input, shape index: {}]
  %s3 = inlined_call_operand.vmem [shape: f32[512,32], index: 3, kind: output, shape index: {}]
  %s4 = sld [smem:[#allocation0]]
  $region22: #{_lambda_.16} parent=0
    _
  %s6 = ssub.s32 1, %s4
  %s7 = scalar_select 0, %s6, %s4
  // Predicated region
  $region2: #{_lambda_.16} parent=0 // pred_check
    _
  $region3: #{_lambda_.16} parent=0 // pred_check_branch
    %9 = sbr.rel (0) target = $region5
  $region4: #{_lambda_.16} parent=0 // pred_region
    _
  $region5: #{_lambda_.16} parent=0 // pred_fallthru
    _
  // Predicated region
  $region6: #{_lambda_.16} parent=0 // pred_check
    _
  $region7: #{_lambda_.16} parent=0 // pred_check_branch
    %11 = sbr.rel (0) target = $region9
  $region8: #{_lambda_.16} parent=0 // pred_region
    _
  $region9: #{_lambda_.16} parent=0 // pred_fallthru
    _
  // Predicated region
  $region10: #{_lambda_.16} parent=0 // pred_check
    _
  $region11: #{_lambda_.16} parent=0 // pred_check_branch
    %13 = sbr.rel (0) target = $region13
  $region12: #{_lambda_.16} parent=0 // pred_region
    _
  $region13: #{_lambda_.16} parent=0 // pred_fallthru
    _
  %v15 = vld [vmem:[%s0] sm:$0xff]
  %v16 = vld [vmem:[%s0 + $0x8] sm:$0xf]
  %v17 = vld [vmem:[%s0 + $0xc] sm:$0xff]
  %v18 = vld [vmem:[%s0 + $0x14] sm:$0xf]
  %v19 = vld [vmem:[%s0 + $0x18] sm:$0xff]
  %v20 = vld [vmem:[%s0 + $0x20] sm:$0xf]
  %v21 = vld [vmem:[%s0 + $0x24] sm:$0xff]
  %v22 = vld [vmem:[%s0 + $0x2c] sm:$0xf]
  %v23 = vld [vmem:[%s0 + $0x30] sm:$0xff]
  %v24 = vld [vmem:[%s0 + $0x38] sm:$0xf]
  %v25 = vld [vmem:[%s0 + $0x3c] sm:$0xff]
  %v26 = vld [vmem:[%s0 + $0x44] sm:$0xf]
  %v27 = vld [vmem:[%s0 + $0x48] sm:$0xff]
  %v28 = vld [vmem:[%s0 + $0x50] sm:$0xf]
  %v29 = vld [vmem:[%s0 + $0x54] sm:$0xff]
  %v30 = vld [vmem:[%s0 + $0x5c] sm:$0xf]
  %v31 = vld [vmem:[%s0 + $0x60] sm:$0xff]
  %v32 = vld [vmem:[%s0 + $0x68] sm:$0xf]
  %v33 = vld [vmem:[%s0 + $0x6c] sm:$0xff]
  %v34 = vld [vmem:[%s0 + $0x74] sm:$0xf]
  %v35 = vld [vmem:[%s0 + $0x78] sm:$0xff]
  %v36 = vld [vmem:[%s0 + $0x80] sm:$0xf]
  %v37 = vld [vmem:[%s0 + $0x84] sm:$0xff]
  %v38 = vld [vmem:[%s0 + $0x8c] sm:$0xf]
  %v39 = vld [vmem:[%s0 + $0x90] sm:$0xff]
  %v40 = vld [vmem:[%s0 + $0x98] sm:$0xf]
  %v41 = vld [vmem:[%s0 + $0x9c] sm:$0xff]
  %v42 = vld [vmem:[%s0 + $0xa4] sm:$0xf]
  %v43 = vld [vmem:[%s0 + $0xa8] sm:$0xff]
  %v44 = vld [vmem:[%s0 + $0xb0] sm:$0xf]
  %v45 = vld [vmem:[%s0 + $0xb4] sm:$0xff]
  %v46 = vld [vmem:[%s0 + $0xbc] sm:$0xf]
  %v47 = vld [vmem:[%s0 + $0xc0] sm:$0xff]
  %v48 = vld [vmem:[%s0 + $0xc8] sm:$0xf]
  %v49 = vld [vmem:[%s0 + $0xcc] sm:$0xff]
  %v50 = vld [vmem:[%s0 + $0xd4] sm:$0xf]
  %v51 = vld [vmem:[%s0 + $0xd8] sm:$0xff]
  %v52 = vld [vmem:[%s0 + $0xe0] sm:$0xf]
  %v53 = vld [vmem:[%s0 + $0xe4] sm:$0xff]
  %v54 = vld [vmem:[%s0 + $0xec] sm:$0xf]
  %v55 = vld [vmem:[%s0 + $0xf0] sm:$0xff]
  %v56 = vld [vmem:[%s0 + $0xf8] sm:$0xf]
  %v57 = vld [vmem:[%s0 + $0xfc] sm:$0xff]
  %v58 = vld [vmem:[%s0 + $0x104] sm:$0xf]
  %v59 = vld [vmem:[%s0 + $0x108] sm:$0xff]
  %v60 = vld [vmem:[%s0 + $0x110] sm:$0xf]
  %v61 = vld [vmem:[%s0 + $0x114] sm:$0xff]
  %v62 = vld [vmem:[%s0 + $0x11c] sm:$0xf]
  %v63 = vld [vmem:[%s0 + $0x120] sm:$0xff]
  %v64 = vld [vmem:[%s0 + $0x128] sm:$0xf]
  %v65 = vld [vmem:[%s0 + $0x12c] sm:$0xff]
  %v66 = vld [vmem:[%s0 + $0x134] sm:$0xf]
  %v67 = vld [vmem:[%s0 + $0x138] sm:$0xff]
  %v68 = vld [vmem:[%s0 + $0x140] sm:$0xf]
  %v69 = vld [vmem:[%s0 + $0x144] sm:$0xff]
  %v70 = vld [vmem:[%s0 + $0x14c] sm:$0xf]
  %v71 = vld [vmem:[%s0 + $0x150] sm:$0xff]
  %v72 = vld [vmem:[%s0 + $0x158] sm:$0xf]
  %v73 = vld [vmem:[%s0 + $0x15c] sm:$0xff]
  %v74 = vld [vmem:[%s0 + $0x164] sm:$0xf]
  %v75 = vld [vmem:[%s0 + $0x168] sm:$0xff]
  %v76 = vld [vmem:[%s0 + $0x170] sm:$0xf]
  %v77 = vld [vmem:[%s0 + $0x174] sm:$0xff]
  %v78 = vld [vmem:[%s0 + $0x17c] sm:$0xf]
  %v79 = vld [vmem:[%s0 + $0x180] sm:$0xff]
  %v80 = vld [vmem:[%s0 + $0x188] sm:$0xf]
  %v81 = vld [vmem:[%s0 + $0x18c] sm:$0xff]
  %v82 = vld [vmem:[%s0 + $0x194] sm:$0xf]
  %v83 = vld [vmem:[%s0 + $0x198] sm:$0xff]
  %v84 = vld [vmem:[%s0 + $0x1a0] sm:$0xf]
  %v85 = vld [vmem:[%s0 + $0x1a4] sm:$0xff]
  %v86 = vld [vmem:[%s0 + $0x1ac] sm:$0xf]
  %v87 = vld [vmem:[%s0 + $0x1b0] sm:$0xff]
  %v88 = vld [vmem:[%s0 + $0x1b8] sm:$0xf]
  %v89 = vld [vmem:[%s0 + $0x1bc] sm:$0xff]
  %v90 = vld [vmem:[%s0 + $0x1c4] sm:$0xf]
  %v91 = vld [vmem:[%s0 + $0x1c8] sm:$0xff]
  %v92 = vld [vmem:[%s0 + $0x1d0] sm:$0xf]
  %v93 = vld [vmem:[%s0 + $0x1d4] sm:$0xff]
  %v94 = vld [vmem:[%s0 + $0x1dc] sm:$0xf]
  %v95 = vld [vmem:[%s0 + $0x1e0] sm:$0xff]
  %v96 = vld [vmem:[%s0 + $0x1e8] sm:$0xf]
  %v97 = vld [vmem:[%s0 + $0x1ec] sm:$0xff]
  %v98 = vld [vmem:[%s0 + $0x1f4] sm:$0xf]
  %v99 = vld [vmem:[%s0 + $0x1f8] sm:$0xff]
  %v100 = vld [vmem:[%s0 + $0x200] sm:$0xf]
  %v101 = vld [vmem:[%s0 + $0x204] sm:$0xff]
  %v102 = vld [vmem:[%s0 + $0x20c] sm:$0xf]
  %v103 = vld [vmem:[%s0 + $0x210] sm:$0xff]
  %v104 = vld [vmem:[%s0 + $0x218] sm:$0xf]
  %v105 = vld [vmem:[%s0 + $0x21c] sm:$0xff]
  %v106 = vld [vmem:[%s0 + $0x224] sm:$0xf]
  %v107 = vld [vmem:[%s0 + $0x228] sm:$0xff]
  %v108 = vld [vmem:[%s0 + $0x230] sm:$0xf]
  %v109 = vld [vmem:[%s0 + $0x234] sm:$0xff]
  %v110 = vld [vmem:[%s0 + $0x23c] sm:$0xf]
  %v111 = vld [vmem:[%s0 + $0x240] sm:$0xff]
  %v112 = vld [vmem:[%s0 + $0x248] sm:$0xf]
  %v113 = vld [vmem:[%s0 + $0x24c] sm:$0xff]
  %v114 = vld [vmem:[%s0 + $0x254] sm:$0xf]
  %v115 = vld [vmem:[%s0 + $0x258] sm:$0xff]
  %v116 = vld [vmem:[%s0 + $0x260] sm:$0xf]
  %v117 = vld [vmem:[%s0 + $0x264] sm:$0xff]
  %v118 = vld [vmem:[%s0 + $0x26c] sm:$0xf]
  %v119 = vld [vmem:[%s0 + $0x270] sm:$0xff]
  %v120 = vld [vmem:[%s0 + $0x278] sm:$0xf]
  %v121 = vld [vmem:[%s0 + $0x27c] sm:$0xff]
  %v122 = vld [vmem:[%s0 + $0x284] sm:$0xf]
  %v123 = vld [vmem:[%s0 + $0x288] sm:$0xff]
  %v124 = vld [vmem:[%s0 + $0x290] sm:$0xf]
  %v125 = vld [vmem:[%s0 + $0x294] sm:$0xff]
  %v126 = vld [vmem:[%s0 + $0x29c] sm:$0xf]
  %v127 = vld [vmem:[%s0 + $0x2a0] sm:$0xff]
  %v128 = vld [vmem:[%s0 + $0x2a8] sm:$0xf]
  %v129 = vld [vmem:[%s0 + $0x2ac] sm:$0xff]
  %v130 = vld [vmem:[%s0 + $0x2b4] sm:$0xf]
  %v131 = vld [vmem:[%s0 + $0x2b8] sm:$0xff]
  %v132 = vld [vmem:[%s0 + $0x2c0] sm:$0xf]
  %v133 = vld [vmem:[%s0 + $0x2c4] sm:$0xff]
  %v134 = vld [vmem:[%s0 + $0x2cc] sm:$0xf]
  %v135 = vld [vmem:[%s0 + $0x2d0] sm:$0xff]
  %v136 = vld [vmem:[%s0 + $0x2d8] sm:$0xf]
  %v137 = vld [vmem:[%s0 + $0x2dc] sm:$0xff]
  %v138 = vld [vmem:[%s0 + $0x2e4] sm:$0xf]
  %v139 = vld [vmem:[%s0 + $0x2e8] sm:$0xff]
  %v140 = vld [vmem:[%s0 + $0x2f0] sm:$0xf]
  %v141 = vld [vmem:[%s0 + $0x2f4] sm:$0xff]
  %v142 = vld [vmem:[%s0 + $0x2fc] sm:$0xf]
  %v143 = vld [vmem:[%s1] sm:$0xf]
  %v144 = vld [vmem:[%s1 + $0x4] sm:$0xf]
  %v145 = vld [vmem:[%s1 + $0x8] sm:$0xf]
  %v146 = vld [vmem:[%s1 + $0xc] sm:$0xf]
  %v147 = vld [vmem:[%s1 + $0x10] sm:$0xf]
  %v148 = vld [vmem:[%s1 + $0x14] sm:$0xf]
  %v149 = vld [vmem:[%s1 + $0x18] sm:$0xf]
  %v150 = vld [vmem:[%s1 + $0x1c] sm:$0xf]
  %v151 = vld [vmem:[%s1 + $0x20] sm:$0xf]
  %v152 = vld [vmem:[%s1 + $0x24] sm:$0xf]
  %v153 = vld [vmem:[%s1 + $0x28] sm:$0xf]
  %v154 = vld [vmem:[%s1 + $0x2c] sm:$0xf]
  %v155 = vld [vmem:[%s1 + $0x30] sm:$0xf]
  %v156 = vld [vmem:[%s1 + $0x34] sm:$0xf]
  %v157 = vld [vmem:[%s1 + $0x38] sm:$0xf]
  %v158 = vld [vmem:[%s1 + $0x3c] sm:$0xf]
  %v159 = vld [vmem:[%s1 + $0x40] sm:$0xf]
  %v160 = vld [vmem:[%s1 + $0x44] sm:$0xf]
  %v161 = vld [vmem:[%s1 + $0x48] sm:$0xf]
  %v162 = vld [vmem:[%s1 + $0x4c] sm:$0xf]
  %v163 = vld [vmem:[%s1 + $0x50] sm:$0xf]
  %v164 = vld [vmem:[%s1 + $0x54] sm:$0xf]
  %v165 = vld [vmem:[%s1 + $0x58] sm:$0xf]
  %v166 = vld [vmem:[%s1 + $0x5c] sm:$0xf]
  %v167 = vld [vmem:[%s1 + $0x60] sm:$0xf]
  %v168 = vld [vmem:[%s1 + $0x64] sm:$0xf]
  %v169 = vld [vmem:[%s1 + $0x68] sm:$0xf]
  %v170 = vld [vmem:[%s1 + $0x6c] sm:$0xf]
  %v171 = vld [vmem:[%s1 + $0x70] sm:$0xf]
  %v172 = vld [vmem:[%s1 + $0x74] sm:$0xf]
  %v173 = vld [vmem:[%s1 + $0x78] sm:$0xf]
  %v174 = vld [vmem:[%s1 + $0x7c] sm:$0xf]
  %v175 = vld [vmem:[%s1 + $0x80] sm:$0xf]
  %v176 = vld [vmem:[%s1 + $0x84] sm:$0xf]
  %v177 = vld [vmem:[%s1 + $0x88] sm:$0xf]
  %v178 = vld [vmem:[%s1 + $0x8c] sm:$0xf]
  %v179 = vld [vmem:[%s2] sm:$0x1]
  %v181 = vperm.slane %v179, 0
  %v311 = vunpack.c.l.b16 %v15
  %v312 = vunpack.c.h.b16 %v15
  %v313 = vunpack.c.l.b16 %v16
  %v314 = vunpack.c.l.b16 %v17
  %v315 = vunpack.c.h.b16 %v17
  %v316 = vunpack.c.l.b16 %v18
  %v317 = vunpack.c.l.b16 %v19
  %v318 = vunpack.c.h.b16 %v19
  %v319 = vunpack.c.l.b16 %v20
  %v320 = vunpack.c.l.b16 %v21
  %v321 = vunpack.c.h.b16 %v21
  %v322 = vunpack.c.l.b16 %v22
  %v323 = vunpack.c.l.b16 %v23
  %v324 = vunpack.c.h.b16 %v23
  %v325 = vunpack.c.l.b16 %v24
  %v326 = vunpack.c.l.b16 %v25
  %v327 = vunpack.c.h.b16 %v25
  %v328 = vunpack.c.l.b16 %v26
  %v329 = vunpack.c.l.b16 %v27
  %v330 = vunpack.c.h.b16 %v27
  %v331 = vunpack.c.l.b16 %v28
  %v332 = vunpack.c.l.b16 %v29
  %v333 = vunpack.c.h.b16 %v29
  %v334 = vunpack.c.l.b16 %v30
  %v335 = vunpack.c.l.b16 %v31
  %v336 = vunpack.c.h.b16 %v31
  %v337 = vunpack.c.l.b16 %v32
  %v338 = vunpack.c.l.b16 %v33
  %v339 = vunpack.c.h.b16 %v33
  %v340 = vunpack.c.l.b16 %v34
  %v341 = vunpack.c.l.b16 %v35
  %v342 = vunpack.c.h.b16 %v35
  %v343 = vunpack.c.l.b16 %v36
  %v344 = vunpack.c.l.b16 %v37
  %v345 = vunpack.c.h.b16 %v37
  %v346 = vunpack.c.l.b16 %v38
  %v347 = vunpack.c.l.b16 %v39
  %v348 = vunpack.c.h.b16 %v39
  %v349 = vunpack.c.l.b16 %v40
  %v350 = vunpack.c.l.b16 %v41
  %v351 = vunpack.c.h.b16 %v41
  %v352 = vunpack.c.l.b16 %v42
  %v353 = vunpack.c.l.b16 %v43
  %v354 = vunpack.c.h.b16 %v43
  %v355 = vunpack.c.l.b16 %v44
  %v356 = vunpack.c.l.b16 %v45
  %v357 = vunpack.c.h.b16 %v45
  %v358 = vunpack.c.l.b16 %v46
  %v359 = vunpack.c.l.b16 %v47
  %v360 = vunpack.c.h.b16 %v47
  %v361 = vunpack.c.l.b16 %v48
  %v362 = vunpack.c.l.b16 %v49
  %v363 = vunpack.c.h.b16 %v49
  %v364 = vunpack.c.l.b16 %v50
  %v365 = vunpack.c.l.b16 %v51
  %v366 = vunpack.c.h.b16 %v51
  %v367 = vunpack.c.l.b16 %v52
  %v368 = vunpack.c.l.b16 %v53
  %v369 = vunpack.c.h.b16 %v53
  %v370 = vunpack.c.l.b16 %v54
  %v371 = vunpack.c.l.b16 %v55
  %v372 = vunpack.c.h.b16 %v55
  %v373 = vunpack.c.l.b16 %v56
  %v374 = vunpack.c.l.b16 %v57
  %v375 = vunpack.c.h.b16 %v57
  %v376 = vunpack.c.l.b16 %v58
  %v377 = vunpack.c.l.b16 %v59
  %v378 = vunpack.c.h.b16 %v59
  %v379 = vunpack.c.l.b16 %v60
  %v380 = vunpack.c.l.b16 %v61
  %v381 = vunpack.c.h.b16 %v61
  %v382 = vunpack.c.l.b16 %v62
  %v383 = vunpack.c.l.b16 %v63
  %v384 = vunpack.c.h.b16 %v63
  %v385 = vunpack.c.l.b16 %v64
  %v386 = vunpack.c.l.b16 %v65
  %v387 = vunpack.c.h.b16 %v65
  %v388 = vunpack.c.l.b16 %v66
  %v389 = vunpack.c.l.b16 %v67
  %v390 = vunpack.c.h.b16 %v67
  %v391 = vunpack.c.l.b16 %v68
  %v392 = vunpack.c.l.b16 %v69
  %v393 = vunpack.c.h.b16 %v69
  %v394 = vunpack.c.l.b16 %v70
  %v395 = vunpack.c.l.b16 %v71
  %v396 = vunpack.c.h.b16 %v71
  %v397 = vunpack.c.l.b16 %v72
  %v398 = vunpack.c.l.b16 %v73
  %v399 = vunpack.c.h.b16 %v73
  %v400 = vunpack.c.l.b16 %v74
  %v401 = vunpack.c.l.b16 %v75
  %v402 = vunpack.c.h.b16 %v75
  %v403 = vunpack.c.l.b16 %v76
  %v404 = vunpack.c.l.b16 %v77
  %v405 = vunpack.c.h.b16 %v77
  %v406 = vunpack.c.l.b16 %v78
  %v407 = vunpack.c.l.b16 %v79
  %v408 = vunpack.c.h.b16 %v79
  %v409 = vunpack.c.l.b16 %v80
  %v410 = vunpack.c.l.b16 %v81
  %v411 = vunpack.c.h.b16 %v81
  %v412 = vunpack.c.l.b16 %v82
  %v413 = vunpack.c.l.b16 %v83
  %v414 = vunpack.c.h.b16 %v83
  %v415 = vunpack.c.l.b16 %v84
  %v416 = vunpack.c.l.b16 %v85
  %v417 = vunpack.c.h.b16 %v85
  %v418 = vunpack.c.l.b16 %v86
  %v419 = vunpack.c.l.b16 %v87
  %v420 = vunpack.c.h.b16 %v87
  %v421 = vunpack.c.l.b16 %v88
  %v422 = vunpack.c.l.b16 %v89
  %v423 = vunpack.c.h.b16 %v89
  %v424 = vunpack.c.l.b16 %v90
  %v425 = vunpack.c.l.b16 %v91
  %v426 = vunpack.c.h.b16 %v91
  %v427 = vunpack.c.l.b16 %v92
  %v428 = vunpack.c.l.b16 %v93
  %v429 = vunpack.c.h.b16 %v93
  %v430 = vunpack.c.l.b16 %v94
  %v431 = vunpack.c.l.b16 %v95
  %v432 = vunpack.c.h.b16 %v95
  %v433 = vunpack.c.l.b16 %v96
  %v434 = vunpack.c.l.b16 %v97
  %v435 = vunpack.c.h.b16 %v97
  %v436 = vunpack.c.l.b16 %v98
  %v437 = vunpack.c.l.b16 %v99
  %v438 = vunpack.c.h.b16 %v99
  %v439 = vunpack.c.l.b16 %v100
  %v440 = vunpack.c.l.b16 %v101
  %v441 = vunpack.c.h.b16 %v101
  %v442 = vunpack.c.l.b16 %v102
  %v443 = vunpack.c.l.b16 %v103
  %v444 = vunpack.c.h.b16 %v103
  %v445 = vunpack.c.l.b16 %v104
  %v446 = vunpack.c.l.b16 %v105
  %v447 = vunpack.c.h.b16 %v105
  %v448 = vunpack.c.l.b16 %v106
  %v449 = vunpack.c.l.b16 %v107
  %v450 = vunpack.c.h.b16 %v107
  %v451 = vunpack.c.l.b16 %v108
  %v452 = vunpack.c.l.b16 %v109
  %v453 = vunpack.c.h.b16 %v109
  %v454 = vunpack.c.l.b16 %v110
  %v455 = vunpack.c.l.b16 %v111
  %v456 = vunpack.c.h.b16 %v111
  %v457 = vunpack.c.l.b16 %v112
  %v458 = vunpack.c.l.b16 %v113
  %v459 = vunpack.c.h.b16 %v113
  %v460 = vunpack.c.l.b16 %v114
  %v461 = vunpack.c.l.b16 %v115
  %v462 = vunpack.c.h.b16 %v115
  %v463 = vunpack.c.l.b16 %v116
  %v464 = vunpack.c.l.b16 %v117
  %v465 = vunpack.c.h.b16 %v117
  %v466 = vunpack.c.l.b16 %v118
  %v467 = vunpack.c.l.b16 %v119
  %v468 = vunpack.c.h.b16 %v119
  %v469 = vunpack.c.l.b16 %v120
  %v470 = vunpack.c.l.b16 %v121
  %v471 = vunpack.c.h.b16 %v121
  %v472 = vunpack.c.l.b16 %v122
  %v473 = vunpack.c.l.b16 %v123
  %v474 = vunpack.c.h.b16 %v123
  %v475 = vunpack.c.l.b16 %v124
  %v476 = vunpack.c.l.b16 %v125
  %v477 = vunpack.c.h.b16 %v125
  %v478 = vunpack.c.l.b16 %v126
  %v479 = vunpack.c.l.b16 %v127
  %v480 = vunpack.c.h.b16 %v127
  %v481 = vunpack.c.l.b16 %v128
  %v482 = vunpack.c.l.b16 %v129
  %v483 = vunpack.c.h.b16 %v129
  %v484 = vunpack.c.l.b16 %v130
  %v485 = vunpack.c.l.b16 %v131
  %v486 = vunpack.c.h.b16 %v131
  %v487 = vunpack.c.l.b16 %v132
  %v488 = vunpack.c.l.b16 %v133
  %v489 = vunpack.c.h.b16 %v133
  %v490 = vunpack.c.l.b16 %v134
  %v491 = vunpack.c.l.b16 %v135
  %v492 = vunpack.c.h.b16 %v135
  %v493 = vunpack.c.l.b16 %v136
  %v494 = vunpack.c.l.b16 %v137
  %v495 = vunpack.c.h.b16 %v137
  %v496 = vunpack.c.l.b16 %v138
  %v497 = vunpack.c.l.b16 %v139
  %v498 = vunpack.c.h.b16 %v139
  %v499 = vunpack.c.l.b16 %v140
  %v500 = vunpack.c.l.b16 %v141
  %v501 = vunpack.c.h.b16 %v141
  %v502 = vunpack.c.l.b16 %v142
  %v503 = vpack.c.b16 %v314, %v311
  %v504 = vpack.c.b16 %v315, %v312
  %v505 = vpack.c.b16 %v316, %v313
  %v506 = vpack.c.b16 %v320, %v317
  %v507 = vpack.c.b16 %v321, %v318
  %v508 = vpack.c.b16 %v322, %v319
  %v509 = vpack.c.b16 %v326, %v323
  %v510 = vpack.c.b16 %v327, %v324
  %v511 = vpack.c.b16 %v328, %v325
  %v512 = vpack.c.b16 %v332, %v329
  %v513 = vpack.c.b16 %v333, %v330
  %v514 = vpack.c.b16 %v334, %v331
  %v515 = vpack.c.b16 %v338, %v335
  %v516 = vpack.c.b16 %v339, %v336
  %v517 = vpack.c.b16 %v340, %v337
  %v518 = vpack.c.b16 %v344, %v341
  %v519 = vpack.c.b16 %v345, %v342
  %v520 = vpack.c.b16 %v346, %v343
  %v521 = vpack.c.b16 %v350, %v347
  %v522 = vpack.c.b16 %v351, %v348
  %v523 = vpack.c.b16 %v352, %v349
  %v524 = vpack.c.b16 %v356, %v353
  %v525 = vpack.c.b16 %v357, %v354
  %v526 = vpack.c.b16 %v358, %v355
  %v527 = vpack.c.b16 %v362, %v359
  %v528 = vpack.c.b16 %v363, %v360
  %v529 = vpack.c.b16 %v364, %v361
  %v530 = vpack.c.b16 %v368, %v365
  %v531 = vpack.c.b16 %v369, %v366
  %v532 = vpack.c.b16 %v370, %v367
  %v533 = vpack.c.b16 %v374, %v371
  %v534 = vpack.c.b16 %v375, %v372
  %v535 = vpack.c.b16 %v376, %v373
  %v536 = vpack.c.b16 %v380, %v377
  %v537 = vpack.c.b16 %v381, %v378
  %v538 = vpack.c.b16 %v382, %v379
  %v539 = vpack.c.b16 %v386, %v383
  %v540 = vpack.c.b16 %v387, %v384
  %v541 = vpack.c.b16 %v388, %v385
  %v542 = vpack.c.b16 %v392, %v389
  %v543 = vpack.c.b16 %v393, %v390
  %v544 = vpack.c.b16 %v394, %v391
  %v545 = vpack.c.b16 %v398, %v395
  %v546 = vpack.c.b16 %v399, %v396
  %v547 = vpack.c.b16 %v400, %v397
  %v548 = vpack.c.b16 %v404, %v401
  %v549 = vpack.c.b16 %v405, %v402
  %v550 = vpack.c.b16 %v406, %v403
  %v551 = vpack.c.b16 %v410, %v407
  %v552 = vpack.c.b16 %v411, %v408
  %v553 = vpack.c.b16 %v412, %v409
  %v554 = vpack.c.b16 %v416, %v413
  %v555 = vpack.c.b16 %v417, %v414
  %v556 = vpack.c.b16 %v418, %v415
  %v557 = vpack.c.b16 %v422, %v419
  %v558 = vpack.c.b16 %v423, %v420
  %v559 = vpack.c.b16 %v424, %v421
  %v560 = vpack.c.b16 %v428, %v425
  %v561 = vpack.c.b16 %v429, %v426
  %v562 = vpack.c.b16 %v430, %v427
  %v563 = vpack.c.b16 %v434, %v431
  %v564 = vpack.c.b16 %v435, %v432
  %v565 = vpack.c.b16 %v436, %v433
  %v566 = vpack.c.b16 %v440, %v437
  %v567 = vpack.c.b16 %v441, %v438
  %v568 = vpack.c.b16 %v442, %v439
  %v569 = vpack.c.b16 %v446, %v443
  %v570 = vpack.c.b16 %v447, %v444
  %v571 = vpack.c.b16 %v448, %v445
  %v572 = vpack.c.b16 %v452, %v449
  %v573 = vpack.c.b16 %v453, %v450
  %v574 = vpack.c.b16 %v454, %v451
  %v575 = vpack.c.b16 %v458, %v455
  %v576 = vpack.c.b16 %v459, %v456
  %v577 = vpack.c.b16 %v460, %v457
  %v578 = vpack.c.b16 %v464, %v461
  %v579 = vpack.c.b16 %v465, %v462
  %v580 = vpack.c.b16 %v466, %v463
  %v581 = vpack.c.b16 %v470, %v467
  %v582 = vpack.c.b16 %v471, %v468
  %v583 = vpack.c.b16 %v472, %v469
  %v584 = vpack.c.b16 %v476, %v473
  %v585 = vpack.c.b16 %v477, %v474
  %v586 = vpack.c.b16 %v478, %v475
  %v587 = vpack.c.b16 %v482, %v479
  %v588 = vpack.c.b16 %v483, %v480
  %v589 = vpack.c.b16 %v484, %v481
  %v590 = vpack.c.b16 %v488, %v485
  %v591 = vpack.c.b16 %v489, %v486
  %v592 = vpack.c.b16 %v490, %v487
  %v593 = vpack.c.b16 %v494, %v491
  %v594 = vpack.c.b16 %v495, %v492
  %v595 = vpack.c.b16 %v496, %v493
  %v596 = vpack.c.b16 %v500, %v497
  %v597 = vpack.c.b16 %v501, %v498
  %v598 = vpack.c.b16 %v502, %v499
  %v699 = vunpack.c.l.b16 %v143
  %v700 = vunpack.c.l.b16 %v144
  %v701 = vunpack.c.l.b16 %v145
  %v702 = vunpack.c.l.b16 %v146
  %v703 = vunpack.c.l.b16 %v147
  %v704 = vunpack.c.l.b16 %v148
  %v705 = vunpack.c.l.b16 %v149
  %v706 = vunpack.c.l.b16 %v150
  %v707 = vunpack.c.l.b16 %v151
  %v708 = vunpack.c.l.b16 %v152
  %v709 = vunpack.c.l.b16 %v153
  %v710 = vunpack.c.l.b16 %v154
  %v711 = vunpack.c.l.b16 %v155
  %v712 = vunpack.c.l.b16 %v156
  %v713 = vunpack.c.l.b16 %v157
  %v714 = vunpack.c.l.b16 %v158
  %v715 = vunpack.c.l.b16 %v159
  %v716 = vunpack.c.l.b16 %v160
  %v717 = vunpack.c.l.b16 %v161
  %v718 = vunpack.c.l.b16 %v162
  %v719 = vunpack.c.l.b16 %v163
  %v720 = vunpack.c.l.b16 %v164
  %v721 = vunpack.c.l.b16 %v165
  %v722 = vunpack.c.l.b16 %v166
  %v723 = vunpack.c.l.b16 %v167
  %v724 = vunpack.c.l.b16 %v168
  %v725 = vunpack.c.l.b16 %v169
  %v726 = vunpack.c.l.b16 %v170
  %v727 = vunpack.c.l.b16 %v171
  %v728 = vunpack.c.l.b16 %v172
  %v729 = vunpack.c.l.b16 %v173
  %v730 = vunpack.c.l.b16 %v174
  %v731 = vunpack.c.l.b16 %v175
  %v732 = vunpack.c.l.b16 %v176
  %v733 = vunpack.c.l.b16 %v177
  %v734 = vunpack.c.l.b16 %v178
  %v735 = vpack.c.b16 %v700, %v699
  %v736 = vpack.c.b16 %v702, %v701
  %v737 = vpack.c.b16 %v704, %v703
  %v738 = vpack.c.b16 %v706, %v705
  %v739 = vpack.c.b16 %v708, %v707
  %v740 = vpack.c.b16 %v710, %v709
  %v741 = vpack.c.b16 %v712, %v711
  %v742 = vpack.c.b16 %v714, %v713
  %v743 = vpack.c.b16 %v716, %v715
  %v744 = vpack.c.b16 %v718, %v717
  %v745 = vpack.c.b16 %v720, %v719
  %v746 = vpack.c.b16 %v722, %v721
  %v747 = vpack.c.b16 %v724, %v723
  %v748 = vpack.c.b16 %v726, %v725
  %v749 = vpack.c.b16 %v728, %v727
  %v750 = vpack.c.b16 %v730, %v729
  %v751 = vpack.c.b16 %v732, %v731
  %v752 = vpack.c.b16 %v734, %v733
  %vm771 = vcmask 261120
  %v773 = vsel %vm771, %v505, 0
  %v776 = vsel %vm771, %v508, 0
  %v779 = vsel %vm771, %v511, 0
  %v782 = vsel %vm771, %v514, 0
  %v785 = vsel %vm771, %v517, 0
  %v788 = vsel %vm771, %v520, 0
  %v791 = vsel %vm771, %v523, 0
  %v794 = vsel %vm771, %v526, 0
  %v797 = vsel %vm771, %v529, 0
  %v800 = vsel %vm771, %v532, 0
  %v803 = vsel %vm771, %v535, 0
  %v806 = vsel %vm771, %v538, 0
  %v809 = vsel %vm771, %v541, 0
  %v812 = vsel %vm771, %v544, 0
  %v815 = vsel %vm771, %v547, 0
  %v818 = vsel %vm771, %v550, 0
  %v821 = vsel %vm771, %v553, 0
  %v824 = vsel %vm771, %v556, 0
  %v827 = vsel %vm771, %v559, 0
  %v830 = vsel %vm771, %v562, 0
  %v833 = vsel %vm771, %v565, 0
  %v836 = vsel %vm771, %v568, 0
  %v839 = vsel %vm771, %v571, 0
  %v842 = vsel %vm771, %v574, 0
  %v845 = vsel %vm771, %v577, 0
  %v848 = vsel %vm771, %v580, 0
  %v851 = vsel %vm771, %v583, 0
  %v854 = vsel %vm771, %v586, 0
  %v857 = vsel %vm771, %v589, 0
  %v860 = vsel %vm771, %v592, 0
  %v863 = vsel %vm771, %v595, 0
  %v866 = vsel %vm771, %v598, 0
  %868 = vmatpush.bf16.msra.mxu0 %v742
  %869 = vmatpush.bf16.msra.mxu0 %v741
  %870 = vmatpush.bf16.msra.mxu0 %v740
  %871 = vmatpush.bf16.msra.mxu0 %v739
  %872 = vmatpush.bf16.msra.mxu0 %v738
  %873 = vmatpush.bf16.msra.mxu0 %v737
  %874 = vmatpush.bf16.msra.mxu0 %v736
  %875 = vmatpush.bf16.msra.mxu0 %v735
  %876 = vmatmul.bf16.gmra.mxu0 %v503
  %v877 = vpop.f32.mrf.mxu0
  %v878 = vadd.f32 %v181, %v877
  %v879 = vpop.f32.mrf.mxu0
  %v880 = vadd.f32 %v181, %v879
  %881 = vmatmul.bf16.gmra.mxu0 %v506
  %v882 = vpop.f32.mrf.mxu0
  %v883 = vadd.f32 %v181, %v882
  %v884 = vpop.f32.mrf.mxu0
  %v885 = vadd.f32 %v181, %v884
  %886 = vmatmul.bf16.gmra.mxu0 %v509
  %v887 = vpop.f32.mrf.mxu0
  %v888 = vadd.f32 %v181, %v887
  %v889 = vpop.f32.mrf.mxu0
  %v890 = vadd.f32 %v181, %v889
  %891 = vmatmul.bf16.gmra.mxu0 %v512
  %v892 = vpop.f32.mrf.mxu0
  %v893 = vadd.f32 %v181, %v892
  %v894 = vpop.f32.mrf.mxu0
  %v895 = vadd.f32 %v181, %v894
  %896 = vmatmul.bf16.gmra.mxu0 %v515
  %v897 = vpop.f32.mrf.mxu0
  %v898 = vadd.f32 %v181, %v897
  %v899 = vpop.f32.mrf.mxu0
  %v900 = vadd.f32 %v181, %v899
  %901 = vmatmul.bf16.gmra.mxu0 %v518
  %v902 = vpop.f32.mrf.mxu0
  %v903 = vadd.f32 %v181, %v902
  %v904 = vpop.f32.mrf.mxu0
  %v905 = vadd.f32 %v181, %v904
  %906 = vmatmul.bf16.gmra.mxu0 %v521
  %v907 = vpop.f32.mrf.mxu0
  %v908 = vadd.f32 %v181, %v907
  %v909 = vpop.f32.mrf.mxu0
  %v910 = vadd.f32 %v181, %v909
  %911 = vmatmul.bf16.gmra.mxu0 %v524
  %v912 = vpop.f32.mrf.mxu0
  %v913 = vadd.f32 %v181, %v912
  %v914 = vpop.f32.mrf.mxu0
  %v915 = vadd.f32 %v181, %v914
  %916 = vmatmul.bf16.gmra.mxu0 %v527
  %v917 = vpop.f32.mrf.mxu0
  %v918 = vadd.f32 %v181, %v917
  %v919 = vpop.f32.mrf.mxu0
  %v920 = vadd.f32 %v181, %v919
  %921 = vmatmul.bf16.gmra.mxu0 %v530
  %v922 = vpop.f32.mrf.mxu0
  %v923 = vadd.f32 %v181, %v922
  %v924 = vpop.f32.mrf.mxu0
  %v925 = vadd.f32 %v181, %v924
  %926 = vmatmul.bf16.gmra.mxu0 %v533
  %v927 = vpop.f32.mrf.mxu0
  %v928 = vadd.f32 %v181, %v927
  %v929 = vpop.f32.mrf.mxu0
  %v930 = vadd.f32 %v181, %v929
  %931 = vmatmul.bf16.gmra.mxu0 %v536
  %v932 = vpop.f32.mrf.mxu0
  %v933 = vadd.f32 %v181, %v932
  %v934 = vpop.f32.mrf.mxu0
  %v935 = vadd.f32 %v181, %v934
  %936 = vmatmul.bf16.gmra.mxu0 %v539
  %v937 = vpop.f32.mrf.mxu0
  %v938 = vadd.f32 %v181, %v937
  %v939 = vpop.f32.mrf.mxu0
  %v940 = vadd.f32 %v181, %v939
  %941 = vmatmul.bf16.gmra.mxu0 %v542
  %v942 = vpop.f32.mrf.mxu0
  %v943 = vadd.f32 %v181, %v942
  %v944 = vpop.f32.mrf.mxu0
  %v945 = vadd.f32 %v181, %v944
  %946 = vmatmul.bf16.gmra.mxu0 %v545
  %v947 = vpop.f32.mrf.mxu0
  %v948 = vadd.f32 %v181, %v947
  %v949 = vpop.f32.mrf.mxu0
  %v950 = vadd.f32 %v181, %v949
  %951 = vmatmul.bf16.gmra.mxu0 %v548
  %v952 = vpop.f32.mrf.mxu0
  %v953 = vadd.f32 %v181, %v952
  %v954 = vpop.f32.mrf.mxu0
  %v955 = vadd.f32 %v181, %v954
  %956 = vmatmul.bf16.gmra.mxu0 %v551
  %v957 = vpop.f32.mrf.mxu0
  %v958 = vadd.f32 %v181, %v957
  %v959 = vpop.f32.mrf.mxu0
  %v960 = vadd.f32 %v181, %v959
  %961 = vmatmul.bf16.gmra.mxu0 %v554
  %v962 = vpop.f32.mrf.mxu0
  %v963 = vadd.f32 %v181, %v962
  %v964 = vpop.f32.mrf.mxu0
  %v965 = vadd.f32 %v181, %v964
  %966 = vmatmul.bf16.gmra.mxu0 %v557
  %v967 = vpop.f32.mrf.mxu0
  %v968 = vadd.f32 %v181, %v967
  %v969 = vpop.f32.mrf.mxu0
  %v970 = vadd.f32 %v181, %v969
  %971 = vmatmul.bf16.gmra.mxu0 %v560
  %v972 = vpop.f32.mrf.mxu0
  %v973 = vadd.f32 %v181, %v972
  %v974 = vpop.f32.mrf.mxu0
  %v975 = vadd.f32 %v181, %v974
  %976 = vmatmul.bf16.gmra.mxu0 %v563
  %v977 = vpop.f32.mrf.mxu0
  %v978 = vadd.f32 %v181, %v977
  %v979 = vpop.f32.mrf.mxu0
  %v980 = vadd.f32 %v181, %v979
  %981 = vmatmul.bf16.gmra.mxu0 %v566
  %v982 = vpop.f32.mrf.mxu0
  %v983 = vadd.f32 %v181, %v982
  %v984 = vpop.f32.mrf.mxu0
  %v985 = vadd.f32 %v181, %v984
  %986 = vmatmul.bf16.gmra.mxu0 %v569
  %v987 = vpop.f32.mrf.mxu0
  %v988 = vadd.f32 %v181, %v987
  %v989 = vpop.f32.mrf.mxu0
  %v990 = vadd.f32 %v181, %v989
  %991 = vmatmul.bf16.gmra.mxu0 %v572
  %v992 = vpop.f32.mrf.mxu0
  %v993 = vadd.f32 %v181, %v992
  %v994 = vpop.f32.mrf.mxu0
  %v995 = vadd.f32 %v181, %v994
  %996 = vmatmul.bf16.gmra.mxu0 %v575
  %v997 = vpop.f32.mrf.mxu0
  %v998 = vadd.f32 %v181, %v997
  %v999 = vpop.f32.mrf.mxu0
  %v1000 = vadd.f32 %v181, %v999
  %1001 = vmatmul.bf16.gmra.mxu0 %v578
  %v1002 = vpop.f32.mrf.mxu0
  %v1003 = vadd.f32 %v181, %v1002
  %v1004 = vpop.f32.mrf.mxu0
  %v1005 = vadd.f32 %v181, %v1004
  %1006 = vmatmul.bf16.gmra.mxu0 %v581
  %v1007 = vpop.f32.mrf.mxu0
  %v1008 = vadd.f32 %v181, %v1007
  %v1009 = vpop.f32.mrf.mxu0
  %v1010 = vadd.f32 %v181, %v1009
  %1011 = vmatmul.bf16.gmra.mxu0 %v584
  %v1012 = vpop.f32.mrf.mxu0
  %v1013 = vadd.f32 %v181, %v1012
  %v1014 = vpop.f32.mrf.mxu0
  %v1015 = vadd.f32 %v181, %v1014
  %1016 = vmatmul.bf16.gmra.mxu0 %v587
  %v1017 = vpop.f32.mrf.mxu0
  %v1018 = vadd.f32 %v181, %v1017
  %v1019 = vpop.f32.mrf.mxu0
  %v1020 = vadd.f32 %v181, %v1019
  %1021 = vmatmul.bf16.gmra.mxu0 %v590
  %v1022 = vpop.f32.mrf.mxu0
  %v1023 = vadd.f32 %v181, %v1022
  %v1024 = vpop.f32.mrf.mxu0
  %v1025 = vadd.f32 %v181, %v1024
  %1026 = vmatmul.bf16.gmra.mxu0 %v593
  %v1027 = vpop.f32.mrf.mxu0
  %v1028 = vadd.f32 %v181, %v1027
  %v1029 = vpop.f32.mrf.mxu0
  %v1030 = vadd.f32 %v181, %v1029
  %1031 = vmatmul.bf16.gmra.mxu0 %v596
  %v1032 = vpop.f32.mrf.mxu0
  %v1033 = vadd.f32 %v181, %v1032
  %v1034 = vpop.f32.mrf.mxu0
  %v1035 = vadd.f32 %v181, %v1034
  %1036 = vdwg.mxu0
  %1037 = vmatpush.bf16.msra.mxu0 %v750
  %1038 = vmatpush.bf16.msra.mxu0 %v749
  %1039 = vmatpush.bf16.msra.mxu0 %v748
  %1040 = vmatpush.bf16.msra.mxu0 %v747
  %1041 = vmatpush.bf16.msra.mxu0 %v746
  %1042 = vmatpush.bf16.msra.mxu0 %v745
  %1043 = vmatpush.bf16.msra.mxu0 %v744
  %1044 = vmatpush.bf16.msra.mxu0 %v743
  %1045 = vmatmul.bf16.gmra.mxu0 %v504
  %v1046 = vpop.f32.mrf.mxu0
  %v1047 = vadd.f32 %v878, %v1046
  %v1048 = vpop.f32.mrf.mxu0
  %v1049 = vadd.f32 %v880, %v1048
  %1050 = vmatmul.bf16.gmra.mxu0 %v507
  %v1051 = vpop.f32.mrf.mxu0
  %v1052 = vadd.f32 %v883, %v1051
  %v1053 = vpop.f32.mrf.mxu0
  %v1054 = vadd.f32 %v885, %v1053
  %1055 = vmatmul.bf16.gmra.mxu0 %v510
  %v1056 = vpop.f32.mrf.mxu0
  %v1057 = vadd.f32 %v888, %v1056
  %v1058 = vpop.f32.mrf.mxu0
  %v1059 = vadd.f32 %v890, %v1058
  %1060 = vmatmul.bf16.gmra.mxu0 %v513
  %v1061 = vpop.f32.mrf.mxu0
  %v1062 = vadd.f32 %v893, %v1061
  %v1063 = vpop.f32.mrf.mxu0
  %v1064 = vadd.f32 %v895, %v1063
  %1065 = vmatmul.bf16.gmra.mxu0 %v516
  %v1066 = vpop.f32.mrf.mxu0
  %v1067 = vadd.f32 %v898, %v1066
  %v1068 = vpop.f32.mrf.mxu0
  %v1069 = vadd.f32 %v900, %v1068
  %1070 = vmatmul.bf16.gmra.mxu0 %v519
  %v1071 = vpop.f32.mrf.mxu0
  %v1072 = vadd.f32 %v903, %v1071
  %v1073 = vpop.f32.mrf.mxu0
  %v1074 = vadd.f32 %v905, %v1073
  %1075 = vmatmul.bf16.gmra.mxu0 %v522
  %v1076 = vpop.f32.mrf.mxu0
  %v1077 = vadd.f32 %v908, %v1076
  %v1078 = vpop.f32.mrf.mxu0
  %v1079 = vadd.f32 %v910, %v1078
  %1080 = vmatmul.bf16.gmra.mxu0 %v525
  %v1081 = vpop.f32.mrf.mxu0
  %v1082 = vadd.f32 %v913, %v1081
  %v1083 = vpop.f32.mrf.mxu0
  %v1084 = vadd.f32 %v915, %v1083
  %1085 = vmatmul.bf16.gmra.mxu0 %v528
  %v1086 = vpop.f32.mrf.mxu0
  %v1087 = vadd.f32 %v918, %v1086
  %v1088 = vpop.f32.mrf.mxu0
  %v1089 = vadd.f32 %v920, %v1088
  %1090 = vmatmul.bf16.gmra.mxu0 %v531
  %v1091 = vpop.f32.mrf.mxu0
  %v1092 = vadd.f32 %v923, %v1091
  %v1093 = vpop.f32.mrf.mxu0
  %v1094 = vadd.f32 %v925, %v1093
  %1095 = vmatmul.bf16.gmra.mxu0 %v534
  %v1096 = vpop.f32.mrf.mxu0
  %v1097 = vadd.f32 %v928, %v1096
  %v1098 = vpop.f32.mrf.mxu0
  %v1099 = vadd.f32 %v930, %v1098
  %1100 = vmatmul.bf16.gmra.mxu0 %v537
  %v1101 = vpop.f32.mrf.mxu0
  %v1102 = vadd.f32 %v933, %v1101
  %v1103 = vpop.f32.mrf.mxu0
  %v1104 = vadd.f32 %v935, %v1103
  %1105 = vmatmul.bf16.gmra.mxu0 %v540
  %v1106 = vpop.f32.mrf.mxu0
  %v1107 = vadd.f32 %v938, %v1106
  %v1108 = vpop.f32.mrf.mxu0
  %v1109 = vadd.f32 %v940, %v1108
  %1110 = vmatmul.bf16.gmra.mxu0 %v543
  %v1111 = vpop.f32.mrf.mxu0
  %v1112 = vadd.f32 %v943, %v1111
  %v1113 = vpop.f32.mrf.mxu0
  %v1114 = vadd.f32 %v945, %v1113
  %1115 = vmatmul.bf16.gmra.mxu0 %v546
  %v1116 = vpop.f32.mrf.mxu0
  %v1117 = vadd.f32 %v948, %v1116
  %v1118 = vpop.f32.mrf.mxu0
  %v1119 = vadd.f32 %v950, %v1118
  %1120 = vmatmul.bf16.gmra.mxu0 %v549
  %v1121 = vpop.f32.mrf.mxu0
  %v1122 = vadd.f32 %v953, %v1121
  %v1123 = vpop.f32.mrf.mxu0
  %v1124 = vadd.f32 %v955, %v1123
  %1125 = vmatmul.bf16.gmra.mxu0 %v552
  %v1126 = vpop.f32.mrf.mxu0
  %v1127 = vadd.f32 %v958, %v1126
  %v1128 = vpop.f32.mrf.mxu0
  %v1129 = vadd.f32 %v960, %v1128
  %1130 = vmatmul.bf16.gmra.mxu0 %v555
  %v1131 = vpop.f32.mrf.mxu0
  %v1132 = vadd.f32 %v963, %v1131
  %v1133 = vpop.f32.mrf.mxu0
  %v1134 = vadd.f32 %v965, %v1133
  %1135 = vmatmul.bf16.gmra.mxu0 %v558
  %v1136 = vpop.f32.mrf.mxu0
  %v1137 = vadd.f32 %v968, %v1136
  %v1138 = vpop.f32.mrf.mxu0
  %v1139 = vadd.f32 %v970, %v1138
  %1140 = vmatmul.bf16.gmra.mxu0 %v561
  %v1141 = vpop.f32.mrf.mxu0
  %v1142 = vadd.f32 %v973, %v1141
  %v1143 = vpop.f32.mrf.mxu0
  %v1144 = vadd.f32 %v975, %v1143
  %1145 = vmatmul.bf16.gmra.mxu0 %v564
  %v1146 = vpop.f32.mrf.mxu0
  %v1147 = vadd.f32 %v978, %v1146
  %v1148 = vpop.f32.mrf.mxu0
  %v1149 = vadd.f32 %v980, %v1148
  %1150 = vmatmul.bf16.gmra.mxu0 %v567
  %v1151 = vpop.f32.mrf.mxu0
  %v1152 = vadd.f32 %v983, %v1151
  %v1153 = vpop.f32.mrf.mxu0
  %v1154 = vadd.f32 %v985, %v1153
  %1155 = vmatmul.bf16.gmra.mxu0 %v570
  %v1156 = vpop.f32.mrf.mxu0
  %v1157 = vadd.f32 %v988, %v1156
  %v1158 = vpop.f32.mrf.mxu0
  %v1159 = vadd.f32 %v990, %v1158
  %1160 = vmatmul.bf16.gmra.mxu0 %v573
  %v1161 = vpop.f32.mrf.mxu0
  %v1162 = vadd.f32 %v993, %v1161
  %v1163 = vpop.f32.mrf.mxu0
  %v1164 = vadd.f32 %v995, %v1163
  %1165 = vmatmul.bf16.gmra.mxu0 %v576
  %v1166 = vpop.f32.mrf.mxu0
  %v1167 = vadd.f32 %v998, %v1166
  %v1168 = vpop.f32.mrf.mxu0
  %v1169 = vadd.f32 %v1000, %v1168
  %1170 = vmatmul.bf16.gmra.mxu0 %v579
  %v1171 = vpop.f32.mrf.mxu0
  %v1172 = vadd.f32 %v1003, %v1171
  %v1173 = vpop.f32.mrf.mxu0
  %v1174 = vadd.f32 %v1005, %v1173
  %1175 = vmatmul.bf16.gmra.mxu0 %v582
  %v1176 = vpop.f32.mrf.mxu0
  %v1177 = vadd.f32 %v1008, %v1176
  %v1178 = vpop.f32.mrf.mxu0
  %v1179 = vadd.f32 %v1010, %v1178
  %1180 = vmatmul.bf16.gmra.mxu0 %v585
  %v1181 = vpop.f32.mrf.mxu0
  %v1182 = vadd.f32 %v1013, %v1181
  %v1183 = vpop.f32.mrf.mxu0
  %v1184 = vadd.f32 %v1015, %v1183
  %1185 = vmatmul.bf16.gmra.mxu0 %v588
  %v1186 = vpop.f32.mrf.mxu0
  %v1187 = vadd.f32 %v1018, %v1186
  %v1188 = vpop.f32.mrf.mxu0
  %v1189 = vadd.f32 %v1020, %v1188
  %1190 = vmatmul.bf16.gmra.mxu0 %v591
  %v1191 = vpop.f32.mrf.mxu0
  %v1192 = vadd.f32 %v1023, %v1191
  %v1193 = vpop.f32.mrf.mxu0
  %v1194 = vadd.f32 %v1025, %v1193
  %1195 = vmatmul.bf16.gmra.mxu0 %v594
  %v1196 = vpop.f32.mrf.mxu0
  %v1197 = vadd.f32 %v1028, %v1196
  %v1198 = vpop.f32.mrf.mxu0
  %v1199 = vadd.f32 %v1030, %v1198
  %1200 = vmatmul.bf16.gmra.mxu0 %v597
  %v1201 = vpop.f32.mrf.mxu0
  %v1202 = vadd.f32 %v1033, %v1201
  %v1203 = vpop.f32.mrf.mxu0
  %v1204 = vadd.f32 %v1035, %v1203
  %1205 = vdwg.mxu0
  %1206 = vmatpush.bf16.msra.mxu0 0
  %1207 = vmatpush.bf16.msra.mxu0 0
  %1208 = vmatpush.bf16.msra.mxu0 0
  %1209 = vmatpush.bf16.msra.mxu0 0
  %1210 = vmatpush.bf16.msra.mxu0 0
  %1211 = vmatpush.bf16.msra.mxu0 0
  %1212 = vmatpush.bf16.msra.mxu0 %v752
  %1213 = vmatpush.bf16.msra.mxu0 %v751
  %1214 = vmatmul.bf16.gmra.mxu0 %v773
  %v1215 = vpop.f32.mrf.mxu0
  %v1216 = vadd.f32 %v1047, %v1215
  %v1217 = vpop.f32.mrf.mxu0
  %v1218 = vadd.f32 %v1049, %v1217
  %1219 = vmatmul.bf16.gmra.mxu0 %v776
  %v1220 = vpop.f32.mrf.mxu0
  %v1221 = vadd.f32 %v1052, %v1220
  %v1222 = vpop.f32.mrf.mxu0
  %v1223 = vadd.f32 %v1054, %v1222
  %1224 = vmatmul.bf16.gmra.mxu0 %v779
  %v1225 = vpop.f32.mrf.mxu0
  %v1226 = vadd.f32 %v1057, %v1225
  %v1227 = vpop.f32.mrf.mxu0
  %v1228 = vadd.f32 %v1059, %v1227
  %1229 = vmatmul.bf16.gmra.mxu0 %v782
  %v1230 = vpop.f32.mrf.mxu0
  %v1231 = vadd.f32 %v1062, %v1230
  %v1232 = vpop.f32.mrf.mxu0
  %v1233 = vadd.f32 %v1064, %v1232
  %1234 = vmatmul.bf16.gmra.mxu0 %v785
  %v1235 = vpop.f32.mrf.mxu0
  %v1236 = vadd.f32 %v1067, %v1235
  %v1237 = vpop.f32.mrf.mxu0
  %v1238 = vadd.f32 %v1069, %v1237
  %1239 = vmatmul.bf16.gmra.mxu0 %v788
  %v1240 = vpop.f32.mrf.mxu0
  %v1241 = vadd.f32 %v1072, %v1240
  %v1242 = vpop.f32.mrf.mxu0
  %v1243 = vadd.f32 %v1074, %v1242
  %1244 = vmatmul.bf16.gmra.mxu0 %v791
  %v1245 = vpop.f32.mrf.mxu0
  %v1246 = vadd.f32 %v1077, %v1245
  %v1247 = vpop.f32.mrf.mxu0
  %v1248 = vadd.f32 %v1079, %v1247
  %1249 = vmatmul.bf16.gmra.mxu0 %v794
  %v1250 = vpop.f32.mrf.mxu0
  %v1251 = vadd.f32 %v1082, %v1250
  %v1252 = vpop.f32.mrf.mxu0
  %v1253 = vadd.f32 %v1084, %v1252
  %1254 = vmatmul.bf16.gmra.mxu0 %v797
  %v1255 = vpop.f32.mrf.mxu0
  %v1256 = vadd.f32 %v1087, %v1255
  %v1257 = vpop.f32.mrf.mxu0
  %v1258 = vadd.f32 %v1089, %v1257
  %1259 = vmatmul.bf16.gmra.mxu0 %v800
  %v1260 = vpop.f32.mrf.mxu0
  %v1261 = vadd.f32 %v1092, %v1260
  %v1262 = vpop.f32.mrf.mxu0
  %v1263 = vadd.f32 %v1094, %v1262
  %1264 = vmatmul.bf16.gmra.mxu0 %v803
  %v1265 = vpop.f32.mrf.mxu0
  %v1266 = vadd.f32 %v1097, %v1265
  %v1267 = vpop.f32.mrf.mxu0
  %v1268 = vadd.f32 %v1099, %v1267
  %1269 = vmatmul.bf16.gmra.mxu0 %v806
  %v1270 = vpop.f32.mrf.mxu0
  %v1271 = vadd.f32 %v1102, %v1270
  %v1272 = vpop.f32.mrf.mxu0
  %v1273 = vadd.f32 %v1104, %v1272
  %1274 = vmatmul.bf16.gmra.mxu0 %v809
  %v1275 = vpop.f32.mrf.mxu0
  %v1276 = vadd.f32 %v1107, %v1275
  %v1277 = vpop.f32.mrf.mxu0
  %v1278 = vadd.f32 %v1109, %v1277
  %1279 = vmatmul.bf16.gmra.mxu0 %v812
  %v1280 = vpop.f32.mrf.mxu0
  %v1281 = vadd.f32 %v1112, %v1280
  %v1282 = vpop.f32.mrf.mxu0
  %v1283 = vadd.f32 %v1114, %v1282
  %1284 = vmatmul.bf16.gmra.mxu0 %v815
  %v1285 = vpop.f32.mrf.mxu0
  %v1286 = vadd.f32 %v1117, %v1285
  %v1287 = vpop.f32.mrf.mxu0
  %v1288 = vadd.f32 %v1119, %v1287
  %1289 = vmatmul.bf16.gmra.mxu0 %v818
  %v1290 = vpop.f32.mrf.mxu0
  %v1291 = vadd.f32 %v1122, %v1290
  %v1292 = vpop.f32.mrf.mxu0
  %v1293 = vadd.f32 %v1124, %v1292
  %1294 = vmatmul.bf16.gmra.mxu0 %v821
  %v1295 = vpop.f32.mrf.mxu0
  %v1296 = vadd.f32 %v1127, %v1295
  %v1297 = vpop.f32.mrf.mxu0
  %v1298 = vadd.f32 %v1129, %v1297
  %1299 = vmatmul.bf16.gmra.mxu0 %v824
  %v1300 = vpop.f32.mrf.mxu0
  %v1301 = vadd.f32 %v1132, %v1300
  %v1302 = vpop.f32.mrf.mxu0
  %v1303 = vadd.f32 %v1134, %v1302
  %1304 = vmatmul.bf16.gmra.mxu0 %v827
  %v1305 = vpop.f32.mrf.mxu0
  %v1306 = vadd.f32 %v1137, %v1305
  %v1307 = vpop.f32.mrf.mxu0
  %v1308 = vadd.f32 %v1139, %v1307
  %1309 = vmatmul.bf16.gmra.mxu0 %v830
  %v1310 = vpop.f32.mrf.mxu0
  %v1311 = vadd.f32 %v1142, %v1310
  %v1312 = vpop.f32.mrf.mxu0
  %v1313 = vadd.f32 %v1144, %v1312
  %1314 = vmatmul.bf16.gmra.mxu0 %v833
  %v1315 = vpop.f32.mrf.mxu0
  %v1316 = vadd.f32 %v1147, %v1315
  %v1317 = vpop.f32.mrf.mxu0
  %v1318 = vadd.f32 %v1149, %v1317
  %1319 = vmatmul.bf16.gmra.mxu0 %v836
  %v1320 = vpop.f32.mrf.mxu0
  %v1321 = vadd.f32 %v1152, %v1320
  %v1322 = vpop.f32.mrf.mxu0
  %v1323 = vadd.f32 %v1154, %v1322
  %1324 = vmatmul.bf16.gmra.mxu0 %v839
  %v1325 = vpop.f32.mrf.mxu0
  %v1326 = vadd.f32 %v1157, %v1325
  %v1327 = vpop.f32.mrf.mxu0
  %v1328 = vadd.f32 %v1159, %v1327
  %1329 = vmatmul.bf16.gmra.mxu0 %v842
  %v1330 = vpop.f32.mrf.mxu0
  %v1331 = vadd.f32 %v1162, %v1330
  %v1332 = vpop.f32.mrf.mxu0
  %v1333 = vadd.f32 %v1164, %v1332
  %1334 = vmatmul.bf16.gmra.mxu0 %v845
  %v1335 = vpop.f32.mrf.mxu0
  %v1336 = vadd.f32 %v1167, %v1335
  %v1337 = vpop.f32.mrf.mxu0
  %v1338 = vadd.f32 %v1169, %v1337
  %1339 = vmatmul.bf16.gmra.mxu0 %v848
  %v1340 = vpop.f32.mrf.mxu0
  %v1341 = vadd.f32 %v1172, %v1340
  %v1342 = vpop.f32.mrf.mxu0
  %v1343 = vadd.f32 %v1174, %v1342
  %1344 = vmatmul.bf16.gmra.mxu0 %v851
  %v1345 = vpop.f32.mrf.mxu0
  %v1346 = vadd.f32 %v1177, %v1345
  %v1347 = vpop.f32.mrf.mxu0
  %v1348 = vadd.f32 %v1179, %v1347
  %1349 = vmatmul.bf16.gmra.mxu0 %v854
  %v1350 = vpop.f32.mrf.mxu0
  %v1351 = vadd.f32 %v1182, %v1350
  %v1352 = vpop.f32.mrf.mxu0
  %v1353 = vadd.f32 %v1184, %v1352
  %1354 = vmatmul.bf16.gmra.mxu0 %v857
  %v1355 = vpop.f32.mrf.mxu0
  %v1356 = vadd.f32 %v1187, %v1355
  %v1357 = vpop.f32.mrf.mxu0
  %v1358 = vadd.f32 %v1189, %v1357
  %1359 = vmatmul.bf16.gmra.mxu0 %v860
  %v1360 = vpop.f32.mrf.mxu0
  %v1361 = vadd.f32 %v1192, %v1360
  %v1362 = vpop.f32.mrf.mxu0
  %v1363 = vadd.f32 %v1194, %v1362
  %1364 = vmatmul.bf16.gmra.mxu0 %v863
  %v1365 = vpop.f32.mrf.mxu0
  %v1366 = vadd.f32 %v1197, %v1365
  %v1367 = vpop.f32.mrf.mxu0
  %v1368 = vadd.f32 %v1199, %v1367
  %1369 = vmatmul.bf16.gmra.mxu0 %v866
  %v1370 = vpop.f32.mrf.mxu0
  %v1371 = vadd.f32 %v1202, %v1370
  %v1372 = vpop.f32.mrf.mxu0
  %v1373 = vadd.f32 %v1204, %v1372
  %1374 = vdwg.mxu0
  %v1375 = vmax.f32 %v1216, 0.0
  %v1376 = vmax.f32 %v1218, 0.0
  %v1377 = vmax.f32 %v1221, 0.0
  %v1378 = vmax.f32 %v1223, 0.0
  %v1379 = vmax.f32 %v1226, 0.0
  %v1380 = vmax.f32 %v1228, 0.0
  %v1381 = vmax.f32 %v1231, 0.0
  %v1382 = vmax.f32 %v1233, 0.0
  %v1383 = vmax.f32 %v1236, 0.0
  %v1384 = vmax.f32 %v1238, 0.0
  %v1385 = vmax.f32 %v1241, 0.0
  %v1386 = vmax.f32 %v1243, 0.0
  %v1387 = vmax.f32 %v1246, 0.0
  %v1388 = vmax.f32 %v1248, 0.0
  %v1389 = vmax.f32 %v1251, 0.0
  %v1390 = vmax.f32 %v1253, 0.0
  %v1391 = vmax.f32 %v1256, 0.0
  %v1392 = vmax.f32 %v1258, 0.0
  %v1393 = vmax.f32 %v1261, 0.0
  %v1394 = vmax.f32 %v1263, 0.0
  %v1395 = vmax.f32 %v1266, 0.0
  %v1396 = vmax.f32 %v1268, 0.0
  %v1397 = vmax.f32 %v1271, 0.0
  %v1398 = vmax.f32 %v1273, 0.0
  %v1399 = vmax.f32 %v1276, 0.0
  %v1400 = vmax.f32 %v1278, 0.0
  %v1401 = vmax.f32 %v1281, 0.0
  %v1402 = vmax.f32 %v1283, 0.0
  %v1403 = vmax.f32 %v1286, 0.0
  %v1404 = vmax.f32 %v1288, 0.0
  %v1405 = vmax.f32 %v1291, 0.0
  %v1406 = vmax.f32 %v1293, 0.0
  %v1407 = vmax.f32 %v1296, 0.0
  %v1408 = vmax.f32 %v1298, 0.0
  %v1409 = vmax.f32 %v1301, 0.0
  %v1410 = vmax.f32 %v1303, 0.0
  %v1411 = vmax.f32 %v1306, 0.0
  %v1412 = vmax.f32 %v1308, 0.0
  %v1413 = vmax.f32 %v1311, 0.0
  %v1414 = vmax.f32 %v1313, 0.0
  %v1415 = vmax.f32 %v1316, 0.0
  %v1416 = vmax.f32 %v1318, 0.0
  %v1417 = vmax.f32 %v1321, 0.0
  %v1418 = vmax.f32 %v1323, 0.0
  %v1419 = vmax.f32 %v1326, 0.0
  %v1420 = vmax.f32 %v1328, 0.0
  %v1421 = vmax.f32 %v1331, 0.0
  %v1422 = vmax.f32 %v1333, 0.0
  %v1423 = vmax.f32 %v1336, 0.0
  %v1424 = vmax.f32 %v1338, 0.0
  %v1425 = vmax.f32 %v1341, 0.0
  %v1426 = vmax.f32 %v1343, 0.0
  %v1427 = vmax.f32 %v1346, 0.0
  %v1428 = vmax.f32 %v1348, 0.0
  %v1429 = vmax.f32 %v1351, 0.0
  %v1430 = vmax.f32 %v1353, 0.0
  %v1431 = vmax.f32 %v1356, 0.0
  %v1432 = vmax.f32 %v1358, 0.0
  %v1433 = vmax.f32 %v1361, 0.0
  %v1434 = vmax.f32 %v1363, 0.0
  %v1435 = vmax.f32 %v1366, 0.0
  %v1436 = vmax.f32 %v1368, 0.0
  %v1437 = vmax.f32 %v1371, 0.0
  %v1438 = vmax.f32 %v1373, 0.0
  %1439 = vst.msk [vmem:[%s3] sm:$0xff] %vm771, %v1375
  %1440 = vst.msk [vmem:[%s3 + $0x8] sm:$0xff] %vm771, %v1376
  %1441 = vst.msk [vmem:[%s3 + $0x10] sm:$0xff] %vm771, %v1377
  %1442 = vst.msk [vmem:[%s3 + $0x18] sm:$0xff] %vm771, %v1378
  %1443 = vst.msk [vmem:[%s3 + $0x20] sm:$0xff] %vm771, %v1379
  %1444 = vst.msk [vmem:[%s3 + $0x28] sm:$0xff] %vm771, %v1380
  %1445 = vst.msk [vmem:[%s3 + $0x30] sm:$0xff] %vm771, %v1381
  %1446 = vst.msk [vmem:[%s3 + $0x38] sm:$0xff] %vm771, %v1382
  %1447 = vst.msk [vmem:[%s3 + $0x40] sm:$0xff] %vm771, %v1383
  %1448 = vst.msk [vmem:[%s3 + $0x48] sm:$0xff] %vm771, %v1384
  %1449 = vst.msk [vmem:[%s3 + $0x50] sm:$0xff] %vm771, %v1385
  %1450 = vst.msk [vmem:[%s3 + $0x58] sm:$0xff] %vm771, %v1386
  %1451 = vst.msk [vmem:[%s3 + $0x60] sm:$0xff] %vm771, %v1387
  %1452 = vst.msk [vmem:[%s3 + $0x68] sm:$0xff] %vm771, %v1388
  %1453 = vst.msk [vmem:[%s3 + $0x70] sm:$0xff] %vm771, %v1389
  %1454 = vst.msk [vmem:[%s3 + $0x78] sm:$0xff] %vm771, %v1390
  %1455 = vst.msk [vmem:[%s3 + $0x80] sm:$0xff] %vm771, %v1391
  %1456 = vst.msk [vmem:[%s3 + $0x88] sm:$0xff] %vm771, %v1392
  %1457 = vst.msk [vmem:[%s3 + $0x90] sm:$0xff] %vm771, %v1393
  %1458 = vst.msk [vmem:[%s3 + $0x98] sm:$0xff] %vm771, %v1394
  %1459 = vst.msk [vmem:[%s3 + $0xa0] sm:$0xff] %vm771, %v1395
  %1460 = vst.msk [vmem:[%s3 + $0xa8] sm:$0xff] %vm771, %v1396
  %1461 = vst.msk [vmem:[%s3 + $0xb0] sm:$0xff] %vm771, %v1397
  %1462 = vst.msk [vmem:[%s3 + $0xb8] sm:$0xff] %vm771, %v1398
  %1463 = vst.msk [vmem:[%s3 + $0xc0] sm:$0xff] %vm771, %v1399
  %1464 = vst.msk [vmem:[%s3 + $0xc8] sm:$0xff] %vm771, %v1400
  %1465 = vst.msk [vmem:[%s3 + $0xd0] sm:$0xff] %vm771, %v1401
  %1466 = vst.msk [vmem:[%s3 + $0xd8] sm:$0xff] %vm771, %v1402
  %1467 = vst.msk [vmem:[%s3 + $0xe0] sm:$0xff] %vm771, %v1403
  %1468 = vst.msk [vmem:[%s3 + $0xe8] sm:$0xff] %vm771, %v1404
  %1469 = vst.msk [vmem:[%s3 + $0xf0] sm:$0xff] %vm771, %v1405
  %1470 = vst.msk [vmem:[%s3 + $0xf8] sm:$0xff] %vm771, %v1406
  %1471 = vst.msk [vmem:[%s3 + $0x100] sm:$0xff] %vm771, %v1407
  %1472 = vst.msk [vmem:[%s3 + $0x108] sm:$0xff] %vm771, %v1408
  %1473 = vst.msk [vmem:[%s3 + $0x110] sm:$0xff] %vm771, %v1409
  %1474 = vst.msk [vmem:[%s3 + $0x118] sm:$0xff] %vm771, %v1410
  %1475 = vst.msk [vmem:[%s3 + $0x120] sm:$0xff] %vm771, %v1411
  %1476 = vst.msk [vmem:[%s3 + $0x128] sm:$0xff] %vm771, %v1412
  %1477 = vst.msk [vmem:[%s3 + $0x130] sm:$0xff] %vm771, %v1413
  %1478 = vst.msk [vmem:[%s3 + $0x138] sm:$0xff] %vm771, %v1414
  %1479 = vst.msk [vmem:[%s3 + $0x140] sm:$0xff] %vm771, %v1415
  %1480 = vst.msk [vmem:[%s3 + $0x148] sm:$0xff] %vm771, %v1416
  %1481 = vst.msk [vmem:[%s3 + $0x150] sm:$0xff] %vm771, %v1417
  %1482 = vst.msk [vmem:[%s3 + $0x158] sm:$0xff] %vm771, %v1418
  %1483 = vst.msk [vmem:[%s3 + $0x160] sm:$0xff] %vm771, %v1419
  %1484 = vst.msk [vmem:[%s3 + $0x168] sm:$0xff] %vm771, %v1420
  %1485 = vst.msk [vmem:[%s3 + $0x170] sm:$0xff] %vm771, %v1421
  %1486 = vst.msk [vmem:[%s3 + $0x178] sm:$0xff] %vm771, %v1422
  %1487 = vst.msk [vmem:[%s3 + $0x180] sm:$0xff] %vm771, %v1423
  %1488 = vst.msk [vmem:[%s3 + $0x188] sm:$0xff] %vm771, %v1424
  %1489 = vst.msk [vmem:[%s3 + $0x190] sm:$0xff] %vm771, %v1425
  %1490 = vst.msk [vmem:[%s3 + $0x198] sm:$0xff] %vm771, %v1426
  %1491 = vst.msk [vmem:[%s3 + $0x1a0] sm:$0xff] %vm771, %v1427
  %1492 = vst.msk [vmem:[%s3 + $0x1a8] sm:$0xff] %vm771, %v1428
  %1493 = vst.msk [vmem:[%s3 + $0x1b0] sm:$0xff] %vm771, %v1429
  %1494 = vst.msk [vmem:[%s3 + $0x1b8] sm:$0xff] %vm771, %v1430
  %1495 = vst.msk [vmem:[%s3 + $0x1c0] sm:$0xff] %vm771, %v1431
  %1496 = vst.msk [vmem:[%s3 + $0x1c8] sm:$0xff] %vm771, %v1432
  %1497 = vst.msk [vmem:[%s3 + $0x1d0] sm:$0xff] %vm771, %v1433
  %1498 = vst.msk [vmem:[%s3 + $0x1d8] sm:$0xff] %vm771, %v1434
  %1499 = vst.msk [vmem:[%s3 + $0x1e0] sm:$0xff] %vm771, %v1435
  %1500 = vst.msk [vmem:[%s3 + $0x1e8] sm:$0xff] %vm771, %v1436
  %1501 = vst.msk [vmem:[%s3 + $0x1f0] sm:$0xff] %vm771, %v1437
  %1502 = vst.msk [vmem:[%s3 + $0x1f8] sm:$0xff] %vm771, %v1438
  // Predicated region
  $region14: #{_lambda_.16} parent=0 // pred_check
    _
  $region15: #{_lambda_.16} parent=0 // pred_check_branch
    %1504 = sbr.rel (0) target = $region17
  $region16: #{_lambda_.16} parent=0 // pred_region
    _
  $region17: #{_lambda_.16} parent=0 // pred_fallthru
    _
  // Predicated region
  $region18: #{_lambda_.16} parent=0 // pred_check
    _
  $region19: #{_lambda_.16} parent=0 // pred_check_branch
    %1506 = sbr.rel (0) target = $region21
  $region20: #{_lambda_.16} parent=0 // pred_region
    _
  $region21: #{_lambda_.16} parent=0 // pred_fallthru
    _

// kernel: _lambda_.17
$region0: #{_lambda_.17}
  #allocation0 [shape = 'u32[]', space=smem, size = 0x4, offset = 0x4, fixed_abs, tag = 'smem constant byte address 0x4 - core index']
  #allocation1 [shape = 'u32[72,128]{1,0:T(1,128)}', space=vmem, size = 0x9000, scoped, tag = 'internal scratch']
  %s0 = inlined_call_operand.vmem [shape: bf16[512,288], index: 0, kind: input, shape index: {}]
  %s1 = inlined_call_operand.vmem [shape: bf16[288,32], index: 1, kind: input, shape index: {}]
  %s2 = inlined_call_operand.vmem [shape: f32[1,32], index: 2, kind: input, shape index: {}]
  %s3 = inlined_call_operand.vmem [shape: bf16[32,2], index: 3, kind: input, shape index: {}]
  %s4 = inlined_call_operand.vmem [shape: f32[1,2], index: 4, kind: input, shape index: {}]
  %s5 = inlined_call_operand.vmem [shape: f32[512,2], index: 5, kind: output, shape index: {}]
  %s6 = sld [smem:[#allocation0]]
  $region30: #{_lambda_.17} parent=0
    _
  %s8 = ssub.s32 1, %s6
  %s9 = scalar_select 0, %s8, %s6
  // Predicated region
  $region2: #{_lambda_.17} parent=0 // pred_check
    _
  $region3: #{_lambda_.17} parent=0 // pred_check_branch
    %11 = sbr.rel (0) target = $region5
  $region4: #{_lambda_.17} parent=0 // pred_region
    _
  $region5: #{_lambda_.17} parent=0 // pred_fallthru
    _
  // Predicated region
  $region6: #{_lambda_.17} parent=0 // pred_check
    _
  $region7: #{_lambda_.17} parent=0 // pred_check_branch
    %13 = sbr.rel (0) target = $region9
  $region8: #{_lambda_.17} parent=0 // pred_region
    _
  $region9: #{_lambda_.17} parent=0 // pred_fallthru
    _
  // Predicated region
  $region10: #{_lambda_.17} parent=0 // pred_check
    _
  $region11: #{_lambda_.17} parent=0 // pred_check_branch
    %15 = sbr.rel (0) target = $region13
  $region12: #{_lambda_.17} parent=0 // pred_region
    _
  $region13: #{_lambda_.17} parent=0 // pred_fallthru
    _
  // Predicated region
  $region14: #{_lambda_.17} parent=0 // pred_check
    _
  $region15: #{_lambda_.17} parent=0 // pred_check_branch
    %17 = sbr.rel (0) target = $region17
  $region16: #{_lambda_.17} parent=0 // pred_region
    _
  $region17: #{_lambda_.17} parent=0 // pred_fallthru
    _
  // Predicated region
  $region18: #{_lambda_.17} parent=0 // pred_check
    _
  $region19: #{_lambda_.17} parent=0 // pred_check_branch
    %19 = sbr.rel (0) target = $region21
  $region20: #{_lambda_.17} parent=0 // pred_region
    _
  $region21: #{_lambda_.17} parent=0 // pred_fallthru
    _
  %v21 = vld [vmem:[%s0] sm:$0xff]
  %v22 = vld [vmem:[%s0 + $0x8] sm:$0xf]
  %v23 = vld [vmem:[%s0 + $0xc] sm:$0xff]
  %v24 = vld [vmem:[%s0 + $0x14] sm:$0xf]
  %v25 = vld [vmem:[%s0 + $0x18] sm:$0xff]
  %v26 = vld [vmem:[%s0 + $0x20] sm:$0xf]
  %v27 = vld [vmem:[%s0 + $0x24] sm:$0xff]
  %v28 = vld [vmem:[%s0 + $0x2c] sm:$0xf]
  %v29 = vld [vmem:[%s0 + $0x30] sm:$0xff]
  %v30 = vld [vmem:[%s0 + $0x38] sm:$0xf]
  %v31 = vld [vmem:[%s0 + $0x3c] sm:$0xff]
  %v32 = vld [vmem:[%s0 + $0x44] sm:$0xf]
  %v33 = vld [vmem:[%s0 + $0x48] sm:$0xff]
  %v34 = vld [vmem:[%s0 + $0x50] sm:$0xf]
  %v35 = vld [vmem:[%s0 + $0x54] sm:$0xff]
  %v36 = vld [vmem:[%s0 + $0x5c] sm:$0xf]
  %v37 = vld [vmem:[%s0 + $0x60] sm:$0xff]
  %v38 = vld [vmem:[%s0 + $0x68] sm:$0xf]
  %v39 = vld [vmem:[%s0 + $0x6c] sm:$0xff]
  %v40 = vld [vmem:[%s0 + $0x74] sm:$0xf]
  %v41 = vld [vmem:[%s0 + $0x78] sm:$0xff]
  %v42 = vld [vmem:[%s0 + $0x80] sm:$0xf]
  %v43 = vld [vmem:[%s0 + $0x84] sm:$0xff]
  %v44 = vld [vmem:[%s0 + $0x8c] sm:$0xf]
  %v45 = vld [vmem:[%s0 + $0x90] sm:$0xff]
  %v46 = vld [vmem:[%s0 + $0x98] sm:$0xf]
  %v47 = vld [vmem:[%s0 + $0x9c] sm:$0xff]
  %v48 = vld [vmem:[%s0 + $0xa4] sm:$0xf]
  %v49 = vld [vmem:[%s0 + $0xa8] sm:$0xff]
  %v50 = vld [vmem:[%s0 + $0xb0] sm:$0xf]
  %v51 = vld [vmem:[%s0 + $0xb4] sm:$0xff]
  %v52 = vld [vmem:[%s0 + $0xbc] sm:$0xf]
  %v53 = vld [vmem:[%s0 + $0xc0] sm:$0xff]
  %v54 = vld [vmem:[%s0 + $0xc8] sm:$0xf]
  %v55 = vld [vmem:[%s0 + $0xcc] sm:$0xff]
  %v56 = vld [vmem:[%s0 + $0xd4] sm:$0xf]
  %v57 = vld [vmem:[%s0 + $0xd8] sm:$0xff]
  %v58 = vld [vmem:[%s0 + $0xe0] sm:$0xf]
  %v59 = vld [vmem:[%s0 + $0xe4] sm:$0xff]
  %v60 = vld [vmem:[%s0 + $0xec] sm:$0xf]
  %v61 = vld [vmem:[%s0 + $0xf0] sm:$0xff]
  %v62 = vld [vmem:[%s0 + $0xf8] sm:$0xf]
  %v63 = vld [vmem:[%s0 + $0xfc] sm:$0xff]
  %v64 = vld [vmem:[%s0 + $0x104] sm:$0xf]
  %v65 = vld [vmem:[%s0 + $0x108] sm:$0xff]
  %v66 = vld [vmem:[%s0 + $0x110] sm:$0xf]
  %v67 = vld [vmem:[%s0 + $0x114] sm:$0xff]
  %v68 = vld [vmem:[%s0 + $0x11c] sm:$0xf]
  %v69 = vld [vmem:[%s0 + $0x120] sm:$0xff]
  %v70 = vld [vmem:[%s0 + $0x128] sm:$0xf]
  %v71 = vld [vmem:[%s0 + $0x12c] sm:$0xff]
  %v72 = vld [vmem:[%s0 + $0x134] sm:$0xf]
  %v73 = vld [vmem:[%s0 + $0x138] sm:$0xff]
  %v74 = vld [vmem:[%s0 + $0x140] sm:$0xf]
  %v75 = vld [vmem:[%s0 + $0x144] sm:$0xff]
  %v76 = vld [vmem:[%s0 + $0x14c] sm:$0xf]
  %v77 = vld [vmem:[%s0 + $0x150] sm:$0xff]
  %v78 = vld [vmem:[%s0 + $0x158] sm:$0xf]
  %v79 = vld [vmem:[%s0 + $0x15c] sm:$0xff]
  %v80 = vld [vmem:[%s0 + $0x164] sm:$0xf]
  %v81 = vld [vmem:[%s0 + $0x168] sm:$0xff]
  %v82 = vld [vmem:[%s0 + $0x170] sm:$0xf]
  %v83 = vld [vmem:[%s0 + $0x174] sm:$0xff]
  %v84 = vld [vmem:[%s0 + $0x17c] sm:$0xf]
  %v85 = vld [vmem:[%s0 + $0x180] sm:$0xff]
  %v86 = vld [vmem:[%s0 + $0x188] sm:$0xf]
  %v87 = vld [vmem:[%s0 + $0x18c] sm:$0xff]
  %v88 = vld [vmem:[%s0 + $0x194] sm:$0xf]
  %v89 = vld [vmem:[%s0 + $0x198] sm:$0xff]
  %v90 = vld [vmem:[%s0 + $0x1a0] sm:$0xf]
  %v91 = vld [vmem:[%s0 + $0x1a4] sm:$0xff]
  %v92 = vld [vmem:[%s0 + $0x1ac] sm:$0xf]
  %v93 = vld [vmem:[%s0 + $0x1b0] sm:$0xff]
  %v94 = vld [vmem:[%s0 + $0x1b8] sm:$0xf]
  %v95 = vld [vmem:[%s0 + $0x1bc] sm:$0xff]
  %v96 = vld [vmem:[%s0 + $0x1c4] sm:$0xf]
  %v97 = vld [vmem:[%s0 + $0x1c8] sm:$0xff]
  %v98 = vld [vmem:[%s0 + $0x1d0] sm:$0xf]
  %v99 = vld [vmem:[%s0 + $0x1d4] sm:$0xff]
  %v100 = vld [vmem:[%s0 + $0x1dc] sm:$0xf]
  %v101 = vld [vmem:[%s0 + $0x1e0] sm:$0xff]
  %v102 = vld [vmem:[%s0 + $0x1e8] sm:$0xf]
  %v103 = vld [vmem:[%s0 + $0x1ec] sm:$0xff]
  %v104 = vld [vmem:[%s0 + $0x1f4] sm:$0xf]
  %v105 = vld [vmem:[%s0 + $0x1f8] sm:$0xff]
  %v106 = vld [vmem:[%s0 + $0x200] sm:$0xf]
  %v107 = vld [vmem:[%s0 + $0x204] sm:$0xff]
  %v108 = vld [vmem:[%s0 + $0x20c] sm:$0xf]
  %v109 = vld [vmem:[%s0 + $0x210] sm:$0xff]
  %v110 = vld [vmem:[%s0 + $0x218] sm:$0xf]
  %v111 = vld [vmem:[%s0 + $0x21c] sm:$0xff]
  %v112 = vld [vmem:[%s0 + $0x224] sm:$0xf]
  %v113 = vld [vmem:[%s0 + $0x228] sm:$0xff]
  %v114 = vld [vmem:[%s0 + $0x230] sm:$0xf]
  %v115 = vld [vmem:[%s0 + $0x234] sm:$0xff]
  %v116 = vld [vmem:[%s0 + $0x23c] sm:$0xf]
  %v117 = vld [vmem:[%s0 + $0x240] sm:$0xff]
  %v118 = vld [vmem:[%s0 + $0x248] sm:$0xf]
  %v119 = vld [vmem:[%s0 + $0x24c] sm:$0xff]
  %v120 = vld [vmem:[%s0 + $0x254] sm:$0xf]
  %v121 = vld [vmem:[%s0 + $0x258] sm:$0xff]
  %v122 = vld [vmem:[%s0 + $0x260] sm:$0xf]
  %v123 = vld [vmem:[%s0 + $0x264] sm:$0xff]
  %v124 = vld [vmem:[%s0 + $0x26c] sm:$0xf]
  %v125 = vld [vmem:[%s0 + $0x270] sm:$0xff]
  %v126 = vld [vmem:[%s0 + $0x278] sm:$0xf]
  %v127 = vld [vmem:[%s0 + $0x27c] sm:$0xff]
  %v128 = vld [vmem:[%s0 + $0x284] sm:$0xf]
  %v129 = vld [vmem:[%s0 + $0x288] sm:$0xff]
  %v130 = vld [vmem:[%s0 + $0x290] sm:$0xf]
  %v131 = vld [vmem:[%s0 + $0x294] sm:$0xff]
  %v132 = vld [vmem:[%s0 + $0x29c] sm:$0xf]
  %v133 = vld [vmem:[%s0 + $0x2a0] sm:$0xff]
  %v134 = vld [vmem:[%s0 + $0x2a8] sm:$0xf]
  %v135 = vld [vmem:[%s0 + $0x2ac] sm:$0xff]
  %v136 = vld [vmem:[%s0 + $0x2b4] sm:$0xf]
  %v137 = vld [vmem:[%s0 + $0x2b8] sm:$0xff]
  %v138 = vld [vmem:[%s0 + $0x2c0] sm:$0xf]
  %v139 = vld [vmem:[%s0 + $0x2c4] sm:$0xff]
  %v140 = vld [vmem:[%s0 + $0x2cc] sm:$0xf]
  %v141 = vld [vmem:[%s0 + $0x2d0] sm:$0xff]
  %v142 = vld [vmem:[%s0 + $0x2d8] sm:$0xf]
  %v143 = vld [vmem:[%s0 + $0x2dc] sm:$0xff]
  %v144 = vld [vmem:[%s0 + $0x2e4] sm:$0xf]
  %v145 = vld [vmem:[%s0 + $0x2e8] sm:$0xff]
  %v146 = vld [vmem:[%s0 + $0x2f0] sm:$0xf]
  %v147 = vld [vmem:[%s0 + $0x2f4] sm:$0xff]
  %v148 = vld [vmem:[%s0 + $0x2fc] sm:$0xf]
  %v149 = vld [vmem:[%s1] sm:$0xf]
  %v150 = vld [vmem:[%s1 + $0x4] sm:$0xf]
  %v151 = vld [vmem:[%s1 + $0x8] sm:$0xf]
  %v152 = vld [vmem:[%s1 + $0xc] sm:$0xf]
  %v153 = vld [vmem:[%s1 + $0x10] sm:$0xf]
  %v154 = vld [vmem:[%s1 + $0x14] sm:$0xf]
  %v155 = vld [vmem:[%s1 + $0x18] sm:$0xf]
  %v156 = vld [vmem:[%s1 + $0x1c] sm:$0xf]
  %v157 = vld [vmem:[%s1 + $0x20] sm:$0xf]
  %v158 = vld [vmem:[%s1 + $0x24] sm:$0xf]
  %v159 = vld [vmem:[%s1 + $0x28] sm:$0xf]
  %v160 = vld [vmem:[%s1 + $0x2c] sm:$0xf]
  %v161 = vld [vmem:[%s1 + $0x30] sm:$0xf]
  %v162 = vld [vmem:[%s1 + $0x34] sm:$0xf]
  %v163 = vld [vmem:[%s1 + $0x38] sm:$0xf]
  %v164 = vld [vmem:[%s1 + $0x3c] sm:$0xf]
  %v165 = vld [vmem:[%s1 + $0x40] sm:$0xf]
  %v166 = vld [vmem:[%s1 + $0x44] sm:$0xf]
  %v167 = vld [vmem:[%s1 + $0x48] sm:$0xf]
  %v168 = vld [vmem:[%s1 + $0x4c] sm:$0xf]
  %v169 = vld [vmem:[%s1 + $0x50] sm:$0xf]
  %v170 = vld [vmem:[%s1 + $0x54] sm:$0xf]
  %v171 = vld [vmem:[%s1 + $0x58] sm:$0xf]
  %v172 = vld [vmem:[%s1 + $0x5c] sm:$0xf]
  %v173 = vld [vmem:[%s1 + $0x60] sm:$0xf]
  %v174 = vld [vmem:[%s1 + $0x64] sm:$0xf]
  %v175 = vld [vmem:[%s1 + $0x68] sm:$0xf]
  %v176 = vld [vmem:[%s1 + $0x6c] sm:$0xf]
  %v177 = vld [vmem:[%s1 + $0x70] sm:$0xf]
  %v178 = vld [vmem:[%s1 + $0x74] sm:$0xf]
  %v179 = vld [vmem:[%s1 + $0x78] sm:$0xf]
  %v180 = vld [vmem:[%s1 + $0x7c] sm:$0xf]
  %v181 = vld [vmem:[%s1 + $0x80] sm:$0xf]
  %v182 = vld [vmem:[%s1 + $0x84] sm:$0xf]
  %v183 = vld [vmem:[%s1 + $0x88] sm:$0xf]
  %v184 = vld [vmem:[%s1 + $0x8c] sm:$0xf]
  %v185 = vld [vmem:[%s2] sm:$0x1]
  %v187 = vperm.slane %v185, 0
  %v317 = vunpack.c.l.b16 %v21
  %v318 = vunpack.c.h.b16 %v21
  %v319 = vunpack.c.l.b16 %v22
  %v320 = vunpack.c.l.b16 %v23
  %v321 = vunpack.c.h.b16 %v23
  %v322 = vunpack.c.l.b16 %v24
  %v323 = vunpack.c.l.b16 %v25
  %v324 = vunpack.c.h.b16 %v25
  %v325 = vunpack.c.l.b16 %v26
  %v326 = vunpack.c.l.b16 %v27
  %v327 = vunpack.c.h.b16 %v27
  %v328 = vunpack.c.l.b16 %v28
  %v329 = vunpack.c.l.b16 %v29
  %v330 = vunpack.c.h.b16 %v29
  %v331 = vunpack.c.l.b16 %v30
  %v332 = vunpack.c.l.b16 %v31
  %v333 = vunpack.c.h.b16 %v31
  %v334 = vunpack.c.l.b16 %v32
  %v335 = vunpack.c.l.b16 %v33
  %v336 = vunpack.c.h.b16 %v33
  %v337 = vunpack.c.l.b16 %v34
  %v338 = vunpack.c.l.b16 %v35
  %v339 = vunpack.c.h.b16 %v35
  %v340 = vunpack.c.l.b16 %v36
  %v341 = vunpack.c.l.b16 %v37
  %v342 = vunpack.c.h.b16 %v37
  %v343 = vunpack.c.l.b16 %v38
  %v344 = vunpack.c.l.b16 %v39
  %v345 = vunpack.c.h.b16 %v39
  %v346 = vunpack.c.l.b16 %v40
  %v347 = vunpack.c.l.b16 %v41
  %v348 = vunpack.c.h.b16 %v41
  %v349 = vunpack.c.l.b16 %v42
  %v350 = vunpack.c.l.b16 %v43
  %v351 = vunpack.c.h.b16 %v43
  %v352 = vunpack.c.l.b16 %v44
  %v353 = vunpack.c.l.b16 %v45
  %v354 = vunpack.c.h.b16 %v45
  %v355 = vunpack.c.l.b16 %v46
  %v356 = vunpack.c.l.b16 %v47
  %v357 = vunpack.c.h.b16 %v47
  %v358 = vunpack.c.l.b16 %v48
  %v359 = vunpack.c.l.b16 %v49
  %v360 = vunpack.c.h.b16 %v49
  %v361 = vunpack.c.l.b16 %v50
  %v362 = vunpack.c.l.b16 %v51
  %v363 = vunpack.c.h.b16 %v51
  %v364 = vunpack.c.l.b16 %v52
  %v365 = vunpack.c.l.b16 %v53
  %v366 = vunpack.c.h.b16 %v53
  %v367 = vunpack.c.l.b16 %v54
  %v368 = vunpack.c.l.b16 %v55
  %v369 = vunpack.c.h.b16 %v55
  %v370 = vunpack.c.l.b16 %v56
  %v371 = vunpack.c.l.b16 %v57
  %v372 = vunpack.c.h.b16 %v57
  %v373 = vunpack.c.l.b16 %v58
  %v374 = vunpack.c.l.b16 %v59
  %v375 = vunpack.c.h.b16 %v59
  %v376 = vunpack.c.l.b16 %v60
  %v377 = vunpack.c.l.b16 %v61
  %v378 = vunpack.c.h.b16 %v61
  %v379 = vunpack.c.l.b16 %v62
  %v380 = vunpack.c.l.b16 %v63
  %v381 = vunpack.c.h.b16 %v63
  %v382 = vunpack.c.l.b16 %v64
  %v383 = vunpack.c.l.b16 %v65
  %v384 = vunpack.c.h.b16 %v65
  %v385 = vunpack.c.l.b16 %v66
  %v386 = vunpack.c.l.b16 %v67
  %v387 = vunpack.c.h.b16 %v67
  %v388 = vunpack.c.l.b16 %v68
  %v389 = vunpack.c.l.b16 %v69
  %v390 = vunpack.c.h.b16 %v69
  %v391 = vunpack.c.l.b16 %v70
  %v392 = vunpack.c.l.b16 %v71
  %v393 = vunpack.c.h.b16 %v71
  %v394 = vunpack.c.l.b16 %v72
  %v395 = vunpack.c.l.b16 %v73
  %v396 = vunpack.c.h.b16 %v73
  %v397 = vunpack.c.l.b16 %v74
  %v398 = vunpack.c.l.b16 %v75
  %v399 = vunpack.c.h.b16 %v75
  %v400 = vunpack.c.l.b16 %v76
  %v401 = vunpack.c.l.b16 %v77
  %v402 = vunpack.c.h.b16 %v77
  %v403 = vunpack.c.l.b16 %v78
  %v404 = vunpack.c.l.b16 %v79
  %v405 = vunpack.c.h.b16 %v79
  %v406 = vunpack.c.l.b16 %v80
  %v407 = vunpack.c.l.b16 %v81
  %v408 = vunpack.c.h.b16 %v81
  %v409 = vunpack.c.l.b16 %v82
  %v410 = vunpack.c.l.b16 %v83
  %v411 = vunpack.c.h.b16 %v83
  %v412 = vunpack.c.l.b16 %v84
  %v413 = vunpack.c.l.b16 %v85
  %v414 = vunpack.c.h.b16 %v85
  %v415 = vunpack.c.l.b16 %v86
  %v416 = vunpack.c.l.b16 %v87
  %v417 = vunpack.c.h.b16 %v87
  %v418 = vunpack.c.l.b16 %v88
  %v419 = vunpack.c.l.b16 %v89
  %v420 = vunpack.c.h.b16 %v89
  %v421 = vunpack.c.l.b16 %v90
  %v422 = vunpack.c.l.b16 %v91
  %v423 = vunpack.c.h.b16 %v91
  %v424 = vunpack.c.l.b16 %v92
  %v425 = vunpack.c.l.b16 %v93
  %v426 = vunpack.c.h.b16 %v93
  %v427 = vunpack.c.l.b16 %v94
  %v428 = vunpack.c.l.b16 %v95
  %v429 = vunpack.c.h.b16 %v95
  %v430 = vunpack.c.l.b16 %v96
  %v431 = vunpack.c.l.b16 %v97
  %v432 = vunpack.c.h.b16 %v97
  %v433 = vunpack.c.l.b16 %v98
  %v434 = vunpack.c.l.b16 %v99
  %v435 = vunpack.c.h.b16 %v99
  %v436 = vunpack.c.l.b16 %v100
  %v437 = vunpack.c.l.b16 %v101
  %v438 = vunpack.c.h.b16 %v101
  %v439 = vunpack.c.l.b16 %v102
  %v440 = vunpack.c.l.b16 %v103
  %v441 = vunpack.c.h.b16 %v103
  %v442 = vunpack.c.l.b16 %v104
  %v443 = vunpack.c.l.b16 %v105
  %v444 = vunpack.c.h.b16 %v105
  %v445 = vunpack.c.l.b16 %v106
  %v446 = vunpack.c.l.b16 %v107
  %v447 = vunpack.c.h.b16 %v107
  %v448 = vunpack.c.l.b16 %v108
  %v449 = vunpack.c.l.b16 %v109
  %v450 = vunpack.c.h.b16 %v109
  %v451 = vunpack.c.l.b16 %v110
  %v452 = vunpack.c.l.b16 %v111
  %v453 = vunpack.c.h.b16 %v111
  %v454 = vunpack.c.l.b16 %v112
  %v455 = vunpack.c.l.b16 %v113
  %v456 = vunpack.c.h.b16 %v113
  %v457 = vunpack.c.l.b16 %v114
  %v458 = vunpack.c.l.b16 %v115
  %v459 = vunpack.c.h.b16 %v115
  %v460 = vunpack.c.l.b16 %v116
  %v461 = vunpack.c.l.b16 %v117
  %v462 = vunpack.c.h.b16 %v117
  %v463 = vunpack.c.l.b16 %v118
  %v464 = vunpack.c.l.b16 %v119
  %v465 = vunpack.c.h.b16 %v119
  %v466 = vunpack.c.l.b16 %v120
  %v467 = vunpack.c.l.b16 %v121
  %v468 = vunpack.c.h.b16 %v121
  %v469 = vunpack.c.l.b16 %v122
  %v470 = vunpack.c.l.b16 %v123
  %v471 = vunpack.c.h.b16 %v123
  %v472 = vunpack.c.l.b16 %v124
  %v473 = vunpack.c.l.b16 %v125
  %v474 = vunpack.c.h.b16 %v125
  %v475 = vunpack.c.l.b16 %v126
  %v476 = vunpack.c.l.b16 %v127
  %v477 = vunpack.c.h.b16 %v127
  %v478 = vunpack.c.l.b16 %v128
  %v479 = vunpack.c.l.b16 %v129
  %v480 = vunpack.c.h.b16 %v129
  %v481 = vunpack.c.l.b16 %v130
  %v482 = vunpack.c.l.b16 %v131
  %v483 = vunpack.c.h.b16 %v131
  %v484 = vunpack.c.l.b16 %v132
  %v485 = vunpack.c.l.b16 %v133
  %v486 = vunpack.c.h.b16 %v133
  %v487 = vunpack.c.l.b16 %v134
  %v488 = vunpack.c.l.b16 %v135
  %v489 = vunpack.c.h.b16 %v135
  %v490 = vunpack.c.l.b16 %v136
  %v491 = vunpack.c.l.b16 %v137
  %v492 = vunpack.c.h.b16 %v137
  %v493 = vunpack.c.l.b16 %v138
  %v494 = vunpack.c.l.b16 %v139
  %v495 = vunpack.c.h.b16 %v139
  %v496 = vunpack.c.l.b16 %v140
  %v497 = vunpack.c.l.b16 %v141
  %v498 = vunpack.c.h.b16 %v141
  %v499 = vunpack.c.l.b16 %v142
  %v500 = vunpack.c.l.b16 %v143
  %v501 = vunpack.c.h.b16 %v143
  %v502 = vunpack.c.l.b16 %v144
  %v503 = vunpack.c.l.b16 %v145
  %v504 = vunpack.c.h.b16 %v145
  %v505 = vunpack.c.l.b16 %v146
  %v506 = vunpack.c.l.b16 %v147
  %v507 = vunpack.c.h.b16 %v147
  %v508 = vunpack.c.l.b16 %v148
  %v509 = vpack.c.b16 %v320, %v317
  %v510 = vpack.c.b16 %v321, %v318
  %v511 = vpack.c.b16 %v322, %v319
  %v512 = vpack.c.b16 %v326, %v323
  %v513 = vpack.c.b16 %v327, %v324
  %v514 = vpack.c.b16 %v328, %v325
  %v515 = vpack.c.b16 %v332, %v329
  %v516 = vpack.c.b16 %v333, %v330
  %v517 = vpack.c.b16 %v334, %v331
  %v518 = vpack.c.b16 %v338, %v335
  %v519 = vpack.c.b16 %v339, %v336
  %v520 = vpack.c.b16 %v340, %v337
  %v521 = vpack.c.b16 %v344, %v341
  %v522 = vpack.c.b16 %v345, %v342
  %v523 = vpack.c.b16 %v346, %v343
  %v524 = vpack.c.b16 %v350, %v347
  %v525 = vpack.c.b16 %v351, %v348
  %v526 = vpack.c.b16 %v352, %v349
  %v527 = vpack.c.b16 %v356, %v353
  %v528 = vpack.c.b16 %v357, %v354
  %v529 = vpack.c.b16 %v358, %v355
  %v530 = vpack.c.b16 %v362, %v359
  %v531 = vpack.c.b16 %v363, %v360
  %v532 = vpack.c.b16 %v364, %v361
  %v533 = vpack.c.b16 %v368, %v365
  %v534 = vpack.c.b16 %v369, %v366
  %v535 = vpack.c.b16 %v370, %v367
  %v536 = vpack.c.b16 %v374, %v371
  %v537 = vpack.c.b16 %v375, %v372
  %v538 = vpack.c.b16 %v376, %v373
  %v539 = vpack.c.b16 %v380, %v377
  %v540 = vpack.c.b16 %v381, %v378
  %v541 = vpack.c.b16 %v382, %v379
  %v542 = vpack.c.b16 %v386, %v383
  %v543 = vpack.c.b16 %v387, %v384
  %v544 = vpack.c.b16 %v388, %v385
  %v545 = vpack.c.b16 %v392, %v389
  %v546 = vpack.c.b16 %v393, %v390
  %v547 = vpack.c.b16 %v394, %v391
  %v548 = vpack.c.b16 %v398, %v395
  %v549 = vpack.c.b16 %v399, %v396
  %v550 = vpack.c.b16 %v400, %v397
  %v551 = vpack.c.b16 %v404, %v401
  %v552 = vpack.c.b16 %v405, %v402
  %v553 = vpack.c.b16 %v406, %v403
  %v554 = vpack.c.b16 %v410, %v407
  %v555 = vpack.c.b16 %v411, %v408
  %v556 = vpack.c.b16 %v412, %v409
  %v557 = vpack.c.b16 %v416, %v413
  %v558 = vpack.c.b16 %v417, %v414
  %v559 = vpack.c.b16 %v418, %v415
  %v560 = vpack.c.b16 %v422, %v419
  %v561 = vpack.c.b16 %v423, %v420
  %v562 = vpack.c.b16 %v424, %v421
  %v563 = vpack.c.b16 %v428, %v425
  %v564 = vpack.c.b16 %v429, %v426
  %v565 = vpack.c.b16 %v430, %v427
  %v566 = vpack.c.b16 %v434, %v431
  %v567 = vpack.c.b16 %v435, %v432
  %v568 = vpack.c.b16 %v436, %v433
  %v569 = vpack.c.b16 %v440, %v437
  %v570 = vpack.c.b16 %v441, %v438
  %v571 = vpack.c.b16 %v442, %v439
  %v572 = vpack.c.b16 %v446, %v443
  %v573 = vpack.c.b16 %v447, %v444
  %v574 = vpack.c.b16 %v448, %v445
  %v575 = vpack.c.b16 %v452, %v449
  %v576 = vpack.c.b16 %v453, %v450
  %v577 = vpack.c.b16 %v454, %v451
  %v578 = vpack.c.b16 %v458, %v455
  %v579 = vpack.c.b16 %v459, %v456
  %v580 = vpack.c.b16 %v460, %v457
  %v581 = vpack.c.b16 %v464, %v461
  %v582 = vpack.c.b16 %v465, %v462
  %v583 = vpack.c.b16 %v466, %v463
  %v584 = vpack.c.b16 %v470, %v467
  %v585 = vpack.c.b16 %v471, %v468
  %v586 = vpack.c.b16 %v472, %v469
  %v587 = vpack.c.b16 %v476, %v473
  %v588 = vpack.c.b16 %v477, %v474
  %v589 = vpack.c.b16 %v478, %v475
  %v590 = vpack.c.b16 %v482, %v479
  %v591 = vpack.c.b16 %v483, %v480
  %v592 = vpack.c.b16 %v484, %v481
  %v593 = vpack.c.b16 %v488, %v485
  %v594 = vpack.c.b16 %v489, %v486
  %v595 = vpack.c.b16 %v490, %v487
  %v596 = vpack.c.b16 %v494, %v491
  %v597 = vpack.c.b16 %v495, %v492
  %v598 = vpack.c.b16 %v496, %v493
  %v599 = vpack.c.b16 %v500, %v497
  %v600 = vpack.c.b16 %v501, %v498
  %v601 = vpack.c.b16 %v502, %v499
  %v602 = vpack.c.b16 %v506, %v503
  %v603 = vpack.c.b16 %v507, %v504
  %v604 = vpack.c.b16 %v508, %v505
  %v705 = vunpack.c.l.b16 %v149
  %v706 = vunpack.c.l.b16 %v150
  %v707 = vunpack.c.l.b16 %v151
  %v708 = vunpack.c.l.b16 %v152
  %v709 = vunpack.c.l.b16 %v153
  %v710 = vunpack.c.l.b16 %v154
  %v711 = vunpack.c.l.b16 %v155
  %v712 = vunpack.c.l.b16 %v156
  %v713 = vunpack.c.l.b16 %v157
  %v714 = vunpack.c.l.b16 %v158
  %v715 = vunpack.c.l.b16 %v159
  %v716 = vunpack.c.l.b16 %v160
  %v717 = vunpack.c.l.b16 %v161
  %v718 = vunpack.c.l.b16 %v162
  %v719 = vunpack.c.l.b16 %v163
  %v720 = vunpack.c.l.b16 %v164
  %v721 = vunpack.c.l.b16 %v165
  %v722 = vunpack.c.l.b16 %v166
  %v723 = vunpack.c.l.b16 %v167
  %v724 = vunpack.c.l.b16 %v168
  %v725 = vunpack.c.l.b16 %v169
  %v726 = vunpack.c.l.b16 %v170
  %v727 = vunpack.c.l.b16 %v171
  %v728 = vunpack.c.l.b16 %v172
  %v729 = vunpack.c.l.b16 %v173
  %v730 = vunpack.c.l.b16 %v174
  %v731 = vunpack.c.l.b16 %v175
  %v732 = vunpack.c.l.b16 %v176
  %v733 = vunpack.c.l.b16 %v177
  %v734 = vunpack.c.l.b16 %v178
  %v735 = vunpack.c.l.b16 %v179
  %v736 = vunpack.c.l.b16 %v180
  %v737 = vunpack.c.l.b16 %v181
  %v738 = vunpack.c.l.b16 %v182
  %v739 = vunpack.c.l.b16 %v183
  %v740 = vunpack.c.l.b16 %v184
  %v741 = vpack.c.b16 %v706, %v705
  %v742 = vpack.c.b16 %v708, %v707
  %v743 = vpack.c.b16 %v710, %v709
  %v744 = vpack.c.b16 %v712, %v711
  %v745 = vpack.c.b16 %v714, %v713
  %v746 = vpack.c.b16 %v716, %v715
  %v747 = vpack.c.b16 %v718, %v717
  %v748 = vpack.c.b16 %v720, %v719
  %v749 = vpack.c.b16 %v722, %v721
  %v750 = vpack.c.b16 %v724, %v723
  %v751 = vpack.c.b16 %v726, %v725
  %v752 = vpack.c.b16 %v728, %v727
  %v753 = vpack.c.b16 %v730, %v729
  %v754 = vpack.c.b16 %v732, %v731
  %v755 = vpack.c.b16 %v734, %v733
  %v756 = vpack.c.b16 %v736, %v735
  %v757 = vpack.c.b16 %v738, %v737
  %v758 = vpack.c.b16 %v740, %v739
  %vm777 = vcmask 261120
  %v779 = vsel %vm777, %v511, 0
  %v782 = vsel %vm777, %v514, 0
  %v785 = vsel %vm777, %v517, 0
  %v788 = vsel %vm777, %v520, 0
  %v791 = vsel %vm777, %v523, 0
  %v794 = vsel %vm777, %v526, 0
  %v797 = vsel %vm777, %v529, 0
  %v800 = vsel %vm777, %v532, 0
  %v803 = vsel %vm777, %v535, 0
  %v806 = vsel %vm777, %v538, 0
  %v809 = vsel %vm777, %v541, 0
  %v812 = vsel %vm777, %v544, 0
  %v815 = vsel %vm777, %v547, 0
  %v818 = vsel %vm777, %v550, 0
  %v821 = vsel %vm777, %v553, 0
  %v824 = vsel %vm777, %v556, 0
  %v827 = vsel %vm777, %v559, 0
  %v830 = vsel %vm777, %v562, 0
  %v833 = vsel %vm777, %v565, 0
  %v836 = vsel %vm777, %v568, 0
  %v839 = vsel %vm777, %v571, 0
  %v842 = vsel %vm777, %v574, 0
  %v845 = vsel %vm777, %v577, 0
  %v848 = vsel %vm777, %v580, 0
  %v851 = vsel %vm777, %v583, 0
  %v854 = vsel %vm777, %v586, 0
  %v857 = vsel %vm777, %v589, 0
  %v860 = vsel %vm777, %v592, 0
  %v863 = vsel %vm777, %v595, 0
  %v866 = vsel %vm777, %v598, 0
  %v869 = vsel %vm777, %v601, 0
  %v872 = vsel %vm777, %v604, 0
  %874 = vmatpush.bf16.msra.mxu0 %v748
  %875 = vmatpush.bf16.msra.mxu0 %v747
  %876 = vmatpush.bf16.msra.mxu0 %v746
  %877 = vmatpush.bf16.msra.mxu0 %v745
  %878 = vmatpush.bf16.msra.mxu0 %v744
  %879 = vmatpush.bf16.msra.mxu0 %v743
  %880 = vmatpush.bf16.msra.mxu0 %v742
  %881 = vmatpush.bf16.msra.mxu0 %v741
  %882 = vmatmul.bf16.gmra.mxu0 %v509
  %v883 = vpop.f32.mrf.mxu0
  %v884 = vadd.f32 %v187, %v883
  %v885 = vpop.f32.mrf.mxu0
  %v886 = vadd.f32 %v187, %v885
  %887 = vmatmul.bf16.gmra.mxu0 %v512
  %v888 = vpop.f32.mrf.mxu0
  %v889 = vadd.f32 %v187, %v888
  %v890 = vpop.f32.mrf.mxu0
  %v891 = vadd.f32 %v187, %v890
  %892 = vmatmul.bf16.gmra.mxu0 %v515
  %v893 = vpop.f32.mrf.mxu0
  %v894 = vadd.f32 %v187, %v893
  %v895 = vpop.f32.mrf.mxu0
  %v896 = vadd.f32 %v187, %v895
  %897 = vmatmul.bf16.gmra.mxu0 %v518
  %v898 = vpop.f32.mrf.mxu0
  %v899 = vadd.f32 %v187, %v898
  %v900 = vpop.f32.mrf.mxu0
  %v901 = vadd.f32 %v187, %v900
  %902 = vmatmul.bf16.gmra.mxu0 %v521
  %v903 = vpop.f32.mrf.mxu0
  %v904 = vadd.f32 %v187, %v903
  %v905 = vpop.f32.mrf.mxu0
  %v906 = vadd.f32 %v187, %v905
  %907 = vmatmul.bf16.gmra.mxu0 %v524
  %v908 = vpop.f32.mrf.mxu0
  %v909 = vadd.f32 %v187, %v908
  %v910 = vpop.f32.mrf.mxu0
  %v911 = vadd.f32 %v187, %v910
  %912 = vmatmul.bf16.gmra.mxu0 %v527
  %v913 = vpop.f32.mrf.mxu0
  %v914 = vadd.f32 %v187, %v913
  %v915 = vpop.f32.mrf.mxu0
  %v916 = vadd.f32 %v187, %v915
  %917 = vmatmul.bf16.gmra.mxu0 %v530
  %v918 = vpop.f32.mrf.mxu0
  %v919 = vadd.f32 %v187, %v918
  %v920 = vpop.f32.mrf.mxu0
  %v921 = vadd.f32 %v187, %v920
  %922 = vmatmul.bf16.gmra.mxu0 %v533
  %v923 = vpop.f32.mrf.mxu0
  %v924 = vadd.f32 %v187, %v923
  %v925 = vpop.f32.mrf.mxu0
  %v926 = vadd.f32 %v187, %v925
  %927 = vmatmul.bf16.gmra.mxu0 %v536
  %v928 = vpop.f32.mrf.mxu0
  %v929 = vadd.f32 %v187, %v928
  %v930 = vpop.f32.mrf.mxu0
  %v931 = vadd.f32 %v187, %v930
  %932 = vmatmul.bf16.gmra.mxu0 %v539
  %v933 = vpop.f32.mrf.mxu0
  %v934 = vadd.f32 %v187, %v933
  %v935 = vpop.f32.mrf.mxu0
  %v936 = vadd.f32 %v187, %v935
  %937 = vmatmul.bf16.gmra.mxu0 %v542
  %v938 = vpop.f32.mrf.mxu0
  %v939 = vadd.f32 %v187, %v938
  %v940 = vpop.f32.mrf.mxu0
  %v941 = vadd.f32 %v187, %v940
  %942 = vmatmul.bf16.gmra.mxu0 %v545
  %v943 = vpop.f32.mrf.mxu0
  %v944 = vadd.f32 %v187, %v943
  %v945 = vpop.f32.mrf.mxu0
  %v946 = vadd.f32 %v187, %v945
  %947 = vmatmul.bf16.gmra.mxu0 %v548
  %v948 = vpop.f32.mrf.mxu0
  %v949 = vadd.f32 %v187, %v948
  %v950 = vpop.f32.mrf.mxu0
  %v951 = vadd.f32 %v187, %v950
  %952 = vmatmul.bf16.gmra.mxu0 %v551
  %v953 = vpop.f32.mrf.mxu0
  %v954 = vadd.f32 %v187, %v953
  %v955 = vpop.f32.mrf.mxu0
  %v956 = vadd.f32 %v187, %v955
  %957 = vmatmul.bf16.gmra.mxu0 %v554
  %v958 = vpop.f32.mrf.mxu0
  %v959 = vadd.f32 %v187, %v958
  %v960 = vpop.f32.mrf.mxu0
  %v961 = vadd.f32 %v187, %v960
  %962 = vmatmul.bf16.gmra.mxu0 %v557
  %v963 = vpop.f32.mrf.mxu0
  %v964 = vadd.f32 %v187, %v963
  %v965 = vpop.f32.mrf.mxu0
  %v966 = vadd.f32 %v187, %v965
  %967 = vmatmul.bf16.gmra.mxu0 %v560
  %v968 = vpop.f32.mrf.mxu0
  %v969 = vadd.f32 %v187, %v968
  %v970 = vpop.f32.mrf.mxu0
  %v971 = vadd.f32 %v187, %v970
  %972 = vmatmul.bf16.gmra.mxu0 %v563
  %v973 = vpop.f32.mrf.mxu0
  %v974 = vadd.f32 %v187, %v973
  %v975 = vpop.f32.mrf.mxu0
  %v976 = vadd.f32 %v187, %v975
  %977 = vmatmul.bf16.gmra.mxu0 %v566
  %v978 = vpop.f32.mrf.mxu0
  %v979 = vadd.f32 %v187, %v978
  %v980 = vpop.f32.mrf.mxu0
  %v981 = vadd.f32 %v187, %v980
  %982 = vmatmul.bf16.gmra.mxu0 %v569
  %v983 = vpop.f32.mrf.mxu0
  %v984 = vadd.f32 %v187, %v983
  %v985 = vpop.f32.mrf.mxu0
  %v986 = vadd.f32 %v187, %v985
  %987 = vmatmul.bf16.gmra.mxu0 %v572
  %v988 = vpop.f32.mrf.mxu0
  %v989 = vadd.f32 %v187, %v988
  %v990 = vpop.f32.mrf.mxu0
  %v991 = vadd.f32 %v187, %v990
  %992 = vmatmul.bf16.gmra.mxu0 %v575
  %v993 = vpop.f32.mrf.mxu0
  %v994 = vadd.f32 %v187, %v993
  %v995 = vpop.f32.mrf.mxu0
  %v996 = vadd.f32 %v187, %v995
  %997 = vmatmul.bf16.gmra.mxu0 %v578
  %v998 = vpop.f32.mrf.mxu0
  %v999 = vadd.f32 %v187, %v998
  %v1000 = vpop.f32.mrf.mxu0
  %v1001 = vadd.f32 %v187, %v1000
  %1002 = vmatmul.bf16.gmra.mxu0 %v581
  %v1003 = vpop.f32.mrf.mxu0
  %v1004 = vadd.f32 %v187, %v1003
  %v1005 = vpop.f32.mrf.mxu0
  %v1006 = vadd.f32 %v187, %v1005
  %1007 = vmatmul.bf16.gmra.mxu0 %v584
  %v1008 = vpop.f32.mrf.mxu0
  %v1009 = vadd.f32 %v187, %v1008
  %v1010 = vpop.f32.mrf.mxu0
  %v1011 = vadd.f32 %v187, %v1010
  %1012 = vmatmul.bf16.gmra.mxu0 %v587
  %v1013 = vpop.f32.mrf.mxu0
  %v1014 = vadd.f32 %v187, %v1013
  %v1015 = vpop.f32.mrf.mxu0
  %v1016 = vadd.f32 %v187, %v1015
  %1017 = vmatmul.bf16.gmra.mxu0 %v590
  %v1018 = vpop.f32.mrf.mxu0
  %v1019 = vadd.f32 %v187, %v1018
  %v1020 = vpop.f32.mrf.mxu0
  %v1021 = vadd.f32 %v187, %v1020
  %1022 = vmatmul.bf16.gmra.mxu0 %v593
  %v1023 = vpop.f32.mrf.mxu0
  %v1024 = vadd.f32 %v187, %v1023
  %v1025 = vpop.f32.mrf.mxu0
  %v1026 = vadd.f32 %v187, %v1025
  %1027 = vmatmul.bf16.gmra.mxu0 %v596
  %v1028 = vpop.f32.mrf.mxu0
  %v1029 = vadd.f32 %v187, %v1028
  %v1030 = vpop.f32.mrf.mxu0
  %v1031 = vadd.f32 %v187, %v1030
  %1032 = vmatmul.bf16.gmra.mxu0 %v599
  %v1033 = vpop.f32.mrf.mxu0
  %v1034 = vadd.f32 %v187, %v1033
  %v1035 = vpop.f32.mrf.mxu0
  %v1036 = vadd.f32 %v187, %v1035
  %1037 = vmatmul.bf16.gmra.mxu0 %v602
  %v1038 = vpop.f32.mrf.mxu0
  %v1039 = vadd.f32 %v187, %v1038
  %v1040 = vpop.f32.mrf.mxu0
  %v1041 = vadd.f32 %v187, %v1040
  %1042 = vdwg.mxu0
  %1043 = vmatpush.bf16.msra.mxu0 %v756
  %1044 = vmatpush.bf16.msra.mxu0 %v755
  %1045 = vmatpush.bf16.msra.mxu0 %v754
  %1046 = vmatpush.bf16.msra.mxu0 %v753
  %1047 = vmatpush.bf16.msra.mxu0 %v752
  %1048 = vmatpush.bf16.msra.mxu0 %v751
  %1049 = vmatpush.bf16.msra.mxu0 %v750
  %1050 = vmatpush.bf16.msra.mxu0 %v749
  %1051 = vmatmul.bf16.gmra.mxu0 %v510
  %v1052 = vpop.f32.mrf.mxu0
  %v1053 = vadd.f32 %v884, %v1052
  %v1054 = vpop.f32.mrf.mxu0
  %v1055 = vadd.f32 %v886, %v1054
  %1056 = vmatmul.bf16.gmra.mxu0 %v513
  %v1057 = vpop.f32.mrf.mxu0
  %v1058 = vadd.f32 %v889, %v1057
  %v1059 = vpop.f32.mrf.mxu0
  %v1060 = vadd.f32 %v891, %v1059
  %1061 = vmatmul.bf16.gmra.mxu0 %v516
  %v1062 = vpop.f32.mrf.mxu0
  %v1063 = vadd.f32 %v894, %v1062
  %v1064 = vpop.f32.mrf.mxu0
  %v1065 = vadd.f32 %v896, %v1064
  %1066 = vmatmul.bf16.gmra.mxu0 %v519
  %v1067 = vpop.f32.mrf.mxu0
  %v1068 = vadd.f32 %v899, %v1067
  %v1069 = vpop.f32.mrf.mxu0
  %v1070 = vadd.f32 %v901, %v1069
  %1071 = vmatmul.bf16.gmra.mxu0 %v522
  %v1072 = vpop.f32.mrf.mxu0
  %v1073 = vadd.f32 %v904, %v1072
  %v1074 = vpop.f32.mrf.mxu0
  %v1075 = vadd.f32 %v906, %v1074
  %1076 = vmatmul.bf16.gmra.mxu0 %v525
  %v1077 = vpop.f32.mrf.mxu0
  %v1078 = vadd.f32 %v909, %v1077
  %v1079 = vpop.f32.mrf.mxu0
  %v1080 = vadd.f32 %v911, %v1079
  %1081 = vmatmul.bf16.gmra.mxu0 %v528
  %v1082 = vpop.f32.mrf.mxu0
  %v1083 = vadd.f32 %v914, %v1082
  %v1084 = vpop.f32.mrf.mxu0
  %v1085 = vadd.f32 %v916, %v1084
  %1086 = vmatmul.bf16.gmra.mxu0 %v531
  %v1087 = vpop.f32.mrf.mxu0
  %v1088 = vadd.f32 %v919, %v1087
  %v1089 = vpop.f32.mrf.mxu0
  %v1090 = vadd.f32 %v921, %v1089
  %1091 = vmatmul.bf16.gmra.mxu0 %v534
  %v1092 = vpop.f32.mrf.mxu0
  %v1093 = vadd.f32 %v924, %v1092
  %v1094 = vpop.f32.mrf.mxu0
  %v1095 = vadd.f32 %v926, %v1094
  %1096 = vmatmul.bf16.gmra.mxu0 %v537
  %v1097 = vpop.f32.mrf.mxu0
  %v1098 = vadd.f32 %v929, %v1097
  %v1099 = vpop.f32.mrf.mxu0
  %v1100 = vadd.f32 %v931, %v1099
  %1101 = vmatmul.bf16.gmra.mxu0 %v540
  %v1102 = vpop.f32.mrf.mxu0
  %v1103 = vadd.f32 %v934, %v1102
  %v1104 = vpop.f32.mrf.mxu0
  %v1105 = vadd.f32 %v936, %v1104
  %1106 = vmatmul.bf16.gmra.mxu0 %v543
  %v1107 = vpop.f32.mrf.mxu0
  %v1108 = vadd.f32 %v939, %v1107
  %v1109 = vpop.f32.mrf.mxu0
  %v1110 = vadd.f32 %v941, %v1109
  %1111 = vmatmul.bf16.gmra.mxu0 %v546
  %v1112 = vpop.f32.mrf.mxu0
  %v1113 = vadd.f32 %v944, %v1112
  %v1114 = vpop.f32.mrf.mxu0
  %v1115 = vadd.f32 %v946, %v1114
  %1116 = vmatmul.bf16.gmra.mxu0 %v549
  %v1117 = vpop.f32.mrf.mxu0
  %v1118 = vadd.f32 %v949, %v1117
  %v1119 = vpop.f32.mrf.mxu0
  %v1120 = vadd.f32 %v951, %v1119
  %1121 = vmatmul.bf16.gmra.mxu0 %v552
  %v1122 = vpop.f32.mrf.mxu0
  %v1123 = vadd.f32 %v954, %v1122
  %v1124 = vpop.f32.mrf.mxu0
  %v1125 = vadd.f32 %v956, %v1124
  %1126 = vmatmul.bf16.gmra.mxu0 %v555
  %v1127 = vpop.f32.mrf.mxu0
  %v1128 = vadd.f32 %v959, %v1127
  %v1129 = vpop.f32.mrf.mxu0
  %v1130 = vadd.f32 %v961, %v1129
  %1131 = vmatmul.bf16.gmra.mxu0 %v558
  %v1132 = vpop.f32.mrf.mxu0
  %v1133 = vadd.f32 %v964, %v1132
  %v1134 = vpop.f32.mrf.mxu0
  %v1135 = vadd.f32 %v966, %v1134
  %1136 = vmatmul.bf16.gmra.mxu0 %v561
  %v1137 = vpop.f32.mrf.mxu0
  %v1138 = vadd.f32 %v969, %v1137
  %v1139 = vpop.f32.mrf.mxu0
  %v1140 = vadd.f32 %v971, %v1139
  %1141 = vmatmul.bf16.gmra.mxu0 %v564
  %v1142 = vpop.f32.mrf.mxu0
  %v1143 = vadd.f32 %v974, %v1142
  %v1144 = vpop.f32.mrf.mxu0
  %v1145 = vadd.f32 %v976, %v1144
  %1146 = vmatmul.bf16.gmra.mxu0 %v567
  %v1147 = vpop.f32.mrf.mxu0
  %v1148 = vadd.f32 %v979, %v1147
  %v1149 = vpop.f32.mrf.mxu0
  %v1150 = vadd.f32 %v981, %v1149
  %1151 = vmatmul.bf16.gmra.mxu0 %v570
  %v1152 = vpop.f32.mrf.mxu0
  %v1153 = vadd.f32 %v984, %v1152
  %v1154 = vpop.f32.mrf.mxu0
  %v1155 = vadd.f32 %v986, %v1154
  %1156 = vmatmul.bf16.gmra.mxu0 %v573
  %v1157 = vpop.f32.mrf.mxu0
  %v1158 = vadd.f32 %v989, %v1157
  %v1159 = vpop.f32.mrf.mxu0
  %v1160 = vadd.f32 %v991, %v1159
  %1161 = vmatmul.bf16.gmra.mxu0 %v576
  %v1162 = vpop.f32.mrf.mxu0
  %v1163 = vadd.f32 %v994, %v1162
  %v1164 = vpop.f32.mrf.mxu0
  %v1165 = vadd.f32 %v996, %v1164
  %1166 = vmatmul.bf16.gmra.mxu0 %v579
  %v1167 = vpop.f32.mrf.mxu0
  %v1168 = vadd.f32 %v999, %v1167
  %v1169 = vpop.f32.mrf.mxu0
  %v1170 = vadd.f32 %v1001, %v1169
  %1171 = vmatmul.bf16.gmra.mxu0 %v582
  %v1172 = vpop.f32.mrf.mxu0
  %v1173 = vadd.f32 %v1004, %v1172
  %v1174 = vpop.f32.mrf.mxu0
  %v1175 = vadd.f32 %v1006, %v1174
  %1176 = vmatmul.bf16.gmra.mxu0 %v585
  %v1177 = vpop.f32.mrf.mxu0
  %v1178 = vadd.f32 %v1009, %v1177
  %v1179 = vpop.f32.mrf.mxu0
  %v1180 = vadd.f32 %v1011, %v1179
  %1181 = vmatmul.bf16.gmra.mxu0 %v588
  %v1182 = vpop.f32.mrf.mxu0
  %v1183 = vadd.f32 %v1014, %v1182
  %v1184 = vpop.f32.mrf.mxu0
  %v1185 = vadd.f32 %v1016, %v1184
  %1186 = vmatmul.bf16.gmra.mxu0 %v591
  %v1187 = vpop.f32.mrf.mxu0
  %v1188 = vadd.f32 %v1019, %v1187
  %v1189 = vpop.f32.mrf.mxu0
  %v1190 = vadd.f32 %v1021, %v1189
  %1191 = vmatmul.bf16.gmra.mxu0 %v594
  %v1192 = vpop.f32.mrf.mxu0
  %v1193 = vadd.f32 %v1024, %v1192
  %v1194 = vpop.f32.mrf.mxu0
  %v1195 = vadd.f32 %v1026, %v1194
  %1196 = vmatmul.bf16.gmra.mxu0 %v597
  %v1197 = vpop.f32.mrf.mxu0
  %v1198 = vadd.f32 %v1029, %v1197
  %v1199 = vpop.f32.mrf.mxu0
  %v1200 = vadd.f32 %v1031, %v1199
  %1201 = vmatmul.bf16.gmra.mxu0 %v600
  %v1202 = vpop.f32.mrf.mxu0
  %v1203 = vadd.f32 %v1034, %v1202
  %v1204 = vpop.f32.mrf.mxu0
  %v1205 = vadd.f32 %v1036, %v1204
  %1206 = vmatmul.bf16.gmra.mxu0 %v603
  %v1207 = vpop.f32.mrf.mxu0
  %v1208 = vadd.f32 %v1039, %v1207
  %v1209 = vpop.f32.mrf.mxu0
  %v1210 = vadd.f32 %v1041, %v1209
  %1211 = vdwg.mxu0
  %1212 = vmatpush.bf16.msra.mxu0 0
  %1213 = vmatpush.bf16.msra.mxu0 0
  %1214 = vmatpush.bf16.msra.mxu0 0
  %1215 = vmatpush.bf16.msra.mxu0 0
  %1216 = vmatpush.bf16.msra.mxu0 0
  %1217 = vmatpush.bf16.msra.mxu0 0
  %1218 = vmatpush.bf16.msra.mxu0 %v758
  %1219 = vmatpush.bf16.msra.mxu0 %v757
  %1220 = vmatmul.bf16.gmra.mxu0 %v779
  %v1221 = vpop.f32.mrf.mxu0
  %v1222 = vadd.f32 %v1053, %v1221
  %v1223 = vpop.f32.mrf.mxu0
  %v1224 = vadd.f32 %v1055, %v1223
  %1225 = vmatmul.bf16.gmra.mxu0 %v782
  %v1226 = vpop.f32.mrf.mxu0
  %v1227 = vadd.f32 %v1058, %v1226
  %v1228 = vpop.f32.mrf.mxu0
  %v1229 = vadd.f32 %v1060, %v1228
  %1230 = vmatmul.bf16.gmra.mxu0 %v785
  %v1231 = vpop.f32.mrf.mxu0
  %v1232 = vadd.f32 %v1063, %v1231
  %v1233 = vpop.f32.mrf.mxu0
  %v1234 = vadd.f32 %v1065, %v1233
  %1235 = vmatmul.bf16.gmra.mxu0 %v788
  %v1236 = vpop.f32.mrf.mxu0
  %v1237 = vadd.f32 %v1068, %v1236
  %v1238 = vpop.f32.mrf.mxu0
  %v1239 = vadd.f32 %v1070, %v1238
  %1240 = vmatmul.bf16.gmra.mxu0 %v791
  %v1241 = vpop.f32.mrf.mxu0
  %v1242 = vadd.f32 %v1073, %v1241
  %v1243 = vpop.f32.mrf.mxu0
  %v1244 = vadd.f32 %v1075, %v1243
  %1245 = vmatmul.bf16.gmra.mxu0 %v794
  %v1246 = vpop.f32.mrf.mxu0
  %v1247 = vadd.f32 %v1078, %v1246
  %v1248 = vpop.f32.mrf.mxu0
  %v1249 = vadd.f32 %v1080, %v1248
  %1250 = vmatmul.bf16.gmra.mxu0 %v797
  %v1251 = vpop.f32.mrf.mxu0
  %v1252 = vadd.f32 %v1083, %v1251
  %v1253 = vpop.f32.mrf.mxu0
  %v1254 = vadd.f32 %v1085, %v1253
  %1255 = vmatmul.bf16.gmra.mxu0 %v800
  %v1256 = vpop.f32.mrf.mxu0
  %v1257 = vadd.f32 %v1088, %v1256
  %v1258 = vpop.f32.mrf.mxu0
  %v1259 = vadd.f32 %v1090, %v1258
  %1260 = vmatmul.bf16.gmra.mxu0 %v803
  %v1261 = vpop.f32.mrf.mxu0
  %v1262 = vadd.f32 %v1093, %v1261
  %v1263 = vpop.f32.mrf.mxu0
  %v1264 = vadd.f32 %v1095, %v1263
  %1265 = vmatmul.bf16.gmra.mxu0 %v806
  %v1266 = vpop.f32.mrf.mxu0
  %v1267 = vadd.f32 %v1098, %v1266
  %v1268 = vpop.f32.mrf.mxu0
  %v1269 = vadd.f32 %v1100, %v1268
  %1270 = vmatmul.bf16.gmra.mxu0 %v809
  %v1271 = vpop.f32.mrf.mxu0
  %v1272 = vadd.f32 %v1103, %v1271
  %v1273 = vpop.f32.mrf.mxu0
  %v1274 = vadd.f32 %v1105, %v1273
  %1275 = vmatmul.bf16.gmra.mxu0 %v812
  %v1276 = vpop.f32.mrf.mxu0
  %v1277 = vadd.f32 %v1108, %v1276
  %v1278 = vpop.f32.mrf.mxu0
  %v1279 = vadd.f32 %v1110, %v1278
  %1280 = vmatmul.bf16.gmra.mxu0 %v815
  %v1281 = vpop.f32.mrf.mxu0
  %v1282 = vadd.f32 %v1113, %v1281
  %v1283 = vpop.f32.mrf.mxu0
  %v1284 = vadd.f32 %v1115, %v1283
  %1285 = vmatmul.bf16.gmra.mxu0 %v818
  %v1286 = vpop.f32.mrf.mxu0
  %v1287 = vadd.f32 %v1118, %v1286
  %v1288 = vpop.f32.mrf.mxu0
  %v1289 = vadd.f32 %v1120, %v1288
  %1290 = vmatmul.bf16.gmra.mxu0 %v821
  %v1291 = vpop.f32.mrf.mxu0
  %v1292 = vadd.f32 %v1123, %v1291
  %v1293 = vpop.f32.mrf.mxu0
  %v1294 = vadd.f32 %v1125, %v1293
  %1295 = vmatmul.bf16.gmra.mxu0 %v824
  %v1296 = vpop.f32.mrf.mxu0
  %v1297 = vadd.f32 %v1128, %v1296
  %v1298 = vpop.f32.mrf.mxu0
  %v1299 = vadd.f32 %v1130, %v1298
  %1300 = vmatmul.bf16.gmra.mxu0 %v827
  %v1301 = vpop.f32.mrf.mxu0
  %v1302 = vadd.f32 %v1133, %v1301
  %v1303 = vpop.f32.mrf.mxu0
  %v1304 = vadd.f32 %v1135, %v1303
  %1305 = vmatmul.bf16.gmra.mxu0 %v830
  %v1306 = vpop.f32.mrf.mxu0
  %v1307 = vadd.f32 %v1138, %v1306
  %v1308 = vpop.f32.mrf.mxu0
  %v1309 = vadd.f32 %v1140, %v1308
  %1310 = vmatmul.bf16.gmra.mxu0 %v833
  %v1311 = vpop.f32.mrf.mxu0
  %v1312 = vadd.f32 %v1143, %v1311
  %v1313 = vpop.f32.mrf.mxu0
  %v1314 = vadd.f32 %v1145, %v1313
  %1315 = vmatmul.bf16.gmra.mxu0 %v836
  %v1316 = vpop.f32.mrf.mxu0
  %v1317 = vadd.f32 %v1148, %v1316
  %v1318 = vpop.f32.mrf.mxu0
  %v1319 = vadd.f32 %v1150, %v1318
  %1320 = vmatmul.bf16.gmra.mxu0 %v839
  %v1321 = vpop.f32.mrf.mxu0
  %v1322 = vadd.f32 %v1153, %v1321
  %v1323 = vpop.f32.mrf.mxu0
  %v1324 = vadd.f32 %v1155, %v1323
  %1325 = vmatmul.bf16.gmra.mxu0 %v842
  %v1326 = vpop.f32.mrf.mxu0
  %v1327 = vadd.f32 %v1158, %v1326
  %v1328 = vpop.f32.mrf.mxu0
  %v1329 = vadd.f32 %v1160, %v1328
  %1330 = vmatmul.bf16.gmra.mxu0 %v845
  %v1331 = vpop.f32.mrf.mxu0
  %v1332 = vadd.f32 %v1163, %v1331
  %v1333 = vpop.f32.mrf.mxu0
  %v1334 = vadd.f32 %v1165, %v1333
  %1335 = vmatmul.bf16.gmra.mxu0 %v848
  %v1336 = vpop.f32.mrf.mxu0
  %v1337 = vadd.f32 %v1168, %v1336
  %v1338 = vpop.f32.mrf.mxu0
  %v1339 = vadd.f32 %v1170, %v1338
  %1340 = vmatmul.bf16.gmra.mxu0 %v851
  %v1341 = vpop.f32.mrf.mxu0
  %v1342 = vadd.f32 %v1173, %v1341
  %v1343 = vpop.f32.mrf.mxu0
  %v1344 = vadd.f32 %v1175, %v1343
  %1345 = vmatmul.bf16.gmra.mxu0 %v854
  %v1346 = vpop.f32.mrf.mxu0
  %v1347 = vadd.f32 %v1178, %v1346
  %v1348 = vpop.f32.mrf.mxu0
  %v1349 = vadd.f32 %v1180, %v1348
  %1350 = vmatmul.bf16.gmra.mxu0 %v857
  %v1351 = vpop.f32.mrf.mxu0
  %v1352 = vadd.f32 %v1183, %v1351
  %v1353 = vpop.f32.mrf.mxu0
  %v1354 = vadd.f32 %v1185, %v1353
  %1355 = vmatmul.bf16.gmra.mxu0 %v860
  %v1356 = vpop.f32.mrf.mxu0
  %v1357 = vadd.f32 %v1188, %v1356
  %v1358 = vpop.f32.mrf.mxu0
  %v1359 = vadd.f32 %v1190, %v1358
  %1360 = vmatmul.bf16.gmra.mxu0 %v863
  %v1361 = vpop.f32.mrf.mxu0
  %v1362 = vadd.f32 %v1193, %v1361
  %v1363 = vpop.f32.mrf.mxu0
  %v1364 = vadd.f32 %v1195, %v1363
  %1365 = vmatmul.bf16.gmra.mxu0 %v866
  %v1366 = vpop.f32.mrf.mxu0
  %v1367 = vadd.f32 %v1198, %v1366
  %v1368 = vpop.f32.mrf.mxu0
  %v1369 = vadd.f32 %v1200, %v1368
  %1370 = vmatmul.bf16.gmra.mxu0 %v869
  %v1371 = vpop.f32.mrf.mxu0
  %v1372 = vadd.f32 %v1203, %v1371
  %v1373 = vpop.f32.mrf.mxu0
  %v1374 = vadd.f32 %v1205, %v1373
  %1375 = vmatmul.bf16.gmra.mxu0 %v872
  %v1376 = vpop.f32.mrf.mxu0
  %v1377 = vadd.f32 %v1208, %v1376
  %v1378 = vpop.f32.mrf.mxu0
  %v1379 = vadd.f32 %v1210, %v1378
  %1380 = vdwg.mxu0
  %v1381 = vmax.f32 %v1222, 0.0
  %v1382 = vmax.f32 %v1224, 0.0
  %v1383 = vmax.f32 %v1227, 0.0
  %v1384 = vmax.f32 %v1229, 0.0
  %v1385 = vmax.f32 %v1232, 0.0
  %v1386 = vmax.f32 %v1234, 0.0
  %v1387 = vmax.f32 %v1237, 0.0
  %v1388 = vmax.f32 %v1239, 0.0
  %v1389 = vmax.f32 %v1242, 0.0
  %v1390 = vmax.f32 %v1244, 0.0
  %v1391 = vmax.f32 %v1247, 0.0
  %v1392 = vmax.f32 %v1249, 0.0
  %v1393 = vmax.f32 %v1252, 0.0
  %v1394 = vmax.f32 %v1254, 0.0
  %v1395 = vmax.f32 %v1257, 0.0
  %v1396 = vmax.f32 %v1259, 0.0
  %v1397 = vmax.f32 %v1262, 0.0
  %v1398 = vmax.f32 %v1264, 0.0
  %v1399 = vmax.f32 %v1267, 0.0
  %v1400 = vmax.f32 %v1269, 0.0
  %v1401 = vmax.f32 %v1272, 0.0
  %v1402 = vmax.f32 %v1274, 0.0
  %v1403 = vmax.f32 %v1277, 0.0
  %v1404 = vmax.f32 %v1279, 0.0
  %v1405 = vmax.f32 %v1282, 0.0
  %v1406 = vmax.f32 %v1284, 0.0
  %v1407 = vmax.f32 %v1287, 0.0
  %v1408 = vmax.f32 %v1289, 0.0
  %v1409 = vmax.f32 %v1292, 0.0
  %v1410 = vmax.f32 %v1294, 0.0
  %v1411 = vmax.f32 %v1297, 0.0
  %v1412 = vmax.f32 %v1299, 0.0
  %v1413 = vmax.f32 %v1302, 0.0
  %v1414 = vmax.f32 %v1304, 0.0
  %v1415 = vmax.f32 %v1307, 0.0
  %v1416 = vmax.f32 %v1309, 0.0
  %v1417 = vmax.f32 %v1312, 0.0
  %v1418 = vmax.f32 %v1314, 0.0
  %v1419 = vmax.f32 %v1317, 0.0
  %v1420 = vmax.f32 %v1319, 0.0
  %v1421 = vmax.f32 %v1322, 0.0
  %v1422 = vmax.f32 %v1324, 0.0
  %v1423 = vmax.f32 %v1327, 0.0
  %v1424 = vmax.f32 %v1329, 0.0
  %v1425 = vmax.f32 %v1332, 0.0
  %v1426 = vmax.f32 %v1334, 0.0
  %v1427 = vmax.f32 %v1337, 0.0
  %v1428 = vmax.f32 %v1339, 0.0
  %v1429 = vmax.f32 %v1342, 0.0
  %v1430 = vmax.f32 %v1344, 0.0
  %v1431 = vmax.f32 %v1347, 0.0
  %v1432 = vmax.f32 %v1349, 0.0
  %v1433 = vmax.f32 %v1352, 0.0
  %v1434 = vmax.f32 %v1354, 0.0
  %v1435 = vmax.f32 %v1357, 0.0
  %v1436 = vmax.f32 %v1359, 0.0
  %v1437 = vmax.f32 %v1362, 0.0
  %v1438 = vmax.f32 %v1364, 0.0
  %v1439 = vmax.f32 %v1367, 0.0
  %v1440 = vmax.f32 %v1369, 0.0
  %v1441 = vmax.f32 %v1372, 0.0
  %v1442 = vmax.f32 %v1374, 0.0
  %v1443 = vmax.f32 %v1377, 0.0
  %v1444 = vmax.f32 %v1379, 0.0
  %v1445 = vpack.c.bf16 %v1382, %v1381
  %v1446 = vpack.c.bf16 %v1384, %v1383
  %v1447 = vpack.c.bf16 %v1386, %v1385
  %v1448 = vpack.c.bf16 %v1388, %v1387
  %v1449 = vpack.c.bf16 %v1390, %v1389
  %v1450 = vpack.c.bf16 %v1392, %v1391
  %v1451 = vpack.c.bf16 %v1394, %v1393
  %v1452 = vpack.c.bf16 %v1396, %v1395
  %v1453 = vpack.c.bf16 %v1398, %v1397
  %v1454 = vpack.c.bf16 %v1400, %v1399
  %v1455 = vpack.c.bf16 %v1402, %v1401
  %v1456 = vpack.c.bf16 %v1404, %v1403
  %v1457 = vpack.c.bf16 %v1406, %v1405
  %v1458 = vpack.c.bf16 %v1408, %v1407
  %v1459 = vpack.c.bf16 %v1410, %v1409
  %v1460 = vpack.c.bf16 %v1412, %v1411
  %v1461 = vpack.c.bf16 %v1414, %v1413
  %v1462 = vpack.c.bf16 %v1416, %v1415
  %v1463 = vpack.c.bf16 %v1418, %v1417
  %v1464 = vpack.c.bf16 %v1420, %v1419
  %v1465 = vpack.c.bf16 %v1422, %v1421
  %v1466 = vpack.c.bf16 %v1424, %v1423
  %v1467 = vpack.c.bf16 %v1426, %v1425
  %v1468 = vpack.c.bf16 %v1428, %v1427
  %v1469 = vpack.c.bf16 %v1430, %v1429
  %v1470 = vpack.c.bf16 %v1432, %v1431
  %v1471 = vpack.c.bf16 %v1434, %v1433
  %v1472 = vpack.c.bf16 %v1436, %v1435
  %v1473 = vpack.c.bf16 %v1438, %v1437
  %v1474 = vpack.c.bf16 %v1440, %v1439
  %v1475 = vpack.c.bf16 %v1442, %v1441
  %v1476 = vpack.c.bf16 %v1444, %v1443
  %v1477 = vld [vmem:[%s3] sm:$0xf]
  %v1478 = vld [vmem:[%s3 + $0x4] sm:$0xf]
  %v1479 = vld [vmem:[%s3 + $0x8] sm:$0xf]
  %v1480 = vld [vmem:[%s3 + $0xc] sm:$0xf]
  %v1481 = vld [vmem:[%s4] sm:$0x1]
  %v1483 = vperm.slane %v1481, 0
  %v1489 = vunpack.c.l.b16 %v1477
  %v1490 = vunpack.c.l.b16 %v1478
  %v1491 = vunpack.c.l.b16 %v1479
  %v1492 = vunpack.c.l.b16 %v1480
  %v1493 = vpack.c.b16 %v1490, %v1489
  %v1494 = vpack.c.b16 %v1492, %v1491
  %v1498 = vsel %vm777, %v1445, 0
  %v1501 = vsel %vm777, %v1446, 0
  %v1504 = vsel %vm777, %v1447, 0
  %v1507 = vsel %vm777, %v1448, 0
  %v1510 = vsel %vm777, %v1449, 0
  %v1513 = vsel %vm777, %v1450, 0
  %v1516 = vsel %vm777, %v1451, 0
  %v1519 = vsel %vm777, %v1452, 0
  %v1522 = vsel %vm777, %v1453, 0
  %v1525 = vsel %vm777, %v1454, 0
  %v1528 = vsel %vm777, %v1455, 0
  %v1531 = vsel %vm777, %v1456, 0
  %v1534 = vsel %vm777, %v1457, 0
  %v1537 = vsel %vm777, %v1458, 0
  %v1540 = vsel %vm777, %v1459, 0
  %v1543 = vsel %vm777, %v1460, 0
  %v1546 = vsel %vm777, %v1461, 0
  %v1549 = vsel %vm777, %v1462, 0
  %v1552 = vsel %vm777, %v1463, 0
  %v1555 = vsel %vm777, %v1464, 0
  %v1558 = vsel %vm777, %v1465, 0
  %v1561 = vsel %vm777, %v1466, 0
  %v1564 = vsel %vm777, %v1467, 0
  %v1567 = vsel %vm777, %v1468, 0
  %v1570 = vsel %vm777, %v1469, 0
  %v1573 = vsel %vm777, %v1470, 0
  %v1576 = vsel %vm777, %v1471, 0
  %v1579 = vsel %vm777, %v1472, 0
  %v1582 = vsel %vm777, %v1473, 0
  %v1585 = vsel %vm777, %v1474, 0
  %v1588 = vsel %vm777, %v1475, 0
  %v1591 = vsel %vm777, %v1476, 0
  %1593 = vmatpush.bf16.msra.mxu0 0
  %1594 = vmatpush.bf16.msra.mxu0 0
  %1595 = vmatpush.bf16.msra.mxu0 0
  %1596 = vmatpush.bf16.msra.mxu0 0
  %1597 = vmatpush.bf16.msra.mxu0 0
  %1598 = vmatpush.bf16.msra.mxu0 0
  %1599 = vmatpush.bf16.msra.mxu0 %v1494
  %1600 = vmatpush.bf16.msra.mxu0 %v1493
  %1601 = vmatmul.bf16.gmra.mxu0 %v1498
  %v1602 = vpop.f32.mrf.mxu0
  %v1603 = vadd.f32 %v1483, %v1602
  %v1604 = vpop.f32.mrf.mxu0
  %v1605 = vadd.f32 %v1483, %v1604
  %1606 = vmatmul.bf16.gmra.mxu0 %v1501
  %v1607 = vpop.f32.mrf.mxu0
  %v1608 = vadd.f32 %v1483, %v1607
  %v1609 = vpop.f32.mrf.mxu0
  %v1610 = vadd.f32 %v1483, %v1609
  %1611 = vmatmul.bf16.gmra.mxu0 %v1504
  %v1612 = vpop.f32.mrf.mxu0
  %v1613 = vadd.f32 %v1483, %v1612
  %v1614 = vpop.f32.mrf.mxu0
  %v1615 = vadd.f32 %v1483, %v1614
  %1616 = vmatmul.bf16.gmra.mxu0 %v1507
  %v1617 = vpop.f32.mrf.mxu0
  %v1618 = vadd.f32 %v1483, %v1617
  %v1619 = vpop.f32.mrf.mxu0
  %v1620 = vadd.f32 %v1483, %v1619
  %1621 = vmatmul.bf16.gmra.mxu0 %v1510
  %v1622 = vpop.f32.mrf.mxu0
  %v1623 = vadd.f32 %v1483, %v1622
  %v1624 = vpop.f32.mrf.mxu0
  %v1625 = vadd.f32 %v1483, %v1624
  %1626 = vmatmul.bf16.gmra.mxu0 %v1513
  %v1627 = vpop.f32.mrf.mxu0
  %v1628 = vadd.f32 %v1483, %v1627
  %v1629 = vpop.f32.mrf.mxu0
  %v1630 = vadd.f32 %v1483, %v1629
  %1631 = vmatmul.bf16.gmra.mxu0 %v1516
  %v1632 = vpop.f32.mrf.mxu0
  %v1633 = vadd.f32 %v1483, %v1632
  %v1634 = vpop.f32.mrf.mxu0
  %v1635 = vadd.f32 %v1483, %v1634
  %1636 = vmatmul.bf16.gmra.mxu0 %v1519
  %v1637 = vpop.f32.mrf.mxu0
  %v1638 = vadd.f32 %v1483, %v1637
  %v1639 = vpop.f32.mrf.mxu0
  %v1640 = vadd.f32 %v1483, %v1639
  %1641 = vmatmul.bf16.gmra.mxu0 %v1522
  %v1642 = vpop.f32.mrf.mxu0
  %v1643 = vadd.f32 %v1483, %v1642
  %v1644 = vpop.f32.mrf.mxu0
  %v1645 = vadd.f32 %v1483, %v1644
  %1646 = vmatmul.bf16.gmra.mxu0 %v1525
  %v1647 = vpop.f32.mrf.mxu0
  %v1648 = vadd.f32 %v1483, %v1647
  %v1649 = vpop.f32.mrf.mxu0
  %v1650 = vadd.f32 %v1483, %v1649
  %1651 = vmatmul.bf16.gmra.mxu0 %v1528
  %v1652 = vpop.f32.mrf.mxu0
  %v1653 = vadd.f32 %v1483, %v1652
  %v1654 = vpop.f32.mrf.mxu0
  %v1655 = vadd.f32 %v1483, %v1654
  %1656 = vmatmul.bf16.gmra.mxu0 %v1531
  %v1657 = vpop.f32.mrf.mxu0
  %v1658 = vadd.f32 %v1483, %v1657
  %v1659 = vpop.f32.mrf.mxu0
  %v1660 = vadd.f32 %v1483, %v1659
  %1661 = vmatmul.bf16.gmra.mxu0 %v1534
  %v1662 = vpop.f32.mrf.mxu0
  %v1663 = vadd.f32 %v1483, %v1662
  %v1664 = vpop.f32.mrf.mxu0
  %v1665 = vadd.f32 %v1483, %v1664
  %1666 = vmatmul.bf16.gmra.mxu0 %v1537
  %v1667 = vpop.f32.mrf.mxu0
  %v1668 = vadd.f32 %v1483, %v1667
  %v1669 = vpop.f32.mrf.mxu0
  %v1670 = vadd.f32 %v1483, %v1669
  %1671 = vmatmul.bf16.gmra.mxu0 %v1540
  %v1672 = vpop.f32.mrf.mxu0
  %v1673 = vadd.f32 %v1483, %v1672
  %v1674 = vpop.f32.mrf.mxu0
  %v1675 = vadd.f32 %v1483, %v1674
  %1676 = vmatmul.bf16.gmra.mxu0 %v1543
  %v1677 = vpop.f32.mrf.mxu0
  %v1678 = vadd.f32 %v1483, %v1677
  %v1679 = vpop.f32.mrf.mxu0
  %v1680 = vadd.f32 %v1483, %v1679
  %1681 = vmatmul.bf16.gmra.mxu0 %v1546
  %v1682 = vpop.f32.mrf.mxu0
  %v1683 = vadd.f32 %v1483, %v1682
  %v1684 = vpop.f32.mrf.mxu0
  %v1685 = vadd.f32 %v1483, %v1684
  %1686 = vmatmul.bf16.gmra.mxu0 %v1549
  %v1687 = vpop.f32.mrf.mxu0
  %v1688 = vadd.f32 %v1483, %v1687
  %v1689 = vpop.f32.mrf.mxu0
  %v1690 = vadd.f32 %v1483, %v1689
  %1691 = vmatmul.bf16.gmra.mxu0 %v1552
  %v1692 = vpop.f32.mrf.mxu0
  %v1693 = vadd.f32 %v1483, %v1692
  %v1694 = vpop.f32.mrf.mxu0
  %v1695 = vadd.f32 %v1483, %v1694
  %1696 = vmatmul.bf16.gmra.mxu0 %v1555
  %v1697 = vpop.f32.mrf.mxu0
  %v1698 = vadd.f32 %v1483, %v1697
  %v1699 = vpop.f32.mrf.mxu0
  %v1700 = vadd.f32 %v1483, %v1699
  %1701 = vmatmul.bf16.gmra.mxu0 %v1558
  %v1702 = vpop.f32.mrf.mxu0
  %v1703 = vadd.f32 %v1483, %v1702
  %v1704 = vpop.f32.mrf.mxu0
  %v1705 = vadd.f32 %v1483, %v1704
  %1706 = vmatmul.bf16.gmra.mxu0 %v1561
  %v1707 = vpop.f32.mrf.mxu0
  %v1708 = vadd.f32 %v1483, %v1707
  %v1709 = vpop.f32.mrf.mxu0
  %v1710 = vadd.f32 %v1483, %v1709
  %1711 = vmatmul.bf16.gmra.mxu0 %v1564
  %v1712 = vpop.f32.mrf.mxu0
  %v1713 = vadd.f32 %v1483, %v1712
  %v1714 = vpop.f32.mrf.mxu0
  %v1715 = vadd.f32 %v1483, %v1714
  %1716 = vmatmul.bf16.gmra.mxu0 %v1567
  %v1717 = vpop.f32.mrf.mxu0
  %v1718 = vadd.f32 %v1483, %v1717
  %v1719 = vpop.f32.mrf.mxu0
  %v1720 = vadd.f32 %v1483, %v1719
  %1721 = vmatmul.bf16.gmra.mxu0 %v1570
  %v1722 = vpop.f32.mrf.mxu0
  %v1723 = vadd.f32 %v1483, %v1722
  %v1724 = vpop.f32.mrf.mxu0
  %v1725 = vadd.f32 %v1483, %v1724
  %1726 = vmatmul.bf16.gmra.mxu0 %v1573
  %v1727 = vpop.f32.mrf.mxu0
  %v1728 = vadd.f32 %v1483, %v1727
  %v1729 = vpop.f32.mrf.mxu0
  %v1730 = vadd.f32 %v1483, %v1729
  %1731 = vmatmul.bf16.gmra.mxu0 %v1576
  %v1732 = vpop.f32.mrf.mxu0
  %v1733 = vadd.f32 %v1483, %v1732
  %v1734 = vpop.f32.mrf.mxu0
  %v1735 = vadd.f32 %v1483, %v1734
  %1736 = vmatmul.bf16.gmra.mxu0 %v1579
  %v1737 = vpop.f32.mrf.mxu0
  %v1738 = vadd.f32 %v1483, %v1737
  %v1739 = vpop.f32.mrf.mxu0
  %v1740 = vadd.f32 %v1483, %v1739
  %1741 = vmatmul.bf16.gmra.mxu0 %v1582
  %v1742 = vpop.f32.mrf.mxu0
  %v1743 = vadd.f32 %v1483, %v1742
  %v1744 = vpop.f32.mrf.mxu0
  %v1745 = vadd.f32 %v1483, %v1744
  %1746 = vmatmul.bf16.gmra.mxu0 %v1585
  %v1747 = vpop.f32.mrf.mxu0
  %v1748 = vadd.f32 %v1483, %v1747
  %v1749 = vpop.f32.mrf.mxu0
  %v1750 = vadd.f32 %v1483, %v1749
  %1751 = vmatmul.bf16.gmra.mxu0 %v1588
  %v1752 = vpop.f32.mrf.mxu0
  %v1753 = vadd.f32 %v1483, %v1752
  %v1754 = vpop.f32.mrf.mxu0
  %v1755 = vadd.f32 %v1483, %v1754
  %1756 = vmatmul.bf16.gmra.mxu0 %v1591
  %v1757 = vpop.f32.mrf.mxu0
  %v1758 = vadd.f32 %v1483, %v1757
  %v1759 = vpop.f32.mrf.mxu0
  %v1760 = vadd.f32 %v1483, %v1759
  %1761 = vdwg.mxu0
  %v1762 = vsub.f32 0.0, %v1603
  %v1763 = vsub.f32 0.0, %v1605
  %v1764 = vsub.f32 0.0, %v1608
  %v1765 = vsub.f32 0.0, %v1610
  %v1766 = vsub.f32 0.0, %v1613
  %v1767 = vsub.f32 0.0, %v1615
  %v1768 = vsub.f32 0.0, %v1618
  %v1769 = vsub.f32 0.0, %v1620
  %v1770 = vsub.f32 0.0, %v1623
  %v1771 = vsub.f32 0.0, %v1625
  %v1772 = vsub.f32 0.0, %v1628
  %v1773 = vsub.f32 0.0, %v1630
  %v1774 = vsub.f32 0.0, %v1633
  %v1775 = vsub.f32 0.0, %v1635
  %v1776 = vsub.f32 0.0, %v1638
  %v1777 = vsub.f32 0.0, %v1640
  %v1778 = vsub.f32 0.0, %v1643
  %v1779 = vsub.f32 0.0, %v1645
  %v1780 = vsub.f32 0.0, %v1648
  %v1781 = vsub.f32 0.0, %v1650
  %v1782 = vsub.f32 0.0, %v1653
  %v1783 = vsub.f32 0.0, %v1655
  %v1784 = vsub.f32 0.0, %v1658
  %v1785 = vsub.f32 0.0, %v1660
  %v1786 = vsub.f32 0.0, %v1663
  %v1787 = vsub.f32 0.0, %v1665
  %v1788 = vsub.f32 0.0, %v1668
  %v1789 = vsub.f32 0.0, %v1670
  %v1790 = vsub.f32 0.0, %v1673
  %v1791 = vsub.f32 0.0, %v1675
  %v1792 = vsub.f32 0.0, %v1678
  %v1793 = vsub.f32 0.0, %v1680
  %v1794 = vsub.f32 0.0, %v1683
  %v1795 = vsub.f32 0.0, %v1685
  %v1796 = vsub.f32 0.0, %v1688
  %v1797 = vsub.f32 0.0, %v1690
  %v1798 = vsub.f32 0.0, %v1693
  %v1799 = vsub.f32 0.0, %v1695
  %v1800 = vsub.f32 0.0, %v1698
  %v1801 = vsub.f32 0.0, %v1700
  %v1802 = vsub.f32 0.0, %v1703
  %v1803 = vsub.f32 0.0, %v1705
  %v1804 = vsub.f32 0.0, %v1708
  %v1805 = vsub.f32 0.0, %v1710
  %v1806 = vsub.f32 0.0, %v1713
  %v1807 = vsub.f32 0.0, %v1715
  %v1808 = vsub.f32 0.0, %v1718
  %v1809 = vsub.f32 0.0, %v1720
  %v1810 = vsub.f32 0.0, %v1723
  %v1811 = vsub.f32 0.0, %v1725
  %v1812 = vsub.f32 0.0, %v1728
  %v1813 = vsub.f32 0.0, %v1730
  %v1814 = vsub.f32 0.0, %v1733
  %v1815 = vsub.f32 0.0, %v1735
  %v1816 = vsub.f32 0.0, %v1738
  %v1817 = vsub.f32 0.0, %v1740
  %v1818 = vsub.f32 0.0, %v1743
  %v1819 = vsub.f32 0.0, %v1745
  %v1820 = vsub.f32 0.0, %v1748
  %v1821 = vsub.f32 0.0, %v1750
  %v1822 = vsub.f32 0.0, %v1753
  %v1823 = vsub.f32 0.0, %v1755
  %v1824 = vsub.f32 0.0, %v1758
  %v1825 = vsub.f32 0.0, %v1760
  %v1826 = vmul.f32 %v1762, 1.442695
  %v1827 = vpow.pop %v1826
  %v1828 = vmul.f32 %v1763, 1.442695
  %v1829 = vpow.pop %v1828
  %v1830 = vmul.f32 %v1764, 1.442695
  %v1831 = vpow.pop %v1830
  %v1832 = vmul.f32 %v1765, 1.442695
  %v1833 = vpow.pop %v1832
  %v1834 = vmul.f32 %v1766, 1.442695
  %v1835 = vpow.pop %v1834
  %v1836 = vmul.f32 %v1767, 1.442695
  %v1837 = vpow.pop %v1836
  %v1838 = vmul.f32 %v1768, 1.442695
  %v1839 = vpow.pop %v1838
  %v1840 = vmul.f32 %v1769, 1.442695
  %v1841 = vpow.pop %v1840
  %v1842 = vmul.f32 %v1770, 1.442695
  %v1843 = vpow.pop %v1842
  %v1844 = vmul.f32 %v1771, 1.442695
  %v1845 = vpow.pop %v1844
  %v1846 = vmul.f32 %v1772, 1.442695
  %v1847 = vpow.pop %v1846
  %v1848 = vmul.f32 %v1773, 1.442695
  %v1849 = vpow.pop %v1848
  %v1850 = vmul.f32 %v1774, 1.442695
  %v1851 = vpow.pop %v1850
  %v1852 = vmul.f32 %v1775, 1.442695
  %v1853 = vpow.pop %v1852
  %v1854 = vmul.f32 %v1776, 1.442695
  %v1855 = vpow.pop %v1854
  %v1856 = vmul.f32 %v1777, 1.442695
  %v1857 = vpow.pop %v1856
  %v1858 = vmul.f32 %v1778, 1.442695
  %v1859 = vpow.pop %v1858
  %v1860 = vmul.f32 %v1779, 1.442695
  %v1861 = vpow.pop %v1860
  %v1862 = vmul.f32 %v1780, 1.442695
  %v1863 = vpow.pop %v1862
  %v1864 = vmul.f32 %v1781, 1.442695
  %v1865 = vpow.pop %v1864
  %v1866 = vmul.f32 %v1782, 1.442695
  %v1867 = vpow.pop %v1866
  %v1868 = vmul.f32 %v1783, 1.442695
  %v1869 = vpow.pop %v1868
  %v1870 = vmul.f32 %v1784, 1.442695
  %v1871 = vpow.pop %v1870
  %v1872 = vmul.f32 %v1785, 1.442695
  %v1873 = vpow.pop %v1872
  %v1874 = vmul.f32 %v1786, 1.442695
  %v1875 = vpow.pop %v1874
  %v1876 = vmul.f32 %v1787, 1.442695
  %v1877 = vpow.pop %v1876
  %v1878 = vmul.f32 %v1788, 1.442695
  %v1879 = vpow.pop %v1878
  %v1880 = vmul.f32 %v1789, 1.442695
  %v1881 = vpow.pop %v1880
  %v1882 = vmul.f32 %v1790, 1.442695
  %v1883 = vpow.pop %v1882
  %v1884 = vmul.f32 %v1791, 1.442695
  %v1885 = vpow.pop %v1884
  %v1886 = vmul.f32 %v1792, 1.442695
  %v1887 = vpow.pop %v1886
  %v1888 = vmul.f32 %v1793, 1.442695
  %v1889 = vpow.pop %v1888
  %v1890 = vmul.f32 %v1794, 1.442695
  %v1891 = vpow.pop %v1890
  %v1892 = vmul.f32 %v1795, 1.442695
  %v1893 = vpow.pop %v1892
  %v1894 = vmul.f32 %v1796, 1.442695
  %v1895 = vpow.pop %v1894
  %v1896 = vmul.f32 %v1797, 1.442695
  %v1897 = vpow.pop %v1896
  %v1898 = vmul.f32 %v1798, 1.442695
  %v1899 = vpow.pop %v1898
  %v1900 = vmul.f32 %v1799, 1.442695
  %v1901 = vpow.pop %v1900
  %v1902 = vmul.f32 %v1800, 1.442695
  %v1903 = vpow.pop %v1902
  %v1904 = vmul.f32 %v1801, 1.442695
  %v1905 = vpow.pop %v1904
  %v1906 = vmul.f32 %v1802, 1.442695
  %v1907 = vpow.pop %v1906
  %v1908 = vmul.f32 %v1803, 1.442695
  %v1909 = vpow.pop %v1908
  %v1910 = vmul.f32 %v1804, 1.442695
  %v1911 = vpow.pop %v1910
  %v1912 = vmul.f32 %v1805, 1.442695
  %v1913 = vpow.pop %v1912
  %v1914 = vmul.f32 %v1806, 1.442695
  %v1915 = vpow.pop %v1914
  %v1916 = vmul.f32 %v1807, 1.442695
  %v1917 = vpow.pop %v1916
  %v1918 = vmul.f32 %v1808, 1.442695
  %v1919 = vpow.pop %v1918
  %v1920 = vmul.f32 %v1809, 1.442695
  %v1921 = vpow.pop %v1920
  %v1922 = vmul.f32 %v1810, 1.442695
  %v1923 = vpow.pop %v1922
  %v1924 = vmul.f32 %v1811, 1.442695
  %v1925 = vpow.pop %v1924
  %v1926 = vmul.f32 %v1812, 1.442695
  %v1927 = vpow.pop %v1926
  %v1928 = vmul.f32 %v1813, 1.442695
  %v1929 = vpow.pop %v1928
  %v1930 = vmul.f32 %v1814, 1.442695
  %v1931 = vpow.pop %v1930
  %v1932 = vmul.f32 %v1815, 1.442695
  %v1933 = vpow.pop %v1932
  %v1934 = vmul.f32 %v1816, 1.442695
  %v1935 = vpow.pop %v1934
  %v1936 = vmul.f32 %v1817, 1.442695
  %v1937 = vpow.pop %v1936
  %v1938 = vmul.f32 %v1818, 1.442695
  %v1939 = vpow.pop %v1938
  %v1940 = vmul.f32 %v1819, 1.442695
  %v1941 = vpow.pop %v1940
  %v1942 = vmul.f32 %v1820, 1.442695
  %v1943 = vpow.pop %v1942
  %v1944 = vmul.f32 %v1821, 1.442695
  %v1945 = vpow.pop %v1944
  %v1946 = vmul.f32 %v1822, 1.442695
  %v1947 = vpow.pop %v1946
  %v1948 = vmul.f32 %v1823, 1.442695
  %v1949 = vpow.pop %v1948
  %v1950 = vmul.f32 %v1824, 1.442695
  %v1951 = vpow.pop %v1950
  %v1952 = vmul.f32 %v1825, 1.442695
  %v1953 = vpow.pop %v1952
  %v1954 = vadd.f32 %v1827, 1.0
  %v1955 = vadd.f32 %v1829, 1.0
  %v1956 = vadd.f32 %v1831, 1.0
  %v1957 = vadd.f32 %v1833, 1.0
  %v1958 = vadd.f32 %v1835, 1.0
  %v1959 = vadd.f32 %v1837, 1.0
  %v1960 = vadd.f32 %v1839, 1.0
  %v1961 = vadd.f32 %v1841, 1.0
  %v1962 = vadd.f32 %v1843, 1.0
  %v1963 = vadd.f32 %v1845, 1.0
  %v1964 = vadd.f32 %v1847, 1.0
  %v1965 = vadd.f32 %v1849, 1.0
  %v1966 = vadd.f32 %v1851, 1.0
  %v1967 = vadd.f32 %v1853, 1.0
  %v1968 = vadd.f32 %v1855, 1.0
  %v1969 = vadd.f32 %v1857, 1.0
  %v1970 = vadd.f32 %v1859, 1.0
  %v1971 = vadd.f32 %v1861, 1.0
  %v1972 = vadd.f32 %v1863, 1.0
  %v1973 = vadd.f32 %v1865, 1.0
  %v1974 = vadd.f32 %v1867, 1.0
  %v1975 = vadd.f32 %v1869, 1.0
  %v1976 = vadd.f32 %v1871, 1.0
  %v1977 = vadd.f32 %v1873, 1.0
  %v1978 = vadd.f32 %v1875, 1.0
  %v1979 = vadd.f32 %v1877, 1.0
  %v1980 = vadd.f32 %v1879, 1.0
  %v1981 = vadd.f32 %v1881, 1.0
  %v1982 = vadd.f32 %v1883, 1.0
  %v1983 = vadd.f32 %v1885, 1.0
  %v1984 = vadd.f32 %v1887, 1.0
  %v1985 = vadd.f32 %v1889, 1.0
  %v1986 = vadd.f32 %v1891, 1.0
  %v1987 = vadd.f32 %v1893, 1.0
  %v1988 = vadd.f32 %v1895, 1.0
  %v1989 = vadd.f32 %v1897, 1.0
  %v1990 = vadd.f32 %v1899, 1.0
  %v1991 = vadd.f32 %v1901, 1.0
  %v1992 = vadd.f32 %v1903, 1.0
  %v1993 = vadd.f32 %v1905, 1.0
  %v1994 = vadd.f32 %v1907, 1.0
  %v1995 = vadd.f32 %v1909, 1.0
  %v1996 = vadd.f32 %v1911, 1.0
  %v1997 = vadd.f32 %v1913, 1.0
  %v1998 = vadd.f32 %v1915, 1.0
  %v1999 = vadd.f32 %v1917, 1.0
  %v2000 = vadd.f32 %v1919, 1.0
  %v2001 = vadd.f32 %v1921, 1.0
  %v2002 = vadd.f32 %v1923, 1.0
  %v2003 = vadd.f32 %v1925, 1.0
  %v2004 = vadd.f32 %v1927, 1.0
  %v2005 = vadd.f32 %v1929, 1.0
  %v2006 = vadd.f32 %v1931, 1.0
  %v2007 = vadd.f32 %v1933, 1.0
  %v2008 = vadd.f32 %v1935, 1.0
  %v2009 = vadd.f32 %v1937, 1.0
  %v2010 = vadd.f32 %v1939, 1.0
  %v2011 = vadd.f32 %v1941, 1.0
  %v2012 = vadd.f32 %v1943, 1.0
  %v2013 = vadd.f32 %v1945, 1.0
  %v2014 = vadd.f32 %v1947, 1.0
  %v2015 = vadd.f32 %v1949, 1.0
  %v2016 = vadd.f32 %v1951, 1.0
  %v2017 = vadd.f32 %v1953, 1.0
  %v2018 = vrcp.pop %v1954
  %v2019 = vmul.f32 %v1954, %v2018
  %v2020 = vsub.f32 1.0, %v2019
  %v2021 = vmul.f32 %v2018, %v2020
  %v2022 = vadd.f32 %v2018, %v2021
  %vm2023 = vweird.f32 %v1954
  %vm2024 = vweird.f32 %v2018
  %vm2025 = vmor %vm2023, %vm2024
  %v2026 = vsel %vm2025, %v2018, %v2022
  %v2027 = vand.u32 2147483647, %v1954
  %vm2028 = vcmp.eq.f32.partialorder %v2027, 8.507059e+37
  %v2029 = vand.u32 %v1954, 2147483648
  %v2030 = vor.u32 1.1754944e-38, %v2029
  %v2031 = vsel %vm2028, %v2030, %v2026
  %v2032 = vmul.f32 1.0, %v2031
  %v2033 = vrcp.pop %v1955
  %v2034 = vmul.f32 %v1955, %v2033
  %v2035 = vsub.f32 1.0, %v2034
  %v2036 = vmul.f32 %v2033, %v2035
  %v2037 = vadd.f32 %v2033, %v2036
  %vm2038 = vweird.f32 %v1955
  %vm2039 = vweird.f32 %v2033
  %vm2040 = vmor %vm2038, %vm2039
  %v2041 = vsel %vm2040, %v2033, %v2037
  %v2042 = vand.u32 2147483647, %v1955
  %vm2043 = vcmp.eq.f32.partialorder %v2042, 8.507059e+37
  %v2044 = vand.u32 %v1955, 2147483648
  %v2045 = vor.u32 1.1754944e-38, %v2044
  %v2046 = vsel %vm2043, %v2045, %v2041
  %v2047 = vmul.f32 1.0, %v2046
  %v2048 = vrcp.pop %v1956
  %v2049 = vmul.f32 %v1956, %v2048
  %v2050 = vsub.f32 1.0, %v2049
  %v2051 = vmul.f32 %v2048, %v2050
  %v2052 = vadd.f32 %v2048, %v2051
  %vm2053 = vweird.f32 %v1956
  %vm2054 = vweird.f32 %v2048
  %vm2055 = vmor %vm2053, %vm2054
  %v2056 = vsel %vm2055, %v2048, %v2052
  %v2057 = vand.u32 2147483647, %v1956
  %vm2058 = vcmp.eq.f32.partialorder %v2057, 8.507059e+37
  %v2059 = vand.u32 %v1956, 2147483648
  %v2060 = vor.u32 1.1754944e-38, %v2059
  %v2061 = vsel %vm2058, %v2060, %v2056
  %v2062 = vmul.f32 1.0, %v2061
  %v2063 = vrcp.pop %v1957
  %v2064 = vmul.f32 %v1957, %v2063
  %v2065 = vsub.f32 1.0, %v2064
  %v2066 = vmul.f32 %v2063, %v2065
  %v2067 = vadd.f32 %v2063, %v2066
  %vm2068 = vweird.f32 %v1957
  %vm2069 = vweird.f32 %v2063
  %vm2070 = vmor %vm2068, %vm2069
  %v2071 = vsel %vm2070, %v2063, %v2067
  %v2072 = vand.u32 2147483647, %v1957
  %vm2073 = vcmp.eq.f32.partialorder %v2072, 8.507059e+37
  %v2074 = vand.u32 %v1957, 2147483648
  %v2075 = vor.u32 1.1754944e-38, %v2074
  %v2076 = vsel %vm2073, %v2075, %v2071
  %v2077 = vmul.f32 1.0, %v2076
  %v2078 = vrcp.pop %v1958
  %v2079 = vmul.f32 %v1958, %v2078
  %v2080 = vsub.f32 1.0, %v2079
  %v2081 = vmul.f32 %v2078, %v2080
  %v2082 = vadd.f32 %v2078, %v2081
  %vm2083 = vweird.f32 %v1958
  %vm2084 = vweird.f32 %v2078
  %vm2085 = vmor %vm2083, %vm2084
  %v2086 = vsel %vm2085, %v2078, %v2082
  %v2087 = vand.u32 2147483647, %v1958
  %vm2088 = vcmp.eq.f32.partialorder %v2087, 8.507059e+37
  %v2089 = vand.u32 %v1958, 2147483648
  %v2090 = vor.u32 1.1754944e-38, %v2089
  %v2091 = vsel %vm2088, %v2090, %v2086
  %v2092 = vmul.f32 1.0, %v2091
  %v2093 = vrcp.pop %v1959
  %v2094 = vmul.f32 %v1959, %v2093
  %v2095 = vsub.f32 1.0, %v2094
  %v2096 = vmul.f32 %v2093, %v2095
  %v2097 = vadd.f32 %v2093, %v2096
  %vm2098 = vweird.f32 %v1959
  %vm2099 = vweird.f32 %v2093
  %vm2100 = vmor %vm2098, %vm2099
  %v2101 = vsel %vm2100, %v2093, %v2097
  %v2102 = vand.u32 2147483647, %v1959
  %vm2103 = vcmp.eq.f32.partialorder %v2102, 8.507059e+37
  %v2104 = vand.u32 %v1959, 2147483648
  %v2105 = vor.u32 1.1754944e-38, %v2104
  %v2106 = vsel %vm2103, %v2105, %v2101
  %v2107 = vmul.f32 1.0, %v2106
  %v2108 = vrcp.pop %v1960
  %v2109 = vmul.f32 %v1960, %v2108
  %v2110 = vsub.f32 1.0, %v2109
  %v2111 = vmul.f32 %v2108, %v2110
  %v2112 = vadd.f32 %v2108, %v2111
  %vm2113 = vweird.f32 %v1960
  %vm2114 = vweird.f32 %v2108
  %vm2115 = vmor %vm2113, %vm2114
  %v2116 = vsel %vm2115, %v2108, %v2112
  %v2117 = vand.u32 2147483647, %v1960
  %vm2118 = vcmp.eq.f32.partialorder %v2117, 8.507059e+37
  %v2119 = vand.u32 %v1960, 2147483648
  %v2120 = vor.u32 1.1754944e-38, %v2119
  %v2121 = vsel %vm2118, %v2120, %v2116
  %v2122 = vmul.f32 1.0, %v2121
  %v2123 = vrcp.pop %v1961
  %v2124 = vmul.f32 %v1961, %v2123
  %v2125 = vsub.f32 1.0, %v2124
  %v2126 = vmul.f32 %v2123, %v2125
  %v2127 = vadd.f32 %v2123, %v2126
  %vm2128 = vweird.f32 %v1961
  %vm2129 = vweird.f32 %v2123
  %vm2130 = vmor %vm2128, %vm2129
  %v2131 = vsel %vm2130, %v2123, %v2127
  %v2132 = vand.u32 2147483647, %v1961
  %vm2133 = vcmp.eq.f32.partialorder %v2132, 8.507059e+37
  %v2134 = vand.u32 %v1961, 2147483648
  %v2135 = vor.u32 1.1754944e-38, %v2134
  %v2136 = vsel %vm2133, %v2135, %v2131
  %v2137 = vmul.f32 1.0, %v2136
  %v2138 = vrcp.pop %v1962
  %v2139 = vmul.f32 %v1962, %v2138
  %v2140 = vsub.f32 1.0, %v2139
  %v2141 = vmul.f32 %v2138, %v2140
  %v2142 = vadd.f32 %v2138, %v2141
  %vm2143 = vweird.f32 %v1962
  %vm2144 = vweird.f32 %v2138
  %vm2145 = vmor %vm2143, %vm2144
  %v2146 = vsel %vm2145, %v2138, %v2142
  %v2147 = vand.u32 2147483647, %v1962
  %vm2148 = vcmp.eq.f32.partialorder %v2147, 8.507059e+37
  %v2149 = vand.u32 %v1962, 2147483648
  %v2150 = vor.u32 1.1754944e-38, %v2149
  %v2151 = vsel %vm2148, %v2150, %v2146
  %v2152 = vmul.f32 1.0, %v2151
  %v2153 = vrcp.pop %v1963
  %v2154 = vmul.f32 %v1963, %v2153
  %v2155 = vsub.f32 1.0, %v2154
  %v2156 = vmul.f32 %v2153, %v2155
  %v2157 = vadd.f32 %v2153, %v2156
  %vm2158 = vweird.f32 %v1963
  %vm2159 = vweird.f32 %v2153
  %vm2160 = vmor %vm2158, %vm2159
  %v2161 = vsel %vm2160, %v2153, %v2157
  %v2162 = vand.u32 2147483647, %v1963
  %vm2163 = vcmp.eq.f32.partialorder %v2162, 8.507059e+37
  %v2164 = vand.u32 %v1963, 2147483648
  %v2165 = vor.u32 1.1754944e-38, %v2164
  %v2166 = vsel %vm2163, %v2165, %v2161
  %v2167 = vmul.f32 1.0, %v2166
  %v2168 = vrcp.pop %v1964
  %v2169 = vmul.f32 %v1964, %v2168
  %v2170 = vsub.f32 1.0, %v2169
  %v2171 = vmul.f32 %v2168, %v2170
  %v2172 = vadd.f32 %v2168, %v2171
  %vm2173 = vweird.f32 %v1964
  %vm2174 = vweird.f32 %v2168
  %vm2175 = vmor %vm2173, %vm2174
  %v2176 = vsel %vm2175, %v2168, %v2172
  %v2177 = vand.u32 2147483647, %v1964
  %vm2178 = vcmp.eq.f32.partialorder %v2177, 8.507059e+37
  %v2179 = vand.u32 %v1964, 2147483648
  %v2180 = vor.u32 1.1754944e-38, %v2179
  %v2181 = vsel %vm2178, %v2180, %v2176
  %v2182 = vmul.f32 1.0, %v2181
  %v2183 = vrcp.pop %v1965
  %v2184 = vmul.f32 %v1965, %v2183
  %v2185 = vsub.f32 1.0, %v2184
  %v2186 = vmul.f32 %v2183, %v2185
  %v2187 = vadd.f32 %v2183, %v2186
  %vm2188 = vweird.f32 %v1965
  %vm2189 = vweird.f32 %v2183
  %vm2190 = vmor %vm2188, %vm2189
  %v2191 = vsel %vm2190, %v2183, %v2187
  %v2192 = vand.u32 2147483647, %v1965
  %vm2193 = vcmp.eq.f32.partialorder %v2192, 8.507059e+37
  %v2194 = vand.u32 %v1965, 2147483648
  %v2195 = vor.u32 1.1754944e-38, %v2194
  %v2196 = vsel %vm2193, %v2195, %v2191
  %v2197 = vmul.f32 1.0, %v2196
  %v2198 = vrcp.pop %v1966
  %v2199 = vmul.f32 %v1966, %v2198
  %v2200 = vsub.f32 1.0, %v2199
  %v2201 = vmul.f32 %v2198, %v2200
  %v2202 = vadd.f32 %v2198, %v2201
  %vm2203 = vweird.f32 %v1966
  %vm2204 = vweird.f32 %v2198
  %vm2205 = vmor %vm2203, %vm2204
  %v2206 = vsel %vm2205, %v2198, %v2202
  %v2207 = vand.u32 2147483647, %v1966
  %vm2208 = vcmp.eq.f32.partialorder %v2207, 8.507059e+37
  %v2209 = vand.u32 %v1966, 2147483648
  %v2210 = vor.u32 1.1754944e-38, %v2209
  %v2211 = vsel %vm2208, %v2210, %v2206
  %v2212 = vmul.f32 1.0, %v2211
  %v2213 = vrcp.pop %v1967
  %v2214 = vmul.f32 %v1967, %v2213
  %v2215 = vsub.f32 1.0, %v2214
  %v2216 = vmul.f32 %v2213, %v2215
  %v2217 = vadd.f32 %v2213, %v2216
  %vm2218 = vweird.f32 %v1967
  %vm2219 = vweird.f32 %v2213
  %vm2220 = vmor %vm2218, %vm2219
  %v2221 = vsel %vm2220, %v2213, %v2217
  %v2222 = vand.u32 2147483647, %v1967
  %vm2223 = vcmp.eq.f32.partialorder %v2222, 8.507059e+37
  %v2224 = vand.u32 %v1967, 2147483648
  %v2225 = vor.u32 1.1754944e-38, %v2224
  %v2226 = vsel %vm2223, %v2225, %v2221
  %v2227 = vmul.f32 1.0, %v2226
  %v2228 = vrcp.pop %v1968
  %v2229 = vmul.f32 %v1968, %v2228
  %v2230 = vsub.f32 1.0, %v2229
  %v2231 = vmul.f32 %v2228, %v2230
  %v2232 = vadd.f32 %v2228, %v2231
  %vm2233 = vweird.f32 %v1968
  %vm2234 = vweird.f32 %v2228
  %vm2235 = vmor %vm2233, %vm2234
  %v2236 = vsel %vm2235, %v2228, %v2232
  %v2237 = vand.u32 2147483647, %v1968
  %vm2238 = vcmp.eq.f32.partialorder %v2237, 8.507059e+37
  %v2239 = vand.u32 %v1968, 2147483648
  %v2240 = vor.u32 1.1754944e-38, %v2239
  %v2241 = vsel %vm2238, %v2240, %v2236
  %v2242 = vmul.f32 1.0, %v2241
  %v2243 = vrcp.pop %v1969
  %v2244 = vmul.f32 %v1969, %v2243
  %v2245 = vsub.f32 1.0, %v2244
  %v2246 = vmul.f32 %v2243, %v2245
  %v2247 = vadd.f32 %v2243, %v2246
  %vm2248 = vweird.f32 %v1969
  %vm2249 = vweird.f32 %v2243
  %vm2250 = vmor %vm2248, %vm2249
  %v2251 = vsel %vm2250, %v2243, %v2247
  %v2252 = vand.u32 2147483647, %v1969
  %vm2253 = vcmp.eq.f32.partialorder %v2252, 8.507059e+37
  %v2254 = vand.u32 %v1969, 2147483648
  %v2255 = vor.u32 1.1754944e-38, %v2254
  %v2256 = vsel %vm2253, %v2255, %v2251
  %v2257 = vmul.f32 1.0, %v2256
  %v2258 = vrcp.pop %v1970
  %v2259 = vmul.f32 %v1970, %v2258
  %v2260 = vsub.f32 1.0, %v2259
  %v2261 = vmul.f32 %v2258, %v2260
  %v2262 = vadd.f32 %v2258, %v2261
  %vm2263 = vweird.f32 %v1970
  %vm2264 = vweird.f32 %v2258
  %vm2265 = vmor %vm2263, %vm2264
  %v2266 = vsel %vm2265, %v2258, %v2262
  %v2267 = vand.u32 2147483647, %v1970
  %vm2268 = vcmp.eq.f32.partialorder %v2267, 8.507059e+37
  %v2269 = vand.u32 %v1970, 2147483648
  %v2270 = vor.u32 1.1754944e-38, %v2269
  %v2271 = vsel %vm2268, %v2270, %v2266
  %v2272 = vmul.f32 1.0, %v2271
  %v2273 = vrcp.pop %v1971
  %v2274 = vmul.f32 %v1971, %v2273
  %v2275 = vsub.f32 1.0, %v2274
  %v2276 = vmul.f32 %v2273, %v2275
  %v2277 = vadd.f32 %v2273, %v2276
  %vm2278 = vweird.f32 %v1971
  %vm2279 = vweird.f32 %v2273
  %vm2280 = vmor %vm2278, %vm2279
  %v2281 = vsel %vm2280, %v2273, %v2277
  %v2282 = vand.u32 2147483647, %v1971
  %vm2283 = vcmp.eq.f32.partialorder %v2282, 8.507059e+37
  %v2284 = vand.u32 %v1971, 2147483648
  %v2285 = vor.u32 1.1754944e-38, %v2284
  %v2286 = vsel %vm2283, %v2285, %v2281
  %v2287 = vmul.f32 1.0, %v2286
  %v2288 = vrcp.pop %v1972
  %v2289 = vmul.f32 %v1972, %v2288
  %v2290 = vsub.f32 1.0, %v2289
  %v2291 = vmul.f32 %v2288, %v2290
  %v2292 = vadd.f32 %v2288, %v2291
  %vm2293 = vweird.f32 %v1972
  %vm2294 = vweird.f32 %v2288
  %vm2295 = vmor %vm2293, %vm2294
  %v2296 = vsel %vm2295, %v2288, %v2292
  %v2297 = vand.u32 2147483647, %v1972
  %vm2298 = vcmp.eq.f32.partialorder %v2297, 8.507059e+37
  %v2299 = vand.u32 %v1972, 2147483648
  %v2300 = vor.u32 1.1754944e-38, %v2299
  %v2301 = vsel %vm2298, %v2300, %v2296
  %v2302 = vmul.f32 1.0, %v2301
  %v2303 = vrcp.pop %v1973
  %v2304 = vmul.f32 %v1973, %v2303
  %v2305 = vsub.f32 1.0, %v2304
  %v2306 = vmul.f32 %v2303, %v2305
  %v2307 = vadd.f32 %v2303, %v2306
  %vm2308 = vweird.f32 %v1973
  %vm2309 = vweird.f32 %v2303
  %vm2310 = vmor %vm2308, %vm2309
  %v2311 = vsel %vm2310, %v2303, %v2307
  %v2312 = vand.u32 2147483647, %v1973
  %vm2313 = vcmp.eq.f32.partialorder %v2312, 8.507059e+37
  %v2314 = vand.u32 %v1973, 2147483648
  %v2315 = vor.u32 1.1754944e-38, %v2314
  %v2316 = vsel %vm2313, %v2315, %v2311
  %v2317 = vmul.f32 1.0, %v2316
  %v2318 = vrcp.pop %v1974
  %v2319 = vmul.f32 %v1974, %v2318
  %v2320 = vsub.f32 1.0, %v2319
  %v2321 = vmul.f32 %v2318, %v2320
  %v2322 = vadd.f32 %v2318, %v2321
  %vm2323 = vweird.f32 %v1974
  %vm2324 = vweird.f32 %v2318
  %vm2325 = vmor %vm2323, %vm2324
  %v2326 = vsel %vm2325, %v2318, %v2322
  %v2327 = vand.u32 2147483647, %v1974
  %vm2328 = vcmp.eq.f32.partialorder %v2327, 8.507059e+37
  %v2329 = vand.u32 %v1974, 2147483648
  %v2330 = vor.u32 1.1754944e-38, %v2329
  %v2331 = vsel %vm2328, %v2330, %v2326
  %v2332 = vmul.f32 1.0, %v2331
  %v2333 = vrcp.pop %v1975
  %v2334 = vmul.f32 %v1975, %v2333
  %v2335 = vsub.f32 1.0, %v2334
  %v2336 = vmul.f32 %v2333, %v2335
  %v2337 = vadd.f32 %v2333, %v2336
  %vm2338 = vweird.f32 %v1975
  %vm2339 = vweird.f32 %v2333
  %vm2340 = vmor %vm2338, %vm2339
  %v2341 = vsel %vm2340, %v2333, %v2337
  %v2342 = vand.u32 2147483647, %v1975
  %vm2343 = vcmp.eq.f32.partialorder %v2342, 8.507059e+37
  %v2344 = vand.u32 %v1975, 2147483648
  %v2345 = vor.u32 1.1754944e-38, %v2344
  %v2346 = vsel %vm2343, %v2345, %v2341
  %v2347 = vmul.f32 1.0, %v2346
  %v2348 = vrcp.pop %v1976
  %v2349 = vmul.f32 %v1976, %v2348
  %v2350 = vsub.f32 1.0, %v2349
  %v2351 = vmul.f32 %v2348, %v2350
  %v2352 = vadd.f32 %v2348, %v2351
  %vm2353 = vweird.f32 %v1976
  %vm2354 = vweird.f32 %v2348
  %vm2355 = vmor %vm2353, %vm2354
  %v2356 = vsel %vm2355, %v2348, %v2352
  %v2357 = vand.u32 2147483647, %v1976
  %vm2358 = vcmp.eq.f32.partialorder %v2357, 8.507059e+37
  %v2359 = vand.u32 %v1976, 2147483648
  %v2360 = vor.u32 1.1754944e-38, %v2359
  %v2361 = vsel %vm2358, %v2360, %v2356
  %v2362 = vmul.f32 1.0, %v2361
  %v2363 = vrcp.pop %v1977
  %v2364 = vmul.f32 %v1977, %v2363
  %v2365 = vsub.f32 1.0, %v2364
  %v2366 = vmul.f32 %v2363, %v2365
  %v2367 = vadd.f32 %v2363, %v2366
  %vm2368 = vweird.f32 %v1977
  %vm2369 = vweird.f32 %v2363
  %vm2370 = vmor %vm2368, %vm2369
  %v2371 = vsel %vm2370, %v2363, %v2367
  %v2372 = vand.u32 2147483647, %v1977
  %vm2373 = vcmp.eq.f32.partialorder %v2372, 8.507059e+37
  %v2374 = vand.u32 %v1977, 2147483648
  %v2375 = vor.u32 1.1754944e-38, %v2374
  %v2376 = vsel %vm2373, %v2375, %v2371
  %v2377 = vmul.f32 1.0, %v2376
  %v2378 = vrcp.pop %v1978
  %v2379 = vmul.f32 %v1978, %v2378
  %v2380 = vsub.f32 1.0, %v2379
  %v2381 = vmul.f32 %v2378, %v2380
  %v2382 = vadd.f32 %v2378, %v2381
  %vm2383 = vweird.f32 %v1978
  %vm2384 = vweird.f32 %v2378
  %vm2385 = vmor %vm2383, %vm2384
  %v2386 = vsel %vm2385, %v2378, %v2382
  %v2387 = vand.u32 2147483647, %v1978
  %vm2388 = vcmp.eq.f32.partialorder %v2387, 8.507059e+37
  %v2389 = vand.u32 %v1978, 2147483648
  %v2390 = vor.u32 1.1754944e-38, %v2389
  %v2391 = vsel %vm2388, %v2390, %v2386
  %v2392 = vmul.f32 1.0, %v2391
  %v2393 = vrcp.pop %v1979
  %v2394 = vmul.f32 %v1979, %v2393
  %v2395 = vsub.f32 1.0, %v2394
  %v2396 = vmul.f32 %v2393, %v2395
  %v2397 = vadd.f32 %v2393, %v2396
  %vm2398 = vweird.f32 %v1979
  %vm2399 = vweird.f32 %v2393
  %vm2400 = vmor %vm2398, %vm2399
  %v2401 = vsel %vm2400, %v2393, %v2397
  %v2402 = vand.u32 2147483647, %v1979
  %vm2403 = vcmp.eq.f32.partialorder %v2402, 8.507059e+37
  %v2404 = vand.u32 %v1979, 2147483648
  %v2405 = vor.u32 1.1754944e-38, %v2404
  %v2406 = vsel %vm2403, %v2405, %v2401
  %v2407 = vmul.f32 1.0, %v2406
  %v2408 = vrcp.pop %v1980
  %v2409 = vmul.f32 %v1980, %v2408
  %v2410 = vsub.f32 1.0, %v2409
  %v2411 = vmul.f32 %v2408, %v2410
  %v2412 = vadd.f32 %v2408, %v2411
  %vm2413 = vweird.f32 %v1980
  %vm2414 = vweird.f32 %v2408
  %vm2415 = vmor %vm2413, %vm2414
  %v2416 = vsel %vm2415, %v2408, %v2412
  %v2417 = vand.u32 2147483647, %v1980
  %vm2418 = vcmp.eq.f32.partialorder %v2417, 8.507059e+37
  %v2419 = vand.u32 %v1980, 2147483648
  %v2420 = vor.u32 1.1754944e-38, %v2419
  %v2421 = vsel %vm2418, %v2420, %v2416
  %v2422 = vmul.f32 1.0, %v2421
  %v2423 = vrcp.pop %v1981
  %v2424 = vmul.f32 %v1981, %v2423
  %v2425 = vsub.f32 1.0, %v2424
  %v2426 = vmul.f32 %v2423, %v2425
  %v2427 = vadd.f32 %v2423, %v2426
  %vm2428 = vweird.f32 %v1981
  %vm2429 = vweird.f32 %v2423
  %vm2430 = vmor %vm2428, %vm2429
  %v2431 = vsel %vm2430, %v2423, %v2427
  %v2432 = vand.u32 2147483647, %v1981
  %vm2433 = vcmp.eq.f32.partialorder %v2432, 8.507059e+37
  %v2434 = vand.u32 %v1981, 2147483648
  %v2435 = vor.u32 1.1754944e-38, %v2434
  %v2436 = vsel %vm2433, %v2435, %v2431
  %v2437 = vmul.f32 1.0, %v2436
  %v2438 = vrcp.pop %v1982
  %v2439 = vmul.f32 %v1982, %v2438
  %v2440 = vsub.f32 1.0, %v2439
  %v2441 = vmul.f32 %v2438, %v2440
  %v2442 = vadd.f32 %v2438, %v2441
  %vm2443 = vweird.f32 %v1982
  %vm2444 = vweird.f32 %v2438
  %vm2445 = vmor %vm2443, %vm2444
  %v2446 = vsel %vm2445, %v2438, %v2442
  %v2447 = vand.u32 2147483647, %v1982
  %vm2448 = vcmp.eq.f32.partialorder %v2447, 8.507059e+37
  %v2449 = vand.u32 %v1982, 2147483648
  %v2450 = vor.u32 1.1754944e-38, %v2449
  %v2451 = vsel %vm2448, %v2450, %v2446
  %v2452 = vmul.f32 1.0, %v2451
  %v2453 = vrcp.pop %v1983
  %v2454 = vmul.f32 %v1983, %v2453
  %v2455 = vsub.f32 1.0, %v2454
  %v2456 = vmul.f32 %v2453, %v2455
  %v2457 = vadd.f32 %v2453, %v2456
  %vm2458 = vweird.f32 %v1983
  %vm2459 = vweird.f32 %v2453
  %vm2460 = vmor %vm2458, %vm2459
  %v2461 = vsel %vm2460, %v2453, %v2457
  %v2462 = vand.u32 2147483647, %v1983
  %vm2463 = vcmp.eq.f32.partialorder %v2462, 8.507059e+37
  %v2464 = vand.u32 %v1983, 2147483648
  %v2465 = vor.u32 1.1754944e-38, %v2464
  %v2466 = vsel %vm2463, %v2465, %v2461
  %v2467 = vmul.f32 1.0, %v2466
  %v2468 = vrcp.pop %v1984
  %v2469 = vmul.f32 %v1984, %v2468
  %v2470 = vsub.f32 1.0, %v2469
  %v2471 = vmul.f32 %v2468, %v2470
  %v2472 = vadd.f32 %v2468, %v2471
  %vm2473 = vweird.f32 %v1984
  %vm2474 = vweird.f32 %v2468
  %vm2475 = vmor %vm2473, %vm2474
  %v2476 = vsel %vm2475, %v2468, %v2472
  %v2477 = vand.u32 2147483647, %v1984
  %vm2478 = vcmp.eq.f32.partialorder %v2477, 8.507059e+37
  %v2479 = vand.u32 %v1984, 2147483648
  %v2480 = vor.u32 1.1754944e-38, %v2479
  %v2481 = vsel %vm2478, %v2480, %v2476
  %v2482 = vmul.f32 1.0, %v2481
  %v2483 = vrcp.pop %v1985
  %v2484 = vmul.f32 %v1985, %v2483
  %v2485 = vsub.f32 1.0, %v2484
  %v2486 = vmul.f32 %v2483, %v2485
  %v2487 = vadd.f32 %v2483, %v2486
  %vm2488 = vweird.f32 %v1985
  %vm2489 = vweird.f32 %v2483
  %vm2490 = vmor %vm2488, %vm2489
  %v2491 = vsel %vm2490, %v2483, %v2487
  %v2492 = vand.u32 2147483647, %v1985
  %vm2493 = vcmp.eq.f32.partialorder %v2492, 8.507059e+37
  %v2494 = vand.u32 %v1985, 2147483648
  %v2495 = vor.u32 1.1754944e-38, %v2494
  %v2496 = vsel %vm2493, %v2495, %v2491
  %v2497 = vmul.f32 1.0, %v2496
  %v2498 = vrcp.pop %v1986
  %v2499 = vmul.f32 %v1986, %v2498
  %v2500 = vsub.f32 1.0, %v2499
  %v2501 = vmul.f32 %v2498, %v2500
  %v2502 = vadd.f32 %v2498, %v2501
  %vm2503 = vweird.f32 %v1986
  %vm2504 = vweird.f32 %v2498
  %vm2505 = vmor %vm2503, %vm2504
  %v2506 = vsel %vm2505, %v2498, %v2502
  %v2507 = vand.u32 2147483647, %v1986
  %vm2508 = vcmp.eq.f32.partialorder %v2507, 8.507059e+37
  %v2509 = vand.u32 %v1986, 2147483648
  %v2510 = vor.u32 1.1754944e-38, %v2509
  %v2511 = vsel %vm2508, %v2510, %v2506
  %v2512 = vmul.f32 1.0, %v2511
  %v2513 = vrcp.pop %v1987
  %v2514 = vmul.f32 %v1987, %v2513
  %v2515 = vsub.f32 1.0, %v2514
  %v2516 = vmul.f32 %v2513, %v2515
  %v2517 = vadd.f32 %v2513, %v2516
  %vm2518 = vweird.f32 %v1987
  %vm2519 = vweird.f32 %v2513
  %vm2520 = vmor %vm2518, %vm2519
  %v2521 = vsel %vm2520, %v2513, %v2517
  %v2522 = vand.u32 2147483647, %v1987
  %vm2523 = vcmp.eq.f32.partialorder %v2522, 8.507059e+37
  %v2524 = vand.u32 %v1987, 2147483648
  %v2525 = vor.u32 1.1754944e-38, %v2524
  %v2526 = vsel %vm2523, %v2525, %v2521
  %v2527 = vmul.f32 1.0, %v2526
  %v2528 = vrcp.pop %v1988
  %v2529 = vmul.f32 %v1988, %v2528
  %v2530 = vsub.f32 1.0, %v2529
  %v2531 = vmul.f32 %v2528, %v2530
  %v2532 = vadd.f32 %v2528, %v2531
  %vm2533 = vweird.f32 %v1988
  %vm2534 = vweird.f32 %v2528
  %vm2535 = vmor %vm2533, %vm2534
  %v2536 = vsel %vm2535, %v2528, %v2532
  %v2537 = vand.u32 2147483647, %v1988
  %vm2538 = vcmp.eq.f32.partialorder %v2537, 8.507059e+37
  %v2539 = vand.u32 %v1988, 2147483648
  %v2540 = vor.u32 1.1754944e-38, %v2539
  %v2541 = vsel %vm2538, %v2540, %v2536
  %v2542 = vmul.f32 1.0, %v2541
  %v2543 = vrcp.pop %v1989
  %v2544 = vmul.f32 %v1989, %v2543
  %v2545 = vsub.f32 1.0, %v2544
  %v2546 = vmul.f32 %v2543, %v2545
  %v2547 = vadd.f32 %v2543, %v2546
  %vm2548 = vweird.f32 %v1989
  %vm2549 = vweird.f32 %v2543
  %vm2550 = vmor %vm2548, %vm2549
  %v2551 = vsel %vm2550, %v2543, %v2547
  %v2552 = vand.u32 2147483647, %v1989
  %vm2553 = vcmp.eq.f32.partialorder %v2552, 8.507059e+37
  %v2554 = vand.u32 %v1989, 2147483648
  %v2555 = vor.u32 1.1754944e-38, %v2554
  %v2556 = vsel %vm2553, %v2555, %v2551
  %v2557 = vmul.f32 1.0, %v2556
  %v2558 = vrcp.pop %v1990
  %v2559 = vmul.f32 %v1990, %v2558
  %v2560 = vsub.f32 1.0, %v2559
  %v2561 = vmul.f32 %v2558, %v2560
  %v2562 = vadd.f32 %v2558, %v2561
  %vm2563 = vweird.f32 %v1990
  %vm2564 = vweird.f32 %v2558
  %vm2565 = vmor %vm2563, %vm2564
  %v2566 = vsel %vm2565, %v2558, %v2562
  %v2567 = vand.u32 2147483647, %v1990
  %vm2568 = vcmp.eq.f32.partialorder %v2567, 8.507059e+37
  %v2569 = vand.u32 %v1990, 2147483648
  %v2570 = vor.u32 1.1754944e-38, %v2569
  %v2571 = vsel %vm2568, %v2570, %v2566
  %v2572 = vmul.f32 1.0, %v2571
  %v2573 = vrcp.pop %v1991
  %v2574 = vmul.f32 %v1991, %v2573
  %v2575 = vsub.f32 1.0, %v2574
  %v2576 = vmul.f32 %v2573, %v2575
  %v2577 = vadd.f32 %v2573, %v2576
  %vm2578 = vweird.f32 %v1991
  %vm2579 = vweird.f32 %v2573
  %vm2580 = vmor %vm2578, %vm2579
  %v2581 = vsel %vm2580, %v2573, %v2577
  %v2582 = vand.u32 2147483647, %v1991
  %vm2583 = vcmp.eq.f32.partialorder %v2582, 8.507059e+37
  %v2584 = vand.u32 %v1991, 2147483648
  %v2585 = vor.u32 1.1754944e-38, %v2584
  %v2586 = vsel %vm2583, %v2585, %v2581
  %v2587 = vmul.f32 1.0, %v2586
  %v2588 = vrcp.pop %v1992
  %v2589 = vmul.f32 %v1992, %v2588
  %v2590 = vsub.f32 1.0, %v2589
  %v2591 = vmul.f32 %v2588, %v2590
  %v2592 = vadd.f32 %v2588, %v2591
  %vm2593 = vweird.f32 %v1992
  %vm2594 = vweird.f32 %v2588
  %vm2595 = vmor %vm2593, %vm2594
  %v2596 = vsel %vm2595, %v2588, %v2592
  %v2597 = vand.u32 2147483647, %v1992
  %vm2598 = vcmp.eq.f32.partialorder %v2597, 8.507059e+37
  %v2599 = vand.u32 %v1992, 2147483648
  %v2600 = vor.u32 1.1754944e-38, %v2599
  %v2601 = vsel %vm2598, %v2600, %v2596
  %v2602 = vmul.f32 1.0, %v2601
  %v2603 = vrcp.pop %v1993
  %v2604 = vmul.f32 %v1993, %v2603
  %v2605 = vsub.f32 1.0, %v2604
  %v2606 = vmul.f32 %v2603, %v2605
  %v2607 = vadd.f32 %v2603, %v2606
  %vm2608 = vweird.f32 %v1993
  %vm2609 = vweird.f32 %v2603
  %vm2610 = vmor %vm2608, %vm2609
  %v2611 = vsel %vm2610, %v2603, %v2607
  %v2612 = vand.u32 2147483647, %v1993
  %vm2613 = vcmp.eq.f32.partialorder %v2612, 8.507059e+37
  %v2614 = vand.u32 %v1993, 2147483648
  %v2615 = vor.u32 1.1754944e-38, %v2614
  %v2616 = vsel %vm2613, %v2615, %v2611
  %v2617 = vmul.f32 1.0, %v2616
  %v2618 = vrcp.pop %v1994
  %v2619 = vmul.f32 %v1994, %v2618
  %v2620 = vsub.f32 1.0, %v2619
  %v2621 = vmul.f32 %v2618, %v2620
  %v2622 = vadd.f32 %v2618, %v2621
  %vm2623 = vweird.f32 %v1994
  %vm2624 = vweird.f32 %v2618
  %vm2625 = vmor %vm2623, %vm2624
  %v2626 = vsel %vm2625, %v2618, %v2622
  %v2627 = vand.u32 2147483647, %v1994
  %vm2628 = vcmp.eq.f32.partialorder %v2627, 8.507059e+37
  %v2629 = vand.u32 %v1994, 2147483648
  %v2630 = vor.u32 1.1754944e-38, %v2629
  %v2631 = vsel %vm2628, %v2630, %v2626
  %v2632 = vmul.f32 1.0, %v2631
  %v2633 = vrcp.pop %v1995
  %v2634 = vmul.f32 %v1995, %v2633
  %v2635 = vsub.f32 1.0, %v2634
  %v2636 = vmul.f32 %v2633, %v2635
  %v2637 = vadd.f32 %v2633, %v2636
  %vm2638 = vweird.f32 %v1995
  %vm2639 = vweird.f32 %v2633
  %vm2640 = vmor %vm2638, %vm2639
  %v2641 = vsel %vm2640, %v2633, %v2637
  %v2642 = vand.u32 2147483647, %v1995
  %vm2643 = vcmp.eq.f32.partialorder %v2642, 8.507059e+37
  %v2644 = vand.u32 %v1995, 2147483648
  %v2645 = vor.u32 1.1754944e-38, %v2644
  %v2646 = vsel %vm2643, %v2645, %v2641
  %v2647 = vmul.f32 1.0, %v2646
  %v2648 = vrcp.pop %v1996
  %v2649 = vmul.f32 %v1996, %v2648
  %v2650 = vsub.f32 1.0, %v2649
  %v2651 = vmul.f32 %v2648, %v2650
  %v2652 = vadd.f32 %v2648, %v2651
  %vm2653 = vweird.f32 %v1996
  %vm2654 = vweird.f32 %v2648
  %vm2655 = vmor %vm2653, %vm2654
  %v2656 = vsel %vm2655, %v2648, %v2652
  %v2657 = vand.u32 2147483647, %v1996
  %vm2658 = vcmp.eq.f32.partialorder %v2657, 8.507059e+37
  %v2659 = vand.u32 %v1996, 2147483648
  %v2660 = vor.u32 1.1754944e-38, %v2659
  %v2661 = vsel %vm2658, %v2660, %v2656
  %v2662 = vmul.f32 1.0, %v2661
  %v2663 = vrcp.pop %v1997
  %v2664 = vmul.f32 %v1997, %v2663
  %v2665 = vsub.f32 1.0, %v2664
  %v2666 = vmul.f32 %v2663, %v2665
  %v2667 = vadd.f32 %v2663, %v2666
  %vm2668 = vweird.f32 %v1997
  %vm2669 = vweird.f32 %v2663
  %vm2670 = vmor %vm2668, %vm2669
  %v2671 = vsel %vm2670, %v2663, %v2667
  %v2672 = vand.u32 2147483647, %v1997
  %vm2673 = vcmp.eq.f32.partialorder %v2672, 8.507059e+37
  %v2674 = vand.u32 %v1997, 2147483648
  %v2675 = vor.u32 1.1754944e-38, %v2674
  %v2676 = vsel %vm2673, %v2675, %v2671
  %v2677 = vmul.f32 1.0, %v2676
  %v2678 = vrcp.pop %v1998
  %v2679 = vmul.f32 %v1998, %v2678
  %v2680 = vsub.f32 1.0, %v2679
  %v2681 = vmul.f32 %v2678, %v2680
  %v2682 = vadd.f32 %v2678, %v2681
  %vm2683 = vweird.f32 %v1998
  %vm2684 = vweird.f32 %v2678
  %vm2685 = vmor %vm2683, %vm2684
  %v2686 = vsel %vm2685, %v2678, %v2682
  %v2687 = vand.u32 2147483647, %v1998
  %vm2688 = vcmp.eq.f32.partialorder %v2687, 8.507059e+37
  %v2689 = vand.u32 %v1998, 2147483648
  %v2690 = vor.u32 1.1754944e-38, %v2689
  %v2691 = vsel %vm2688, %v2690, %v2686
  %v2692 = vmul.f32 1.0, %v2691
  %v2693 = vrcp.pop %v1999
  %v2694 = vmul.f32 %v1999, %v2693
  %v2695 = vsub.f32 1.0, %v2694
  %v2696 = vmul.f32 %v2693, %v2695
  %v2697 = vadd.f32 %v2693, %v2696
  %vm2698 = vweird.f32 %v1999
  %vm2699 = vweird.f32 %v2693
  %vm2700 = vmor %vm2698, %vm2699
  %v2701 = vsel %vm2700, %v2693, %v2697
  %v2702 = vand.u32 2147483647, %v1999
  %vm2703 = vcmp.eq.f32.partialorder %v2702, 8.507059e+37
  %v2704 = vand.u32 %v1999, 2147483648
  %v2705 = vor.u32 1.1754944e-38, %v2704
  %v2706 = vsel %vm2703, %v2705, %v2701
  %v2707 = vmul.f32 1.0, %v2706
  %v2708 = vrcp.pop %v2000
  %v2709 = vmul.f32 %v2000, %v2708
  %v2710 = vsub.f32 1.0, %v2709
  %v2711 = vmul.f32 %v2708, %v2710
  %v2712 = vadd.f32 %v2708, %v2711
  %vm2713 = vweird.f32 %v2000
  %vm2714 = vweird.f32 %v2708
  %vm2715 = vmor %vm2713, %vm2714
  %v2716 = vsel %vm2715, %v2708, %v2712
  %v2717 = vand.u32 2147483647, %v2000
  %vm2718 = vcmp.eq.f32.partialorder %v2717, 8.507059e+37
  %v2719 = vand.u32 %v2000, 2147483648
  %v2720 = vor.u32 1.1754944e-38, %v2719
  %v2721 = vsel %vm2718, %v2720, %v2716
  %v2722 = vmul.f32 1.0, %v2721
  %v2723 = vrcp.pop %v2001
  %v2724 = vmul.f32 %v2001, %v2723
  %v2725 = vsub.f32 1.0, %v2724
  %v2726 = vmul.f32 %v2723, %v2725
  %v2727 = vadd.f32 %v2723, %v2726
  %vm2728 = vweird.f32 %v2001
  %vm2729 = vweird.f32 %v2723
  %vm2730 = vmor %vm2728, %vm2729
  %v2731 = vsel %vm2730, %v2723, %v2727
  %v2732 = vand.u32 2147483647, %v2001
  %vm2733 = vcmp.eq.f32.partialorder %v2732, 8.507059e+37
  %v2734 = vand.u32 %v2001, 2147483648
  %v2735 = vor.u32 1.1754944e-38, %v2734
  %v2736 = vsel %vm2733, %v2735, %v2731
  %v2737 = vmul.f32 1.0, %v2736
  %v2738 = vrcp.pop %v2002
  %v2739 = vmul.f32 %v2002, %v2738
  %v2740 = vsub.f32 1.0, %v2739
  %v2741 = vmul.f32 %v2738, %v2740
  %v2742 = vadd.f32 %v2738, %v2741
  %vm2743 = vweird.f32 %v2002
  %vm2744 = vweird.f32 %v2738
  %vm2745 = vmor %vm2743, %vm2744
  %v2746 = vsel %vm2745, %v2738, %v2742
  %v2747 = vand.u32 2147483647, %v2002
  %vm2748 = vcmp.eq.f32.partialorder %v2747, 8.507059e+37
  %v2749 = vand.u32 %v2002, 2147483648
  %v2750 = vor.u32 1.1754944e-38, %v2749
  %v2751 = vsel %vm2748, %v2750, %v2746
  %v2752 = vmul.f32 1.0, %v2751
  %v2753 = vrcp.pop %v2003
  %v2754 = vmul.f32 %v2003, %v2753
  %v2755 = vsub.f32 1.0, %v2754
  %v2756 = vmul.f32 %v2753, %v2755
  %v2757 = vadd.f32 %v2753, %v2756
  %vm2758 = vweird.f32 %v2003
  %vm2759 = vweird.f32 %v2753
  %vm2760 = vmor %vm2758, %vm2759
  %v2761 = vsel %vm2760, %v2753, %v2757
  %v2762 = vand.u32 2147483647, %v2003
  %vm2763 = vcmp.eq.f32.partialorder %v2762, 8.507059e+37
  %v2764 = vand.u32 %v2003, 2147483648
  %v2765 = vor.u32 1.1754944e-38, %v2764
  %v2766 = vsel %vm2763, %v2765, %v2761
  %v2767 = vmul.f32 1.0, %v2766
  %v2768 = vrcp.pop %v2004
  %v2769 = vmul.f32 %v2004, %v2768
  %v2770 = vsub.f32 1.0, %v2769
  %v2771 = vmul.f32 %v2768, %v2770
  %v2772 = vadd.f32 %v2768, %v2771
  %vm2773 = vweird.f32 %v2004
  %vm2774 = vweird.f32 %v2768
  %vm2775 = vmor %vm2773, %vm2774
  %v2776 = vsel %vm2775, %v2768, %v2772
  %v2777 = vand.u32 2147483647, %v2004
  %vm2778 = vcmp.eq.f32.partialorder %v2777, 8.507059e+37
  %v2779 = vand.u32 %v2004, 2147483648
  %v2780 = vor.u32 1.1754944e-38, %v2779
  %v2781 = vsel %vm2778, %v2780, %v2776
  %v2782 = vmul.f32 1.0, %v2781
  %v2783 = vrcp.pop %v2005
  %v2784 = vmul.f32 %v2005, %v2783
  %v2785 = vsub.f32 1.0, %v2784
  %v2786 = vmul.f32 %v2783, %v2785
  %v2787 = vadd.f32 %v2783, %v2786
  %vm2788 = vweird.f32 %v2005
  %vm2789 = vweird.f32 %v2783
  %vm2790 = vmor %vm2788, %vm2789
  %v2791 = vsel %vm2790, %v2783, %v2787
  %v2792 = vand.u32 2147483647, %v2005
  %vm2793 = vcmp.eq.f32.partialorder %v2792, 8.507059e+37
  %v2794 = vand.u32 %v2005, 2147483648
  %v2795 = vor.u32 1.1754944e-38, %v2794
  %v2796 = vsel %vm2793, %v2795, %v2791
  %v2797 = vmul.f32 1.0, %v2796
  %v2798 = vrcp.pop %v2006
  %v2799 = vmul.f32 %v2006, %v2798
  %v2800 = vsub.f32 1.0, %v2799
  %v2801 = vmul.f32 %v2798, %v2800
  %v2802 = vadd.f32 %v2798, %v2801
  %vm2803 = vweird.f32 %v2006
  %vm2804 = vweird.f32 %v2798
  %vm2805 = vmor %vm2803, %vm2804
  %v2806 = vsel %vm2805, %v2798, %v2802
  %v2807 = vand.u32 2147483647, %v2006
  %vm2808 = vcmp.eq.f32.partialorder %v2807, 8.507059e+37
  %v2809 = vand.u32 %v2006, 2147483648
  %v2810 = vor.u32 1.1754944e-38, %v2809
  %v2811 = vsel %vm2808, %v2810, %v2806
  %v2812 = vmul.f32 1.0, %v2811
  %v2813 = vrcp.pop %v2007
  %v2814 = vmul.f32 %v2007, %v2813
  %v2815 = vsub.f32 1.0, %v2814
  %v2816 = vmul.f32 %v2813, %v2815
  %v2817 = vadd.f32 %v2813, %v2816
  %vm2818 = vweird.f32 %v2007
  %vm2819 = vweird.f32 %v2813
  %vm2820 = vmor %vm2818, %vm2819
  %v2821 = vsel %vm2820, %v2813, %v2817
  %v2822 = vand.u32 2147483647, %v2007
  %vm2823 = vcmp.eq.f32.partialorder %v2822, 8.507059e+37
  %v2824 = vand.u32 %v2007, 2147483648
  %v2825 = vor.u32 1.1754944e-38, %v2824
  %v2826 = vsel %vm2823, %v2825, %v2821
  %v2827 = vmul.f32 1.0, %v2826
  %v2828 = vrcp.pop %v2008
  %v2829 = vmul.f32 %v2008, %v2828
  %v2830 = vsub.f32 1.0, %v2829
  %v2831 = vmul.f32 %v2828, %v2830
  %v2832 = vadd.f32 %v2828, %v2831
  %vm2833 = vweird.f32 %v2008
  %vm2834 = vweird.f32 %v2828
  %vm2835 = vmor %vm2833, %vm2834
  %v2836 = vsel %vm2835, %v2828, %v2832
  %v2837 = vand.u32 2147483647, %v2008
  %vm2838 = vcmp.eq.f32.partialorder %v2837, 8.507059e+37
  %v2839 = vand.u32 %v2008, 2147483648
  %v2840 = vor.u32 1.1754944e-38, %v2839
  %v2841 = vsel %vm2838, %v2840, %v2836
  %v2842 = vmul.f32 1.0, %v2841
  %v2843 = vrcp.pop %v2009
  %v2844 = vmul.f32 %v2009, %v2843
  %v2845 = vsub.f32 1.0, %v2844
  %v2846 = vmul.f32 %v2843, %v2845
  %v2847 = vadd.f32 %v2843, %v2846
  %vm2848 = vweird.f32 %v2009
  %vm2849 = vweird.f32 %v2843
  %vm2850 = vmor %vm2848, %vm2849
  %v2851 = vsel %vm2850, %v2843, %v2847
  %v2852 = vand.u32 2147483647, %v2009
  %vm2853 = vcmp.eq.f32.partialorder %v2852, 8.507059e+37
  %v2854 = vand.u32 %v2009, 2147483648
  %v2855 = vor.u32 1.1754944e-38, %v2854
  %v2856 = vsel %vm2853, %v2855, %v2851
  %v2857 = vmul.f32 1.0, %v2856
  %v2858 = vrcp.pop %v2010
  %v2859 = vmul.f32 %v2010, %v2858
  %v2860 = vsub.f32 1.0, %v2859
  %v2861 = vmul.f32 %v2858, %v2860
  %v2862 = vadd.f32 %v2858, %v2861
  %vm2863 = vweird.f32 %v2010
  %vm2864 = vweird.f32 %v2858
  %vm2865 = vmor %vm2863, %vm2864
  %v2866 = vsel %vm2865, %v2858, %v2862
  %v2867 = vand.u32 2147483647, %v2010
  %vm2868 = vcmp.eq.f32.partialorder %v2867, 8.507059e+37
  %v2869 = vand.u32 %v2010, 2147483648
  %v2870 = vor.u32 1.1754944e-38, %v2869
  %v2871 = vsel %vm2868, %v2870, %v2866
  %v2872 = vmul.f32 1.0, %v2871
  %v2873 = vrcp.pop %v2011
  %v2874 = vmul.f32 %v2011, %v2873
  %v2875 = vsub.f32 1.0, %v2874
  %v2876 = vmul.f32 %v2873, %v2875
  %v2877 = vadd.f32 %v2873, %v2876
  %vm2878 = vweird.f32 %v2011
  %vm2879 = vweird.f32 %v2873
  %vm2880 = vmor %vm2878, %vm2879
  %v2881 = vsel %vm2880, %v2873, %v2877
  %v2882 = vand.u32 2147483647, %v2011
  %vm2883 = vcmp.eq.f32.partialorder %v2882, 8.507059e+37
  %v2884 = vand.u32 %v2011, 2147483648
  %v2885 = vor.u32 1.1754944e-38, %v2884
  %v2886 = vsel %vm2883, %v2885, %v2881
  %v2887 = vmul.f32 1.0, %v2886
  %v2888 = vrcp.pop %v2012
  %v2889 = vmul.f32 %v2012, %v2888
  %v2890 = vsub.f32 1.0, %v2889
  %v2891 = vmul.f32 %v2888, %v2890
  %v2892 = vadd.f32 %v2888, %v2891
  %vm2893 = vweird.f32 %v2012
  %vm2894 = vweird.f32 %v2888
  %vm2895 = vmor %vm2893, %vm2894
  %v2896 = vsel %vm2895, %v2888, %v2892
  %v2897 = vand.u32 2147483647, %v2012
  %vm2898 = vcmp.eq.f32.partialorder %v2897, 8.507059e+37
  %v2899 = vand.u32 %v2012, 2147483648
  %v2900 = vor.u32 1.1754944e-38, %v2899
  %v2901 = vsel %vm2898, %v2900, %v2896
  %v2902 = vmul.f32 1.0, %v2901
  %v2903 = vrcp.pop %v2013
  %v2904 = vmul.f32 %v2013, %v2903
  %v2905 = vsub.f32 1.0, %v2904
  %v2906 = vmul.f32 %v2903, %v2905
  %v2907 = vadd.f32 %v2903, %v2906
  %vm2908 = vweird.f32 %v2013
  %vm2909 = vweird.f32 %v2903
  %vm2910 = vmor %vm2908, %vm2909
  %v2911 = vsel %vm2910, %v2903, %v2907
  %v2912 = vand.u32 2147483647, %v2013
  %vm2913 = vcmp.eq.f32.partialorder %v2912, 8.507059e+37
  %v2914 = vand.u32 %v2013, 2147483648
  %v2915 = vor.u32 1.1754944e-38, %v2914
  %v2916 = vsel %vm2913, %v2915, %v2911
  %v2917 = vmul.f32 1.0, %v2916
  %v2918 = vrcp.pop %v2014
  %v2919 = vmul.f32 %v2014, %v2918
  %v2920 = vsub.f32 1.0, %v2919
  %v2921 = vmul.f32 %v2918, %v2920
  %v2922 = vadd.f32 %v2918, %v2921
  %vm2923 = vweird.f32 %v2014
  %vm2924 = vweird.f32 %v2918
  %vm2925 = vmor %vm2923, %vm2924
  %v2926 = vsel %vm2925, %v2918, %v2922
  %v2927 = vand.u32 2147483647, %v2014
  %vm2928 = vcmp.eq.f32.partialorder %v2927, 8.507059e+37
  %v2929 = vand.u32 %v2014, 2147483648
  %v2930 = vor.u32 1.1754944e-38, %v2929
  %v2931 = vsel %vm2928, %v2930, %v2926
  %v2932 = vmul.f32 1.0, %v2931
  %v2933 = vrcp.pop %v2015
  %v2934 = vmul.f32 %v2015, %v2933
  %v2935 = vsub.f32 1.0, %v2934
  %v2936 = vmul.f32 %v2933, %v2935
  %v2937 = vadd.f32 %v2933, %v2936
  %vm2938 = vweird.f32 %v2015
  %vm2939 = vweird.f32 %v2933
  %vm2940 = vmor %vm2938, %vm2939
  %v2941 = vsel %vm2940, %v2933, %v2937
  %v2942 = vand.u32 2147483647, %v2015
  %vm2943 = vcmp.eq.f32.partialorder %v2942, 8.507059e+37
  %v2944 = vand.u32 %v2015, 2147483648
  %v2945 = vor.u32 1.1754944e-38, %v2944
  %v2946 = vsel %vm2943, %v2945, %v2941
  %v2947 = vmul.f32 1.0, %v2946
  %v2948 = vrcp.pop %v2016
  %v2949 = vmul.f32 %v2016, %v2948
  %v2950 = vsub.f32 1.0, %v2949
  %v2951 = vmul.f32 %v2948, %v2950
  %v2952 = vadd.f32 %v2948, %v2951
  %vm2953 = vweird.f32 %v2016
  %vm2954 = vweird.f32 %v2948
  %vm2955 = vmor %vm2953, %vm2954
  %v2956 = vsel %vm2955, %v2948, %v2952
  %v2957 = vand.u32 2147483647, %v2016
  %vm2958 = vcmp.eq.f32.partialorder %v2957, 8.507059e+37
  %v2959 = vand.u32 %v2016, 2147483648
  %v2960 = vor.u32 1.1754944e-38, %v2959
  %v2961 = vsel %vm2958, %v2960, %v2956
  %v2962 = vmul.f32 1.0, %v2961
  %v2963 = vrcp.pop %v2017
  %v2964 = vmul.f32 %v2017, %v2963
  %v2965 = vsub.f32 1.0, %v2964
  %v2966 = vmul.f32 %v2963, %v2965
  %v2967 = vadd.f32 %v2963, %v2966
  %vm2968 = vweird.f32 %v2017
  %vm2969 = vweird.f32 %v2963
  %vm2970 = vmor %vm2968, %vm2969
  %v2971 = vsel %vm2970, %v2963, %v2967
  %v2972 = vand.u32 2147483647, %v2017
  %vm2973 = vcmp.eq.f32.partialorder %v2972, 8.507059e+37
  %v2974 = vand.u32 %v2017, 2147483648
  %v2975 = vor.u32 1.1754944e-38, %v2974
  %v2976 = vsel %vm2973, %v2975, %v2971
  %v2977 = vmul.f32 1.0, %v2976
  %vm2978 = vcmask 15360
  %2979 = vst.msk [vmem:[%s5] sm:$0xff] %vm2978, %v2032
  %2980 = vst.msk [vmem:[%s5 + $0x8] sm:$0xff] %vm2978, %v2047
  %2981 = vst.msk [vmem:[%s5 + $0x10] sm:$0xff] %vm2978, %v2062
  %2982 = vst.msk [vmem:[%s5 + $0x18] sm:$0xff] %vm2978, %v2077
  %2983 = vst.msk [vmem:[%s5 + $0x20] sm:$0xff] %vm2978, %v2092
  %2984 = vst.msk [vmem:[%s5 + $0x28] sm:$0xff] %vm2978, %v2107
  %2985 = vst.msk [vmem:[%s5 + $0x30] sm:$0xff] %vm2978, %v2122
  %2986 = vst.msk [vmem:[%s5 + $0x38] sm:$0xff] %vm2978, %v2137
  %2987 = vst.msk [vmem:[%s5 + $0x40] sm:$0xff] %vm2978, %v2152
  %2988 = vst.msk [vmem:[%s5 + $0x48] sm:$0xff] %vm2978, %v2167
  %2989 = vst.msk [vmem:[%s5 + $0x50] sm:$0xff] %vm2978, %v2182
  %2990 = vst.msk [vmem:[%s5 + $0x58] sm:$0xff] %vm2978, %v2197
  %2991 = vst.msk [vmem:[%s5 + $0x60] sm:$0xff] %vm2978, %v2212
  %2992 = vst.msk [vmem:[%s5 + $0x68] sm:$0xff] %vm2978, %v2227
  %2993 = vst.msk [vmem:[%s5 + $0x70] sm:$0xff] %vm2978, %v2242
  %2994 = vst.msk [vmem:[%s5 + $0x78] sm:$0xff] %vm2978, %v2257
  %2995 = vst.msk [vmem:[%s5 + $0x80] sm:$0xff] %vm2978, %v2272
  %2996 = vst.msk [vmem:[%s5 + $0x88] sm:$0xff] %vm2978, %v2287
  %2997 = vst.msk [vmem:[%s5 + $0x90] sm:$0xff] %vm2978, %v2302
  %2998 = vst.msk [vmem:[%s5 + $0x98] sm:$0xff] %vm2978, %v2317
  %2999 = vst.msk [vmem:[%s5 + $0xa0] sm:$0xff] %vm2978, %v2332
  %3000 = vst.msk [vmem:[%s5 + $0xa8] sm:$0xff] %vm2978, %v2347
  %3001 = vst.msk [vmem:[%s5 + $0xb0] sm:$0xff] %vm2978, %v2362
  %3002 = vst.msk [vmem:[%s5 + $0xb8] sm:$0xff] %vm2978, %v2377
  %3003 = vst.msk [vmem:[%s5 + $0xc0] sm:$0xff] %vm2978, %v2392
  %3004 = vst.msk [vmem:[%s5 + $0xc8] sm:$0xff] %vm2978, %v2407
  %3005 = vst.msk [vmem:[%s5 + $0xd0] sm:$0xff] %vm2978, %v2422
  %3006 = vst.msk [vmem:[%s5 + $0xd8] sm:$0xff] %vm2978, %v2437
  %3007 = vst.msk [vmem:[%s5 + $0xe0] sm:$0xff] %vm2978, %v2452
  %3008 = vst.msk [vmem:[%s5 + $0xe8] sm:$0xff] %vm2978, %v2467
  %3009 = vst.msk [vmem:[%s5 + $0xf0] sm:$0xff] %vm2978, %v2482
  %3010 = vst.msk [vmem:[%s5 + $0xf8] sm:$0xff] %vm2978, %v2497
  %3011 = vst.msk [vmem:[%s5 + $0x100] sm:$0xff] %vm2978, %v2512
  %3012 = vst.msk [vmem:[%s5 + $0x108] sm:$0xff] %vm2978, %v2527
  %3013 = vst.msk [vmem:[%s5 + $0x110] sm:$0xff] %vm2978, %v2542
  %3014 = vst.msk [vmem:[%s5 + $0x118] sm:$0xff] %vm2978, %v2557
  %3015 = vst.msk [vmem:[%s5 + $0x120] sm:$0xff] %vm2978, %v2572
  %3016 = vst.msk [vmem:[%s5 + $0x128] sm:$0xff] %vm2978, %v2587
  %3017 = vst.msk [vmem:[%s5 + $0x130] sm:$0xff] %vm2978, %v2602
  %3018 = vst.msk [vmem:[%s5 + $0x138] sm:$0xff] %vm2978, %v2617
  %3019 = vst.msk [vmem:[%s5 + $0x140] sm:$0xff] %vm2978, %v2632
  %3020 = vst.msk [vmem:[%s5 + $0x148] sm:$0xff] %vm2978, %v2647
  %3021 = vst.msk [vmem:[%s5 + $0x150] sm:$0xff] %vm2978, %v2662
  %3022 = vst.msk [vmem:[%s5 + $0x158] sm:$0xff] %vm2978, %v2677
  %3023 = vst.msk [vmem:[%s5 + $0x160] sm:$0xff] %vm2978, %v2692
  %3024 = vst.msk [vmem:[%s5 + $0x168] sm:$0xff] %vm2978, %v2707
  %3025 = vst.msk [vmem:[%s5 + $0x170] sm:$0xff] %vm2978, %v2722
  %3026 = vst.msk [vmem:[%s5 + $0x178] sm:$0xff] %vm2978, %v2737
  %3027 = vst.msk [vmem:[%s5 + $0x180] sm:$0xff] %vm2978, %v2752
  %3028 = vst.msk [vmem:[%s5 + $0x188] sm:$0xff] %vm2978, %v2767
  %3029 = vst.msk [vmem:[%s5 + $0x190] sm:$0xff] %vm2978, %v2782
  %3030 = vst.msk [vmem:[%s5 + $0x198] sm:$0xff] %vm2978, %v2797
  %3031 = vst.msk [vmem:[%s5 + $0x1a0] sm:$0xff] %vm2978, %v2812
  %3032 = vst.msk [vmem:[%s5 + $0x1a8] sm:$0xff] %vm2978, %v2827
  %3033 = vst.msk [vmem:[%s5 + $0x1b0] sm:$0xff] %vm2978, %v2842
  %3034 = vst.msk [vmem:[%s5 + $0x1b8] sm:$0xff] %vm2978, %v2857
  %3035 = vst.msk [vmem:[%s5 + $0x1c0] sm:$0xff] %vm2978, %v2872
  %3036 = vst.msk [vmem:[%s5 + $0x1c8] sm:$0xff] %vm2978, %v2887
  %3037 = vst.msk [vmem:[%s5 + $0x1d0] sm:$0xff] %vm2978, %v2902
  %3038 = vst.msk [vmem:[%s5 + $0x1d8] sm:$0xff] %vm2978, %v2917
  %3039 = vst.msk [vmem:[%s5 + $0x1e0] sm:$0xff] %vm2978, %v2932
  %3040 = vst.msk [vmem:[%s5 + $0x1e8] sm:$0xff] %vm2978, %v2947
  %3041 = vst.msk [vmem:[%s5 + $0x1f0] sm:$0xff] %vm2978, %v2962
  %3042 = vst.msk [vmem:[%s5 + $0x1f8] sm:$0xff] %vm2978, %v2977
  // Predicated region
  $region22: #{_lambda_.17} parent=0 // pred_check
    _
  $region23: #{_lambda_.17} parent=0 // pred_check_branch
    %3044 = sbr.rel (0) target = $region25
  $region24: #{_lambda_.17} parent=0 // pred_region
    _
  $region25: #{_lambda_.17} parent=0 // pred_fallthru
    _
  // Predicated region
  $region26: #{_lambda_.17} parent=0 // pred_check
    _
  $region27: #{_lambda_.17} parent=0 // pred_check_branch
    %3046 = sbr.rel (0) target = $region29
  $region28: #{_lambda_.17} parent=0 // pred_region
    _
  $region29: #{_lambda_.17} parent=0 // pred_fallthru
    _

</llo_original>
